<compile_context>
chip_gen: v7x
topology: tpu7x:2x2x1
jax: 0.10.0
libtpu: 0.0.40
codegen_flags: <defaults>
</compile_context>

<pallas_src>
import functools

import jax
import jax.numpy as jnp
import numpy as np
from jax.experimental import pallas as pl
from jax.experimental.pallas import tpu as pltpu

EPS = 1e-5
LANE = 128                       # TPU lane width
MATMUL_DTYPE = jnp.bfloat16      # MXU operand dtype (accumulation stays f32)
STORE_DTYPE = jnp.bfloat16       # HBM dtype for the y / skip intermediates


def _round_up(x, m):
    return ((x + m - 1) // m) * m


def _vmem_limit_bytes():
    """Generation-aware scoped-VMEM budget (leave headroom for compiler scratch)."""
    try:
        cap = int(pltpu.get_tpu_info().vmem_capacity_bytes)
    except Exception:               # pragma: no cover - conservative fallback
        cap = 64 * 1024 * 1024      # assume the smallest (v7x-like) VMEM
    return max(32 * 1024 * 1024, min(cap - 24 * 1024 * 1024, 100 * 1024 * 1024))


# ------------------------------ in-kernel helpers --------------------------- #

def _halo_store(scr, interior, H, W):
    """Write `interior` (H, W, C) into the centre of scr (H+2, W+2, C) and zero
    the 1-pixel border strips.  Strips are re-zeroed every grid step (cheap VMEM
    stores) so nothing depends on cross-iteration scratch state (megacore-safe)."""
    Hp, Wp = H + 2, W + 2
    c = scr.shape[-1]
    zrow = jnp.zeros((1, Wp, c), scr.dtype)
    zcol = jnp.zeros((Hp, 1, c), scr.dtype)
    scr[0:1, :, :] = zrow
    scr[H + 1:H + 2, :, :] = zrow
    scr[:, 0:1, :] = zcol
    scr[:, W + 1:W + 2, :] = zcol
    scr[1:H + 1, 1:W + 1, :] = interior


def _conv3x3(scr, w_ref, H, W):
    """3x3 'same' conv over the zero-halo scratch, as shifted-window matmuls.

    If the channel count is lane-aligned, the 3 kw taps per kh row are fused
    into one K = 3*C matmul (lane-aligned concat, fills the 256-deep MXU on
    v6e/v7x).  Otherwise fall back to 9 K=C taps (v5e / tiny-channel case)."""
    c = scr.shape[-1]
    cout = w_ref.shape[-1]
    grouped = (c % LANE == 0)
    acc = jnp.zeros((H * W, cout), jnp.float32)
    for dy in range(3):
        if grouped:
            a_dy = jnp.concatenate(
                [scr[dy:dy + H, dx:dx + W, :].reshape(H * W, c) for dx in range(3)],
                axis=1).astype(MATMUL_DTYPE)                       # (H*W, 3C)
            acc += jnp.dot(a_dy, w_ref[dy], preferred_element_type=jnp.float32)
        else:
            w_dy = w_ref[dy]                                       # (3C, Cout)
            for dx in range(3):
                a_k = scr[dy:dy + H, dx:dx + W, :].reshape(H * W, c)
                acc += jnp.dot(a_k.astype(MATMUL_DTYPE),
                               w_dy[dx * c:(dx + 1) * c, :],
                               preferred_element_type=jnp.float32)
    return acc


# ----------------------------------- kernels -------------------------------- #

def _stats_skip_kernel(x_ref, wid_ref, bid_ref, skip_ref, mean_ref, m2_ref, *, H, W):
    """BN1 per-image partials (mean, centered M2) + the 1x1 identity conv on x.

    The stats pass is memory-bound, so the skip matmul rides along on the idle
    MXU; storing it bf16 removes the x read from stage 3 entirely."""
    cin = x_ref.shape[-1]
    xi = x_ref[0].reshape(H * W, cin)                               # f32
    mu = jnp.mean(xi, axis=0, keepdims=True)                        # (1, Cin)
    m2 = jnp.sum((xi - mu) ** 2, axis=0, keepdims=True)             # (1, Cin)
    mean_ref[0] = jnp.broadcast_to(mu, (8, cin))
    m2_ref[0] = jnp.broadcast_to(m2, (8, cin))
    skip = jnp.dot(xi.astype(MATMUL_DTYPE), wid_ref[...],
                   preferred_element_type=jnp.float32) + bid_ref[...]
    skip_ref[0] = skip.astype(STORE_DTYPE)                          # (H*W, Cq) bf16


def _bn1_conv1_kernel(x_ref, scale_ref, shift_ref, w1_ref, b1_ref,
                      y_ref, mean_ref, m2_ref, a_scr, *, H, W):
    """y = conv3x3(relu(BN1(x))) + b1 (stored lane-dense bf16) + BN2 partials."""
    cq = w1_ref.shape[-1]
    a = jnp.maximum(x_ref[0] * scale_ref[...] + shift_ref[...], 0.0)  # (H, W, Cin) f32
    _halo_store(a_scr, a, H, W)
    y = _conv3x3(a_scr, w1_ref, H, W) + b1_ref[...]                   # (H*W, Cq) f32
    mu = jnp.mean(y, axis=0, keepdims=True)
    m2 = jnp.sum((y - mu) ** 2, axis=0, keepdims=True)
    mean_ref[0] = jnp.broadcast_to(mu, (8, cq))
    m2_ref[0] = jnp.broadcast_to(m2, (8, cq))
    y_ref[0] = y.astype(STORE_DTYPE)


def _bn2_conv2_kernel(y_ref, skip_ref, scale_ref, shift_ref, w2_ref, b2_ref,
                      out_ref, z_scr, *, H, W):
    """out = conv3x3(relu(BN2(y))) + b2 + skip (skip precomputed in stage 1)."""
    cq = w2_ref.shape[-1]
    y = y_ref[0].astype(jnp.float32)                                  # (H*W, Cq)
    z = jnp.maximum(y * scale_ref[...] + shift_ref[...], 0.0)
    _halo_store(z_scr, z.reshape(H, W, cq), H, W)
    acc = _conv3x3(z_scr, w2_ref, H, W)
    out_ref[0] = acc + b2_ref[...] + skip_ref[0].astype(jnp.float32)


# --------------------------------- glue helpers ----------------------------- #

def _bn_coeffs(mean_t, m2_t, count, gamma, beta):
    """Chan combine of per-image (mean, centered M2) -> fused BN scale/shift."""
    mean = jnp.mean(mean_t, axis=0, keepdims=True)                    # (1, C)
    m2 = (jnp.sum(m2_t, axis=0, keepdims=True)
          + count * jnp.sum((mean_t - mean) ** 2, axis=0, keepdims=True))
    var = m2 / (count * mean_t.shape[0])                              # biased var
    inv = jax.lax.rsqrt(var + EPS)
    scale = gamma.reshape(1, -1) * inv
    shift = beta.reshape(1, -1) - mean * scale
    return scale, shift


def _pack_w3x3(wt, ci_pad, co_pad):
    """PyTorch (Cout, Cin, 3, 3) -> (3, 3*ci_pad, co_pad) bf16.

    Per kh row the K axis is ordered [kw=0 | kw=1 | kw=2], each ci_pad wide,
    matching the activation concat / per-tap slicing in _conv3x3."""
    co, ci = wt.shape[0], wt.shape[1]
    wm = jnp.transpose(wt.astype(jnp.float32), (2, 3, 1, 0))          # (3, 3, ci, co)
    wm = jnp.pad(wm, ((0, 0), (0, 0), (0, ci_pad - ci), (0, co_pad - co)))
    return wm.reshape(3, 3 * ci_pad, co_pad).astype(MATMUL_DTYPE)


# ----------------------------------- wrapper -------------------------------- #

@jax.jit
def resu_block_forward(x_nchw, params):
    n, cin, h, w = x_nchw.shape
    cout = params["w1"].shape[0]
    cq = _round_up(cout, LANE)            # lane-dense output channel width
    hp, wp, hw = h + 2, w + 2, h * w
    f32 = jnp.float32

    # NCHW -> channels-last (lane-dense).  No spatial / channel padding of x in
    # HBM: the conv halo lives in VMEM scratch inside the kernels.
    x = jnp.transpose(x_nchw, (0, 2, 3, 1)).astype(f32)               # (n, h, w, cin)

    def padc(v, c_to, fill=0.0):
        return jnp.pad(v.astype(f32), (0, c_to - v.shape[0]), constant_values=fill)

    gamma1 = params["gamma1"].astype(f32)
    beta1 = params["beta1"].astype(f32)
    gamma2, beta2 = padc(params["gamma2"], cq, 1.0), padc(params["beta2"], cq)
    b1 = padc(params["b1"], cq).reshape(1, cq)
    b2 = padc(params["b2"], cq).reshape(1, cq)
    bid = padc(params["bid"], cq).reshape(1, cq)
    w1 = _pack_w3x3(params["w1"], cin, cq)                            # (3, 3*cin, cq)
    w2 = _pack_w3x3(params["w2"], cq, cq)                             # (3, 3*cq,  cq)
    wid = jnp.pad(params["wid"][:, :, 0, 0].T.astype(f32),
                  ((0, 0), (0, cq - cout))).astype(MATMUL_DTYPE)      # (cin, cq)

    x_spec = pl.BlockSpec((1, h, w, cin), lambda i: (i, 0, 0, 0))
    flat_spec = pl.BlockSpec((1, hw, cq), lambda i: (i, 0, 0))

    def stat_spec(c):
        return pl.BlockSpec((1, 8, c), lambda i: (i, 0, 0))

    def const_spec(shape):
        # grid-invariant operand: fetched once, single-buffered (no 2nd buffer).
        nd = len(shape)
        return pl.BlockSpec(shape, lambda i: (0,) * nd,
                            pipeline_mode=pl.Buffered(1))

    cparams = pltpu.CompilerParams(dimension_semantics=("parallel",),
                                   vmem_limit_bytes=_vmem_limit_bytes())

    # ---- Stage 1: BN1 batch-stat partials + 1x1 identity conv (idle-MXU ride).
    skip, mean1_p, m2_1p = pl.pallas_call(
        functools.partial(_stats_skip_kernel, H=h, W=w),
        grid=(n,),
        in_specs=[x_spec, const_spec((cin, cq)), const_spec((1, cq))],
        out_specs=(flat_spec, stat_spec(cin), stat_spec(cin)),
        out_shape=(jax.ShapeDtypeStruct((n, hw, cq), STORE_DTYPE),
                   jax.ShapeDtypeStruct((n, 8, cin), f32),
                   jax.ShapeDtypeStruct((n, 8, cin), f32)),
        compiler_params=cparams,
        cost_estimate=pl.CostEstimate(
            flops=2 * n * hw * cin * cq + 4 * n * hw * cin,
            transcendentals=0,
            bytes_accessed=4 * n * hw * cin + 2 * n * hw * cq),
    )(x, wid, bid)
    scale1, shift1 = _bn_coeffs(mean1_p[:, 0, :], m2_1p[:, 0, :], hw, gamma1, beta1)

    # ---- Stage 2 (fused): relu(BN1(x)) -> conv1 -> y (bf16) + BN2 partials.
    yflat, mean2_p, m2_2p = pl.pallas_call(
        functools.partial(_bn1_conv1_kernel, H=h, W=w),
        grid=(n,),
        in_specs=[x_spec, const_spec((1, cin)), const_spec((1, cin)),
                  const_spec((3, 3 * cin, cq)), const_spec((1, cq))],
        out_specs=(flat_spec, stat_spec(cq), stat_spec(cq)),
        out_shape=(jax.ShapeDtypeStruct((n, hw, cq), STORE_DTYPE),
                   jax.ShapeDtypeStruct((n, 8, cq), f32),
                   jax.ShapeDtypeStruct((n, 8, cq), f32)),
        scratch_shapes=[pltpu.VMEM((hp, wp, cin), f32)],
        compiler_params=cparams,
        cost_estimate=pl.CostEstimate(
            flops=2 * n * hw * 9 * cin * cq,
            transcendentals=0,
            bytes_accessed=4 * n * hw * cin + 2 * n * hw * cq),
    )(x, scale1, shift1, w1, b1)
    scale2, shift2 = _bn_coeffs(mean2_p[:, 0, :], m2_2p[:, 0, :], hw, gamma2, beta2)

    # ---- Stage 3 (fused): relu(BN2(y)) -> conv2 -> + skip -> out (f32).
    out_flat = pl.pallas_call(
        functools.partial(_bn2_conv2_kernel, H=h, W=w),
        grid=(n,),
        in_specs=[flat_spec, flat_spec,
                  const_spec((1, cq)), const_spec((1, cq)),
                  const_spec((3, 3 * cq, cq)), const_spec((1, cq))],
        out_specs=pl.BlockSpec((1, hw, cq), lambda i: (i, 0, 0)),
        out_shape=jax.ShapeDtypeStruct((n, hw, cq), f32),
        scratch_shapes=[pltpu.VMEM((hp, wp, cq), f32)],
        compiler_params=cparams,
        cost_estimate=pl.CostEstimate(
            flops=2 * n * hw * 9 * cq * cq,
            transcendentals=0,
            bytes_accessed=4 * n * hw * cq + 4 * n * hw * cq),
    )(yflat, skip, scale2, shift2, w2, b2)

    out = out_flat.reshape(n, h, w, cq)[..., :cout]
    return jnp.transpose(out, (0, 3, 1, 2))


# ------------------------- pure-JAX reference (NCHW) ------------------------ #

def _ref_forward(x, p):
    def bn(t, g, b):
        mean = t.mean(axis=(0, 2, 3), keepdims=True)
        var = t.var(axis=(0, 2, 3), keepdims=True)       # biased (training-mode BN)
        return (t - mean) / jnp.sqrt(var + EPS) * g.reshape(1, -1, 1, 1) + b.reshape(1, -1, 1, 1)

    def conv(t, wt, b, pad):
        y = jax.lax.conv_general_dilated(
            t, wt, window_strides=(1, 1), padding=((pad, pad), (pad, pad)),
            dimension_numbers=("NCHW", "OIHW", "NCHW"))
        return y + b.reshape(1, -1, 1, 1)

    a = jnp.maximum(bn(x, p["gamma1"], p["beta1"]), 0.0)
    y = conv(a, p["w1"], p["b1"], pad=1)
    z = jnp.maximum(bn(y, p["gamma2"], p["beta2"]), 0.0)
    y2 = conv(z, p["w2"], p["b2"], pad=1)
    s = conv(x, p["wid"], p["bid"], pad=0)
    return y2 + s


# ---------------------------------- main ----------------------------------- #

def _init_params(key, cin, cout):
    ks = jax.random.split(key, 6)
    return {
        "gamma1": jnp.ones((cin,), jnp.float32),
        "beta1": jnp.zeros((cin,), jnp.float32),
        "gamma2": jnp.ones((cout,), jnp.float32),
        "beta2": jnp.zeros((cout,), jnp.float32),
        "w1": 0.1 * jax.random.normal(ks[0], (cout, cin, 3, 3), jnp.float32),
        "b1": 0.1 * jax.random.normal(ks[1], (cout,), jnp.float32),
        "w2": 0.1 * jax.random.normal(ks[2], (cout, cout, 3, 3), jnp.float32),
        "b2": 0.1 * jax.random.normal(ks[3], (cout,), jnp.float32),
        "wid": 0.1 * jax.random.normal(ks[4], (cout, cin, 1, 1), jnp.float32),
        "bid": 0.1 * jax.random.normal(ks[5], (cout,), jnp.float32),
    }


if __name__ == "__main__":
    key = jax.random.PRNGKey(0)
    kx, kp = jax.random.split(key)
    N, CIN, COUT, H, W = 2, 4, 8, 16, 16          # stride s = 1 (module default)
    x = jax.random.normal(kx, (N, CIN, H, W), jnp.float32)
    params = _init_params(kp, CIN, COUT)

    out = jax.block_until_ready(resu_block_forward(x, params))
    ref = jax.block_until_ready(_ref_forward(x, params))

    assert out.shape == (N, COUT, H, W)
    # tolerance accounts for bf16 MXU operands and bf16 y/skip intermediates
    # (accumulation and BN math stay f32)
    np.testing.assert_allclose(np.asarray(out), np.asarray(ref), rtol=2e-2, atol=2e-2)

    print("KERNEL_OK")
</pallas_src>

<mosaic_0001>
module attributes {stable_mosaic.version = 11 : i64} {
  func.func @_stats_skip_kernel(%arg0: i32, %arg1: memref<1x16x16x4xf32, #tpu.memory_space<vmem>>, %arg2: memref<4x128xbf16, #tpu.memory_space<vmem>>, %arg3: memref<1x128xf32, #tpu.memory_space<vmem>>, %arg4: memref<1x256x128xbf16, #tpu.memory_space<vmem>>, %arg5: memref<1x8x4xf32, #tpu.memory_space<vmem>>, %arg6: memref<1x8x4xf32, #tpu.memory_space<vmem>>) attributes {dimension_semantics = [#tpu.dimension_semantics<parallel>], iteration_bounds = array<i64: 2>, scalar_prefetch = 0 : i64, scratch_operands = 0 : i64, tpu.core_type = #tpu.core_type<tc>, window_params = [{transform_indices = @transform_0, window_bounds = array<i64: 1, 16, 16, 4>}, {pipeline_mode = #tpu.pipeline_mode<synchronous>, transform_indices = @transform_1, window_bounds = array<i64: 4, 128>}, {pipeline_mode = #tpu.pipeline_mode<synchronous>, transform_indices = @transform_2, window_bounds = array<i64: 1, 128>}, {transform_indices = @transform_3, window_bounds = array<i64: 1, 256, 128>}, {transform_indices = @transform_4, window_bounds = array<i64: 1, 8, 4>}, {transform_indices = @transform_5, window_bounds = array<i64: 1, 8, 4>}]} {
    %c0 = arith.constant 0 : index
    %c0_0 = arith.constant 0 : index
    %c0_1 = arith.constant 0 : index
    %c0_2 = arith.constant 0 : index
    %0 = vector.load %arg1[%c0, %c0_0, %c0_1, %c0_2] : memref<1x16x16x4xf32, #tpu.memory_space<vmem>>, vector<1x16x16x4xf32>
    %1 = vector.shape_cast %0 : vector<1x16x16x4xf32> to vector<16x16x4xf32>
    %2 = vector.shape_cast %1 : vector<16x16x4xf32> to vector<256x4xf32>
    %cst = arith.constant dense<0.000000e+00> : vector<4xf32>
    %3 = vector.multi_reduction <add>, %2, %cst [0] : vector<256x4xf32> to vector<4xf32>
    %4 = vector.shape_cast %3 : vector<4xf32> to vector<1x4xf32>
    %cst_3 = arith.constant 2.560000e+02 : f32
    %5 = vector.broadcast %cst_3 : f32 to vector<1x4xf32>
    %6 = arith.divf %4, %5 : vector<1x4xf32>
    %7 = vector.broadcast %6 : vector<1x4xf32> to vector<256x4xf32>
    %8 = arith.subf %2, %7 : vector<256x4xf32>
    %9 = arith.mulf %8, %8 : vector<256x4xf32>
    %cst_4 = arith.constant dense<0.000000e+00> : vector<4xf32>
    %10 = vector.multi_reduction <add>, %9, %cst_4 [0] : vector<256x4xf32> to vector<4xf32>
    %11 = vector.shape_cast %10 : vector<4xf32> to vector<1x4xf32>
    %12 = vector.shape_cast %6 : vector<1x4xf32> to vector<1x4xf32>
    %13 = vector.broadcast %12 : vector<1x4xf32> to vector<8x4xf32>
    %c0_5 = arith.constant 0 : index
    %c0_6 = arith.constant 0 : index
    %c0_7 = arith.constant 0 : index
    %14 = vector.load %arg5[%c0_5, %c0_6, %c0_7] : memref<1x8x4xf32, #tpu.memory_space<vmem>>, vector<1x8x4xf32>
    %15 = vector.shape_cast %14 : vector<1x8x4xf32> to vector<8x4xf32>
    %16 = vector.shape_cast %13 : vector<8x4xf32> to vector<1x8x4xf32>
    tpu.vector_store %arg5[%c0_5, %c0_6, %c0_7], %16 {strides = array<i32>} : memref<1x8x4xf32, #tpu.memory_space<vmem>>, vector<1x8x4xf32>,
    %17 = vector.shape_cast %11 : vector<1x4xf32> to vector<1x4xf32>
    %18 = vector.broadcast %17 : vector<1x4xf32> to vector<8x4xf32>
    %c0_8 = arith.constant 0 : index
    %c0_9 = arith.constant 0 : index
    %c0_10 = arith.constant 0 : index
    %19 = vector.load %arg6[%c0_8, %c0_9, %c0_10] : memref<1x8x4xf32, #tpu.memory_space<vmem>>, vector<1x8x4xf32>
    %20 = vector.shape_cast %19 : vector<1x8x4xf32> to vector<8x4xf32>
    %21 = vector.shape_cast %18 : vector<8x4xf32> to vector<1x8x4xf32>
    tpu.vector_store %arg6[%c0_8, %c0_9, %c0_10], %21 {strides = array<i32>} : memref<1x8x4xf32, #tpu.memory_space<vmem>>, vector<1x8x4xf32>,
    %22 = arith.truncf %2 : vector<256x4xf32> to vector<256x4xbf16>
    %c0_11 = arith.constant 0 : index
    %c0_12 = arith.constant 0 : index
    %23 = vector.load %arg2[%c0_11, %c0_12] : memref<4x128xbf16, #tpu.memory_space<vmem>>, vector<4x128xbf16>
    %cst_13 = arith.constant dense<0.000000e+00> : vector<256x128xf32>
    %24 = tpu.matmul %22, %23, %cst_13 {dimension_numbers = #tpu.dot_dimension_numbers<[1], [0], [0], [1], [0, 0, 1, 1], [], []>} : vector<256x4xbf16>, vector<4x128xbf16>, vector<256x128xf32> -> vector<256x128xf32>
    %c0_14 = arith.constant 0 : index
    %c0_15 = arith.constant 0 : index
    %25 = vector.load %arg3[%c0_14, %c0_15] : memref<1x128xf32, #tpu.memory_space<vmem>>, vector<1x128xf32>
    %26 = vector.broadcast %25 : vector<1x128xf32> to vector<256x128xf32>
    %27 = arith.addf %24, %26 : vector<256x128xf32>
    %28 = arith.truncf %27 : vector<256x128xf32> to vector<256x128xbf16>
    %c0_16 = arith.constant 0 : index
    %c0_17 = arith.constant 0 : index
    %c0_18 = arith.constant 0 : index
    %29 = vector.load %arg4[%c0_16, %c0_17, %c0_18] : memref<1x256x128xbf16, #tpu.memory_space<vmem>>, vector<1x256x128xbf16>
    %30 = vector.shape_cast %29 : vector<1x256x128xbf16> to vector<256x128xbf16>
    %31 = vector.shape_cast %28 : vector<256x128xbf16> to vector<1x256x128xbf16>
    tpu.vector_store %arg4[%c0_16, %c0_17, %c0_18], %31 {strides = array<i32>} : memref<1x256x128xbf16, #tpu.memory_space<vmem>>, vector<1x256x128xbf16>,
    return
  }
  func.func @transform_0(%arg0: i32) -> (i32, i32, i32, i32) {
    %c0_i32 = arith.constant 0 : i32
    %c0_i32_0 = arith.constant 0 : i32
    %c0_i32_1 = arith.constant 0 : i32
    %c0_i32_2 = arith.constant 0 : i32
    return %arg0, %c0_i32, %c0_i32_0, %c0_i32_1 : i32, i32, i32, i32
  }
  func.func @transform_1(%arg0: i32) -> (i32, i32) {
    %c0_i32 = arith.constant 0 : i32
    %c0_i32_0 = arith.constant 0 : i32
    %c0_i32_1 = arith.constant 0 : i32
    return %c0_i32, %c0_i32_0 : i32, i32
  }
  func.func @transform_2(%arg0: i32) -> (i32, i32) {
    %c0_i32 = arith.constant 0 : i32
    %c0_i32_0 = arith.constant 0 : i32
    %c0_i32_1 = arith.constant 0 : i32
    return %c0_i32, %c0_i32_0 : i32, i32
  }
  func.func @transform_3(%arg0: i32) -> (i32, i32, i32) {
    %c0_i32 = arith.constant 0 : i32
    %c0_i32_0 = arith.constant 0 : i32
    %c0_i32_1 = arith.constant 0 : i32
    return %arg0, %c0_i32, %c0_i32_0 : i32, i32, i32
  }
  func.func @transform_4(%arg0: i32) -> (i32, i32, i32) {
    %c0_i32 = arith.constant 0 : i32
    %c0_i32_0 = arith.constant 0 : i32
    %c0_i32_1 = arith.constant 0 : i32
    return %arg0, %c0_i32, %c0_i32_0 : i32, i32, i32
  }
  func.func @transform_5(%arg0: i32) -> (i32, i32, i32) {
    %c0_i32 = arith.constant 0 : i32
    %c0_i32_0 = arith.constant 0 : i32
    %c0_i32_1 = arith.constant 0 : i32
    return %arg0, %c0_i32, %c0_i32_0 : i32, i32, i32
  }
}

module attributes {stable_mosaic.version = 11 : i64} {
  func.func @_bn1_conv1_kernel(%arg0: i32, %arg1: memref<1x16x16x4xf32, #tpu.memory_space<vmem>>, %arg2: memref<1x4xf32, #tpu.memory_space<vmem>>, %arg3: memref<1x4xf32, #tpu.memory_space<vmem>>, %arg4: memref<3x12x128xbf16, #tpu.memory_space<vmem>>, %arg5: memref<1x128xf32, #tpu.memory_space<vmem>>, %arg6: memref<1x256x128xbf16, #tpu.memory_space<vmem>>, %arg7: memref<1x8x128xf32, #tpu.memory_space<vmem>>, %arg8: memref<1x8x128xf32, #tpu.memory_space<vmem>>, %arg9: memref<18x18x4xf32, #tpu.memory_space<vmem>>) attributes {dimension_semantics = [#tpu.dimension_semantics<parallel>], iteration_bounds = array<i64: 2>, scalar_prefetch = 0 : i64, scratch_operands = 1 : i64, tpu.core_type = #tpu.core_type<tc>, window_params = [{transform_indices = @transform_0, window_bounds = array<i64: 1, 16, 16, 4>}, {pipeline_mode = #tpu.pipeline_mode<synchronous>, transform_indices = @transform_1, window_bounds = array<i64: 1, 4>}, {pipeline_mode = #tpu.pipeline_mode<synchronous>, transform_indices = @transform_2, window_bounds = array<i64: 1, 4>}, {pipeline_mode = #tpu.pipeline_mode<synchronous>, transform_indices = @transform_3, window_bounds = array<i64: 3, 12, 128>}, {pipeline_mode = #tpu.pipeline_mode<synchronous>, transform_indices = @transform_4, window_bounds = array<i64: 1, 128>}, {transform_indices = @transform_5, window_bounds = array<i64: 1, 256, 128>}, {transform_indices = @transform_6, window_bounds = array<i64: 1, 8, 128>}, {transform_indices = @transform_7, window_bounds = array<i64: 1, 8, 128>}]} {
    %c0 = arith.constant 0 : index
    %c0_0 = arith.constant 0 : index
    %c0_1 = arith.constant 0 : index
    %c0_2 = arith.constant 0 : index
    %0 = vector.load %arg1[%c0, %c0_0, %c0_1, %c0_2] : memref<1x16x16x4xf32, #tpu.memory_space<vmem>>, vector<1x16x16x4xf32>
    %1 = vector.shape_cast %0 : vector<1x16x16x4xf32> to vector<16x16x4xf32>
    %c0_3 = arith.constant 0 : index
    %c0_4 = arith.constant 0 : index
    %2 = vector.load %arg2[%c0_3, %c0_4] : memref<1x4xf32, #tpu.memory_space<vmem>>, vector<1x4xf32>
    %3 = vector.shape_cast %2 : vector<1x4xf32> to vector<1x1x4xf32>
    %4 = vector.broadcast %3 : vector<1x1x4xf32> to vector<16x16x4xf32>
    %5 = arith.mulf %1, %4 : vector<16x16x4xf32>
    %c0_5 = arith.constant 0 : index
    %c0_6 = arith.constant 0 : index
    %6 = vector.load %arg3[%c0_5, %c0_6] : memref<1x4xf32, #tpu.memory_space<vmem>>, vector<1x4xf32>
    %7 = vector.shape_cast %6 : vector<1x4xf32> to vector<1x1x4xf32>
    %8 = vector.broadcast %7 : vector<1x1x4xf32> to vector<16x16x4xf32>
    %9 = arith.addf %5, %8 : vector<16x16x4xf32>
    %cst = arith.constant 0.000000e+00 : f32
    %10 = vector.broadcast %cst : f32 to vector<16x16x4xf32>
    %11 = arith.maximumf %9, %10 : vector<16x16x4xf32>
    %cst_7 = arith.constant 0.000000e+00 : f32
    %12 = vector.broadcast %cst_7 : f32 to vector<1x18x4xf32>
    %cst_8 = arith.constant 0.000000e+00 : f32
    %13 = vector.broadcast %cst_8 : f32 to vector<18x1x4xf32>
    %c0_9 = arith.constant 0 : index
    %c0_10 = arith.constant 0 : index
    %c0_11 = arith.constant 0 : index
    %14 = vector.load %arg9[%c0_9, %c0_10, %c0_11] : memref<18x18x4xf32, #tpu.memory_space<vmem>>, vector<1x18x4xf32>
    tpu.vector_store %arg9[%c0_9, %c0_10, %c0_11], %12 {strides = array<i32>} : memref<18x18x4xf32, #tpu.memory_space<vmem>>, vector<1x18x4xf32>,
    %c17 = arith.constant 17 : index
    %c0_12 = arith.constant 0 : index
    %c0_13 = arith.constant 0 : index
    %15 = vector.load %arg9[%c17, %c0_12, %c0_13] : memref<18x18x4xf32, #tpu.memory_space<vmem>>, vector<1x18x4xf32>
    tpu.vector_store %arg9[%c17, %c0_12, %c0_13], %12 {strides = array<i32>} : memref<18x18x4xf32, #tpu.memory_space<vmem>>, vector<1x18x4xf32>,
    %c0_14 = arith.constant 0 : index
    %c0_15 = arith.constant 0 : index
    %c0_16 = arith.constant 0 : index
    %16 = vector.load %arg9[%c0_14, %c0_15, %c0_16] : memref<18x18x4xf32, #tpu.memory_space<vmem>>, vector<18x1x4xf32>
    tpu.vector_store %arg9[%c0_14, %c0_15, %c0_16], %13 {strides = array<i32>} : memref<18x18x4xf32, #tpu.memory_space<vmem>>, vector<18x1x4xf32>,
    %c0_17 = arith.constant 0 : index
    %c17_18 = arith.constant 17 : index
    %c0_19 = arith.constant 0 : index
    %17 = vector.load %arg9[%c0_17, %c17_18, %c0_19] : memref<18x18x4xf32, #tpu.memory_space<vmem>>, vector<18x1x4xf32>
    tpu.vector_store %arg9[%c0_17, %c17_18, %c0_19], %13 {strides = array<i32>} : memref<18x18x4xf32, #tpu.memory_space<vmem>>, vector<18x1x4xf32>,
    %c1 = arith.constant 1 : index
    %c1_20 = arith.constant 1 : index
    %c0_21 = arith.constant 0 : index
    %18 = vector.load %arg9[%c1, %c1_20, %c0_21] : memref<18x18x4xf32, #tpu.memory_space<vmem>>, vector<16x16x4xf32>
    tpu.vector_store %arg9[%c1, %c1_20, %c0_21], %11 {strides = array<i32>} : memref<18x18x4xf32, #tpu.memory_space<vmem>>, vector<16x16x4xf32>,
    %cst_22 = arith.constant 0.000000e+00 : f32
    %19 = vector.broadcast %cst_22 : f32 to vector<256x128xf32>
    %c0_23 = arith.constant 0 : index
    %c0_24 = arith.constant 0 : index
    %c0_25 = arith.constant 0 : index
    %20 = vector.load %arg4[%c0_23, %c0_24, %c0_25] : memref<3x12x128xbf16, #tpu.memory_space<vmem>>, vector<1x12x128xbf16>
    %21 = vector.shape_cast %20 : vector<1x12x128xbf16> to vector<12x128xbf16>
    %c0_26 = arith.constant 0 : index
    %c0_27 = arith.constant 0 : index
    %c0_28 = arith.constant 0 : index
    %22 = vector.load %arg9[%c0_26, %c0_27, %c0_28] : memref<18x18x4xf32, #tpu.memory_space<vmem>>, vector<16x16x4xf32>
    %23 = vector.shape_cast %22 : vector<16x16x4xf32> to vector<256x4xf32>
    %24 = arith.truncf %23 : vector<256x4xf32> to vector<256x4xbf16>
    %25 = vector.extract_strided_slice %21 {offsets = [0, 0], sizes = [4, 128], strides = [1, 1]} : vector<12x128xbf16> to vector<4x128xbf16>
    %cst_29 = arith.constant dense<0.000000e+00> : vector<256x128xf32>
    %26 = tpu.matmul %24, %25, %cst_29 {dimension_numbers = #tpu.dot_dimension_numbers<[1], [0], [0], [1], [0, 0, 1, 1], [], []>} : vector<256x4xbf16>, vector<4x128xbf16>, vector<256x128xf32> -> vector<256x128xf32>
    %27 = arith.addf %19, %26 : vector<256x128xf32>
    %c0_30 = arith.constant 0 : index
    %c1_31 = arith.constant 1 : index
    %c0_32 = arith.constant 0 : index
    %28 = vector.load %arg9[%c0_30, %c1_31, %c0_32] : memref<18x18x4xf32, #tpu.memory_space<vmem>>, vector<16x16x4xf32>
    %29 = vector.shape_cast %28 : vector<16x16x4xf32> to vector<256x4xf32>
    %30 = arith.truncf %29 : vector<256x4xf32> to vector<256x4xbf16>
    %31 = vector.extract_strided_slice %21 {offsets = [4, 0], sizes = [4, 128], strides = [1, 1]} : vector<12x128xbf16> to vector<4x128xbf16>
    %cst_33 = arith.constant dense<0.000000e+00> : vector<256x128xf32>
    %32 = tpu.matmul %30, %31, %cst_33 {dimension_numbers = #tpu.dot_dimension_numbers<[1], [0], [0], [1], [0, 0, 1, 1], [], []>} : vector<256x4xbf16>, vector<4x128xbf16>, vector<256x128xf32> -> vector<256x128xf32>
    %33 = arith.addf %27, %32 : vector<256x128xf32>
    %c0_34 = arith.constant 0 : index
    %c2 = arith.constant 2 : index
    %c0_35 = arith.constant 0 : index
    %34 = vector.load %arg9[%c0_34, %c2, %c0_35] : memref<18x18x4xf32, #tpu.memory_space<vmem>>, vector<16x16x4xf32>
    %35 = vector.shape_cast %34 : vector<16x16x4xf32> to vector<256x4xf32>
    %36 = arith.truncf %35 : vector<256x4xf32> to vector<256x4xbf16>
    %37 = vector.extract_strided_slice %21 {offsets = [8, 0], sizes = [4, 128], strides = [1, 1]} : vector<12x128xbf16> to vector<4x128xbf16>
    %cst_36 = arith.constant dense<0.000000e+00> : vector<256x128xf32>
    %38 = tpu.matmul %36, %37, %cst_36 {dimension_numbers = #tpu.dot_dimension_numbers<[1], [0], [0], [1], [0, 0, 1, 1], [], []>} : vector<256x4xbf16>, vector<4x128xbf16>, vector<256x128xf32> -> vector<256x128xf32>
    %39 = arith.addf %33, %38 : vector<256x128xf32>
    %c1_37 = arith.constant 1 : index
    %c0_38 = arith.constant 0 : index
    %c0_39 = arith.constant 0 : index
    %40 = vector.load %arg4[%c1_37, %c0_38, %c0_39] : memref<3x12x128xbf16, #tpu.memory_space<vmem>>, vector<1x12x128xbf16>
    %41 = vector.shape_cast %40 : vector<1x12x128xbf16> to vector<12x128xbf16>
    %c1_40 = arith.constant 1 : index
    %c0_41 = arith.constant 0 : index
    %c0_42 = arith.constant 0 : index
    %42 = vector.load %arg9[%c1_40, %c0_41, %c0_42] : memref<18x18x4xf32, #tpu.memory_space<vmem>>, vector<16x16x4xf32>
    %43 = vector.shape_cast %42 : vector<16x16x4xf32> to vector<256x4xf32>
    %44 = arith.truncf %43 : vector<256x4xf32> to vector<256x4xbf16>
    %45 = vector.extract_strided_slice %41 {offsets = [0, 0], sizes = [4, 128], strides = [1, 1]} : vector<12x128xbf16> to vector<4x128xbf16>
    %cst_43 = arith.constant dense<0.000000e+00> : vector<256x128xf32>
    %46 = tpu.matmul %44, %45, %cst_43 {dimension_numbers = #tpu.dot_dimension_numbers<[1], [0], [0], [1], [0, 0, 1, 1], [], []>} : vector<256x4xbf16>, vector<4x128xbf16>, vector<256x128xf32> -> vector<256x128xf32>
    %47 = arith.addf %39, %46 : vector<256x128xf32>
    %c1_44 = arith.constant 1 : index
    %c1_45 = arith.constant 1 : index
    %c0_46 = arith.constant 0 : index
    %48 = vector.load %arg9[%c1_44, %c1_45, %c0_46] : memref<18x18x4xf32, #tpu.memory_space<vmem>>, vector<16x16x4xf32>
    %49 = vector.shape_cast %48 : vector<16x16x4xf32> to vector<256x4xf32>
    %50 = arith.truncf %49 : vector<256x4xf32> to vector<256x4xbf16>
    %51 = vector.extract_strided_slice %41 {offsets = [4, 0], sizes = [4, 128], strides = [1, 1]} : vector<12x128xbf16> to vector<4x128xbf16>
    %cst_47 = arith.constant dense<0.000000e+00> : vector<256x128xf32>
    %52 = tpu.matmul %50, %51, %cst_47 {dimension_numbers = #tpu.dot_dimension_numbers<[1], [0], [0], [1], [0, 0, 1, 1], [], []>} : vector<256x4xbf16>, vector<4x128xbf16>, vector<256x128xf32> -> vector<256x128xf32>
    %53 = arith.addf %47, %52 : vector<256x128xf32>
    %c1_48 = arith.constant 1 : index
    %c2_49 = arith.constant 2 : index
    %c0_50 = arith.constant 0 : index
    %54 = vector.load %arg9[%c1_48, %c2_49, %c0_50] : memref<18x18x4xf32, #tpu.memory_space<vmem>>, vector<16x16x4xf32>
    %55 = vector.shape_cast %54 : vector<16x16x4xf32> to vector<256x4xf32>
    %56 = arith.truncf %55 : vector<256x4xf32> to vector<256x4xbf16>
    %57 = vector.extract_strided_slice %41 {offsets = [8, 0], sizes = [4, 128], strides = [1, 1]} : vector<12x128xbf16> to vector<4x128xbf16>
    %cst_51 = arith.constant dense<0.000000e+00> : vector<256x128xf32>
    %58 = tpu.matmul %56, %57, %cst_51 {dimension_numbers = #tpu.dot_dimension_numbers<[1], [0], [0], [1], [0, 0, 1, 1], [], []>} : vector<256x4xbf16>, vector<4x128xbf16>, vector<256x128xf32> -> vector<256x128xf32>
    %59 = arith.addf %53, %58 : vector<256x128xf32>
    %c2_52 = arith.constant 2 : index
    %c0_53 = arith.constant 0 : index
    %c0_54 = arith.constant 0 : index
    %60 = vector.load %arg4[%c2_52, %c0_53, %c0_54] : memref<3x12x128xbf16, #tpu.memory_space<vmem>>, vector<1x12x128xbf16>
    %61 = vector.shape_cast %60 : vector<1x12x128xbf16> to vector<12x128xbf16>
    %c2_55 = arith.constant 2 : index
    %c0_56 = arith.constant 0 : index
    %c0_57 = arith.constant 0 : index
    %62 = vector.load %arg9[%c2_55, %c0_56, %c0_57] : memref<18x18x4xf32, #tpu.memory_space<vmem>>, vector<16x16x4xf32>
    %63 = vector.shape_cast %62 : vector<16x16x4xf32> to vector<256x4xf32>
    %64 = arith.truncf %63 : vector<256x4xf32> to vector<256x4xbf16>
    %65 = vector.extract_strided_slice %61 {offsets = [0, 0], sizes = [4, 128], strides = [1, 1]} : vector<12x128xbf16> to vector<4x128xbf16>
    %cst_58 = arith.constant dense<0.000000e+00> : vector<256x128xf32>
    %66 = tpu.matmul %64, %65, %cst_58 {dimension_numbers = #tpu.dot_dimension_numbers<[1], [0], [0], [1], [0, 0, 1, 1], [], []>} : vector<256x4xbf16>, vector<4x128xbf16>, vector<256x128xf32> -> vector<256x128xf32>
    %67 = arith.addf %59, %66 : vector<256x128xf32>
    %c2_59 = arith.constant 2 : index
    %c1_60 = arith.constant 1 : index
    %c0_61 = arith.constant 0 : index
    %68 = vector.load %arg9[%c2_59, %c1_60, %c0_61] : memref<18x18x4xf32, #tpu.memory_space<vmem>>, vector<16x16x4xf32>
    %69 = vector.shape_cast %68 : vector<16x16x4xf32> to vector<256x4xf32>
    %70 = arith.truncf %69 : vector<256x4xf32> to vector<256x4xbf16>
    %71 = vector.extract_strided_slice %61 {offsets = [4, 0], sizes = [4, 128], strides = [1, 1]} : vector<12x128xbf16> to vector<4x128xbf16>
    %cst_62 = arith.constant dense<0.000000e+00> : vector<256x128xf32>
    %72 = tpu.matmul %70, %71, %cst_62 {dimension_numbers = #tpu.dot_dimension_numbers<[1], [0], [0], [1], [0, 0, 1, 1], [], []>} : vector<256x4xbf16>, vector<4x128xbf16>, vector<256x128xf32> -> vector<256x128xf32>
    %73 = arith.addf %67, %72 : vector<256x128xf32>
    %c2_63 = arith.constant 2 : index
    %c2_64 = arith.constant 2 : index
    %c0_65 = arith.constant 0 : index
    %74 = vector.load %arg9[%c2_63, %c2_64, %c0_65] : memref<18x18x4xf32, #tpu.memory_space<vmem>>, vector<16x16x4xf32>
    %75 = vector.shape_cast %74 : vector<16x16x4xf32> to vector<256x4xf32>
    %76 = arith.truncf %75 : vector<256x4xf32> to vector<256x4xbf16>
    %77 = vector.extract_strided_slice %61 {offsets = [8, 0], sizes = [4, 128], strides = [1, 1]} : vector<12x128xbf16> to vector<4x128xbf16>
    %cst_66 = arith.constant dense<0.000000e+00> : vector<256x128xf32>
    %78 = tpu.matmul %76, %77, %cst_66 {dimension_numbers = #tpu.dot_dimension_numbers<[1], [0], [0], [1], [0, 0, 1, 1], [], []>} : vector<256x4xbf16>, vector<4x128xbf16>, vector<256x128xf32> -> vector<256x128xf32>
    %79 = arith.addf %73, %78 : vector<256x128xf32>
    %c0_67 = arith.constant 0 : index
    %c0_68 = arith.constant 0 : index
    %80 = vector.load %arg5[%c0_67, %c0_68] : memref<1x128xf32, #tpu.memory_space<vmem>>, vector<1x128xf32>
    %81 = vector.broadcast %80 : vector<1x128xf32> to vector<256x128xf32>
    %82 = arith.addf %79, %81 : vector<256x128xf32>
    %cst_69 = arith.constant dense<0.000000e+00> : vector<128xf32>
    %83 = vector.multi_reduction <add>, %82, %cst_69 [0] : vector<256x128xf32> to vector<128xf32>
    %84 = vector.shape_cast %83 : vector<128xf32> to vector<1x128xf32>
    %cst_70 = arith.constant 2.560000e+02 : f32
    %85 = vector.broadcast %cst_70 : f32 to vector<1x128xf32>
    %86 = arith.divf %84, %85 : vector<1x128xf32>
    %87 = vector.broadcast %86 : vector<1x128xf32> to vector<256x128xf32>
    %88 = arith.subf %82, %87 : vector<256x128xf32>
    %89 = arith.mulf %88, %88 : vector<256x128xf32>
    %cst_71 = arith.constant dense<0.000000e+00> : vector<128xf32>
    %90 = vector.multi_reduction <add>, %89, %cst_71 [0] : vector<256x128xf32> to vector<128xf32>
    %91 = vector.shape_cast %90 : vector<128xf32> to vector<1x128xf32>
    %92 = vector.shape_cast %86 : vector<1x128xf32> to vector<1x128xf32>
    %93 = vector.broadcast %92 : vector<1x128xf32> to vector<8x128xf32>
    %c0_72 = arith.constant 0 : index
    %c0_73 = arith.constant 0 : index
    %c0_74 = arith.constant 0 : index
    %94 = vector.load %arg7[%c0_72, %c0_73, %c0_74] : memref<1x8x128xf32, #tpu.memory_space<vmem>>, vector<1x8x128xf32>
    %95 = vector.shape_cast %94 : vector<1x8x128xf32> to vector<8x128xf32>
    %96 = vector.shape_cast %93 : vector<8x128xf32> to vector<1x8x128xf32>
    tpu.vector_store %arg7[%c0_72, %c0_73, %c0_74], %96 {strides = array<i32>} : memref<1x8x128xf32, #tpu.memory_space<vmem>>, vector<1x8x128xf32>,
    %97 = vector.shape_cast %91 : vector<1x128xf32> to vector<1x128xf32>
    %98 = vector.broadcast %97 : vector<1x128xf32> to vector<8x128xf32>
    %c0_75 = arith.constant 0 : index
    %c0_76 = arith.constant 0 : index
    %c0_77 = arith.constant 0 : index
    %99 = vector.load %arg8[%c0_75, %c0_76, %c0_77] : memref<1x8x128xf32, #tpu.memory_space<vmem>>, vector<1x8x128xf32>
    %100 = vector.shape_cast %99 : vector<1x8x128xf32> to vector<8x128xf32>
    %101 = vector.shape_cast %98 : vector<8x128xf32> to vector<1x8x128xf32>
    tpu.vector_store %arg8[%c0_75, %c0_76, %c0_77], %101 {strides = array<i32>} : memref<1x8x128xf32, #tpu.memory_space<vmem>>, vector<1x8x128xf32>,
    %102 = arith.truncf %82 : vector<256x128xf32> to vector<256x128xbf16>
    %c0_78 = arith.constant 0 : index
    %c0_79 = arith.constant 0 : index
    %c0_80 = arith.constant 0 : index
    %103 = vector.load %arg6[%c0_78, %c0_79, %c0_80] : memref<1x256x128xbf16, #tpu.memory_space<vmem>>, vector<1x256x128xbf16>
    %104 = vector.shape_cast %103 : vector<1x256x128xbf16> to vector<256x128xbf16>
    %105 = vector.shape_cast %102 : vector<256x128xbf16> to vector<1x256x128xbf16>
    tpu.vector_store %arg6[%c0_78, %c0_79, %c0_80], %105 {strides = array<i32>} : memref<1x256x128xbf16, #tpu.memory_space<vmem>>, vector<1x256x128xbf16>,
    return
  }
  func.func @transform_0(%arg0: i32) -> (i32, i32, i32, i32) {
    %c0_i32 = arith.constant 0 : i32
    %c0_i32_0 = arith.constant 0 : i32
    %c0_i32_1 = arith.constant 0 : i32
    %c0_i32_2 = arith.constant 0 : i32
    return %arg0, %c0_i32, %c0_i32_0, %c0_i32_1 : i32, i32, i32, i32
  }
  func.func @transform_1(%arg0: i32) -> (i32, i32) {
    %c0_i32 = arith.constant 0 : i32
    %c0_i32_0 = arith.constant 0 : i32
    %c0_i32_1 = arith.constant 0 : i32
    return %c0_i32, %c0_i32_0 : i32, i32
  }
  func.func @transform_2(%arg0: i32) -> (i32, i32) {
    %c0_i32 = arith.constant 0 : i32
    %c0_i32_0 = arith.constant 0 : i32
    %c0_i32_1 = arith.constant 0 : i32
    return %c0_i32, %c0_i32_0 : i32, i32
  }
  func.func @transform_3(%arg0: i32) -> (i32, i32, i32) {
    %c0_i32 = arith.constant 0 : i32
    %c0_i32_0 = arith.constant 0 : i32
    %c0_i32_1 = arith.constant 0 : i32
    %c0_i32_2 = arith.constant 0 : i32
    return %c0_i32, %c0_i32_0, %c0_i32_1 : i32, i32, i32
  }
  func.func @transform_4(%arg0: i32) -> (i32, i32) {
    %c0_i32 = arith.constant 0 : i32
    %c0_i32_0 = arith.constant 0 : i32
    %c0_i32_1 = arith.constant 0 : i32
    return %c0_i32, %c0_i32_0 : i32, i32
  }
  func.func @transform_5(%arg0: i32) -> (i32, i32, i32) {
    %c0_i32 = arith.constant 0 : i32
    %c0_i32_0 = arith.constant 0 : i32
    %c0_i32_1 = arith.constant 0 : i32
    return %arg0, %c0_i32, %c0_i32_0 : i32, i32, i32
  }
  func.func @transform_6(%arg0: i32) -> (i32, i32, i32) {
    %c0_i32 = arith.constant 0 : i32
    %c0_i32_0 = arith.constant 0 : i32
    %c0_i32_1 = arith.constant 0 : i32
    return %arg0, %c0_i32, %c0_i32_0 : i32, i32, i32
  }
  func.func @transform_7(%arg0: i32) -> (i32, i32, i32) {
    %c0_i32 = arith.constant 0 : i32
    %c0_i32_0 = arith.constant 0 : i32
    %c0_i32_1 = arith.constant 0 : i32
    return %arg0, %c0_i32, %c0_i32_0 : i32, i32, i32
  }
}

module attributes {stable_mosaic.version = 11 : i64} {
  func.func @_bn2_conv2_kernel(%arg0: i32, %arg1: memref<1x256x128xbf16, #tpu.memory_space<vmem>>, %arg2: memref<1x256x128xbf16, #tpu.memory_space<vmem>>, %arg3: memref<1x128xf32, #tpu.memory_space<vmem>>, %arg4: memref<1x128xf32, #tpu.memory_space<vmem>>, %arg5: memref<3x384x128xbf16, #tpu.memory_space<vmem>>, %arg6: memref<1x128xf32, #tpu.memory_space<vmem>>, %arg7: memref<1x256x128xf32, #tpu.memory_space<vmem>>, %arg8: memref<18x18x128xf32, #tpu.memory_space<vmem>>) attributes {dimension_semantics = [#tpu.dimension_semantics<parallel>], iteration_bounds = array<i64: 2>, scalar_prefetch = 0 : i64, scratch_operands = 1 : i64, tpu.core_type = #tpu.core_type<tc>, window_params = [{transform_indices = @transform_0, window_bounds = array<i64: 1, 256, 128>}, {transform_indices = @transform_1, window_bounds = array<i64: 1, 256, 128>}, {pipeline_mode = #tpu.pipeline_mode<synchronous>, transform_indices = @transform_2, window_bounds = array<i64: 1, 128>}, {pipeline_mode = #tpu.pipeline_mode<synchronous>, transform_indices = @transform_3, window_bounds = array<i64: 1, 128>}, {pipeline_mode = #tpu.pipeline_mode<synchronous>, transform_indices = @transform_4, window_bounds = array<i64: 3, 384, 128>}, {pipeline_mode = #tpu.pipeline_mode<synchronous>, transform_indices = @transform_5, window_bounds = array<i64: 1, 128>}, {transform_indices = @transform_6, window_bounds = array<i64: 1, 256, 128>}]} {
    %c0 = arith.constant 0 : index
    %c0_0 = arith.constant 0 : index
    %c0_1 = arith.constant 0 : index
    %0 = vector.load %arg1[%c0, %c0_0, %c0_1] : memref<1x256x128xbf16, #tpu.memory_space<vmem>>, vector<1x256x128xbf16>
    %1 = vector.shape_cast %0 : vector<1x256x128xbf16> to vector<256x128xbf16>
    %2 = arith.extf %1 : vector<256x128xbf16> to vector<256x128xf32>
    %c0_2 = arith.constant 0 : index
    %c0_3 = arith.constant 0 : index
    %3 = vector.load %arg3[%c0_2, %c0_3] : memref<1x128xf32, #tpu.memory_space<vmem>>, vector<1x128xf32>
    %4 = vector.broadcast %3 : vector<1x128xf32> to vector<256x128xf32>
    %5 = arith.mulf %2, %4 : vector<256x128xf32>
    %c0_4 = arith.constant 0 : index
    %c0_5 = arith.constant 0 : index
    %6 = vector.load %arg4[%c0_4, %c0_5] : memref<1x128xf32, #tpu.memory_space<vmem>>, vector<1x128xf32>
    %7 = vector.broadcast %6 : vector<1x128xf32> to vector<256x128xf32>
    %8 = arith.addf %5, %7 : vector<256x128xf32>
    %cst = arith.constant 0.000000e+00 : f32
    %9 = vector.broadcast %cst : f32 to vector<256x128xf32>
    %10 = arith.maximumf %8, %9 : vector<256x128xf32>
    %11 = vector.shape_cast %10 : vector<256x128xf32> to vector<16x16x128xf32>
    %cst_6 = arith.constant 0.000000e+00 : f32
    %12 = vector.broadcast %cst_6 : f32 to vector<1x18x128xf32>
    %cst_7 = arith.constant 0.000000e+00 : f32
    %13 = vector.broadcast %cst_7 : f32 to vector<18x1x128xf32>
    %c0_8 = arith.constant 0 : index
    %c0_9 = arith.constant 0 : index
    %c0_10 = arith.constant 0 : index
    %14 = vector.load %arg8[%c0_8, %c0_9, %c0_10] : memref<18x18x128xf32, #tpu.memory_space<vmem>>, vector<1x18x128xf32>
    tpu.vector_store %arg8[%c0_8, %c0_9, %c0_10], %12 {strides = array<i32>} : memref<18x18x128xf32, #tpu.memory_space<vmem>>, vector<1x18x128xf32>,
    %c17 = arith.constant 17 : index
    %c0_11 = arith.constant 0 : index
    %c0_12 = arith.constant 0 : index
    %15 = vector.load %arg8[%c17, %c0_11, %c0_12] : memref<18x18x128xf32, #tpu.memory_space<vmem>>, vector<1x18x128xf32>
    tpu.vector_store %arg8[%c17, %c0_11, %c0_12], %12 {strides = array<i32>} : memref<18x18x128xf32, #tpu.memory_space<vmem>>, vector<1x18x128xf32>,
    %c0_13 = arith.constant 0 : index
    %c0_14 = arith.constant 0 : index
    %c0_15 = arith.constant 0 : index
    %16 = vector.load %arg8[%c0_13, %c0_14, %c0_15] : memref<18x18x128xf32, #tpu.memory_space<vmem>>, vector<18x1x128xf32>
    tpu.vector_store %arg8[%c0_13, %c0_14, %c0_15], %13 {strides = array<i32>} : memref<18x18x128xf32, #tpu.memory_space<vmem>>, vector<18x1x128xf32>,
    %c0_16 = arith.constant 0 : index
    %c17_17 = arith.constant 17 : index
    %c0_18 = arith.constant 0 : index
    %17 = vector.load %arg8[%c0_16, %c17_17, %c0_18] : memref<18x18x128xf32, #tpu.memory_space<vmem>>, vector<18x1x128xf32>
    tpu.vector_store %arg8[%c0_16, %c17_17, %c0_18], %13 {strides = array<i32>} : memref<18x18x128xf32, #tpu.memory_space<vmem>>, vector<18x1x128xf32>,
    %c1 = arith.constant 1 : index
    %c1_19 = arith.constant 1 : index
    %c0_20 = arith.constant 0 : index
    %18 = vector.load %arg8[%c1, %c1_19, %c0_20] : memref<18x18x128xf32, #tpu.memory_space<vmem>>, vector<16x16x128xf32>
    tpu.vector_store %arg8[%c1, %c1_19, %c0_20], %11 {strides = array<i32>} : memref<18x18x128xf32, #tpu.memory_space<vmem>>, vector<16x16x128xf32>,
    %cst_21 = arith.constant 0.000000e+00 : f32
    %19 = vector.broadcast %cst_21 : f32 to vector<256x128xf32>
    %c0_22 = arith.constant 0 : index
    %c0_23 = arith.constant 0 : index
    %c0_24 = arith.constant 0 : index
    %20 = vector.load %arg8[%c0_22, %c0_23, %c0_24] : memref<18x18x128xf32, #tpu.memory_space<vmem>>, vector<16x16x128xf32>
    %21 = vector.shape_cast %20 : vector<16x16x128xf32> to vector<256x128xf32>
    %c0_25 = arith.constant 0 : index
    %c1_26 = arith.constant 1 : index
    %c0_27 = arith.constant 0 : index
    %22 = vector.load %arg8[%c0_25, %c1_26, %c0_27] : memref<18x18x128xf32, #tpu.memory_space<vmem>>, vector<16x16x128xf32>
    %23 = vector.shape_cast %22 : vector<16x16x128xf32> to vector<256x128xf32>
    %c0_28 = arith.constant 0 : index
    %c2 = arith.constant 2 : index
    %c0_29 = arith.constant 0 : index
    %24 = vector.load %arg8[%c0_28, %c2, %c0_29] : memref<18x18x128xf32, #tpu.memory_space<vmem>>, vector<16x16x128xf32>
    %25 = vector.shape_cast %24 : vector<16x16x128xf32> to vector<256x128xf32>
    %26 = tpu.concatenate %21, %23, %25 in 1 : vector<256x128xf32>, vector<256x128xf32>, vector<256x128xf32> -> vector<256x384xf32>
    %27 = arith.truncf %26 : vector<256x384xf32> to vector<256x384xbf16>
    %c0_30 = arith.constant 0 : index
    %c0_31 = arith.constant 0 : index
    %c0_32 = arith.constant 0 : index
    %28 = vector.load %arg5[%c0_30, %c0_31, %c0_32] : memref<3x384x128xbf16, #tpu.memory_space<vmem>>, vector<1x384x128xbf16>
    %29 = vector.shape_cast %28 : vector<1x384x128xbf16> to vector<384x128xbf16>
    %cst_33 = arith.constant dense<0.000000e+00> : vector<256x128xf32>
    %30 = tpu.matmul %27, %29, %cst_33 {dimension_numbers = #tpu.dot_dimension_numbers<[1], [0], [0], [1], [0, 0, 1, 1], [], []>} : vector<256x384xbf16>, vector<384x128xbf16>, vector<256x128xf32> -> vector<256x128xf32>
    %31 = arith.addf %19, %30 : vector<256x128xf32>
    %c1_34 = arith.constant 1 : index
    %c0_35 = arith.constant 0 : index
    %c0_36 = arith.constant 0 : index
    %32 = vector.load %arg8[%c1_34, %c0_35, %c0_36] : memref<18x18x128xf32, #tpu.memory_space<vmem>>, vector<16x16x128xf32>
    %33 = vector.shape_cast %32 : vector<16x16x128xf32> to vector<256x128xf32>
    %c1_37 = arith.constant 1 : index
    %c1_38 = arith.constant 1 : index
    %c0_39 = arith.constant 0 : index
    %34 = vector.load %arg8[%c1_37, %c1_38, %c0_39] : memref<18x18x128xf32, #tpu.memory_space<vmem>>, vector<16x16x128xf32>
    %35 = vector.shape_cast %34 : vector<16x16x128xf32> to vector<256x128xf32>
    %c1_40 = arith.constant 1 : index
    %c2_41 = arith.constant 2 : index
    %c0_42 = arith.constant 0 : index
    %36 = vector.load %arg8[%c1_40, %c2_41, %c0_42] : memref<18x18x128xf32, #tpu.memory_space<vmem>>, vector<16x16x128xf32>
    %37 = vector.shape_cast %36 : vector<16x16x128xf32> to vector<256x128xf32>
    %38 = tpu.concatenate %33, %35, %37 in 1 : vector<256x128xf32>, vector<256x128xf32>, vector<256x128xf32> -> vector<256x384xf32>
    %39 = arith.truncf %38 : vector<256x384xf32> to vector<256x384xbf16>
    %c1_43 = arith.constant 1 : index
    %c0_44 = arith.constant 0 : index
    %c0_45 = arith.constant 0 : index
    %40 = vector.load %arg5[%c1_43, %c0_44, %c0_45] : memref<3x384x128xbf16, #tpu.memory_space<vmem>>, vector<1x384x128xbf16>
    %41 = vector.shape_cast %40 : vector<1x384x128xbf16> to vector<384x128xbf16>
    %cst_46 = arith.constant dense<0.000000e+00> : vector<256x128xf32>
    %42 = tpu.matmul %39, %41, %cst_46 {dimension_numbers = #tpu.dot_dimension_numbers<[1], [0], [0], [1], [0, 0, 1, 1], [], []>} : vector<256x384xbf16>, vector<384x128xbf16>, vector<256x128xf32> -> vector<256x128xf32>
    %43 = arith.addf %31, %42 : vector<256x128xf32>
    %c2_47 = arith.constant 2 : index
    %c0_48 = arith.constant 0 : index
    %c0_49 = arith.constant 0 : index
    %44 = vector.load %arg8[%c2_47, %c0_48, %c0_49] : memref<18x18x128xf32, #tpu.memory_space<vmem>>, vector<16x16x128xf32>
    %45 = vector.shape_cast %44 : vector<16x16x128xf32> to vector<256x128xf32>
    %c2_50 = arith.constant 2 : index
    %c1_51 = arith.constant 1 : index
    %c0_52 = arith.constant 0 : index
    %46 = vector.load %arg8[%c2_50, %c1_51, %c0_52] : memref<18x18x128xf32, #tpu.memory_space<vmem>>, vector<16x16x128xf32>
    %47 = vector.shape_cast %46 : vector<16x16x128xf32> to vector<256x128xf32>
    %c2_53 = arith.constant 2 : index
    %c2_54 = arith.constant 2 : index
    %c0_55 = arith.constant 0 : index
    %48 = vector.load %arg8[%c2_53, %c2_54, %c0_55] : memref<18x18x128xf32, #tpu.memory_space<vmem>>, vector<16x16x128xf32>
    %49 = vector.shape_cast %48 : vector<16x16x128xf32> to vector<256x128xf32>
    %50 = tpu.concatenate %45, %47, %49 in 1 : vector<256x128xf32>, vector<256x128xf32>, vector<256x128xf32> -> vector<256x384xf32>
    %51 = arith.truncf %50 : vector<256x384xf32> to vector<256x384xbf16>
    %c2_56 = arith.constant 2 : index
    %c0_57 = arith.constant 0 : index
    %c0_58 = arith.constant 0 : index
    %52 = vector.load %arg5[%c2_56, %c0_57, %c0_58] : memref<3x384x128xbf16, #tpu.memory_space<vmem>>, vector<1x384x128xbf16>
    %53 = vector.shape_cast %52 : vector<1x384x128xbf16> to vector<384x128xbf16>
    %cst_59 = arith.constant dense<0.000000e+00> : vector<256x128xf32>
    %54 = tpu.matmul %51, %53, %cst_59 {dimension_numbers = #tpu.dot_dimension_numbers<[1], [0], [0], [1], [0, 0, 1, 1], [], []>} : vector<256x384xbf16>, vector<384x128xbf16>, vector<256x128xf32> -> vector<256x128xf32>
    %55 = arith.addf %43, %54 : vector<256x128xf32>
    %c0_60 = arith.constant 0 : index
    %c0_61 = arith.constant 0 : index
    %56 = vector.load %arg6[%c0_60, %c0_61] : memref<1x128xf32, #tpu.memory_space<vmem>>, vector<1x128xf32>
    %57 = vector.broadcast %56 : vector<1x128xf32> to vector<256x128xf32>
    %58 = arith.addf %55, %57 : vector<256x128xf32>
    %c0_62 = arith.constant 0 : index
    %c0_63 = arith.constant 0 : index
    %c0_64 = arith.constant 0 : index
    %59 = vector.load %arg2[%c0_62, %c0_63, %c0_64] : memref<1x256x128xbf16, #tpu.memory_space<vmem>>, vector<1x256x128xbf16>
    %60 = vector.shape_cast %59 : vector<1x256x128xbf16> to vector<256x128xbf16>
    %61 = arith.extf %60 : vector<256x128xbf16> to vector<256x128xf32>
    %62 = arith.addf %58, %61 : vector<256x128xf32>
    %c0_65 = arith.constant 0 : index
    %c0_66 = arith.constant 0 : index
    %c0_67 = arith.constant 0 : index
    %63 = vector.load %arg7[%c0_65, %c0_66, %c0_67] : memref<1x256x128xf32, #tpu.memory_space<vmem>>, vector<1x256x128xf32>
    %64 = vector.shape_cast %63 : vector<1x256x128xf32> to vector<256x128xf32>
    %65 = vector.shape_cast %62 : vector<256x128xf32> to vector<1x256x128xf32>
    tpu.vector_store %arg7[%c0_65, %c0_66, %c0_67], %65 {strides = array<i32>} : memref<1x256x128xf32, #tpu.memory_space<vmem>>, vector<1x256x128xf32>,
    return
  }
  func.func @transform_0(%arg0: i32) -> (i32, i32, i32) {
    %c0_i32 = arith.constant 0 : i32
    %c0_i32_0 = arith.constant 0 : i32
    %c0_i32_1 = arith.constant 0 : i32
    return %arg0, %c0_i32, %c0_i32_0 : i32, i32, i32
  }
  func.func @transform_1(%arg0: i32) -> (i32, i32, i32) {
    %c0_i32 = arith.constant 0 : i32
    %c0_i32_0 = arith.constant 0 : i32
    %c0_i32_1 = arith.constant 0 : i32
    return %arg0, %c0_i32, %c0_i32_0 : i32, i32, i32
  }
  func.func @transform_2(%arg0: i32) -> (i32, i32) {
    %c0_i32 = arith.constant 0 : i32
    %c0_i32_0 = arith.constant 0 : i32
    %c0_i32_1 = arith.constant 0 : i32
    return %c0_i32, %c0_i32_0 : i32, i32
  }
  func.func @transform_3(%arg0: i32) -> (i32, i32) {
    %c0_i32 = arith.constant 0 : i32
    %c0_i32_0 = arith.constant 0 : i32
    %c0_i32_1 = arith.constant 0 : i32
    return %c0_i32, %c0_i32_0 : i32, i32
  }
  func.func @transform_4(%arg0: i32) -> (i32, i32, i32) {
    %c0_i32 = arith.constant 0 : i32
    %c0_i32_0 = arith.constant 0 : i32
    %c0_i32_1 = arith.constant 0 : i32
    %c0_i32_2 = arith.constant 0 : i32
    return %c0_i32, %c0_i32_0, %c0_i32_1 : i32, i32, i32
  }
  func.func @transform_5(%arg0: i32) -> (i32, i32) {
    %c0_i32 = arith.constant 0 : i32
    %c0_i32_0 = arith.constant 0 : i32
    %c0_i32_1 = arith.constant 0 : i32
    return %c0_i32, %c0_i32_0 : i32, i32
  }
  func.func @transform_6(%arg0: i32) -> (i32, i32, i32) {
    %c0_i32 = arith.constant 0 : i32
    %c0_i32_0 = arith.constant 0 : i32
    %c0_i32_1 = arith.constant 0 : i32
    return %arg0, %c0_i32, %c0_i32_0 : i32, i32, i32
  }
}

</mosaic_0001>

<llo_original>
// kernel: resu_block_forward.3
$region0: #{resu_block_forward.3}
  #allocation0 [shape = 'u32[]', space=smem, size = 0x4, offset = 0x4, fixed_abs, tag = 'smem constant byte address 0x4 - core index']
  #allocation1 [shape = 'u32[144,128]{1,0:T(1,128)}', space=vmem, size = 0x12000, scoped, tag = 'internal scratch']
  %s0 = inlined_call_operand.vmem [shape: f32[2,16,16,4], index: 0, kind: input, shape index: {}]
  %s1 = inlined_call_operand.vmem [shape: bf16[4,128], index: 1, kind: input, shape index: {}]
  %s2 = inlined_call_operand.vmem [shape: f32[1,128], index: 2, kind: input, shape index: {}]
  %s3 = inlined_call_operand.vmem [shape: bf16[2,256,128], index: 3, kind: output, shape index: {0}]
  %s4 = inlined_call_operand.vmem [shape: f32[2,8,4], index: 4, kind: output, shape index: {1}]
  %s5 = inlined_call_operand.vmem [shape: f32[2,8,4], index: 5, kind: output, shape index: {2}]
  %6 = xla_tuple %s3, %s4, %s5
  %s7 = sld [smem:[#allocation0]]
  $region61: #{resu_block_forward.3} parent=0
    _
  %s9 = ssub.s32 1, %s7
  %s10 = scalar_select 0, %s9, %s7
  loop: start=0, step=1, limit=4
  $region2: #{resu_block_forward.3} parent=0 // loop_pre_header
    _
  $region3: #{resu_block_forward.3} parent=0 // loop_header
    %s12 = sphi 0, %s16
    %p13 = scmp.ge.s32.totalorder %s12, 4
    %s22 = sphi 0, %s24
    %s25 = sphi 0, %s22
    %s26 = sphi 0, %s25
    %s42 = sphi 0, %s26
    %s46 = sphi 0, %s46
    %s48 = sphi 0, %s46
    %s49 = sphi 0, %s48
    %s63 = sphi 0, %s49
    %s67 = sphi 0, %s67
    %s69 = sphi 0, %s67
    %s70 = sphi 0, %s69
    %s84 = sphi 0, %s70
    %s90 = sphi 0, %s92
    %s93 = sphi 0, %s90
    %s94 = sphi 0, %s93
    %s110 = sphi 0, %s94
    %s116 = sphi 0, %s118
    %s119 = sphi 0, %s116
    %s120 = sphi 0, %s119
    %s136 = sphi 0, %s120
    %s142 = sphi 0, %s144
    %s145 = sphi 0, %s142
    %s146 = sphi 0, %s145
    %s162 = sphi 0, %s146
  $region4: #{resu_block_forward.3} parent=0 // loop_header_branch
    %15 = sbr.rel (%p13) target = $region8
  $region5: #{resu_block_forward.3} parent=0 // loop_body
    %s17 = ssub.s32 %s12, 1
    %s18 = ssub.s32 %s12, 2
    %s19 = sadd.s32 %s12, 1
    %s20 = ssub.s32 %s12, %s19
    %p21 = scmp.eq.s32.totalorder %s20, 0
    %s23 = sadd.s32 %s22, 1
    %s24 = scalar_select %p21, %s22, %s23
    %p27 = pneg %p21
    %p28 = scmp.eq.s32.totalorder %s12, 1
    %p29 = por %p27, %p28
    %p30 = scmp.ne.s32.totalorder %s22, %s25
    %p31 = scmp.eq.s32.totalorder %s12, 0
    %p32 = por %p30, %p31
    %p33 = scmp.ne.s32.totalorder %s22, %s25
    %p34 = scmp.eq.s32.totalorder %s17, 1
    %p35 = por %p33, %p34
    %p36 = scmp.ne.s32.totalorder %s25, %s26
    %p37 = scmp.eq.s32.totalorder %s17, 0
    %p38 = por %p36, %p37
    %p39 = scmp.ne.s32.totalorder %s25, %s26
    %p40 = scmp.eq.s32.totalorder %s18, 1
    %p41 = por %p39, %p40
    %p43 = scmp.ne.s32.totalorder %s26, %s42
    %p44 = scmp.eq.s32.totalorder %s18, 0
    %p45 = por %p43, %p44
    %s47 = sadd.s32 %s46, 1
    %p50 = scmp.eq.s32.totalorder %s12, 1
    %p51 = scmp.ne.s32.totalorder %s46, %s48
    %p52 = scmp.eq.s32.totalorder %s12, 0
    %p53 = por %p51, %p52
    %p54 = scmp.ne.s32.totalorder %s46, %s48
    %p55 = scmp.eq.s32.totalorder %s17, 1
    %p56 = por %p54, %p55
    %p57 = scmp.ne.s32.totalorder %s48, %s49
    %p58 = scmp.eq.s32.totalorder %s17, 0
    %p59 = por %p57, %p58
    %p60 = scmp.ne.s32.totalorder %s48, %s49
    %p61 = scmp.eq.s32.totalorder %s18, 1
    %p62 = por %p60, %p61
    %p64 = scmp.ne.s32.totalorder %s49, %s63
    %p65 = scmp.eq.s32.totalorder %s18, 0
    %p66 = por %p64, %p65
    %s68 = sadd.s32 %s67, 1
    %p71 = scmp.eq.s32.totalorder %s12, 1
    %p72 = scmp.ne.s32.totalorder %s67, %s69
    %p73 = scmp.eq.s32.totalorder %s12, 0
    %p74 = por %p72, %p73
    %p75 = scmp.ne.s32.totalorder %s67, %s69
    %p76 = scmp.eq.s32.totalorder %s17, 1
    %p77 = por %p75, %p76
    %p78 = scmp.ne.s32.totalorder %s69, %s70
    %p79 = scmp.eq.s32.totalorder %s17, 0
    %p80 = por %p78, %p79
    %p81 = scmp.ne.s32.totalorder %s69, %s70
    %p82 = scmp.eq.s32.totalorder %s18, 1
    %p83 = por %p81, %p82
    %p85 = scmp.ne.s32.totalorder %s70, %s84
    %p86 = scmp.eq.s32.totalorder %s18, 0
    %p87 = por %p85, %p86
    %s88 = ssub.s32 %s12, %s19
    %p89 = scmp.eq.s32.totalorder %s88, 0
    %s91 = sadd.s32 %s90, 1
    %s92 = scalar_select %p89, %s90, %s91
    %p95 = pneg %p89
    %p96 = scmp.eq.s32.totalorder %s12, 1
    %p97 = por %p95, %p96
    %p98 = scmp.ne.s32.totalorder %s90, %s93
    %p99 = scmp.eq.s32.totalorder %s12, 0
    %p100 = por %p98, %p99
    %p101 = scmp.ne.s32.totalorder %s90, %s93
    %p102 = scmp.eq.s32.totalorder %s17, 1
    %p103 = por %p101, %p102
    %p104 = scmp.ne.s32.totalorder %s93, %s94
    %p105 = scmp.eq.s32.totalorder %s17, 0
    %p106 = por %p104, %p105
    %p107 = scmp.ne.s32.totalorder %s93, %s94
    %p108 = scmp.eq.s32.totalorder %s18, 1
    %p109 = por %p107, %p108
    %p111 = scmp.ne.s32.totalorder %s94, %s110
    %p112 = scmp.eq.s32.totalorder %s18, 0
    %p113 = por %p111, %p112
    %s114 = ssub.s32 %s12, %s19
    %p115 = scmp.eq.s32.totalorder %s114, 0
    %s117 = sadd.s32 %s116, 1
    %s118 = scalar_select %p115, %s116, %s117
    %p121 = pneg %p115
    %p122 = scmp.eq.s32.totalorder %s12, 1
    %p123 = por %p121, %p122
    %p124 = scmp.ne.s32.totalorder %s116, %s119
    %p125 = scmp.eq.s32.totalorder %s12, 0
    %p126 = por %p124, %p125
    %p127 = scmp.ne.s32.totalorder %s116, %s119
    %p128 = scmp.eq.s32.totalorder %s17, 1
    %p129 = por %p127, %p128
    %p130 = scmp.ne.s32.totalorder %s119, %s120
    %p131 = scmp.eq.s32.totalorder %s17, 0
    %p132 = por %p130, %p131
    %p133 = scmp.ne.s32.totalorder %s119, %s120
    %p134 = scmp.eq.s32.totalorder %s18, 1
    %p135 = por %p133, %p134
    %p137 = scmp.ne.s32.totalorder %s120, %s136
    %p138 = scmp.eq.s32.totalorder %s18, 0
    %p139 = por %p137, %p138
    %s140 = ssub.s32 %s12, %s19
    %p141 = scmp.eq.s32.totalorder %s140, 0
    %s143 = sadd.s32 %s142, 1
    %s144 = scalar_select %p141, %s142, %s143
    %p147 = pneg %p141
    %p148 = scmp.eq.s32.totalorder %s12, 1
    %p149 = por %p147, %p148
    %p150 = scmp.ne.s32.totalorder %s142, %s145
    %p151 = scmp.eq.s32.totalorder %s12, 0
    %p152 = por %p150, %p151
    %p153 = scmp.ne.s32.totalorder %s142, %s145
    %p154 = scmp.eq.s32.totalorder %s17, 1
    %p155 = por %p153, %p154
    %p156 = scmp.ne.s32.totalorder %s145, %s146
    %p157 = scmp.eq.s32.totalorder %s17, 0
    %p158 = por %p156, %p157
    %p159 = scmp.ne.s32.totalorder %s145, %s146
    %p160 = scmp.eq.s32.totalorder %s18, 1
    %p161 = por %p159, %p160
    %p163 = scmp.ne.s32.totalorder %s146, %s162
    %p164 = scmp.eq.s32.totalorder %s18, 0
    %p165 = por %p163, %p164
    %p166 = scmp.le.s32.totalorder 1, %s12
    %p167 = scmp.lt.s32.totalorder %s12, 3
    %p168 = pnand %p166, %p167
    %p169 = pneg %p168
    // Predicated region
    $region9: #{resu_block_forward.3} parent=5 // pred_check
      _
    $region10: #{resu_block_forward.3} parent=5 // pred_check_branch
      %171 = sbr.rel (%p168) target = $region12
    $region11: #{resu_block_forward.3} parent=5 // pred_region
      %s172 = ssub.s32 %s12, 1
      // Predicated region
      $region13: #{resu_block_forward.3} parent=11 // pred_check
        %p173 = pneg %p59
      $region14: #{resu_block_forward.3} parent=11 // pred_check_branch
        %175 = sbr.rel (%p173) target = $region16
      $region15: #{resu_block_forward.3} parent=11 // pred_region
        _
      $region16: #{resu_block_forward.3} parent=11 // pred_fallthru
        _
      // Predicated region
      $region17: #{resu_block_forward.3} parent=11 // pred_check
        %p176 = pneg %p80
      $region18: #{resu_block_forward.3} parent=11 // pred_check_branch
        %178 = sbr.rel (%p176) target = $region20
      $region19: #{resu_block_forward.3} parent=11 // pred_region
        _
      $region20: #{resu_block_forward.3} parent=11 // pred_fallthru
        _
    $region12: #{resu_block_forward.3} parent=5 // pred_fallthru
      _
    %p179 = scmp.lt.s32.totalorder %s12, 2
    // Predicated region
    $region21: #{resu_block_forward.3} parent=5 // pred_check
      %p180 = pneg %p179
    $region22: #{resu_block_forward.3} parent=5 // pred_check_branch
      %182 = sbr.rel (%p180) target = $region24
    $region23: #{resu_block_forward.3} parent=5 // pred_region
      // Predicated region
      $region25: #{resu_block_forward.3} parent=23 // pred_check
        %p183 = pneg %p32
      $region26: #{resu_block_forward.3} parent=23 // pred_check_branch
        %185 = sbr.rel (%p183) target = $region28
      $region27: #{resu_block_forward.3} parent=23 // pred_region
        %p186 = scmp.lt.s32.totalorder %s12, 1
        %s187 = scalar_select %p186, %s12, 1
        %s188 = smul.addr %s187, 32
        %s189 = smul.addr %s188, 8
        %s190 = scalar_lea.vmem %s0, %s189
      $region28: #{resu_block_forward.3} parent=23 // pred_fallthru
        _
    $region24: #{resu_block_forward.3} parent=5 // pred_fallthru
      _
    %p191 = scmp.le.s32.totalorder 1, %s12
    %p192 = scmp.lt.s32.totalorder %s12, 3
    %p193 = pnand %p191, %p192
    %p194 = pneg %p193
    // Predicated region
    $region29: #{resu_block_forward.3} parent=5 // pred_check
      _
    $region30: #{resu_block_forward.3} parent=5 // pred_check_branch
      %196 = sbr.rel (%p193) target = $region32
    $region31: #{resu_block_forward.3} parent=5 // pred_region
      %s197 = ssub.s32 %s12, 1
      %p198 = scmp.lt.s32.totalorder %s17, 1
      %s199 = scalar_select %p198, %s17, 1
      %s200 = smul.addr %s199, 32
      %s201 = smul.addr %s200, 8
      %s202 = scalar_lea.vmem %s0, %s201
      %p203 = pneg %p38
      %p204 = pneg %p35
      %p205 = pneg %p59
      %p206 = pneg %p56
      %p207 = pneg %p80
      %p208 = pneg %p77
      %p209 = pneg %p106
      %p210 = pneg %p103
      %p211 = scmp.lt.s32.totalorder %s17, 1
      %s212 = scalar_select %p211, %s17, 1
      %s213 = smul.addr %s212, 32
      %s214 = smul.addr %s213, 4
      %s215 = scalar_lea.vmem %s3, %s214
      %p216 = pneg %p132
      %p217 = pneg %p129
      %p218 = scmp.lt.s32.totalorder %s17, 1
      %s219 = scalar_select %p218, %s17, 1
      %s220 = smul.addr %s219, 8
      %s221 = scalar_lea.vmem %s4, %s220
      %p222 = pneg %p158
      %p223 = pneg %p155
      %p224 = scmp.lt.s32.totalorder %s17, 1
      %s225 = scalar_select %p224, %s17, 1
      %s226 = smul.addr %s225, 8
      %s227 = scalar_lea.vmem %s5, %s226
      %p228 = scmp.lt.s32.totalorder %s17, 1
      %s229 = scalar_select %p228, %s17, 1
      %s230 = smul.addr %s229, 32
      %s231 = smul.addr %s230, 8
      %s232 = scalar_lea.vmem %s0, %s231
      %p233 = scmp.lt.s32.totalorder %s17, 1
      %s234 = scalar_select %p233, %s17, 1
      %s235 = smul.addr %s234, 32
      %s236 = smul.addr %s235, 4
      %s237 = scalar_lea.vmem %s3, %s236
      %p238 = scmp.lt.s32.totalorder %s17, 1
      %s239 = scalar_select %p238, %s17, 1
      %s240 = smul.addr %s239, 8
      %s241 = scalar_lea.vmem %s4, %s240
      %p242 = scmp.lt.s32.totalorder %s17, 1
      %s243 = scalar_select %p242, %s17, 1
      %s244 = smul.addr %s243, 8
      %s245 = scalar_lea.vmem %s5, %s244
      %v247 = vld [vmem:[%s232] sm:$0xff]
      %v248 = vld [vmem:[%s232 + $0x8] sm:$0xff]
      %v249 = vld [vmem:[%s232 + $0x10] sm:$0xff]
      %v250 = vld [vmem:[%s232 + $0x18] sm:$0xff]
      %v251 = vld [vmem:[%s232 + $0x20] sm:$0xff]
      %v252 = vld [vmem:[%s232 + $0x28] sm:$0xff]
      %v253 = vld [vmem:[%s232 + $0x30] sm:$0xff]
      %v254 = vld [vmem:[%s232 + $0x38] sm:$0xff]
      %v255 = vld [vmem:[%s232 + $0x40] sm:$0xff]
      %v256 = vld [vmem:[%s232 + $0x48] sm:$0xff]
      %v257 = vld [vmem:[%s232 + $0x50] sm:$0xff]
      %v258 = vld [vmem:[%s232 + $0x58] sm:$0xff]
      %v259 = vld [vmem:[%s232 + $0x60] sm:$0xff]
      %v260 = vld [vmem:[%s232 + $0x68] sm:$0xff]
      %v261 = vld [vmem:[%s232 + $0x70] sm:$0xff]
      %v262 = vld [vmem:[%s232 + $0x78] sm:$0xff]
      %v263 = vld [vmem:[%s232 + $0x80] sm:$0xff]
      %v264 = vld [vmem:[%s232 + $0x88] sm:$0xff]
      %v265 = vld [vmem:[%s232 + $0x90] sm:$0xff]
      %v266 = vld [vmem:[%s232 + $0x98] sm:$0xff]
      %v267 = vld [vmem:[%s232 + $0xa0] sm:$0xff]
      %v268 = vld [vmem:[%s232 + $0xa8] sm:$0xff]
      %v269 = vld [vmem:[%s232 + $0xb0] sm:$0xff]
      %v270 = vld [vmem:[%s232 + $0xb8] sm:$0xff]
      %v271 = vld [vmem:[%s232 + $0xc0] sm:$0xff]
      %v272 = vld [vmem:[%s232 + $0xc8] sm:$0xff]
      %v273 = vld [vmem:[%s232 + $0xd0] sm:$0xff]
      %v274 = vld [vmem:[%s232 + $0xd8] sm:$0xff]
      %v275 = vld [vmem:[%s232 + $0xe0] sm:$0xff]
      %v276 = vld [vmem:[%s232 + $0xe8] sm:$0xff]
      %v277 = vld [vmem:[%s232 + $0xf0] sm:$0xff]
      %v278 = vld [vmem:[%s232 + $0xf8] sm:$0xff]
      %vm279 = vcmask 31744
      %v280 = vsel %vm279, %v247, 0.0
      %v281 = vsel %vm279, %v248, 0.0
      %v282 = vadd.f32 %v280, %v281
      %v283 = vsel %vm279, %v249, 0.0
      %v284 = vadd.f32 %v282, %v283
      %v285 = vsel %vm279, %v250, 0.0
      %v286 = vadd.f32 %v284, %v285
      %v287 = vsel %vm279, %v251, 0.0
      %v288 = vadd.f32 %v286, %v287
      %v289 = vsel %vm279, %v252, 0.0
      %v290 = vadd.f32 %v288, %v289
      %v291 = vsel %vm279, %v253, 0.0
      %v292 = vadd.f32 %v290, %v291
      %v293 = vsel %vm279, %v254, 0.0
      %v294 = vadd.f32 %v292, %v293
      %v295 = vsel %vm279, %v255, 0.0
      %v296 = vadd.f32 %v294, %v295
      %v297 = vsel %vm279, %v256, 0.0
      %v298 = vadd.f32 %v296, %v297
      %v299 = vsel %vm279, %v257, 0.0
      %v300 = vadd.f32 %v298, %v299
      %v301 = vsel %vm279, %v258, 0.0
      %v302 = vadd.f32 %v300, %v301
      %v303 = vsel %vm279, %v259, 0.0
      %v304 = vadd.f32 %v302, %v303
      %v305 = vsel %vm279, %v260, 0.0
      %v306 = vadd.f32 %v304, %v305
      %v307 = vsel %vm279, %v261, 0.0
      %v308 = vadd.f32 %v306, %v307
      %v309 = vsel %vm279, %v262, 0.0
      %v310 = vadd.f32 %v308, %v309
      %v311 = vsel %vm279, %v263, 0.0
      %v312 = vadd.f32 %v310, %v311
      %v313 = vsel %vm279, %v264, 0.0
      %v314 = vadd.f32 %v312, %v313
      %v315 = vsel %vm279, %v265, 0.0
      %v316 = vadd.f32 %v314, %v315
      %v317 = vsel %vm279, %v266, 0.0
      %v318 = vadd.f32 %v316, %v317
      %v319 = vsel %vm279, %v267, 0.0
      %v320 = vadd.f32 %v318, %v319
      %v321 = vsel %vm279, %v268, 0.0
      %v322 = vadd.f32 %v320, %v321
      %v323 = vsel %vm279, %v269, 0.0
      %v324 = vadd.f32 %v322, %v323
      %v325 = vsel %vm279, %v270, 0.0
      %v326 = vadd.f32 %v324, %v325
      %v327 = vsel %vm279, %v271, 0.0
      %v328 = vadd.f32 %v326, %v327
      %v329 = vsel %vm279, %v272, 0.0
      %v330 = vadd.f32 %v328, %v329
      %v331 = vsel %vm279, %v273, 0.0
      %v332 = vadd.f32 %v330, %v331
      %v333 = vsel %vm279, %v274, 0.0
      %v334 = vadd.f32 %v332, %v333
      %v335 = vsel %vm279, %v275, 0.0
      %v336 = vadd.f32 %v334, %v335
      %v337 = vsel %vm279, %v276, 0.0
      %v338 = vadd.f32 %v336, %v337
      %v339 = vsel %vm279, %v277, 0.0
      %v340 = vadd.f32 %v338, %v339
      %v341 = vsel %vm279, %v278, 0.0
      %v342 = vadd.f32 %v340, %v341
      %v343 = vrot.slane %v342, 4
      %v344 = vadd.f32 %v342, %v343
      %v345 = vrot.slane %v344, 2
      %v346 = vadd.f32 %v344, %v345
      %v347 = vrot.slane %v346, 1
      %v348 = vadd.f32 %v346, %v347
      %v349 = vrcp.pop 256.0
      %v350 = vmul.f32 %v348, %v349
      %v351 = vsub.f32 %v247, %v350
      %v352 = vsub.f32 %v248, %v350
      %v353 = vsub.f32 %v249, %v350
      %v354 = vsub.f32 %v250, %v350
      %v355 = vsub.f32 %v251, %v350
      %v356 = vsub.f32 %v252, %v350
      %v357 = vsub.f32 %v253, %v350
      %v358 = vsub.f32 %v254, %v350
      %v359 = vsub.f32 %v255, %v350
      %v360 = vsub.f32 %v256, %v350
      %v361 = vsub.f32 %v257, %v350
      %v362 = vsub.f32 %v258, %v350
      %v363 = vsub.f32 %v259, %v350
      %v364 = vsub.f32 %v260, %v350
      %v365 = vsub.f32 %v261, %v350
      %v366 = vsub.f32 %v262, %v350
      %v367 = vsub.f32 %v263, %v350
      %v368 = vsub.f32 %v264, %v350
      %v369 = vsub.f32 %v265, %v350
      %v370 = vsub.f32 %v266, %v350
      %v371 = vsub.f32 %v267, %v350
      %v372 = vsub.f32 %v268, %v350
      %v373 = vsub.f32 %v269, %v350
      %v374 = vsub.f32 %v270, %v350
      %v375 = vsub.f32 %v271, %v350
      %v376 = vsub.f32 %v272, %v350
      %v377 = vsub.f32 %v273, %v350
      %v378 = vsub.f32 %v274, %v350
      %v379 = vsub.f32 %v275, %v350
      %v380 = vsub.f32 %v276, %v350
      %v381 = vsub.f32 %v277, %v350
      %v382 = vsub.f32 %v278, %v350
      %v383 = vmul.f32 %v351, %v351
      %v384 = vmul.f32 %v352, %v352
      %v385 = vmul.f32 %v353, %v353
      %v386 = vmul.f32 %v354, %v354
      %v387 = vmul.f32 %v355, %v355
      %v388 = vmul.f32 %v356, %v356
      %v389 = vmul.f32 %v357, %v357
      %v390 = vmul.f32 %v358, %v358
      %v391 = vmul.f32 %v359, %v359
      %v392 = vmul.f32 %v360, %v360
      %v393 = vmul.f32 %v361, %v361
      %v394 = vmul.f32 %v362, %v362
      %v395 = vmul.f32 %v363, %v363
      %v396 = vmul.f32 %v364, %v364
      %v397 = vmul.f32 %v365, %v365
      %v398 = vmul.f32 %v366, %v366
      %v399 = vmul.f32 %v367, %v367
      %v400 = vmul.f32 %v368, %v368
      %v401 = vmul.f32 %v369, %v369
      %v402 = vmul.f32 %v370, %v370
      %v403 = vmul.f32 %v371, %v371
      %v404 = vmul.f32 %v372, %v372
      %v405 = vmul.f32 %v373, %v373
      %v406 = vmul.f32 %v374, %v374
      %v407 = vmul.f32 %v375, %v375
      %v408 = vmul.f32 %v376, %v376
      %v409 = vmul.f32 %v377, %v377
      %v410 = vmul.f32 %v378, %v378
      %v411 = vmul.f32 %v379, %v379
      %v412 = vmul.f32 %v380, %v380
      %v413 = vmul.f32 %v381, %v381
      %v414 = vmul.f32 %v382, %v382
      %v415 = vsel %vm279, %v383, 0.0
      %v416 = vsel %vm279, %v384, 0.0
      %v417 = vadd.f32 %v415, %v416
      %v418 = vsel %vm279, %v385, 0.0
      %v419 = vadd.f32 %v417, %v418
      %v420 = vsel %vm279, %v386, 0.0
      %v421 = vadd.f32 %v419, %v420
      %v422 = vsel %vm279, %v387, 0.0
      %v423 = vadd.f32 %v421, %v422
      %v424 = vsel %vm279, %v388, 0.0
      %v425 = vadd.f32 %v423, %v424
      %v426 = vsel %vm279, %v389, 0.0
      %v427 = vadd.f32 %v425, %v426
      %v428 = vsel %vm279, %v390, 0.0
      %v429 = vadd.f32 %v427, %v428
      %v430 = vsel %vm279, %v391, 0.0
      %v431 = vadd.f32 %v429, %v430
      %v432 = vsel %vm279, %v392, 0.0
      %v433 = vadd.f32 %v431, %v432
      %v434 = vsel %vm279, %v393, 0.0
      %v435 = vadd.f32 %v433, %v434
      %v436 = vsel %vm279, %v394, 0.0
      %v437 = vadd.f32 %v435, %v436
      %v438 = vsel %vm279, %v395, 0.0
      %v439 = vadd.f32 %v437, %v438
      %v440 = vsel %vm279, %v396, 0.0
      %v441 = vadd.f32 %v439, %v440
      %v442 = vsel %vm279, %v397, 0.0
      %v443 = vadd.f32 %v441, %v442
      %v444 = vsel %vm279, %v398, 0.0
      %v445 = vadd.f32 %v443, %v444
      %v446 = vsel %vm279, %v399, 0.0
      %v447 = vadd.f32 %v445, %v446
      %v448 = vsel %vm279, %v400, 0.0
      %v449 = vadd.f32 %v447, %v448
      %v450 = vsel %vm279, %v401, 0.0
      %v451 = vadd.f32 %v449, %v450
      %v452 = vsel %vm279, %v402, 0.0
      %v453 = vadd.f32 %v451, %v452
      %v454 = vsel %vm279, %v403, 0.0
      %v455 = vadd.f32 %v453, %v454
      %v456 = vsel %vm279, %v404, 0.0
      %v457 = vadd.f32 %v455, %v456
      %v458 = vsel %vm279, %v405, 0.0
      %v459 = vadd.f32 %v457, %v458
      %v460 = vsel %vm279, %v406, 0.0
      %v461 = vadd.f32 %v459, %v460
      %v462 = vsel %vm279, %v407, 0.0
      %v463 = vadd.f32 %v461, %v462
      %v464 = vsel %vm279, %v408, 0.0
      %v465 = vadd.f32 %v463, %v464
      %v466 = vsel %vm279, %v409, 0.0
      %v467 = vadd.f32 %v465, %v466
      %v468 = vsel %vm279, %v410, 0.0
      %v469 = vadd.f32 %v467, %v468
      %v470 = vsel %vm279, %v411, 0.0
      %v471 = vadd.f32 %v469, %v470
      %v472 = vsel %vm279, %v412, 0.0
      %v473 = vadd.f32 %v471, %v472
      %v474 = vsel %vm279, %v413, 0.0
      %v475 = vadd.f32 %v473, %v474
      %v476 = vsel %vm279, %v414, 0.0
      %v477 = vadd.f32 %v475, %v476
      %v478 = vrot.slane %v477, 4
      %v479 = vadd.f32 %v477, %v478
      %v480 = vrot.slane %v479, 2
      %v481 = vadd.f32 %v479, %v480
      %v482 = vrot.slane %v481, 1
      %v483 = vadd.f32 %v481, %v482
      %484 = vst.msk [vmem:[%s241] sm:$0xff] %vm279, %v350
      %485 = vst.msk [vmem:[%s245] sm:$0xff] %vm279, %v483
      %v486 = vpack.c.bf16 %v248, %v247
      %v487 = vpack.c.bf16 %v250, %v249
      %v488 = vpack.c.bf16 %v252, %v251
      %v489 = vpack.c.bf16 %v254, %v253
      %v490 = vpack.c.bf16 %v256, %v255
      %v491 = vpack.c.bf16 %v258, %v257
      %v492 = vpack.c.bf16 %v260, %v259
      %v493 = vpack.c.bf16 %v262, %v261
      %v494 = vpack.c.bf16 %v264, %v263
      %v495 = vpack.c.bf16 %v266, %v265
      %v496 = vpack.c.bf16 %v268, %v267
      %v497 = vpack.c.bf16 %v270, %v269
      %v498 = vpack.c.bf16 %v272, %v271
      %v499 = vpack.c.bf16 %v274, %v273
      %v500 = vpack.c.bf16 %v276, %v275
      %v501 = vpack.c.bf16 %v278, %v277
      %v502 = vld [vmem:[%s1] sm:$0x3]
      %v503 = vld [vmem:[%s2] sm:$0x1]
      %v505 = vlaneseq
      %v506 = vshrl.u32 %v505, 7
      %v507 = vsub.s32 0, %v506
      %v508 = vrot.slane %v503, %v507
      %v511 = vsel %vm279, %v486, 0
      %v514 = vsel %vm279, %v487, 0
      %v517 = vsel %vm279, %v488, 0
      %v520 = vsel %vm279, %v489, 0
      %v523 = vsel %vm279, %v490, 0
      %v526 = vsel %vm279, %v491, 0
      %v529 = vsel %vm279, %v492, 0
      %v532 = vsel %vm279, %v493, 0
      %v535 = vsel %vm279, %v494, 0
      %v538 = vsel %vm279, %v495, 0
      %v541 = vsel %vm279, %v496, 0
      %v544 = vsel %vm279, %v497, 0
      %v547 = vsel %vm279, %v498, 0
      %v550 = vsel %vm279, %v499, 0
      %v553 = vsel %vm279, %v500, 0
      %v556 = vsel %vm279, %v501, 0
      %vm558 = vcmask 1041408
      %v560 = vsel %vm558, %v502, 0
      %562 = vmatprep.subr.bf16.mxu0 0
      %563 = vmatpush1.bf16.msra.mxu0 %v560
      %564 = vmatprep.subr.bf16.mxu0 0
      %565 = vmatpush1.bf16.msra.mxu0 0
      %566 = vmatprep.subr.bf16.mxu0 0
      %567 = vmatpush1.bf16.msra.mxu0 0
      %568 = vmatprep.subr.bf16.mxu0 0
      %569 = vmatpush1.bf16.msra.mxu0 0
      %570 = vmatprep.subr.bf16.mxu0 0
      %571 = vmatpush1.bf16.msra.mxu0 0
      %572 = vmatprep.subr.bf16.mxu0 0
      %573 = vmatpush1.bf16.msra.mxu0 0
      %574 = vmatprep.subr.bf16.mxu0 0
      %575 = vmatpush1.bf16.msra.mxu0 0
      %576 = vmatprep.subr.bf16.mxu0 0
      %577 = vmatpush1.bf16.msra.mxu0 0
      %578 = vmatprep.subr.bf16.mxu0 0
      %579 = vmatpush1.bf16.msra.mxu0 0
      %580 = vmatprep.subr.bf16.mxu0 0
      %581 = vmatpush1.bf16.msra.mxu0 0
      %582 = vmatprep.subr.bf16.mxu0 0
      %583 = vmatpush1.bf16.msra.mxu0 0
      %584 = vmatprep.subr.bf16.mxu0 0
      %585 = vmatpush1.bf16.msra.mxu0 0
      %586 = vmatprep.subr.bf16.mxu0 0
      %587 = vmatpush1.bf16.msra.mxu0 0
      %588 = vmatprep.subr.bf16.mxu0 0
      %589 = vmatpush1.bf16.msra.mxu0 0
      %590 = vmatprep.subr.bf16.mxu0 0
      %591 = vmatpush1.bf16.msra.mxu0 0
      %592 = vmatprep.subr.bf16.mxu0 0
      %593 = vmatpush1.bf16.msra.mxu0 0
      %594 = vmatprep.mubr.bf16.mxu0 0
      %595 = vmatmul.mubr.bf16.gmra.mrb[0].mxu0 %v511
      %v596 = vpop.f32.mrb[0].mxu0
      %v597 = vadd.f32 %v508, %v596
      %v598 = vpop.f32.mrb[0].mxu0
      %v599 = vpop.f32.mrb[0].mxu0
      %v600 = vadd.f32 %v508, %v599
      %v601 = vpop.f32.mrb[0].mxu0
      %602 = vmatprep.mubr.bf16.mxu0 0
      %603 = vmatmul.mubr.bf16.gmra.mrb[0].mxu0 %v514
      %v604 = vpop.f32.mrb[0].mxu0
      %v605 = vadd.f32 %v508, %v604
      %v606 = vpop.f32.mrb[0].mxu0
      %v607 = vpop.f32.mrb[0].mxu0
      %v608 = vadd.f32 %v508, %v607
      %v609 = vpop.f32.mrb[0].mxu0
      %610 = vmatprep.mubr.bf16.mxu0 0
      %611 = vmatmul.mubr.bf16.gmra.mrb[0].mxu0 %v517
      %v612 = vpop.f32.mrb[0].mxu0
      %v613 = vadd.f32 %v508, %v612
      %v614 = vpop.f32.mrb[0].mxu0
      %v615 = vpop.f32.mrb[0].mxu0
      %v616 = vadd.f32 %v508, %v615
      %v617 = vpop.f32.mrb[0].mxu0
      %618 = vmatprep.mubr.bf16.mxu0 0
      %619 = vmatmul.mubr.bf16.gmra.mrb[0].mxu0 %v520
      %v620 = vpop.f32.mrb[0].mxu0
      %v621 = vadd.f32 %v508, %v620
      %v622 = vpop.f32.mrb[0].mxu0
      %v623 = vpop.f32.mrb[0].mxu0
      %v624 = vadd.f32 %v508, %v623
      %v625 = vpop.f32.mrb[0].mxu0
      %626 = vmatprep.mubr.bf16.mxu0 0
      %627 = vmatmul.mubr.bf16.gmra.mrb[0].mxu0 %v523
      %v628 = vpop.f32.mrb[0].mxu0
      %v629 = vadd.f32 %v508, %v628
      %v630 = vpop.f32.mrb[0].mxu0
      %v631 = vpop.f32.mrb[0].mxu0
      %v632 = vadd.f32 %v508, %v631
      %v633 = vpop.f32.mrb[0].mxu0
      %634 = vmatprep.mubr.bf16.mxu0 0
      %635 = vmatmul.mubr.bf16.gmra.mrb[0].mxu0 %v526
      %v636 = vpop.f32.mrb[0].mxu0
      %v637 = vadd.f32 %v508, %v636
      %v638 = vpop.f32.mrb[0].mxu0
      %v639 = vpop.f32.mrb[0].mxu0
      %v640 = vadd.f32 %v508, %v639
      %v641 = vpop.f32.mrb[0].mxu0
      %642 = vmatprep.mubr.bf16.mxu0 0
      %643 = vmatmul.mubr.bf16.gmra.mrb[0].mxu0 %v529
      %v644 = vpop.f32.mrb[0].mxu0
      %v645 = vadd.f32 %v508, %v644
      %v646 = vpop.f32.mrb[0].mxu0
      %v647 = vpop.f32.mrb[0].mxu0
      %v648 = vadd.f32 %v508, %v647
      %v649 = vpop.f32.mrb[0].mxu0
      %650 = vmatprep.mubr.bf16.mxu0 0
      %651 = vmatmul.mubr.bf16.gmra.mrb[0].mxu0 %v532
      %v652 = vpop.f32.mrb[0].mxu0
      %v653 = vadd.f32 %v508, %v652
      %v654 = vpop.f32.mrb[0].mxu0
      %v655 = vpop.f32.mrb[0].mxu0
      %v656 = vadd.f32 %v508, %v655
      %v657 = vpop.f32.mrb[0].mxu0
      %658 = vmatprep.mubr.bf16.mxu0 0
      %659 = vmatmul.mubr.bf16.gmra.mrb[0].mxu0 %v535
      %v660 = vpop.f32.mrb[0].mxu0
      %v661 = vadd.f32 %v508, %v660
      %v662 = vpop.f32.mrb[0].mxu0
      %v663 = vpop.f32.mrb[0].mxu0
      %v664 = vadd.f32 %v508, %v663
      %v665 = vpop.f32.mrb[0].mxu0
      %666 = vmatprep.mubr.bf16.mxu0 0
      %667 = vmatmul.mubr.bf16.gmra.mrb[0].mxu0 %v538
      %v668 = vpop.f32.mrb[0].mxu0
      %v669 = vadd.f32 %v508, %v668
      %v670 = vpop.f32.mrb[0].mxu0
      %v671 = vpop.f32.mrb[0].mxu0
      %v672 = vadd.f32 %v508, %v671
      %v673 = vpop.f32.mrb[0].mxu0
      %674 = vmatprep.mubr.bf16.mxu0 0
      %675 = vmatmul.mubr.bf16.gmra.mrb[0].mxu0 %v541
      %v676 = vpop.f32.mrb[0].mxu0
      %v677 = vadd.f32 %v508, %v676
      %v678 = vpop.f32.mrb[0].mxu0
      %v679 = vpop.f32.mrb[0].mxu0
      %v680 = vadd.f32 %v508, %v679
      %v681 = vpop.f32.mrb[0].mxu0
      %682 = vmatprep.mubr.bf16.mxu0 0
      %683 = vmatmul.mubr.bf16.gmra.mrb[0].mxu0 %v544
      %v684 = vpop.f32.mrb[0].mxu0
      %v685 = vadd.f32 %v508, %v684
      %v686 = vpop.f32.mrb[0].mxu0
      %v687 = vpop.f32.mrb[0].mxu0
      %v688 = vadd.f32 %v508, %v687
      %v689 = vpop.f32.mrb[0].mxu0
      %690 = vmatprep.mubr.bf16.mxu0 0
      %691 = vmatmul.mubr.bf16.gmra.mrb[0].mxu0 %v547
      %v692 = vpop.f32.mrb[0].mxu0
      %v693 = vadd.f32 %v508, %v692
      %v694 = vpop.f32.mrb[0].mxu0
      %v695 = vpop.f32.mrb[0].mxu0
      %v696 = vadd.f32 %v508, %v695
      %v697 = vpop.f32.mrb[0].mxu0
      %698 = vmatprep.mubr.bf16.mxu0 0
      %699 = vmatmul.mubr.bf16.gmra.mrb[0].mxu0 %v550
      %v700 = vpop.f32.mrb[0].mxu0
      %v701 = vadd.f32 %v508, %v700
      %v702 = vpop.f32.mrb[0].mxu0
      %v703 = vpop.f32.mrb[0].mxu0
      %v704 = vadd.f32 %v508, %v703
      %v705 = vpop.f32.mrb[0].mxu0
      %706 = vmatprep.mubr.bf16.mxu0 0
      %707 = vmatmul.mubr.bf16.gmra.mrb[0].mxu0 %v553
      %v708 = vpop.f32.mrb[0].mxu0
      %v709 = vadd.f32 %v508, %v708
      %v710 = vpop.f32.mrb[0].mxu0
      %v711 = vpop.f32.mrb[0].mxu0
      %v712 = vadd.f32 %v508, %v711
      %v713 = vpop.f32.mrb[0].mxu0
      %714 = vmatprep.mubr.bf16.mxu0 0
      %715 = vmatmul.mubr.bf16.gmra.mrb[0].mxu0 %v556
      %v716 = vpop.f32.mrb[0].mxu0
      %v717 = vadd.f32 %v508, %v716
      %v718 = vpop.f32.mrb[0].mxu0
      %v719 = vpop.f32.mrb[0].mxu0
      %v720 = vadd.f32 %v508, %v719
      %v721 = vpop.f32.mrb[0].mxu0
      %722 = vdwg.mxu0
      %v723 = vpack.c.bf16 %v600, %v597
      %v724 = vpack.c.bf16 %v608, %v605
      %v725 = vpack.c.bf16 %v616, %v613
      %v726 = vpack.c.bf16 %v624, %v621
      %v727 = vpack.c.bf16 %v632, %v629
      %v728 = vpack.c.bf16 %v640, %v637
      %v729 = vpack.c.bf16 %v648, %v645
      %v730 = vpack.c.bf16 %v656, %v653
      %v731 = vpack.c.bf16 %v664, %v661
      %v732 = vpack.c.bf16 %v672, %v669
      %v733 = vpack.c.bf16 %v680, %v677
      %v734 = vpack.c.bf16 %v688, %v685
      %v735 = vpack.c.bf16 %v696, %v693
      %v736 = vpack.c.bf16 %v704, %v701
      %v737 = vpack.c.bf16 %v712, %v709
      %v738 = vpack.c.bf16 %v720, %v717
      %v755 = vunpack.c.l.b16 %v723
      %v756 = vunpack.c.h.b16 %v723
      %v757 = vunpack.c.l.b16 %v724
      %v758 = vunpack.c.h.b16 %v724
      %v759 = vunpack.c.l.b16 %v725
      %v760 = vunpack.c.h.b16 %v725
      %v761 = vunpack.c.l.b16 %v726
      %v762 = vunpack.c.h.b16 %v726
      %v763 = vunpack.c.l.b16 %v727
      %v764 = vunpack.c.h.b16 %v727
      %v765 = vunpack.c.l.b16 %v728
      %v766 = vunpack.c.h.b16 %v728
      %v767 = vunpack.c.l.b16 %v729
      %v768 = vunpack.c.h.b16 %v729
      %v769 = vunpack.c.l.b16 %v730
      %v770 = vunpack.c.h.b16 %v730
      %v771 = vunpack.c.l.b16 %v731
      %v772 = vunpack.c.h.b16 %v731
      %v773 = vunpack.c.l.b16 %v732
      %v774 = vunpack.c.h.b16 %v732
      %v775 = vunpack.c.l.b16 %v733
      %v776 = vunpack.c.h.b16 %v733
      %v777 = vunpack.c.l.b16 %v734
      %v778 = vunpack.c.h.b16 %v734
      %v779 = vunpack.c.l.b16 %v735
      %v780 = vunpack.c.h.b16 %v735
      %v781 = vunpack.c.l.b16 %v736
      %v782 = vunpack.c.h.b16 %v736
      %v783 = vunpack.c.l.b16 %v737
      %v784 = vunpack.c.h.b16 %v737
      %v785 = vunpack.c.l.b16 %v738
      %v786 = vunpack.c.h.b16 %v738
      %v787 = vpack.c.b16 %v755, %v755
      %v788 = vpack.c.b16 %v756, %v756
      %v789 = vpack.c.b16 %v757, %v757
      %v790 = vpack.c.b16 %v758, %v758
      %v791 = vpack.c.b16 %v759, %v759
      %v792 = vpack.c.b16 %v760, %v760
      %v793 = vpack.c.b16 %v761, %v761
      %v794 = vpack.c.b16 %v762, %v762
      %v795 = vpack.c.b16 %v763, %v763
      %v796 = vpack.c.b16 %v764, %v764
      %v797 = vpack.c.b16 %v765, %v765
      %v798 = vpack.c.b16 %v766, %v766
      %v799 = vpack.c.b16 %v767, %v767
      %v800 = vpack.c.b16 %v768, %v768
      %v801 = vpack.c.b16 %v769, %v769
      %v802 = vpack.c.b16 %v770, %v770
      %v803 = vpack.c.b16 %v771, %v771
      %v804 = vpack.c.b16 %v772, %v772
      %v805 = vpack.c.b16 %v773, %v773
      %v806 = vpack.c.b16 %v774, %v774
      %v807 = vpack.c.b16 %v775, %v775
      %v808 = vpack.c.b16 %v776, %v776
      %v809 = vpack.c.b16 %v777, %v777
      %v810 = vpack.c.b16 %v778, %v778
      %v811 = vpack.c.b16 %v779, %v779
      %v812 = vpack.c.b16 %v780, %v780
      %v813 = vpack.c.b16 %v781, %v781
      %v814 = vpack.c.b16 %v782, %v782
      %v815 = vpack.c.b16 %v783, %v783
      %v816 = vpack.c.b16 %v784, %v784
      %v817 = vpack.c.b16 %v785, %v785
      %v818 = vpack.c.b16 %v786, %v786
      %851 = vst [vmem:[%s237] sm:$0xf] %v787
      %852 = vst [vmem:[%s237 + $0x4] sm:$0xf] %v788
      %853 = vst [vmem:[%s237 + $0x8] sm:$0xf] %v789
      %854 = vst [vmem:[%s237 + $0xc] sm:$0xf] %v790
      %855 = vst [vmem:[%s237 + $0x10] sm:$0xf] %v791
      %856 = vst [vmem:[%s237 + $0x14] sm:$0xf] %v792
      %857 = vst [vmem:[%s237 + $0x18] sm:$0xf] %v793
      %858 = vst [vmem:[%s237 + $0x1c] sm:$0xf] %v794
      %859 = vst [vmem:[%s237 + $0x20] sm:$0xf] %v795
      %860 = vst [vmem:[%s237 + $0x24] sm:$0xf] %v796
      %861 = vst [vmem:[%s237 + $0x28] sm:$0xf] %v797
      %862 = vst [vmem:[%s237 + $0x2c] sm:$0xf] %v798
      %863 = vst [vmem:[%s237 + $0x30] sm:$0xf] %v799
      %864 = vst [vmem:[%s237 + $0x34] sm:$0xf] %v800
      %865 = vst [vmem:[%s237 + $0x38] sm:$0xf] %v801
      %866 = vst [vmem:[%s237 + $0x3c] sm:$0xf] %v802
      %867 = vst [vmem:[%s237 + $0x40] sm:$0xf] %v803
      %868 = vst [vmem:[%s237 + $0x44] sm:$0xf] %v804
      %869 = vst [vmem:[%s237 + $0x48] sm:$0xf] %v805
      %870 = vst [vmem:[%s237 + $0x4c] sm:$0xf] %v806
      %871 = vst [vmem:[%s237 + $0x50] sm:$0xf] %v807
      %872 = vst [vmem:[%s237 + $0x54] sm:$0xf] %v808
      %873 = vst [vmem:[%s237 + $0x58] sm:$0xf] %v809
      %874 = vst [vmem:[%s237 + $0x5c] sm:$0xf] %v810
      %875 = vst [vmem:[%s237 + $0x60] sm:$0xf] %v811
      %876 = vst [vmem:[%s237 + $0x64] sm:$0xf] %v812
      %877 = vst [vmem:[%s237 + $0x68] sm:$0xf] %v813
      %878 = vst [vmem:[%s237 + $0x6c] sm:$0xf] %v814
      %879 = vst [vmem:[%s237 + $0x70] sm:$0xf] %v815
      %880 = vst [vmem:[%s237 + $0x74] sm:$0xf] %v816
      %881 = vst [vmem:[%s237 + $0x78] sm:$0xf] %v817
      %882 = vst [vmem:[%s237 + $0x7c] sm:$0xf] %v818
      %p883 = scmp.lt.s32.totalorder %s17, 1
      %s884 = scalar_select %p883, %s17, 1
      %s885 = smul.addr %s884, 32
      %s886 = smul.addr %s885, 4
      %s887 = scalar_lea.vmem %s3, %s886
      %p888 = scmp.lt.s32.totalorder %s17, 1
      %s889 = scalar_select %p888, %s17, 1
      %s890 = smul.addr %s889, 8
      %s891 = scalar_lea.vmem %s4, %s890
      %p892 = scmp.lt.s32.totalorder %s17, 1
      %s893 = scalar_select %p892, %s17, 1
      %s894 = smul.addr %s893, 8
      %s895 = scalar_lea.vmem %s5, %s894
      // Predicated region
      $region33: #{resu_block_forward.3} parent=31 // pred_check
        %p896 = pneg %p103
      $region34: #{resu_block_forward.3} parent=31 // pred_check_branch
        %898 = sbr.rel (%p896) target = $region36
      $region35: #{resu_block_forward.3} parent=31 // pred_region
        _
      $region36: #{resu_block_forward.3} parent=31 // pred_fallthru
        _
      // Predicated region
      $region37: #{resu_block_forward.3} parent=31 // pred_check
        %p899 = pneg %p129
      $region38: #{resu_block_forward.3} parent=31 // pred_check_branch
        %901 = sbr.rel (%p899) target = $region40
      $region39: #{resu_block_forward.3} parent=31 // pred_region
        _
      $region40: #{resu_block_forward.3} parent=31 // pred_fallthru
        _
      // Predicated region
      $region41: #{resu_block_forward.3} parent=31 // pred_check
        %p902 = pneg %p155
      $region42: #{resu_block_forward.3} parent=31 // pred_check_branch
        %904 = sbr.rel (%p902) target = $region44
      $region43: #{resu_block_forward.3} parent=31 // pred_region
        _
      $region44: #{resu_block_forward.3} parent=31 // pred_fallthru
        _
    $region32: #{resu_block_forward.3} parent=5 // pred_fallthru
      _
    %p905 = scmp.le.s32.totalorder 2, %s12
    // Predicated region
    $region45: #{resu_block_forward.3} parent=5 // pred_check
      %p906 = pneg %p905
    $region46: #{resu_block_forward.3} parent=5 // pred_check_branch
      %908 = sbr.rel (%p906) target = $region48
    $region47: #{resu_block_forward.3} parent=5 // pred_region
      %s909 = ssub.s32 %s12, 2
      // Predicated region
      $region49: #{resu_block_forward.3} parent=47 // pred_check
        %p910 = pneg %p109
      $region50: #{resu_block_forward.3} parent=47 // pred_check_branch
        %912 = sbr.rel (%p910) target = $region52
      $region51: #{resu_block_forward.3} parent=47 // pred_region
        %p913 = scmp.lt.s32.totalorder %s18, 1
        %s914 = scalar_select %p913, %s18, 1
        %s915 = smul.addr %s914, 32
        %s916 = smul.addr %s915, 4
        %s917 = scalar_lea.vmem %s3, %s916
      $region52: #{resu_block_forward.3} parent=47 // pred_fallthru
        _
      // Predicated region
      $region53: #{resu_block_forward.3} parent=47 // pred_check
        %p918 = pneg %p135
      $region54: #{resu_block_forward.3} parent=47 // pred_check_branch
        %920 = sbr.rel (%p918) target = $region56
      $region55: #{resu_block_forward.3} parent=47 // pred_region
        %p921 = scmp.lt.s32.totalorder %s18, 1
        %s922 = scalar_select %p921, %s18, 1
        %s923 = smul.addr %s922, 8
        %s924 = scalar_lea.vmem %s4, %s923
      $region56: #{resu_block_forward.3} parent=47 // pred_fallthru
        _
      // Predicated region
      $region57: #{resu_block_forward.3} parent=47 // pred_check
        %p925 = pneg %p161
      $region58: #{resu_block_forward.3} parent=47 // pred_check_branch
        %927 = sbr.rel (%p925) target = $region60
      $region59: #{resu_block_forward.3} parent=47 // pred_region
        %p928 = scmp.lt.s32.totalorder %s18, 1
        %s929 = scalar_select %p928, %s18, 1
        %s930 = smul.addr %s929, 8
        %s931 = scalar_lea.vmem %s5, %s930
      $region60: #{resu_block_forward.3} parent=47 // pred_fallthru
        _
    $region48: #{resu_block_forward.3} parent=5 // pred_fallthru
      _
  $region6: #{resu_block_forward.3} parent=0 // loop_footer
    %s16 = sadd.s32 1, %s12
  $region7: #{resu_block_forward.3} parent=0 // loop_footer_branch
    %11 = sbr.rel target = $region3
  $region8: #{resu_block_forward.3} parent=0 // loop_exit
    _

// kernel: resu_block_forward.4
$region0: #{resu_block_forward.4}
  #allocation0 [shape = 'u32[]', space=smem, size = 0x4, offset = 0x4, fixed_abs, tag = 'smem constant byte address 0x4 - core index']
  #allocation1 [shape = 'u32[144,128]{1,0:T(1,128)}', space=vmem, size = 0x12000, scoped, tag = 'internal scratch']
  #allocation2 [shape = 'f32[18,18,4]{2,1,0:T(8,128)}', space=vmem, size = 0x36000, scoped, tag = 'scratch operand']
  %s0 = inlined_call_operand.vmem [shape: f32[2,16,16,4], index: 0, kind: input, shape index: {}]
  %s1 = inlined_call_operand.vmem [shape: f32[1,4], index: 1, kind: input, shape index: {}]
  %s2 = inlined_call_operand.vmem [shape: f32[1,4], index: 2, kind: input, shape index: {}]
  %s3 = inlined_call_operand.vmem [shape: bf16[3,12,128], index: 3, kind: input, shape index: {}]
  %s4 = inlined_call_operand.vmem [shape: f32[1,128], index: 4, kind: input, shape index: {}]
  %s5 = inlined_call_operand.vmem [shape: bf16[2,256,128], index: 5, kind: output, shape index: {0}]
  %s6 = inlined_call_operand.vmem [shape: f32[2,8,128], index: 6, kind: output, shape index: {1}]
  %s7 = inlined_call_operand.vmem [shape: f32[2,8,128], index: 7, kind: output, shape index: {2}]
  %8 = xla_tuple %s5, %s6, %s7
  %s9 = sld [smem:[#allocation0]]
  $region69: #{resu_block_forward.4} parent=0
    _
  %s11 = ssub.s32 1, %s9
  %s12 = scalar_select 0, %s11, %s9
  loop: start=0, step=1, limit=4
  $region2: #{resu_block_forward.4} parent=0 // loop_pre_header
    _
  $region3: #{resu_block_forward.4} parent=0 // loop_header
    %s14 = sphi 0, %s18
    %p15 = scmp.ge.s32.totalorder %s14, 4
    %s24 = sphi 0, %s26
    %s27 = sphi 0, %s24
    %s28 = sphi 0, %s27
    %s44 = sphi 0, %s28
    %s48 = sphi 0, %s48
    %s50 = sphi 0, %s48
    %s51 = sphi 0, %s50
    %s65 = sphi 0, %s51
    %s69 = sphi 0, %s69
    %s71 = sphi 0, %s69
    %s72 = sphi 0, %s71
    %s86 = sphi 0, %s72
    %s90 = sphi 0, %s90
    %s92 = sphi 0, %s90
    %s93 = sphi 0, %s92
    %s107 = sphi 0, %s93
    %s111 = sphi 0, %s111
    %s113 = sphi 0, %s111
    %s114 = sphi 0, %s113
    %s128 = sphi 0, %s114
    %s134 = sphi 0, %s136
    %s137 = sphi 0, %s134
    %s138 = sphi 0, %s137
    %s154 = sphi 0, %s138
    %s160 = sphi 0, %s162
    %s163 = sphi 0, %s160
    %s164 = sphi 0, %s163
    %s180 = sphi 0, %s164
    %s186 = sphi 0, %s188
    %s189 = sphi 0, %s186
    %s190 = sphi 0, %s189
    %s206 = sphi 0, %s190
  $region4: #{resu_block_forward.4} parent=0 // loop_header_branch
    %17 = sbr.rel (%p15) target = $region8
  $region5: #{resu_block_forward.4} parent=0 // loop_body
    %s19 = ssub.s32 %s14, 1
    %s20 = ssub.s32 %s14, 2
    %s21 = sadd.s32 %s14, 1
    %s22 = ssub.s32 %s14, %s21
    %p23 = scmp.eq.s32.totalorder %s22, 0
    %s25 = sadd.s32 %s24, 1
    %s26 = scalar_select %p23, %s24, %s25
    %p29 = pneg %p23
    %p30 = scmp.eq.s32.totalorder %s14, 1
    %p31 = por %p29, %p30
    %p32 = scmp.ne.s32.totalorder %s24, %s27
    %p33 = scmp.eq.s32.totalorder %s14, 0
    %p34 = por %p32, %p33
    %p35 = scmp.ne.s32.totalorder %s24, %s27
    %p36 = scmp.eq.s32.totalorder %s19, 1
    %p37 = por %p35, %p36
    %p38 = scmp.ne.s32.totalorder %s27, %s28
    %p39 = scmp.eq.s32.totalorder %s19, 0
    %p40 = por %p38, %p39
    %p41 = scmp.ne.s32.totalorder %s27, %s28
    %p42 = scmp.eq.s32.totalorder %s20, 1
    %p43 = por %p41, %p42
    %p45 = scmp.ne.s32.totalorder %s28, %s44
    %p46 = scmp.eq.s32.totalorder %s20, 0
    %p47 = por %p45, %p46
    %s49 = sadd.s32 %s48, 1
    %p52 = scmp.eq.s32.totalorder %s14, 1
    %p53 = scmp.ne.s32.totalorder %s48, %s50
    %p54 = scmp.eq.s32.totalorder %s14, 0
    %p55 = por %p53, %p54
    %p56 = scmp.ne.s32.totalorder %s48, %s50
    %p57 = scmp.eq.s32.totalorder %s19, 1
    %p58 = por %p56, %p57
    %p59 = scmp.ne.s32.totalorder %s50, %s51
    %p60 = scmp.eq.s32.totalorder %s19, 0
    %p61 = por %p59, %p60
    %p62 = scmp.ne.s32.totalorder %s50, %s51
    %p63 = scmp.eq.s32.totalorder %s20, 1
    %p64 = por %p62, %p63
    %p66 = scmp.ne.s32.totalorder %s51, %s65
    %p67 = scmp.eq.s32.totalorder %s20, 0
    %p68 = por %p66, %p67
    %s70 = sadd.s32 %s69, 1
    %p73 = scmp.eq.s32.totalorder %s14, 1
    %p74 = scmp.ne.s32.totalorder %s69, %s71
    %p75 = scmp.eq.s32.totalorder %s14, 0
    %p76 = por %p74, %p75
    %p77 = scmp.ne.s32.totalorder %s69, %s71
    %p78 = scmp.eq.s32.totalorder %s19, 1
    %p79 = por %p77, %p78
    %p80 = scmp.ne.s32.totalorder %s71, %s72
    %p81 = scmp.eq.s32.totalorder %s19, 0
    %p82 = por %p80, %p81
    %p83 = scmp.ne.s32.totalorder %s71, %s72
    %p84 = scmp.eq.s32.totalorder %s20, 1
    %p85 = por %p83, %p84
    %p87 = scmp.ne.s32.totalorder %s72, %s86
    %p88 = scmp.eq.s32.totalorder %s20, 0
    %p89 = por %p87, %p88
    %s91 = sadd.s32 %s90, 1
    %p94 = scmp.eq.s32.totalorder %s14, 1
    %p95 = scmp.ne.s32.totalorder %s90, %s92
    %p96 = scmp.eq.s32.totalorder %s14, 0
    %p97 = por %p95, %p96
    %p98 = scmp.ne.s32.totalorder %s90, %s92
    %p99 = scmp.eq.s32.totalorder %s19, 1
    %p100 = por %p98, %p99
    %p101 = scmp.ne.s32.totalorder %s92, %s93
    %p102 = scmp.eq.s32.totalorder %s19, 0
    %p103 = por %p101, %p102
    %p104 = scmp.ne.s32.totalorder %s92, %s93
    %p105 = scmp.eq.s32.totalorder %s20, 1
    %p106 = por %p104, %p105
    %p108 = scmp.ne.s32.totalorder %s93, %s107
    %p109 = scmp.eq.s32.totalorder %s20, 0
    %p110 = por %p108, %p109
    %s112 = sadd.s32 %s111, 1
    %p115 = scmp.eq.s32.totalorder %s14, 1
    %p116 = scmp.ne.s32.totalorder %s111, %s113
    %p117 = scmp.eq.s32.totalorder %s14, 0
    %p118 = por %p116, %p117
    %p119 = scmp.ne.s32.totalorder %s111, %s113
    %p120 = scmp.eq.s32.totalorder %s19, 1
    %p121 = por %p119, %p120
    %p122 = scmp.ne.s32.totalorder %s113, %s114
    %p123 = scmp.eq.s32.totalorder %s19, 0
    %p124 = por %p122, %p123
    %p125 = scmp.ne.s32.totalorder %s113, %s114
    %p126 = scmp.eq.s32.totalorder %s20, 1
    %p127 = por %p125, %p126
    %p129 = scmp.ne.s32.totalorder %s114, %s128
    %p130 = scmp.eq.s32.totalorder %s20, 0
    %p131 = por %p129, %p130
    %s132 = ssub.s32 %s14, %s21
    %p133 = scmp.eq.s32.totalorder %s132, 0
    %s135 = sadd.s32 %s134, 1
    %s136 = scalar_select %p133, %s134, %s135
    %p139 = pneg %p133
    %p140 = scmp.eq.s32.totalorder %s14, 1
    %p141 = por %p139, %p140
    %p142 = scmp.ne.s32.totalorder %s134, %s137
    %p143 = scmp.eq.s32.totalorder %s14, 0
    %p144 = por %p142, %p143
    %p145 = scmp.ne.s32.totalorder %s134, %s137
    %p146 = scmp.eq.s32.totalorder %s19, 1
    %p147 = por %p145, %p146
    %p148 = scmp.ne.s32.totalorder %s137, %s138
    %p149 = scmp.eq.s32.totalorder %s19, 0
    %p150 = por %p148, %p149
    %p151 = scmp.ne.s32.totalorder %s137, %s138
    %p152 = scmp.eq.s32.totalorder %s20, 1
    %p153 = por %p151, %p152
    %p155 = scmp.ne.s32.totalorder %s138, %s154
    %p156 = scmp.eq.s32.totalorder %s20, 0
    %p157 = por %p155, %p156
    %s158 = ssub.s32 %s14, %s21
    %p159 = scmp.eq.s32.totalorder %s158, 0
    %s161 = sadd.s32 %s160, 1
    %s162 = scalar_select %p159, %s160, %s161
    %p165 = pneg %p159
    %p166 = scmp.eq.s32.totalorder %s14, 1
    %p167 = por %p165, %p166
    %p168 = scmp.ne.s32.totalorder %s160, %s163
    %p169 = scmp.eq.s32.totalorder %s14, 0
    %p170 = por %p168, %p169
    %p171 = scmp.ne.s32.totalorder %s160, %s163
    %p172 = scmp.eq.s32.totalorder %s19, 1
    %p173 = por %p171, %p172
    %p174 = scmp.ne.s32.totalorder %s163, %s164
    %p175 = scmp.eq.s32.totalorder %s19, 0
    %p176 = por %p174, %p175
    %p177 = scmp.ne.s32.totalorder %s163, %s164
    %p178 = scmp.eq.s32.totalorder %s20, 1
    %p179 = por %p177, %p178
    %p181 = scmp.ne.s32.totalorder %s164, %s180
    %p182 = scmp.eq.s32.totalorder %s20, 0
    %p183 = por %p181, %p182
    %s184 = ssub.s32 %s14, %s21
    %p185 = scmp.eq.s32.totalorder %s184, 0
    %s187 = sadd.s32 %s186, 1
    %s188 = scalar_select %p185, %s186, %s187
    %p191 = pneg %p185
    %p192 = scmp.eq.s32.totalorder %s14, 1
    %p193 = por %p191, %p192
    %p194 = scmp.ne.s32.totalorder %s186, %s189
    %p195 = scmp.eq.s32.totalorder %s14, 0
    %p196 = por %p194, %p195
    %p197 = scmp.ne.s32.totalorder %s186, %s189
    %p198 = scmp.eq.s32.totalorder %s19, 1
    %p199 = por %p197, %p198
    %p200 = scmp.ne.s32.totalorder %s189, %s190
    %p201 = scmp.eq.s32.totalorder %s19, 0
    %p202 = por %p200, %p201
    %p203 = scmp.ne.s32.totalorder %s189, %s190
    %p204 = scmp.eq.s32.totalorder %s20, 1
    %p205 = por %p203, %p204
    %p207 = scmp.ne.s32.totalorder %s190, %s206
    %p208 = scmp.eq.s32.totalorder %s20, 0
    %p209 = por %p207, %p208
    %p210 = scmp.le.s32.totalorder 1, %s14
    %p211 = scmp.lt.s32.totalorder %s14, 3
    %p212 = pnand %p210, %p211
    %p213 = pneg %p212
    // Predicated region
    $region9: #{resu_block_forward.4} parent=5 // pred_check
      _
    $region10: #{resu_block_forward.4} parent=5 // pred_check_branch
      %215 = sbr.rel (%p212) target = $region12
    $region11: #{resu_block_forward.4} parent=5 // pred_region
      %s216 = ssub.s32 %s14, 1
      // Predicated region
      $region13: #{resu_block_forward.4} parent=11 // pred_check
        %p217 = pneg %p61
      $region14: #{resu_block_forward.4} parent=11 // pred_check_branch
        %219 = sbr.rel (%p217) target = $region16
      $region15: #{resu_block_forward.4} parent=11 // pred_region
        _
      $region16: #{resu_block_forward.4} parent=11 // pred_fallthru
        _
      // Predicated region
      $region17: #{resu_block_forward.4} parent=11 // pred_check
        %p220 = pneg %p82
      $region18: #{resu_block_forward.4} parent=11 // pred_check_branch
        %222 = sbr.rel (%p220) target = $region20
      $region19: #{resu_block_forward.4} parent=11 // pred_region
        _
      $region20: #{resu_block_forward.4} parent=11 // pred_fallthru
        _
      // Predicated region
      $region21: #{resu_block_forward.4} parent=11 // pred_check
        %p223 = pneg %p103
      $region22: #{resu_block_forward.4} parent=11 // pred_check_branch
        %225 = sbr.rel (%p223) target = $region24
      $region23: #{resu_block_forward.4} parent=11 // pred_region
        _
      $region24: #{resu_block_forward.4} parent=11 // pred_fallthru
        _
      // Predicated region
      $region25: #{resu_block_forward.4} parent=11 // pred_check
        %p226 = pneg %p124
      $region26: #{resu_block_forward.4} parent=11 // pred_check_branch
        %228 = sbr.rel (%p226) target = $region28
      $region27: #{resu_block_forward.4} parent=11 // pred_region
        _
      $region28: #{resu_block_forward.4} parent=11 // pred_fallthru
        _
    $region12: #{resu_block_forward.4} parent=5 // pred_fallthru
      _
    %p229 = scmp.lt.s32.totalorder %s14, 2
    // Predicated region
    $region29: #{resu_block_forward.4} parent=5 // pred_check
      %p230 = pneg %p229
    $region30: #{resu_block_forward.4} parent=5 // pred_check_branch
      %232 = sbr.rel (%p230) target = $region32
    $region31: #{resu_block_forward.4} parent=5 // pred_region
      // Predicated region
      $region33: #{resu_block_forward.4} parent=31 // pred_check
        %p233 = pneg %p34
      $region34: #{resu_block_forward.4} parent=31 // pred_check_branch
        %235 = sbr.rel (%p233) target = $region36
      $region35: #{resu_block_forward.4} parent=31 // pred_region
        %p236 = scmp.lt.s32.totalorder %s14, 1
        %s237 = scalar_select %p236, %s14, 1
        %s238 = smul.addr %s237, 32
        %s239 = smul.addr %s238, 8
        %s240 = scalar_lea.vmem %s0, %s239
      $region36: #{resu_block_forward.4} parent=31 // pred_fallthru
        _
    $region32: #{resu_block_forward.4} parent=5 // pred_fallthru
      _
    %p241 = scmp.le.s32.totalorder 1, %s14
    %p242 = scmp.lt.s32.totalorder %s14, 3
    %p243 = pnand %p241, %p242
    %p244 = pneg %p243
    // Predicated region
    $region37: #{resu_block_forward.4} parent=5 // pred_check
      _
    $region38: #{resu_block_forward.4} parent=5 // pred_check_branch
      %246 = sbr.rel (%p243) target = $region40
    $region39: #{resu_block_forward.4} parent=5 // pred_region
      %s247 = ssub.s32 %s14, 1
      %p248 = scmp.lt.s32.totalorder %s19, 1
      %s249 = scalar_select %p248, %s19, 1
      %s250 = smul.addr %s249, 32
      %s251 = smul.addr %s250, 8
      %s252 = scalar_lea.vmem %s0, %s251
      %p253 = pneg %p40
      %p254 = pneg %p37
      %p255 = pneg %p61
      %p256 = pneg %p58
      %p257 = pneg %p82
      %p258 = pneg %p79
      %p259 = pneg %p103
      %p260 = pneg %p100
      %p261 = pneg %p124
      %p262 = pneg %p121
      %p263 = pneg %p150
      %p264 = pneg %p147
      %p265 = scmp.lt.s32.totalorder %s19, 1
      %s266 = scalar_select %p265, %s19, 1
      %s267 = smul.addr %s266, 32
      %s268 = smul.addr %s267, 4
      %s269 = scalar_lea.vmem %s5, %s268
      %p270 = pneg %p176
      %p271 = pneg %p173
      %p272 = scmp.lt.s32.totalorder %s19, 1
      %s273 = scalar_select %p272, %s19, 1
      %s274 = smul.addr %s273, 8
      %s275 = scalar_lea.vmem %s6, %s274
      %p276 = pneg %p202
      %p277 = pneg %p199
      %p278 = scmp.lt.s32.totalorder %s19, 1
      %s279 = scalar_select %p278, %s19, 1
      %s280 = smul.addr %s279, 8
      %s281 = scalar_lea.vmem %s7, %s280
      %p282 = scmp.lt.s32.totalorder %s19, 1
      %s283 = scalar_select %p282, %s19, 1
      %s284 = smul.addr %s283, 32
      %s285 = smul.addr %s284, 8
      %s286 = scalar_lea.vmem %s0, %s285
      %p287 = scmp.lt.s32.totalorder %s19, 1
      %s288 = scalar_select %p287, %s19, 1
      %s289 = smul.addr %s288, 32
      %s290 = smul.addr %s289, 4
      %s291 = scalar_lea.vmem %s5, %s290
      %p292 = scmp.lt.s32.totalorder %s19, 1
      %s293 = scalar_select %p292, %s19, 1
      %s294 = smul.addr %s293, 8
      %s295 = scalar_lea.vmem %s6, %s294
      %p296 = scmp.lt.s32.totalorder %s19, 1
      %s297 = scalar_select %p296, %s19, 1
      %s298 = smul.addr %s297, 8
      %s299 = scalar_lea.vmem %s7, %s298
      %v301 = vld [vmem:[%s286] sm:$0xff]
      %v302 = vld [vmem:[%s286 + $0x8] sm:$0xff]
      %v303 = vld [vmem:[%s286 + $0x10] sm:$0xff]
      %v304 = vld [vmem:[%s286 + $0x18] sm:$0xff]
      %v305 = vld [vmem:[%s286 + $0x20] sm:$0xff]
      %v306 = vld [vmem:[%s286 + $0x28] sm:$0xff]
      %v307 = vld [vmem:[%s286 + $0x30] sm:$0xff]
      %v308 = vld [vmem:[%s286 + $0x38] sm:$0xff]
      %v309 = vld [vmem:[%s286 + $0x40] sm:$0xff]
      %v310 = vld [vmem:[%s286 + $0x48] sm:$0xff]
      %v311 = vld [vmem:[%s286 + $0x50] sm:$0xff]
      %v312 = vld [vmem:[%s286 + $0x58] sm:$0xff]
      %v313 = vld [vmem:[%s286 + $0x60] sm:$0xff]
      %v314 = vld [vmem:[%s286 + $0x68] sm:$0xff]
      %v315 = vld [vmem:[%s286 + $0x70] sm:$0xff]
      %v316 = vld [vmem:[%s286 + $0x78] sm:$0xff]
      %v317 = vld [vmem:[%s286 + $0x80] sm:$0xff]
      %v318 = vld [vmem:[%s286 + $0x88] sm:$0xff]
      %v319 = vld [vmem:[%s286 + $0x90] sm:$0xff]
      %v320 = vld [vmem:[%s286 + $0x98] sm:$0xff]
      %v321 = vld [vmem:[%s286 + $0xa0] sm:$0xff]
      %v322 = vld [vmem:[%s286 + $0xa8] sm:$0xff]
      %v323 = vld [vmem:[%s286 + $0xb0] sm:$0xff]
      %v324 = vld [vmem:[%s286 + $0xb8] sm:$0xff]
      %v325 = vld [vmem:[%s286 + $0xc0] sm:$0xff]
      %v326 = vld [vmem:[%s286 + $0xc8] sm:$0xff]
      %v327 = vld [vmem:[%s286 + $0xd0] sm:$0xff]
      %v328 = vld [vmem:[%s286 + $0xd8] sm:$0xff]
      %v329 = vld [vmem:[%s286 + $0xe0] sm:$0xff]
      %v330 = vld [vmem:[%s286 + $0xe8] sm:$0xff]
      %v331 = vld [vmem:[%s286 + $0xf0] sm:$0xff]
      %v332 = vld [vmem:[%s286 + $0xf8] sm:$0xff]
      %v333 = vld [vmem:[%s1] sm:$0x1]
      %v335 = vlaneseq
      %v336 = vshrl.u32 %v335, 7
      %v337 = vsub.s32 0, %v336
      %v338 = vrot.slane %v333, %v337
      %v340 = vmul.f32 %v301, %v338
      %v341 = vmul.f32 %v302, %v338
      %v342 = vmul.f32 %v303, %v338
      %v343 = vmul.f32 %v304, %v338
      %v344 = vmul.f32 %v305, %v338
      %v345 = vmul.f32 %v306, %v338
      %v346 = vmul.f32 %v307, %v338
      %v347 = vmul.f32 %v308, %v338
      %v348 = vmul.f32 %v309, %v338
      %v349 = vmul.f32 %v310, %v338
      %v350 = vmul.f32 %v311, %v338
      %v351 = vmul.f32 %v312, %v338
      %v352 = vmul.f32 %v313, %v338
      %v353 = vmul.f32 %v314, %v338
      %v354 = vmul.f32 %v315, %v338
      %v355 = vmul.f32 %v316, %v338
      %v356 = vmul.f32 %v317, %v338
      %v357 = vmul.f32 %v318, %v338
      %v358 = vmul.f32 %v319, %v338
      %v359 = vmul.f32 %v320, %v338
      %v360 = vmul.f32 %v321, %v338
      %v361 = vmul.f32 %v322, %v338
      %v362 = vmul.f32 %v323, %v338
      %v363 = vmul.f32 %v324, %v338
      %v364 = vmul.f32 %v325, %v338
      %v365 = vmul.f32 %v326, %v338
      %v366 = vmul.f32 %v327, %v338
      %v367 = vmul.f32 %v328, %v338
      %v368 = vmul.f32 %v329, %v338
      %v369 = vmul.f32 %v330, %v338
      %v370 = vmul.f32 %v331, %v338
      %v371 = vmul.f32 %v332, %v338
      %v372 = vld [vmem:[%s2] sm:$0x1]
      %v374 = vlaneseq
      %v375 = vshrl.u32 %v374, 7
      %v376 = vsub.s32 0, %v375
      %v377 = vrot.slane %v372, %v376
      %v379 = vadd.f32 %v340, %v377
      %v380 = vadd.f32 %v341, %v377
      %v381 = vadd.f32 %v342, %v377
      %v382 = vadd.f32 %v343, %v377
      %v383 = vadd.f32 %v344, %v377
      %v384 = vadd.f32 %v345, %v377
      %v385 = vadd.f32 %v346, %v377
      %v386 = vadd.f32 %v347, %v377
      %v387 = vadd.f32 %v348, %v377
      %v388 = vadd.f32 %v349, %v377
      %v389 = vadd.f32 %v350, %v377
      %v390 = vadd.f32 %v351, %v377
      %v391 = vadd.f32 %v352, %v377
      %v392 = vadd.f32 %v353, %v377
      %v393 = vadd.f32 %v354, %v377
      %v394 = vadd.f32 %v355, %v377
      %v395 = vadd.f32 %v356, %v377
      %v396 = vadd.f32 %v357, %v377
      %v397 = vadd.f32 %v358, %v377
      %v398 = vadd.f32 %v359, %v377
      %v399 = vadd.f32 %v360, %v377
      %v400 = vadd.f32 %v361, %v377
      %v401 = vadd.f32 %v362, %v377
      %v402 = vadd.f32 %v363, %v377
      %v403 = vadd.f32 %v364, %v377
      %v404 = vadd.f32 %v365, %v377
      %v405 = vadd.f32 %v366, %v377
      %v406 = vadd.f32 %v367, %v377
      %v407 = vadd.f32 %v368, %v377
      %v408 = vadd.f32 %v369, %v377
      %v409 = vadd.f32 %v370, %v377
      %v410 = vadd.f32 %v371, %v377
      %v411 = vmax.f32 %v379, 0.0
      %v412 = vmax.f32 %v380, 0.0
      %v413 = vmax.f32 %v381, 0.0
      %v414 = vmax.f32 %v382, 0.0
      %v415 = vmax.f32 %v383, 0.0
      %v416 = vmax.f32 %v384, 0.0
      %v417 = vmax.f32 %v385, 0.0
      %v418 = vmax.f32 %v386, 0.0
      %v419 = vmax.f32 %v387, 0.0
      %v420 = vmax.f32 %v388, 0.0
      %v421 = vmax.f32 %v389, 0.0
      %v422 = vmax.f32 %v390, 0.0
      %v423 = vmax.f32 %v391, 0.0
      %v424 = vmax.f32 %v392, 0.0
      %v425 = vmax.f32 %v393, 0.0
      %v426 = vmax.f32 %v394, 0.0
      %v427 = vmax.f32 %v395, 0.0
      %v428 = vmax.f32 %v396, 0.0
      %v429 = vmax.f32 %v397, 0.0
      %v430 = vmax.f32 %v398, 0.0
      %v431 = vmax.f32 %v399, 0.0
      %v432 = vmax.f32 %v400, 0.0
      %v433 = vmax.f32 %v401, 0.0
      %v434 = vmax.f32 %v402, 0.0
      %v435 = vmax.f32 %v403, 0.0
      %v436 = vmax.f32 %v404, 0.0
      %v437 = vmax.f32 %v405, 0.0
      %v438 = vmax.f32 %v406, 0.0
      %v439 = vmax.f32 %v407, 0.0
      %v440 = vmax.f32 %v408, 0.0
      %v441 = vmax.f32 %v409, 0.0
      %v442 = vmax.f32 %v410, 0.0
      %vm443 = vcmask 31744
      %444 = vst.msk [vmem:[#allocation2] sm:$0xff] %vm443, 0.0
      %445 = vst.msk [vmem:[#allocation2 + $0x8] sm:$0xff] %vm443, 0.0
      %vm446 = vcmask 25600
      %447 = vst.msk [vmem:[#allocation2 + $0x10] sm:$0x3] %vm446, 0.0
      %s448 = scalar_lea.vmem [#allocation2], 408
      %449 = vst.msk [vmem:[%s448] sm:$0xff] %vm443, 0.0
      %450 = vst.msk [vmem:[%s448 + $0x8] sm:$0xff] %vm443, 0.0
      %451 = vst.msk [vmem:[%s448 + $0x10] sm:$0x3] %vm446, 0.0
      %vm452 = vcmask 24576
      %453 = vst.msk [vmem:[#allocation2] sm:$0x1] %vm452, 0.0
      %454 = vst.msk [vmem:[#allocation2 + $0x18] sm:$0x1] %vm452, 0.0
      %455 = vst.msk [vmem:[#allocation2 + $0x30] sm:$0x1] %vm452, 0.0
      %456 = vst.msk [vmem:[#allocation2 + $0x48] sm:$0x1] %vm452, 0.0
      %457 = vst.msk [vmem:[#allocation2 + $0x60] sm:$0x1] %vm452, 0.0
      %458 = vst.msk [vmem:[#allocation2 + $0x78] sm:$0x1] %vm452, 0.0
      %459 = vst.msk [vmem:[#allocation2 + $0x90] sm:$0x1] %vm452, 0.0
      %460 = vst.msk [vmem:[#allocation2 + $0xa8] sm:$0x1] %vm452, 0.0
      %461 = vst.msk [vmem:[#allocation2 + $0xc0] sm:$0x1] %vm452, 0.0
      %462 = vst.msk [vmem:[#allocation2 + $0xd8] sm:$0x1] %vm452, 0.0
      %463 = vst.msk [vmem:[#allocation2 + $0xf0] sm:$0x1] %vm452, 0.0
      %464 = vst.msk [vmem:[#allocation2 + $0x108] sm:$0x1] %vm452, 0.0
      %465 = vst.msk [vmem:[#allocation2 + $0x120] sm:$0x1] %vm452, 0.0
      %466 = vst.msk [vmem:[#allocation2 + $0x138] sm:$0x1] %vm452, 0.0
      %467 = vst.msk [vmem:[#allocation2 + $0x150] sm:$0x1] %vm452, 0.0
      %468 = vst.msk [vmem:[#allocation2 + $0x168] sm:$0x1] %vm452, 0.0
      %469 = vst.msk [vmem:[#allocation2 + $0x180] sm:$0x1] %vm452, 0.0
      %470 = vst.msk [vmem:[#allocation2 + $0x198] sm:$0x1] %vm452, 0.0
      %471 = vst.msk [vmem:[#allocation2 + $0x11] sm:$0x1] %vm452, 0.0
      %472 = vst.msk [vmem:[#allocation2 + $0x29] sm:$0x1] %vm452, 0.0
      %473 = vst.msk [vmem:[#allocation2 + $0x41] sm:$0x1] %vm452, 0.0
      %474 = vst.msk [vmem:[#allocation2 + $0x59] sm:$0x1] %vm452, 0.0
      %475 = vst.msk [vmem:[#allocation2 + $0x71] sm:$0x1] %vm452, 0.0
      %476 = vst.msk [vmem:[#allocation2 + $0x89] sm:$0x1] %vm452, 0.0
      %477 = vst.msk [vmem:[#allocation2 + $0xa1] sm:$0x1] %vm452, 0.0
      %478 = vst.msk [vmem:[#allocation2 + $0xb9] sm:$0x1] %vm452, 0.0
      %479 = vst.msk [vmem:[#allocation2 + $0xd1] sm:$0x1] %vm452, 0.0
      %480 = vst.msk [vmem:[#allocation2 + $0xe9] sm:$0x1] %vm452, 0.0
      %481 = vst.msk [vmem:[#allocation2 + $0x101] sm:$0x1] %vm452, 0.0
      %482 = vst.msk [vmem:[#allocation2 + $0x119] sm:$0x1] %vm452, 0.0
      %483 = vst.msk [vmem:[#allocation2 + $0x131] sm:$0x1] %vm452, 0.0
      %484 = vst.msk [vmem:[#allocation2 + $0x149] sm:$0x1] %vm452, 0.0
      %485 = vst.msk [vmem:[#allocation2 + $0x161] sm:$0x1] %vm452, 0.0
      %486 = vst.msk [vmem:[#allocation2 + $0x179] sm:$0x1] %vm452, 0.0
      %487 = vst.msk [vmem:[#allocation2 + $0x191] sm:$0x1] %vm452, 0.0
      %488 = vst.msk [vmem:[#allocation2 + $0x1a9] sm:$0x1] %vm452, 0.0
      %s489 = scalar_lea.vmem [#allocation2], 24
      %490 = vst.msk [vmem:[%s489 + $0x1] sm:$0xff] %vm443, %v411
      %491 = vst.msk [vmem:[%s489 + $0x9] sm:$0xff] %vm443, %v412
      %492 = vst.msk [vmem:[%s489 + $0x19] sm:$0xff] %vm443, %v413
      %493 = vst.msk [vmem:[%s489 + $0x21] sm:$0xff] %vm443, %v414
      %494 = vst.msk [vmem:[%s489 + $0x31] sm:$0xff] %vm443, %v415
      %495 = vst.msk [vmem:[%s489 + $0x39] sm:$0xff] %vm443, %v416
      %496 = vst.msk [vmem:[%s489 + $0x49] sm:$0xff] %vm443, %v417
      %497 = vst.msk [vmem:[%s489 + $0x51] sm:$0xff] %vm443, %v418
      %498 = vst.msk [vmem:[%s489 + $0x61] sm:$0xff] %vm443, %v419
      %499 = vst.msk [vmem:[%s489 + $0x69] sm:$0xff] %vm443, %v420
      %500 = vst.msk [vmem:[%s489 + $0x79] sm:$0xff] %vm443, %v421
      %501 = vst.msk [vmem:[%s489 + $0x81] sm:$0xff] %vm443, %v422
      %502 = vst.msk [vmem:[%s489 + $0x91] sm:$0xff] %vm443, %v423
      %503 = vst.msk [vmem:[%s489 + $0x99] sm:$0xff] %vm443, %v424
      %504 = vst.msk [vmem:[%s489 + $0xa9] sm:$0xff] %vm443, %v425
      %505 = vst.msk [vmem:[%s489 + $0xb1] sm:$0xff] %vm443, %v426
      %506 = vst.msk [vmem:[%s489 + $0xc1] sm:$0xff] %vm443, %v427
      %507 = vst.msk [vmem:[%s489 + $0xc9] sm:$0xff] %vm443, %v428
      %508 = vst.msk [vmem:[%s489 + $0xd9] sm:$0xff] %vm443, %v429
      %509 = vst.msk [vmem:[%s489 + $0xe1] sm:$0xff] %vm443, %v430
      %510 = vst.msk [vmem:[%s489 + $0xf1] sm:$0xff] %vm443, %v431
      %511 = vst.msk [vmem:[%s489 + $0xf9] sm:$0xff] %vm443, %v432
      %512 = vst.msk [vmem:[%s489 + $0x109] sm:$0xff] %vm443, %v433
      %513 = vst.msk [vmem:[%s489 + $0x111] sm:$0xff] %vm443, %v434
      %514 = vst.msk [vmem:[%s489 + $0x121] sm:$0xff] %vm443, %v435
      %515 = vst.msk [vmem:[%s489 + $0x129] sm:$0xff] %vm443, %v436
      %516 = vst.msk [vmem:[%s489 + $0x139] sm:$0xff] %vm443, %v437
      %517 = vst.msk [vmem:[%s489 + $0x141] sm:$0xff] %vm443, %v438
      %518 = vst.msk [vmem:[%s489 + $0x151] sm:$0xff] %vm443, %v439
      %519 = vst.msk [vmem:[%s489 + $0x159] sm:$0xff] %vm443, %v440
      %520 = vst.msk [vmem:[%s489 + $0x169] sm:$0xff] %vm443, %v441
      %521 = vst.msk [vmem:[%s489 + $0x171] sm:$0xff] %vm443, %v442
      %v522 = vld [vmem:[%s3] sm:$0xf]
      %v523 = vld [vmem:[%s3 + $0x4] sm:$0x3]
      %v524 = vld [vmem:[#allocation2] sm:$0xff]
      %v525 = vld [vmem:[#allocation2 + $0x8] sm:$0xff]
      %v526 = vld [vmem:[#allocation2 + $0x18] sm:$0xff]
      %v527 = vld [vmem:[#allocation2 + $0x20] sm:$0xff]
      %v528 = vld [vmem:[#allocation2 + $0x30] sm:$0xff]
      %v529 = vld [vmem:[#allocation2 + $0x38] sm:$0xff]
      %v530 = vld [vmem:[#allocation2 + $0x48] sm:$0xff]
      %v531 = vld [vmem:[#allocation2 + $0x50] sm:$0xff]
      %v532 = vld [vmem:[#allocation2 + $0x60] sm:$0xff]
      %v533 = vld [vmem:[#allocation2 + $0x68] sm:$0xff]
      %v534 = vld [vmem:[#allocation2 + $0x78] sm:$0xff]
      %v535 = vld [vmem:[#allocation2 + $0x80] sm:$0xff]
      %v536 = vld [vmem:[#allocation2 + $0x90] sm:$0xff]
      %v537 = vld [vmem:[#allocation2 + $0x98] sm:$0xff]
      %v538 = vld [vmem:[#allocation2 + $0xa8] sm:$0xff]
      %v539 = vld [vmem:[#allocation2 + $0xb0] sm:$0xff]
      %v540 = vld [vmem:[#allocation2 + $0xc0] sm:$0xff]
      %v541 = vld [vmem:[#allocation2 + $0xc8] sm:$0xff]
      %v542 = vld [vmem:[#allocation2 + $0xd8] sm:$0xff]
      %v543 = vld [vmem:[#allocation2 + $0xe0] sm:$0xff]
      %v544 = vld [vmem:[#allocation2 + $0xf0] sm:$0xff]
      %v545 = vld [vmem:[#allocation2 + $0xf8] sm:$0xff]
      %v546 = vld [vmem:[#allocation2 + $0x108] sm:$0xff]
      %v547 = vld [vmem:[#allocation2 + $0x110] sm:$0xff]
      %v548 = vld [vmem:[#allocation2 + $0x120] sm:$0xff]
      %v549 = vld [vmem:[#allocation2 + $0x128] sm:$0xff]
      %v550 = vld [vmem:[#allocation2 + $0x138] sm:$0xff]
      %v551 = vld [vmem:[#allocation2 + $0x140] sm:$0xff]
      %v552 = vld [vmem:[#allocation2 + $0x150] sm:$0xff]
      %v553 = vld [vmem:[#allocation2 + $0x158] sm:$0xff]
      %v554 = vld [vmem:[#allocation2 + $0x168] sm:$0xff]
      %v555 = vld [vmem:[#allocation2 + $0x170] sm:$0xff]
      %v556 = vpack.c.bf16 %v525, %v524
      %v557 = vpack.c.bf16 %v527, %v526
      %v558 = vpack.c.bf16 %v529, %v528
      %v559 = vpack.c.bf16 %v531, %v530
      %v560 = vpack.c.bf16 %v533, %v532
      %v561 = vpack.c.bf16 %v535, %v534
      %v562 = vpack.c.bf16 %v537, %v536
      %v563 = vpack.c.bf16 %v539, %v538
      %v564 = vpack.c.bf16 %v541, %v540
      %v565 = vpack.c.bf16 %v543, %v542
      %v566 = vpack.c.bf16 %v545, %v544
      %v567 = vpack.c.bf16 %v547, %v546
      %v568 = vpack.c.bf16 %v549, %v548
      %v569 = vpack.c.bf16 %v551, %v550
      %v570 = vpack.c.bf16 %v553, %v552
      %v571 = vpack.c.bf16 %v555, %v554
      %v572 = vld [vmem:[#allocation2 + $0x1] sm:$0xff]
      %v573 = vld [vmem:[#allocation2 + $0x9] sm:$0xff]
      %v574 = vld [vmem:[#allocation2 + $0x19] sm:$0xff]
      %v575 = vld [vmem:[#allocation2 + $0x21] sm:$0xff]
      %v576 = vld [vmem:[#allocation2 + $0x31] sm:$0xff]
      %v577 = vld [vmem:[#allocation2 + $0x39] sm:$0xff]
      %v578 = vld [vmem:[#allocation2 + $0x49] sm:$0xff]
      %v579 = vld [vmem:[#allocation2 + $0x51] sm:$0xff]
      %v580 = vld [vmem:[#allocation2 + $0x61] sm:$0xff]
      %v581 = vld [vmem:[#allocation2 + $0x69] sm:$0xff]
      %v582 = vld [vmem:[#allocation2 + $0x79] sm:$0xff]
      %v583 = vld [vmem:[#allocation2 + $0x81] sm:$0xff]
      %v584 = vld [vmem:[#allocation2 + $0x91] sm:$0xff]
      %v585 = vld [vmem:[#allocation2 + $0x99] sm:$0xff]
      %v586 = vld [vmem:[#allocation2 + $0xa9] sm:$0xff]
      %v587 = vld [vmem:[#allocation2 + $0xb1] sm:$0xff]
      %v588 = vld [vmem:[#allocation2 + $0xc1] sm:$0xff]
      %v589 = vld [vmem:[#allocation2 + $0xc9] sm:$0xff]
      %v590 = vld [vmem:[#allocation2 + $0xd9] sm:$0xff]
      %v591 = vld [vmem:[#allocation2 + $0xe1] sm:$0xff]
      %v592 = vld [vmem:[#allocation2 + $0xf1] sm:$0xff]
      %v593 = vld [vmem:[#allocation2 + $0xf9] sm:$0xff]
      %v594 = vld [vmem:[#allocation2 + $0x109] sm:$0xff]
      %v595 = vld [vmem:[#allocation2 + $0x111] sm:$0xff]
      %v596 = vld [vmem:[#allocation2 + $0x121] sm:$0xff]
      %v597 = vld [vmem:[#allocation2 + $0x129] sm:$0xff]
      %v598 = vld [vmem:[#allocation2 + $0x139] sm:$0xff]
      %v599 = vld [vmem:[#allocation2 + $0x141] sm:$0xff]
      %v600 = vld [vmem:[#allocation2 + $0x151] sm:$0xff]
      %v601 = vld [vmem:[#allocation2 + $0x159] sm:$0xff]
      %v602 = vld [vmem:[#allocation2 + $0x169] sm:$0xff]
      %v603 = vld [vmem:[#allocation2 + $0x171] sm:$0xff]
      %v604 = vpack.c.bf16 %v573, %v572
      %v605 = vpack.c.bf16 %v575, %v574
      %v606 = vpack.c.bf16 %v577, %v576
      %v607 = vpack.c.bf16 %v579, %v578
      %v608 = vpack.c.bf16 %v581, %v580
      %v609 = vpack.c.bf16 %v583, %v582
      %v610 = vpack.c.bf16 %v585, %v584
      %v611 = vpack.c.bf16 %v587, %v586
      %v612 = vpack.c.bf16 %v589, %v588
      %v613 = vpack.c.bf16 %v591, %v590
      %v614 = vpack.c.bf16 %v593, %v592
      %v615 = vpack.c.bf16 %v595, %v594
      %v616 = vpack.c.bf16 %v597, %v596
      %v617 = vpack.c.bf16 %v599, %v598
      %v618 = vpack.c.bf16 %v601, %v600
      %v619 = vpack.c.bf16 %v603, %v602
      %v621 = vunpack.c.l.b16 %v522
      %v622 = vpack.c.b16 %v621, %v621
      %v623 = vrot.slane %v622, 2
      %v625 = vsel %vm443, %v604, 0
      %v628 = vsel %vm443, %v605, 0
      %v631 = vsel %vm443, %v606, 0
      %v634 = vsel %vm443, %v607, 0
      %v637 = vsel %vm443, %v608, 0
      %v640 = vsel %vm443, %v609, 0
      %v643 = vsel %vm443, %v610, 0
      %v646 = vsel %vm443, %v611, 0
      %v649 = vsel %vm443, %v612, 0
      %v652 = vsel %vm443, %v613, 0
      %v655 = vsel %vm443, %v614, 0
      %v658 = vsel %vm443, %v615, 0
      %v661 = vsel %vm443, %v616, 0
      %v664 = vsel %vm443, %v617, 0
      %v667 = vsel %vm443, %v618, 0
      %v670 = vsel %vm443, %v619, 0
      %vm672 = vcmask 1041408
      %v674 = vsel %vm672, %v623, 0
      %676 = vmatprep.subr.bf16.mxu0 0
      %677 = vmatpush1.bf16.msra.mxu0 %v674
      %678 = vmatprep.subr.bf16.mxu0 0
      %679 = vmatpush1.bf16.msra.mxu0 0
      %680 = vmatprep.subr.bf16.mxu0 0
      %681 = vmatpush1.bf16.msra.mxu0 0
      %682 = vmatprep.subr.bf16.mxu0 0
      %683 = vmatpush1.bf16.msra.mxu0 0
      %684 = vmatprep.subr.bf16.mxu0 0
      %685 = vmatpush1.bf16.msra.mxu0 0
      %686 = vmatprep.subr.bf16.mxu0 0
      %687 = vmatpush1.bf16.msra.mxu0 0
      %688 = vmatprep.subr.bf16.mxu0 0
      %689 = vmatpush1.bf16.msra.mxu0 0
      %690 = vmatprep.subr.bf16.mxu0 0
      %691 = vmatpush1.bf16.msra.mxu0 0
      %692 = vmatprep.subr.bf16.mxu0 0
      %693 = vmatpush1.bf16.msra.mxu0 0
      %694 = vmatprep.subr.bf16.mxu0 0
      %695 = vmatpush1.bf16.msra.mxu0 0
      %696 = vmatprep.subr.bf16.mxu0 0
      %697 = vmatpush1.bf16.msra.mxu0 0
      %698 = vmatprep.subr.bf16.mxu0 0
      %699 = vmatpush1.bf16.msra.mxu0 0
      %700 = vmatprep.subr.bf16.mxu0 0
      %701 = vmatpush1.bf16.msra.mxu0 0
      %702 = vmatprep.subr.bf16.mxu0 0
      %703 = vmatpush1.bf16.msra.mxu0 0
      %704 = vmatprep.subr.bf16.mxu0 0
      %705 = vmatpush1.bf16.msra.mxu0 0
      %706 = vmatprep.subr.bf16.mxu0 0
      %707 = vmatpush1.bf16.msra.mxu0 0
      %708 = vmatprep.mubr.bf16.mxu0 0
      %709 = vmatmul.mubr.bf16.gmra.mrb[0].mxu0 %v625
      %v710 = vpop.f32.mrb[0].mxu0
      %v711 = vadd.f32 0.0, %v710
      %v712 = vpop.f32.mrb[0].mxu0
      %v713 = vpop.f32.mrb[0].mxu0
      %v714 = vadd.f32 0.0, %v713
      %v715 = vpop.f32.mrb[0].mxu0
      %716 = vmatprep.mubr.bf16.mxu0 0
      %717 = vmatmul.mubr.bf16.gmra.mrb[0].mxu0 %v628
      %v718 = vpop.f32.mrb[0].mxu0
      %v719 = vadd.f32 0.0, %v718
      %v720 = vpop.f32.mrb[0].mxu0
      %v721 = vpop.f32.mrb[0].mxu0
      %v722 = vadd.f32 0.0, %v721
      %v723 = vpop.f32.mrb[0].mxu0
      %724 = vmatprep.mubr.bf16.mxu0 0
      %725 = vmatmul.mubr.bf16.gmra.mrb[0].mxu0 %v631
      %v726 = vpop.f32.mrb[0].mxu0
      %v727 = vadd.f32 0.0, %v726
      %v728 = vpop.f32.mrb[0].mxu0
      %v729 = vpop.f32.mrb[0].mxu0
      %v730 = vadd.f32 0.0, %v729
      %v731 = vpop.f32.mrb[0].mxu0
      %732 = vmatprep.mubr.bf16.mxu0 0
      %733 = vmatmul.mubr.bf16.gmra.mrb[0].mxu0 %v634
      %v734 = vpop.f32.mrb[0].mxu0
      %v735 = vadd.f32 0.0, %v734
      %v736 = vpop.f32.mrb[0].mxu0
      %v737 = vpop.f32.mrb[0].mxu0
      %v738 = vadd.f32 0.0, %v737
      %v739 = vpop.f32.mrb[0].mxu0
      %740 = vmatprep.mubr.bf16.mxu0 0
      %741 = vmatmul.mubr.bf16.gmra.mrb[0].mxu0 %v637
      %v742 = vpop.f32.mrb[0].mxu0
      %v743 = vadd.f32 0.0, %v742
      %v744 = vpop.f32.mrb[0].mxu0
      %v745 = vpop.f32.mrb[0].mxu0
      %v746 = vadd.f32 0.0, %v745
      %v747 = vpop.f32.mrb[0].mxu0
      %748 = vmatprep.mubr.bf16.mxu0 0
      %749 = vmatmul.mubr.bf16.gmra.mrb[0].mxu0 %v640
      %v750 = vpop.f32.mrb[0].mxu0
      %v751 = vadd.f32 0.0, %v750
      %v752 = vpop.f32.mrb[0].mxu0
      %v753 = vpop.f32.mrb[0].mxu0
      %v754 = vadd.f32 0.0, %v753
      %v755 = vpop.f32.mrb[0].mxu0
      %756 = vmatprep.mubr.bf16.mxu0 0
      %757 = vmatmul.mubr.bf16.gmra.mrb[0].mxu0 %v643
      %v758 = vpop.f32.mrb[0].mxu0
      %v759 = vadd.f32 0.0, %v758
      %v760 = vpop.f32.mrb[0].mxu0
      %v761 = vpop.f32.mrb[0].mxu0
      %v762 = vadd.f32 0.0, %v761
      %v763 = vpop.f32.mrb[0].mxu0
      %764 = vmatprep.mubr.bf16.mxu0 0
      %765 = vmatmul.mubr.bf16.gmra.mrb[0].mxu0 %v646
      %v766 = vpop.f32.mrb[0].mxu0
      %v767 = vadd.f32 0.0, %v766
      %v768 = vpop.f32.mrb[0].mxu0
      %v769 = vpop.f32.mrb[0].mxu0
      %v770 = vadd.f32 0.0, %v769
      %v771 = vpop.f32.mrb[0].mxu0
      %772 = vmatprep.mubr.bf16.mxu0 0
      %773 = vmatmul.mubr.bf16.gmra.mrb[0].mxu0 %v649
      %v774 = vpop.f32.mrb[0].mxu0
      %v775 = vadd.f32 0.0, %v774
      %v776 = vpop.f32.mrb[0].mxu0
      %v777 = vpop.f32.mrb[0].mxu0
      %v778 = vadd.f32 0.0, %v777
      %v779 = vpop.f32.mrb[0].mxu0
      %780 = vmatprep.mubr.bf16.mxu0 0
      %781 = vmatmul.mubr.bf16.gmra.mrb[0].mxu0 %v652
      %v782 = vpop.f32.mrb[0].mxu0
      %v783 = vadd.f32 0.0, %v782
      %v784 = vpop.f32.mrb[0].mxu0
      %v785 = vpop.f32.mrb[0].mxu0
      %v786 = vadd.f32 0.0, %v785
      %v787 = vpop.f32.mrb[0].mxu0
      %788 = vmatprep.mubr.bf16.mxu0 0
      %789 = vmatmul.mubr.bf16.gmra.mrb[0].mxu0 %v655
      %v790 = vpop.f32.mrb[0].mxu0
      %v791 = vadd.f32 0.0, %v790
      %v792 = vpop.f32.mrb[0].mxu0
      %v793 = vpop.f32.mrb[0].mxu0
      %v794 = vadd.f32 0.0, %v793
      %v795 = vpop.f32.mrb[0].mxu0
      %796 = vmatprep.mubr.bf16.mxu0 0
      %797 = vmatmul.mubr.bf16.gmra.mrb[0].mxu0 %v658
      %v798 = vpop.f32.mrb[0].mxu0
      %v799 = vadd.f32 0.0, %v798
      %v800 = vpop.f32.mrb[0].mxu0
      %v801 = vpop.f32.mrb[0].mxu0
      %v802 = vadd.f32 0.0, %v801
      %v803 = vpop.f32.mrb[0].mxu0
      %804 = vmatprep.mubr.bf16.mxu0 0
      %805 = vmatmul.mubr.bf16.gmra.mrb[0].mxu0 %v661
      %v806 = vpop.f32.mrb[0].mxu0
      %v807 = vadd.f32 0.0, %v806
      %v808 = vpop.f32.mrb[0].mxu0
      %v809 = vpop.f32.mrb[0].mxu0
      %v810 = vadd.f32 0.0, %v809
      %v811 = vpop.f32.mrb[0].mxu0
      %812 = vmatprep.mubr.bf16.mxu0 0
      %813 = vmatmul.mubr.bf16.gmra.mrb[0].mxu0 %v664
      %v814 = vpop.f32.mrb[0].mxu0
      %v815 = vadd.f32 0.0, %v814
      %v816 = vpop.f32.mrb[0].mxu0
      %v817 = vpop.f32.mrb[0].mxu0
      %v818 = vadd.f32 0.0, %v817
      %v819 = vpop.f32.mrb[0].mxu0
      %820 = vmatprep.mubr.bf16.mxu0 0
      %821 = vmatmul.mubr.bf16.gmra.mrb[0].mxu0 %v667
      %v822 = vpop.f32.mrb[0].mxu0
      %v823 = vadd.f32 0.0, %v822
      %v824 = vpop.f32.mrb[0].mxu0
      %v825 = vpop.f32.mrb[0].mxu0
      %v826 = vadd.f32 0.0, %v825
      %v827 = vpop.f32.mrb[0].mxu0
      %828 = vmatprep.mubr.bf16.mxu0 0
      %829 = vmatmul.mubr.bf16.gmra.mrb[0].mxu0 %v670
      %v830 = vpop.f32.mrb[0].mxu0
      %v831 = vadd.f32 0.0, %v830
      %v832 = vpop.f32.mrb[0].mxu0
      %v833 = vpop.f32.mrb[0].mxu0
      %v834 = vadd.f32 0.0, %v833
      %v835 = vpop.f32.mrb[0].mxu0
      %836 = vdwg.mxu0
      %v838 = vsel %vm443, %v556, 0
      %v841 = vsel %vm443, %v557, 0
      %v844 = vsel %vm443, %v558, 0
      %v847 = vsel %vm443, %v559, 0
      %v850 = vsel %vm443, %v560, 0
      %v853 = vsel %vm443, %v561, 0
      %v856 = vsel %vm443, %v562, 0
      %v859 = vsel %vm443, %v563, 0
      %v862 = vsel %vm443, %v564, 0
      %v865 = vsel %vm443, %v565, 0
      %v868 = vsel %vm443, %v566, 0
      %v871 = vsel %vm443, %v567, 0
      %v874 = vsel %vm443, %v568, 0
      %v877 = vsel %vm443, %v569, 0
      %v880 = vsel %vm443, %v570, 0
      %v883 = vsel %vm443, %v571, 0
      %v886 = vsel %vm672, %v522, 0
      %888 = vmatprep.subr.bf16.mxu0 0
      %889 = vmatpush1.bf16.msra.mxu0 %v886
      %890 = vmatprep.subr.bf16.mxu0 0
      %891 = vmatpush1.bf16.msra.mxu0 0
      %892 = vmatprep.subr.bf16.mxu0 0
      %893 = vmatpush1.bf16.msra.mxu0 0
      %894 = vmatprep.subr.bf16.mxu0 0
      %895 = vmatpush1.bf16.msra.mxu0 0
      %896 = vmatprep.subr.bf16.mxu0 0
      %897 = vmatpush1.bf16.msra.mxu0 0
      %898 = vmatprep.subr.bf16.mxu0 0
      %899 = vmatpush1.bf16.msra.mxu0 0
      %900 = vmatprep.subr.bf16.mxu0 0
      %901 = vmatpush1.bf16.msra.mxu0 0
      %902 = vmatprep.subr.bf16.mxu0 0
      %903 = vmatpush1.bf16.msra.mxu0 0
      %904 = vmatprep.subr.bf16.mxu0 0
      %905 = vmatpush1.bf16.msra.mxu0 0
      %906 = vmatprep.subr.bf16.mxu0 0
      %907 = vmatpush1.bf16.msra.mxu0 0
      %908 = vmatprep.subr.bf16.mxu0 0
      %909 = vmatpush1.bf16.msra.mxu0 0
      %910 = vmatprep.subr.bf16.mxu0 0
      %911 = vmatpush1.bf16.msra.mxu0 0
      %912 = vmatprep.subr.bf16.mxu0 0
      %913 = vmatpush1.bf16.msra.mxu0 0
      %914 = vmatprep.subr.bf16.mxu0 0
      %915 = vmatpush1.bf16.msra.mxu0 0
      %916 = vmatprep.subr.bf16.mxu0 0
      %917 = vmatpush1.bf16.msra.mxu0 0
      %918 = vmatprep.subr.bf16.mxu0 0
      %919 = vmatpush1.bf16.msra.mxu0 0
      %920 = vmatprep.mubr.bf16.mxu0 0
      %921 = vmatmul.mubr.bf16.gmra.mrb[0].mxu0 %v838
      %v922 = vpop.f32.mrb[0].mxu0
      %v923 = vadd.f32 %v711, %v922
      %v924 = vpop.f32.mrb[0].mxu0
      %v925 = vpop.f32.mrb[0].mxu0
      %v926 = vadd.f32 %v714, %v925
      %v927 = vpop.f32.mrb[0].mxu0
      %928 = vmatprep.mubr.bf16.mxu0 0
      %929 = vmatmul.mubr.bf16.gmra.mrb[0].mxu0 %v841
      %v930 = vpop.f32.mrb[0].mxu0
      %v931 = vadd.f32 %v719, %v930
      %v932 = vpop.f32.mrb[0].mxu0
      %v933 = vpop.f32.mrb[0].mxu0
      %v934 = vadd.f32 %v722, %v933
      %v935 = vpop.f32.mrb[0].mxu0
      %936 = vmatprep.mubr.bf16.mxu0 0
      %937 = vmatmul.mubr.bf16.gmra.mrb[0].mxu0 %v844
      %v938 = vpop.f32.mrb[0].mxu0
      %v939 = vadd.f32 %v727, %v938
      %v940 = vpop.f32.mrb[0].mxu0
      %v941 = vpop.f32.mrb[0].mxu0
      %v942 = vadd.f32 %v730, %v941
      %v943 = vpop.f32.mrb[0].mxu0
      %944 = vmatprep.mubr.bf16.mxu0 0
      %945 = vmatmul.mubr.bf16.gmra.mrb[0].mxu0 %v847
      %v946 = vpop.f32.mrb[0].mxu0
      %v947 = vadd.f32 %v735, %v946
      %v948 = vpop.f32.mrb[0].mxu0
      %v949 = vpop.f32.mrb[0].mxu0
      %v950 = vadd.f32 %v738, %v949
      %v951 = vpop.f32.mrb[0].mxu0
      %952 = vmatprep.mubr.bf16.mxu0 0
      %953 = vmatmul.mubr.bf16.gmra.mrb[0].mxu0 %v850
      %v954 = vpop.f32.mrb[0].mxu0
      %v955 = vadd.f32 %v743, %v954
      %v956 = vpop.f32.mrb[0].mxu0
      %v957 = vpop.f32.mrb[0].mxu0
      %v958 = vadd.f32 %v746, %v957
      %v959 = vpop.f32.mrb[0].mxu0
      %960 = vmatprep.mubr.bf16.mxu0 0
      %961 = vmatmul.mubr.bf16.gmra.mrb[0].mxu0 %v853
      %v962 = vpop.f32.mrb[0].mxu0
      %v963 = vadd.f32 %v751, %v962
      %v964 = vpop.f32.mrb[0].mxu0
      %v965 = vpop.f32.mrb[0].mxu0
      %v966 = vadd.f32 %v754, %v965
      %v967 = vpop.f32.mrb[0].mxu0
      %968 = vmatprep.mubr.bf16.mxu0 0
      %969 = vmatmul.mubr.bf16.gmra.mrb[0].mxu0 %v856
      %v970 = vpop.f32.mrb[0].mxu0
      %v971 = vadd.f32 %v759, %v970
      %v972 = vpop.f32.mrb[0].mxu0
      %v973 = vpop.f32.mrb[0].mxu0
      %v974 = vadd.f32 %v762, %v973
      %v975 = vpop.f32.mrb[0].mxu0
      %976 = vmatprep.mubr.bf16.mxu0 0
      %977 = vmatmul.mubr.bf16.gmra.mrb[0].mxu0 %v859
      %v978 = vpop.f32.mrb[0].mxu0
      %v979 = vadd.f32 %v767, %v978
      %v980 = vpop.f32.mrb[0].mxu0
      %v981 = vpop.f32.mrb[0].mxu0
      %v982 = vadd.f32 %v770, %v981
      %v983 = vpop.f32.mrb[0].mxu0
      %984 = vmatprep.mubr.bf16.mxu0 0
      %985 = vmatmul.mubr.bf16.gmra.mrb[0].mxu0 %v862
      %v986 = vpop.f32.mrb[0].mxu0
      %v987 = vadd.f32 %v775, %v986
      %v988 = vpop.f32.mrb[0].mxu0
      %v989 = vpop.f32.mrb[0].mxu0
      %v990 = vadd.f32 %v778, %v989
      %v991 = vpop.f32.mrb[0].mxu0
      %992 = vmatprep.mubr.bf16.mxu0 0
      %993 = vmatmul.mubr.bf16.gmra.mrb[0].mxu0 %v865
      %v994 = vpop.f32.mrb[0].mxu0
      %v995 = vadd.f32 %v783, %v994
      %v996 = vpop.f32.mrb[0].mxu0
      %v997 = vpop.f32.mrb[0].mxu0
      %v998 = vadd.f32 %v786, %v997
      %v999 = vpop.f32.mrb[0].mxu0
      %1000 = vmatprep.mubr.bf16.mxu0 0
      %1001 = vmatmul.mubr.bf16.gmra.mrb[0].mxu0 %v868
      %v1002 = vpop.f32.mrb[0].mxu0
      %v1003 = vadd.f32 %v791, %v1002
      %v1004 = vpop.f32.mrb[0].mxu0
      %v1005 = vpop.f32.mrb[0].mxu0
      %v1006 = vadd.f32 %v794, %v1005
      %v1007 = vpop.f32.mrb[0].mxu0
      %1008 = vmatprep.mubr.bf16.mxu0 0
      %1009 = vmatmul.mubr.bf16.gmra.mrb[0].mxu0 %v871
      %v1010 = vpop.f32.mrb[0].mxu0
      %v1011 = vadd.f32 %v799, %v1010
      %v1012 = vpop.f32.mrb[0].mxu0
      %v1013 = vpop.f32.mrb[0].mxu0
      %v1014 = vadd.f32 %v802, %v1013
      %v1015 = vpop.f32.mrb[0].mxu0
      %1016 = vmatprep.mubr.bf16.mxu0 0
      %1017 = vmatmul.mubr.bf16.gmra.mrb[0].mxu0 %v874
      %v1018 = vpop.f32.mrb[0].mxu0
      %v1019 = vadd.f32 %v807, %v1018
      %v1020 = vpop.f32.mrb[0].mxu0
      %v1021 = vpop.f32.mrb[0].mxu0
      %v1022 = vadd.f32 %v810, %v1021
      %v1023 = vpop.f32.mrb[0].mxu0
      %1024 = vmatprep.mubr.bf16.mxu0 0
      %1025 = vmatmul.mubr.bf16.gmra.mrb[0].mxu0 %v877
      %v1026 = vpop.f32.mrb[0].mxu0
      %v1027 = vadd.f32 %v815, %v1026
      %v1028 = vpop.f32.mrb[0].mxu0
      %v1029 = vpop.f32.mrb[0].mxu0
      %v1030 = vadd.f32 %v818, %v1029
      %v1031 = vpop.f32.mrb[0].mxu0
      %1032 = vmatprep.mubr.bf16.mxu0 0
      %1033 = vmatmul.mubr.bf16.gmra.mrb[0].mxu0 %v880
      %v1034 = vpop.f32.mrb[0].mxu0
      %v1035 = vadd.f32 %v823, %v1034
      %v1036 = vpop.f32.mrb[0].mxu0
      %v1037 = vpop.f32.mrb[0].mxu0
      %v1038 = vadd.f32 %v826, %v1037
      %v1039 = vpop.f32.mrb[0].mxu0
      %1040 = vmatprep.mubr.bf16.mxu0 0
      %1041 = vmatmul.mubr.bf16.gmra.mrb[0].mxu0 %v883
      %v1042 = vpop.f32.mrb[0].mxu0
      %v1043 = vadd.f32 %v831, %v1042
      %v1044 = vpop.f32.mrb[0].mxu0
      %v1045 = vpop.f32.mrb[0].mxu0
      %v1046 = vadd.f32 %v834, %v1045
      %v1047 = vpop.f32.mrb[0].mxu0
      %1048 = vdwg.mxu0
      %v1049 = vld [vmem:[#allocation2 + $0x2] sm:$0xff]
      %v1050 = vld [vmem:[#allocation2 + $0xa] sm:$0xff]
      %v1051 = vld [vmem:[#allocation2 + $0x1a] sm:$0xff]
      %v1052 = vld [vmem:[#allocation2 + $0x22] sm:$0xff]
      %v1053 = vld [vmem:[#allocation2 + $0x32] sm:$0xff]
      %v1054 = vld [vmem:[#allocation2 + $0x3a] sm:$0xff]
      %v1055 = vld [vmem:[#allocation2 + $0x4a] sm:$0xff]
      %v1056 = vld [vmem:[#allocation2 + $0x52] sm:$0xff]
      %v1057 = vld [vmem:[#allocation2 + $0x62] sm:$0xff]
      %v1058 = vld [vmem:[#allocation2 + $0x6a] sm:$0xff]
      %v1059 = vld [vmem:[#allocation2 + $0x7a] sm:$0xff]
      %v1060 = vld [vmem:[#allocation2 + $0x82] sm:$0xff]
      %v1061 = vld [vmem:[#allocation2 + $0x92] sm:$0xff]
      %v1062 = vld [vmem:[#allocation2 + $0x9a] sm:$0xff]
      %v1063 = vld [vmem:[#allocation2 + $0xaa] sm:$0xff]
      %v1064 = vld [vmem:[#allocation2 + $0xb2] sm:$0xff]
      %v1065 = vld [vmem:[#allocation2 + $0xc2] sm:$0xff]
      %v1066 = vld [vmem:[#allocation2 + $0xca] sm:$0xff]
      %v1067 = vld [vmem:[#allocation2 + $0xda] sm:$0xff]
      %v1068 = vld [vmem:[#allocation2 + $0xe2] sm:$0xff]
      %v1069 = vld [vmem:[#allocation2 + $0xf2] sm:$0xff]
      %v1070 = vld [vmem:[#allocation2 + $0xfa] sm:$0xff]
      %v1071 = vld [vmem:[#allocation2 + $0x10a] sm:$0xff]
      %v1072 = vld [vmem:[#allocation2 + $0x112] sm:$0xff]
      %v1073 = vld [vmem:[#allocation2 + $0x122] sm:$0xff]
      %v1074 = vld [vmem:[#allocation2 + $0x12a] sm:$0xff]
      %v1075 = vld [vmem:[#allocation2 + $0x13a] sm:$0xff]
      %v1076 = vld [vmem:[#allocation2 + $0x142] sm:$0xff]
      %v1077 = vld [vmem:[#allocation2 + $0x152] sm:$0xff]
      %v1078 = vld [vmem:[#allocation2 + $0x15a] sm:$0xff]
      %v1079 = vld [vmem:[#allocation2 + $0x16a] sm:$0xff]
      %v1080 = vld [vmem:[#allocation2 + $0x172] sm:$0xff]
      %v1081 = vpack.c.bf16 %v1050, %v1049
      %v1082 = vpack.c.bf16 %v1052, %v1051
      %v1083 = vpack.c.bf16 %v1054, %v1053
      %v1084 = vpack.c.bf16 %v1056, %v1055
      %v1085 = vpack.c.bf16 %v1058, %v1057
      %v1086 = vpack.c.bf16 %v1060, %v1059
      %v1087 = vpack.c.bf16 %v1062, %v1061
      %v1088 = vpack.c.bf16 %v1064, %v1063
      %v1089 = vpack.c.bf16 %v1066, %v1065
      %v1090 = vpack.c.bf16 %v1068, %v1067
      %v1091 = vpack.c.bf16 %v1070, %v1069
      %v1092 = vpack.c.bf16 %v1072, %v1071
      %v1093 = vpack.c.bf16 %v1074, %v1073
      %v1094 = vpack.c.bf16 %v1076, %v1075
      %v1095 = vpack.c.bf16 %v1078, %v1077
      %v1096 = vpack.c.bf16 %v1080, %v1079
      %v1098 = vsel %vm443, %v1081, 0
      %v1101 = vsel %vm443, %v1082, 0
      %v1104 = vsel %vm443, %v1083, 0
      %v1107 = vsel %vm443, %v1084, 0
      %v1110 = vsel %vm443, %v1085, 0
      %v1113 = vsel %vm443, %v1086, 0
      %v1116 = vsel %vm443, %v1087, 0
      %v1119 = vsel %vm443, %v1088, 0
      %v1122 = vsel %vm443, %v1089, 0
      %v1125 = vsel %vm443, %v1090, 0
      %v1128 = vsel %vm443, %v1091, 0
      %v1131 = vsel %vm443, %v1092, 0
      %v1134 = vsel %vm443, %v1093, 0
      %v1137 = vsel %vm443, %v1094, 0
      %v1140 = vsel %vm443, %v1095, 0
      %v1143 = vsel %vm443, %v1096, 0
      %v1146 = vsel %vm672, %v523, 0
      %1148 = vmatprep.subr.bf16.mxu0 0
      %1149 = vmatpush1.bf16.msra.mxu0 %v1146
      %1150 = vmatprep.subr.bf16.mxu0 0
      %1151 = vmatpush1.bf16.msra.mxu0 0
      %1152 = vmatprep.subr.bf16.mxu0 0
      %1153 = vmatpush1.bf16.msra.mxu0 0
      %1154 = vmatprep.subr.bf16.mxu0 0
      %1155 = vmatpush1.bf16.msra.mxu0 0
      %1156 = vmatprep.subr.bf16.mxu0 0
      %1157 = vmatpush1.bf16.msra.mxu0 0
      %1158 = vmatprep.subr.bf16.mxu0 0
      %1159 = vmatpush1.bf16.msra.mxu0 0
      %1160 = vmatprep.subr.bf16.mxu0 0
      %1161 = vmatpush1.bf16.msra.mxu0 0
      %1162 = vmatprep.subr.bf16.mxu0 0
      %1163 = vmatpush1.bf16.msra.mxu0 0
      %1164 = vmatprep.subr.bf16.mxu0 0
      %1165 = vmatpush1.bf16.msra.mxu0 0
      %1166 = vmatprep.subr.bf16.mxu0 0
      %1167 = vmatpush1.bf16.msra.mxu0 0
      %1168 = vmatprep.subr.bf16.mxu0 0
      %1169 = vmatpush1.bf16.msra.mxu0 0
      %1170 = vmatprep.subr.bf16.mxu0 0
      %1171 = vmatpush1.bf16.msra.mxu0 0
      %1172 = vmatprep.subr.bf16.mxu0 0
      %1173 = vmatpush1.bf16.msra.mxu0 0
      %1174 = vmatprep.subr.bf16.mxu0 0
      %1175 = vmatpush1.bf16.msra.mxu0 0
      %1176 = vmatprep.subr.bf16.mxu0 0
      %1177 = vmatpush1.bf16.msra.mxu0 0
      %1178 = vmatprep.subr.bf16.mxu0 0
      %1179 = vmatpush1.bf16.msra.mxu0 0
      %1180 = vmatprep.mubr.bf16.mxu0 0
      %1181 = vmatmul.mubr.bf16.gmra.mrb[0].mxu0 %v1098
      %v1182 = vpop.f32.mrb[0].mxu0
      %v1183 = vadd.f32 0.0, %v1182
      %v1184 = vpop.f32.mrb[0].mxu0
      %v1185 = vpop.f32.mrb[0].mxu0
      %v1186 = vadd.f32 0.0, %v1185
      %v1187 = vpop.f32.mrb[0].mxu0
      %1188 = vmatprep.mubr.bf16.mxu0 0
      %1189 = vmatmul.mubr.bf16.gmra.mrb[0].mxu0 %v1101
      %v1190 = vpop.f32.mrb[0].mxu0
      %v1191 = vadd.f32 0.0, %v1190
      %v1192 = vpop.f32.mrb[0].mxu0
      %v1193 = vpop.f32.mrb[0].mxu0
      %v1194 = vadd.f32 0.0, %v1193
      %v1195 = vpop.f32.mrb[0].mxu0
      %1196 = vmatprep.mubr.bf16.mxu0 0
      %1197 = vmatmul.mubr.bf16.gmra.mrb[0].mxu0 %v1104
      %v1198 = vpop.f32.mrb[0].mxu0
      %v1199 = vadd.f32 0.0, %v1198
      %v1200 = vpop.f32.mrb[0].mxu0
      %v1201 = vpop.f32.mrb[0].mxu0
      %v1202 = vadd.f32 0.0, %v1201
      %v1203 = vpop.f32.mrb[0].mxu0
      %1204 = vmatprep.mubr.bf16.mxu0 0
      %1205 = vmatmul.mubr.bf16.gmra.mrb[0].mxu0 %v1107
      %v1206 = vpop.f32.mrb[0].mxu0
      %v1207 = vadd.f32 0.0, %v1206
      %v1208 = vpop.f32.mrb[0].mxu0
      %v1209 = vpop.f32.mrb[0].mxu0
      %v1210 = vadd.f32 0.0, %v1209
      %v1211 = vpop.f32.mrb[0].mxu0
      %1212 = vmatprep.mubr.bf16.mxu0 0
      %1213 = vmatmul.mubr.bf16.gmra.mrb[0].mxu0 %v1110
      %v1214 = vpop.f32.mrb[0].mxu0
      %v1215 = vadd.f32 0.0, %v1214
      %v1216 = vpop.f32.mrb[0].mxu0
      %v1217 = vpop.f32.mrb[0].mxu0
      %v1218 = vadd.f32 0.0, %v1217
      %v1219 = vpop.f32.mrb[0].mxu0
      %1220 = vmatprep.mubr.bf16.mxu0 0
      %1221 = vmatmul.mubr.bf16.gmra.mrb[0].mxu0 %v1113
      %v1222 = vpop.f32.mrb[0].mxu0
      %v1223 = vadd.f32 0.0, %v1222
      %v1224 = vpop.f32.mrb[0].mxu0
      %v1225 = vpop.f32.mrb[0].mxu0
      %v1226 = vadd.f32 0.0, %v1225
      %v1227 = vpop.f32.mrb[0].mxu0
      %1228 = vmatprep.mubr.bf16.mxu0 0
      %1229 = vmatmul.mubr.bf16.gmra.mrb[0].mxu0 %v1116
      %v1230 = vpop.f32.mrb[0].mxu0
      %v1231 = vadd.f32 0.0, %v1230
      %v1232 = vpop.f32.mrb[0].mxu0
      %v1233 = vpop.f32.mrb[0].mxu0
      %v1234 = vadd.f32 0.0, %v1233
      %v1235 = vpop.f32.mrb[0].mxu0
      %1236 = vmatprep.mubr.bf16.mxu0 0
      %1237 = vmatmul.mubr.bf16.gmra.mrb[0].mxu0 %v1119
      %v1238 = vpop.f32.mrb[0].mxu0
      %v1239 = vadd.f32 0.0, %v1238
      %v1240 = vpop.f32.mrb[0].mxu0
      %v1241 = vpop.f32.mrb[0].mxu0
      %v1242 = vadd.f32 0.0, %v1241
      %v1243 = vpop.f32.mrb[0].mxu0
      %1244 = vmatprep.mubr.bf16.mxu0 0
      %1245 = vmatmul.mubr.bf16.gmra.mrb[0].mxu0 %v1122
      %v1246 = vpop.f32.mrb[0].mxu0
      %v1247 = vadd.f32 0.0, %v1246
      %v1248 = vpop.f32.mrb[0].mxu0
      %v1249 = vpop.f32.mrb[0].mxu0
      %v1250 = vadd.f32 0.0, %v1249
      %v1251 = vpop.f32.mrb[0].mxu0
      %1252 = vmatprep.mubr.bf16.mxu0 0
      %1253 = vmatmul.mubr.bf16.gmra.mrb[0].mxu0 %v1125
      %v1254 = vpop.f32.mrb[0].mxu0
      %v1255 = vadd.f32 0.0, %v1254
      %v1256 = vpop.f32.mrb[0].mxu0
      %v1257 = vpop.f32.mrb[0].mxu0
      %v1258 = vadd.f32 0.0, %v1257
      %v1259 = vpop.f32.mrb[0].mxu0
      %1260 = vmatprep.mubr.bf16.mxu0 0
      %1261 = vmatmul.mubr.bf16.gmra.mrb[0].mxu0 %v1128
      %v1262 = vpop.f32.mrb[0].mxu0
      %v1263 = vadd.f32 0.0, %v1262
      %v1264 = vpop.f32.mrb[0].mxu0
      %v1265 = vpop.f32.mrb[0].mxu0
      %v1266 = vadd.f32 0.0, %v1265
      %v1267 = vpop.f32.mrb[0].mxu0
      %1268 = vmatprep.mubr.bf16.mxu0 0
      %1269 = vmatmul.mubr.bf16.gmra.mrb[0].mxu0 %v1131
      %v1270 = vpop.f32.mrb[0].mxu0
      %v1271 = vadd.f32 0.0, %v1270
      %v1272 = vpop.f32.mrb[0].mxu0
      %v1273 = vpop.f32.mrb[0].mxu0
      %v1274 = vadd.f32 0.0, %v1273
      %v1275 = vpop.f32.mrb[0].mxu0
      %1276 = vmatprep.mubr.bf16.mxu0 0
      %1277 = vmatmul.mubr.bf16.gmra.mrb[0].mxu0 %v1134
      %v1278 = vpop.f32.mrb[0].mxu0
      %v1279 = vadd.f32 0.0, %v1278
      %v1280 = vpop.f32.mrb[0].mxu0
      %v1281 = vpop.f32.mrb[0].mxu0
      %v1282 = vadd.f32 0.0, %v1281
      %v1283 = vpop.f32.mrb[0].mxu0
      %1284 = vmatprep.mubr.bf16.mxu0 0
      %1285 = vmatmul.mubr.bf16.gmra.mrb[0].mxu0 %v1137
      %v1286 = vpop.f32.mrb[0].mxu0
      %v1287 = vadd.f32 0.0, %v1286
      %v1288 = vpop.f32.mrb[0].mxu0
      %v1289 = vpop.f32.mrb[0].mxu0
      %v1290 = vadd.f32 0.0, %v1289
      %v1291 = vpop.f32.mrb[0].mxu0
      %1292 = vmatprep.mubr.bf16.mxu0 0
      %1293 = vmatmul.mubr.bf16.gmra.mrb[0].mxu0 %v1140
      %v1294 = vpop.f32.mrb[0].mxu0
      %v1295 = vadd.f32 0.0, %v1294
      %v1296 = vpop.f32.mrb[0].mxu0
      %v1297 = vpop.f32.mrb[0].mxu0
      %v1298 = vadd.f32 0.0, %v1297
      %v1299 = vpop.f32.mrb[0].mxu0
      %1300 = vmatprep.mubr.bf16.mxu0 0
      %1301 = vmatmul.mubr.bf16.gmra.mrb[0].mxu0 %v1143
      %v1302 = vpop.f32.mrb[0].mxu0
      %v1303 = vadd.f32 0.0, %v1302
      %v1304 = vpop.f32.mrb[0].mxu0
      %v1305 = vpop.f32.mrb[0].mxu0
      %v1306 = vadd.f32 0.0, %v1305
      %v1307 = vpop.f32.mrb[0].mxu0
      %1308 = vdwg.mxu0
      %v1309 = vadd.f32 %v923, %v1183
      %v1310 = vadd.f32 %v926, %v1186
      %v1311 = vadd.f32 %v931, %v1191
      %v1312 = vadd.f32 %v934, %v1194
      %v1313 = vadd.f32 %v939, %v1199
      %v1314 = vadd.f32 %v942, %v1202
      %v1315 = vadd.f32 %v947, %v1207
      %v1316 = vadd.f32 %v950, %v1210
      %v1317 = vadd.f32 %v955, %v1215
      %v1318 = vadd.f32 %v958, %v1218
      %v1319 = vadd.f32 %v963, %v1223
      %v1320 = vadd.f32 %v966, %v1226
      %v1321 = vadd.f32 %v971, %v1231
      %v1322 = vadd.f32 %v974, %v1234
      %v1323 = vadd.f32 %v979, %v1239
      %v1324 = vadd.f32 %v982, %v1242
      %v1325 = vadd.f32 %v987, %v1247
      %v1326 = vadd.f32 %v990, %v1250
      %v1327 = vadd.f32 %v995, %v1255
      %v1328 = vadd.f32 %v998, %v1258
      %v1329 = vadd.f32 %v1003, %v1263
      %v1330 = vadd.f32 %v1006, %v1266
      %v1331 = vadd.f32 %v1011, %v1271
      %v1332 = vadd.f32 %v1014, %v1274
      %v1333 = vadd.f32 %v1019, %v1279
      %v1334 = vadd.f32 %v1022, %v1282
      %v1335 = vadd.f32 %v1027, %v1287
      %v1336 = vadd.f32 %v1030, %v1290
      %v1337 = vadd.f32 %v1035, %v1295
      %v1338 = vadd.f32 %v1038, %v1298
      %v1339 = vadd.f32 %v1043, %v1303
      %v1340 = vadd.f32 %v1046, %v1306
      %s1341 = scalar_lea.vmem %s3, 8
      %v1342 = vld [vmem:[%s1341] sm:$0xf]
      %v1343 = vld [vmem:[%s1341 + $0x4] sm:$0x3]
      %v1344 = vld [vmem:[%s489] sm:$0xff]
      %v1345 = vld [vmem:[%s489 + $0x8] sm:$0xff]
      %v1346 = vld [vmem:[%s489 + $0x18] sm:$0xff]
      %v1347 = vld [vmem:[%s489 + $0x20] sm:$0xff]
      %v1348 = vld [vmem:[%s489 + $0x30] sm:$0xff]
      %v1349 = vld [vmem:[%s489 + $0x38] sm:$0xff]
      %v1350 = vld [vmem:[%s489 + $0x48] sm:$0xff]
      %v1351 = vld [vmem:[%s489 + $0x50] sm:$0xff]
      %v1352 = vld [vmem:[%s489 + $0x60] sm:$0xff]
      %v1353 = vld [vmem:[%s489 + $0x68] sm:$0xff]
      %v1354 = vld [vmem:[%s489 + $0x78] sm:$0xff]
      %v1355 = vld [vmem:[%s489 + $0x80] sm:$0xff]
      %v1356 = vld [vmem:[%s489 + $0x90] sm:$0xff]
      %v1357 = vld [vmem:[%s489 + $0x98] sm:$0xff]
      %v1358 = vld [vmem:[%s489 + $0xa8] sm:$0xff]
      %v1359 = vld [vmem:[%s489 + $0xb0] sm:$0xff]
      %v1360 = vld [vmem:[%s489 + $0xc0] sm:$0xff]
      %v1361 = vld [vmem:[%s489 + $0xc8] sm:$0xff]
      %v1362 = vld [vmem:[%s489 + $0xd8] sm:$0xff]
      %v1363 = vld [vmem:[%s489 + $0xe0] sm:$0xff]
      %v1364 = vld [vmem:[%s489 + $0xf0] sm:$0xff]
      %v1365 = vld [vmem:[%s489 + $0xf8] sm:$0xff]
      %v1366 = vld [vmem:[%s489 + $0x108] sm:$0xff]
      %v1367 = vld [vmem:[%s489 + $0x110] sm:$0xff]
      %v1368 = vld [vmem:[%s489 + $0x120] sm:$0xff]
      %v1369 = vld [vmem:[%s489 + $0x128] sm:$0xff]
      %v1370 = vld [vmem:[%s489 + $0x138] sm:$0xff]
      %v1371 = vld [vmem:[%s489 + $0x140] sm:$0xff]
      %v1372 = vld [vmem:[%s489 + $0x150] sm:$0xff]
      %v1373 = vld [vmem:[%s489 + $0x158] sm:$0xff]
      %v1374 = vld [vmem:[%s489 + $0x168] sm:$0xff]
      %v1375 = vld [vmem:[%s489 + $0x170] sm:$0xff]
      %v1376 = vpack.c.bf16 %v1345, %v1344
      %v1377 = vpack.c.bf16 %v1347, %v1346
      %v1378 = vpack.c.bf16 %v1349, %v1348
      %v1379 = vpack.c.bf16 %v1351, %v1350
      %v1380 = vpack.c.bf16 %v1353, %v1352
      %v1381 = vpack.c.bf16 %v1355, %v1354
      %v1382 = vpack.c.bf16 %v1357, %v1356
      %v1383 = vpack.c.bf16 %v1359, %v1358
      %v1384 = vpack.c.bf16 %v1361, %v1360
      %v1385 = vpack.c.bf16 %v1363, %v1362
      %v1386 = vpack.c.bf16 %v1365, %v1364
      %v1387 = vpack.c.bf16 %v1367, %v1366
      %v1388 = vpack.c.bf16 %v1369, %v1368
      %v1389 = vpack.c.bf16 %v1371, %v1370
      %v1390 = vpack.c.bf16 %v1373, %v1372
      %v1391 = vpack.c.bf16 %v1375, %v1374
      %v1393 = vsel %vm443, %v1376, 0
      %v1396 = vsel %vm443, %v1377, 0
      %v1399 = vsel %vm443, %v1378, 0
      %v1402 = vsel %vm443, %v1379, 0
      %v1405 = vsel %vm443, %v1380, 0
      %v1408 = vsel %vm443, %v1381, 0
      %v1411 = vsel %vm443, %v1382, 0
      %v1414 = vsel %vm443, %v1383, 0
      %v1417 = vsel %vm443, %v1384, 0
      %v1420 = vsel %vm443, %v1385, 0
      %v1423 = vsel %vm443, %v1386, 0
      %v1426 = vsel %vm443, %v1387, 0
      %v1429 = vsel %vm443, %v1388, 0
      %v1432 = vsel %vm443, %v1389, 0
      %v1435 = vsel %vm443, %v1390, 0
      %v1438 = vsel %vm443, %v1391, 0
      %v1441 = vsel %vm672, %v1342, 0
      %1443 = vmatprep.subr.bf16.mxu0 0
      %1444 = vmatpush1.bf16.msra.mxu0 %v1441
      %1445 = vmatprep.subr.bf16.mxu0 0
      %1446 = vmatpush1.bf16.msra.mxu0 0
      %1447 = vmatprep.subr.bf16.mxu0 0
      %1448 = vmatpush1.bf16.msra.mxu0 0
      %1449 = vmatprep.subr.bf16.mxu0 0
      %1450 = vmatpush1.bf16.msra.mxu0 0
      %1451 = vmatprep.subr.bf16.mxu0 0
      %1452 = vmatpush1.bf16.msra.mxu0 0
      %1453 = vmatprep.subr.bf16.mxu0 0
      %1454 = vmatpush1.bf16.msra.mxu0 0
      %1455 = vmatprep.subr.bf16.mxu0 0
      %1456 = vmatpush1.bf16.msra.mxu0 0
      %1457 = vmatprep.subr.bf16.mxu0 0
      %1458 = vmatpush1.bf16.msra.mxu0 0
      %1459 = vmatprep.subr.bf16.mxu0 0
      %1460 = vmatpush1.bf16.msra.mxu0 0
      %1461 = vmatprep.subr.bf16.mxu0 0
      %1462 = vmatpush1.bf16.msra.mxu0 0
      %1463 = vmatprep.subr.bf16.mxu0 0
      %1464 = vmatpush1.bf16.msra.mxu0 0
      %1465 = vmatprep.subr.bf16.mxu0 0
      %1466 = vmatpush1.bf16.msra.mxu0 0
      %1467 = vmatprep.subr.bf16.mxu0 0
      %1468 = vmatpush1.bf16.msra.mxu0 0
      %1469 = vmatprep.subr.bf16.mxu0 0
      %1470 = vmatpush1.bf16.msra.mxu0 0
      %1471 = vmatprep.subr.bf16.mxu0 0
      %1472 = vmatpush1.bf16.msra.mxu0 0
      %1473 = vmatprep.subr.bf16.mxu0 0
      %1474 = vmatpush1.bf16.msra.mxu0 0
      %1475 = vmatprep.mubr.bf16.mxu0 0
      %1476 = vmatmul.mubr.bf16.gmra.mrb[0].mxu0 %v1393
      %v1477 = vpop.f32.mrb[0].mxu0
      %v1478 = vadd.f32 0.0, %v1477
      %v1479 = vpop.f32.mrb[0].mxu0
      %v1480 = vpop.f32.mrb[0].mxu0
      %v1481 = vadd.f32 0.0, %v1480
      %v1482 = vpop.f32.mrb[0].mxu0
      %1483 = vmatprep.mubr.bf16.mxu0 0
      %1484 = vmatmul.mubr.bf16.gmra.mrb[0].mxu0 %v1396
      %v1485 = vpop.f32.mrb[0].mxu0
      %v1486 = vadd.f32 0.0, %v1485
      %v1487 = vpop.f32.mrb[0].mxu0
      %v1488 = vpop.f32.mrb[0].mxu0
      %v1489 = vadd.f32 0.0, %v1488
      %v1490 = vpop.f32.mrb[0].mxu0
      %1491 = vmatprep.mubr.bf16.mxu0 0
      %1492 = vmatmul.mubr.bf16.gmra.mrb[0].mxu0 %v1399
      %v1493 = vpop.f32.mrb[0].mxu0
      %v1494 = vadd.f32 0.0, %v1493
      %v1495 = vpop.f32.mrb[0].mxu0
      %v1496 = vpop.f32.mrb[0].mxu0
      %v1497 = vadd.f32 0.0, %v1496
      %v1498 = vpop.f32.mrb[0].mxu0
      %1499 = vmatprep.mubr.bf16.mxu0 0
      %1500 = vmatmul.mubr.bf16.gmra.mrb[0].mxu0 %v1402
      %v1501 = vpop.f32.mrb[0].mxu0
      %v1502 = vadd.f32 0.0, %v1501
      %v1503 = vpop.f32.mrb[0].mxu0
      %v1504 = vpop.f32.mrb[0].mxu0
      %v1505 = vadd.f32 0.0, %v1504
      %v1506 = vpop.f32.mrb[0].mxu0
      %1507 = vmatprep.mubr.bf16.mxu0 0
      %1508 = vmatmul.mubr.bf16.gmra.mrb[0].mxu0 %v1405
      %v1509 = vpop.f32.mrb[0].mxu0
      %v1510 = vadd.f32 0.0, %v1509
      %v1511 = vpop.f32.mrb[0].mxu0
      %v1512 = vpop.f32.mrb[0].mxu0
      %v1513 = vadd.f32 0.0, %v1512
      %v1514 = vpop.f32.mrb[0].mxu0
      %1515 = vmatprep.mubr.bf16.mxu0 0
      %1516 = vmatmul.mubr.bf16.gmra.mrb[0].mxu0 %v1408
      %v1517 = vpop.f32.mrb[0].mxu0
      %v1518 = vadd.f32 0.0, %v1517
      %v1519 = vpop.f32.mrb[0].mxu0
      %v1520 = vpop.f32.mrb[0].mxu0
      %v1521 = vadd.f32 0.0, %v1520
      %v1522 = vpop.f32.mrb[0].mxu0
      %1523 = vmatprep.mubr.bf16.mxu0 0
      %1524 = vmatmul.mubr.bf16.gmra.mrb[0].mxu0 %v1411
      %v1525 = vpop.f32.mrb[0].mxu0
      %v1526 = vadd.f32 0.0, %v1525
      %v1527 = vpop.f32.mrb[0].mxu0
      %v1528 = vpop.f32.mrb[0].mxu0
      %v1529 = vadd.f32 0.0, %v1528
      %v1530 = vpop.f32.mrb[0].mxu0
      %1531 = vmatprep.mubr.bf16.mxu0 0
      %1532 = vmatmul.mubr.bf16.gmra.mrb[0].mxu0 %v1414
      %v1533 = vpop.f32.mrb[0].mxu0
      %v1534 = vadd.f32 0.0, %v1533
      %v1535 = vpop.f32.mrb[0].mxu0
      %v1536 = vpop.f32.mrb[0].mxu0
      %v1537 = vadd.f32 0.0, %v1536
      %v1538 = vpop.f32.mrb[0].mxu0
      %1539 = vmatprep.mubr.bf16.mxu0 0
      %1540 = vmatmul.mubr.bf16.gmra.mrb[0].mxu0 %v1417
      %v1541 = vpop.f32.mrb[0].mxu0
      %v1542 = vadd.f32 0.0, %v1541
      %v1543 = vpop.f32.mrb[0].mxu0
      %v1544 = vpop.f32.mrb[0].mxu0
      %v1545 = vadd.f32 0.0, %v1544
      %v1546 = vpop.f32.mrb[0].mxu0
      %1547 = vmatprep.mubr.bf16.mxu0 0
      %1548 = vmatmul.mubr.bf16.gmra.mrb[0].mxu0 %v1420
      %v1549 = vpop.f32.mrb[0].mxu0
      %v1550 = vadd.f32 0.0, %v1549
      %v1551 = vpop.f32.mrb[0].mxu0
      %v1552 = vpop.f32.mrb[0].mxu0
      %v1553 = vadd.f32 0.0, %v1552
      %v1554 = vpop.f32.mrb[0].mxu0
      %1555 = vmatprep.mubr.bf16.mxu0 0
      %1556 = vmatmul.mubr.bf16.gmra.mrb[0].mxu0 %v1423
      %v1557 = vpop.f32.mrb[0].mxu0
      %v1558 = vadd.f32 0.0, %v1557
      %v1559 = vpop.f32.mrb[0].mxu0
      %v1560 = vpop.f32.mrb[0].mxu0
      %v1561 = vadd.f32 0.0, %v1560
      %v1562 = vpop.f32.mrb[0].mxu0
      %1563 = vmatprep.mubr.bf16.mxu0 0
      %1564 = vmatmul.mubr.bf16.gmra.mrb[0].mxu0 %v1426
      %v1565 = vpop.f32.mrb[0].mxu0
      %v1566 = vadd.f32 0.0, %v1565
      %v1567 = vpop.f32.mrb[0].mxu0
      %v1568 = vpop.f32.mrb[0].mxu0
      %v1569 = vadd.f32 0.0, %v1568
      %v1570 = vpop.f32.mrb[0].mxu0
      %1571 = vmatprep.mubr.bf16.mxu0 0
      %1572 = vmatmul.mubr.bf16.gmra.mrb[0].mxu0 %v1429
      %v1573 = vpop.f32.mrb[0].mxu0
      %v1574 = vadd.f32 0.0, %v1573
      %v1575 = vpop.f32.mrb[0].mxu0
      %v1576 = vpop.f32.mrb[0].mxu0
      %v1577 = vadd.f32 0.0, %v1576
      %v1578 = vpop.f32.mrb[0].mxu0
      %1579 = vmatprep.mubr.bf16.mxu0 0
      %1580 = vmatmul.mubr.bf16.gmra.mrb[0].mxu0 %v1432
      %v1581 = vpop.f32.mrb[0].mxu0
      %v1582 = vadd.f32 0.0, %v1581
      %v1583 = vpop.f32.mrb[0].mxu0
      %v1584 = vpop.f32.mrb[0].mxu0
      %v1585 = vadd.f32 0.0, %v1584
      %v1586 = vpop.f32.mrb[0].mxu0
      %1587 = vmatprep.mubr.bf16.mxu0 0
      %1588 = vmatmul.mubr.bf16.gmra.mrb[0].mxu0 %v1435
      %v1589 = vpop.f32.mrb[0].mxu0
      %v1590 = vadd.f32 0.0, %v1589
      %v1591 = vpop.f32.mrb[0].mxu0
      %v1592 = vpop.f32.mrb[0].mxu0
      %v1593 = vadd.f32 0.0, %v1592
      %v1594 = vpop.f32.mrb[0].mxu0
      %1595 = vmatprep.mubr.bf16.mxu0 0
      %1596 = vmatmul.mubr.bf16.gmra.mrb[0].mxu0 %v1438
      %v1597 = vpop.f32.mrb[0].mxu0
      %v1598 = vadd.f32 0.0, %v1597
      %v1599 = vpop.f32.mrb[0].mxu0
      %v1600 = vpop.f32.mrb[0].mxu0
      %v1601 = vadd.f32 0.0, %v1600
      %v1602 = vpop.f32.mrb[0].mxu0
      %1603 = vdwg.mxu0
      %v1604 = vadd.f32 %v1309, %v1478
      %v1605 = vadd.f32 %v1310, %v1481
      %v1606 = vadd.f32 %v1311, %v1486
      %v1607 = vadd.f32 %v1312, %v1489
      %v1608 = vadd.f32 %v1313, %v1494
      %v1609 = vadd.f32 %v1314, %v1497
      %v1610 = vadd.f32 %v1315, %v1502
      %v1611 = vadd.f32 %v1316, %v1505
      %v1612 = vadd.f32 %v1317, %v1510
      %v1613 = vadd.f32 %v1318, %v1513
      %v1614 = vadd.f32 %v1319, %v1518
      %v1615 = vadd.f32 %v1320, %v1521
      %v1616 = vadd.f32 %v1321, %v1526
      %v1617 = vadd.f32 %v1322, %v1529
      %v1618 = vadd.f32 %v1323, %v1534
      %v1619 = vadd.f32 %v1324, %v1537
      %v1620 = vadd.f32 %v1325, %v1542
      %v1621 = vadd.f32 %v1326, %v1545
      %v1622 = vadd.f32 %v1327, %v1550
      %v1623 = vadd.f32 %v1328, %v1553
      %v1624 = vadd.f32 %v1329, %v1558
      %v1625 = vadd.f32 %v1330, %v1561
      %v1626 = vadd.f32 %v1331, %v1566
      %v1627 = vadd.f32 %v1332, %v1569
      %v1628 = vadd.f32 %v1333, %v1574
      %v1629 = vadd.f32 %v1334, %v1577
      %v1630 = vadd.f32 %v1335, %v1582
      %v1631 = vadd.f32 %v1336, %v1585
      %v1632 = vadd.f32 %v1337, %v1590
      %v1633 = vadd.f32 %v1338, %v1593
      %v1634 = vadd.f32 %v1339, %v1598
      %v1635 = vadd.f32 %v1340, %v1601
      %v1636 = vld [vmem:[%s489 + $0x1] sm:$0xff]
      %v1637 = vld [vmem:[%s489 + $0x9] sm:$0xff]
      %v1638 = vld [vmem:[%s489 + $0x19] sm:$0xff]
      %v1639 = vld [vmem:[%s489 + $0x21] sm:$0xff]
      %v1640 = vld [vmem:[%s489 + $0x31] sm:$0xff]
      %v1641 = vld [vmem:[%s489 + $0x39] sm:$0xff]
      %v1642 = vld [vmem:[%s489 + $0x49] sm:$0xff]
      %v1643 = vld [vmem:[%s489 + $0x51] sm:$0xff]
      %v1644 = vld [vmem:[%s489 + $0x61] sm:$0xff]
      %v1645 = vld [vmem:[%s489 + $0x69] sm:$0xff]
      %v1646 = vld [vmem:[%s489 + $0x79] sm:$0xff]
      %v1647 = vld [vmem:[%s489 + $0x81] sm:$0xff]
      %v1648 = vld [vmem:[%s489 + $0x91] sm:$0xff]
      %v1649 = vld [vmem:[%s489 + $0x99] sm:$0xff]
      %v1650 = vld [vmem:[%s489 + $0xa9] sm:$0xff]
      %v1651 = vld [vmem:[%s489 + $0xb1] sm:$0xff]
      %v1652 = vld [vmem:[%s489 + $0xc1] sm:$0xff]
      %v1653 = vld [vmem:[%s489 + $0xc9] sm:$0xff]
      %v1654 = vld [vmem:[%s489 + $0xd9] sm:$0xff]
      %v1655 = vld [vmem:[%s489 + $0xe1] sm:$0xff]
      %v1656 = vld [vmem:[%s489 + $0xf1] sm:$0xff]
      %v1657 = vld [vmem:[%s489 + $0xf9] sm:$0xff]
      %v1658 = vld [vmem:[%s489 + $0x109] sm:$0xff]
      %v1659 = vld [vmem:[%s489 + $0x111] sm:$0xff]
      %v1660 = vld [vmem:[%s489 + $0x121] sm:$0xff]
      %v1661 = vld [vmem:[%s489 + $0x129] sm:$0xff]
      %v1662 = vld [vmem:[%s489 + $0x139] sm:$0xff]
      %v1663 = vld [vmem:[%s489 + $0x141] sm:$0xff]
      %v1664 = vld [vmem:[%s489 + $0x151] sm:$0xff]
      %v1665 = vld [vmem:[%s489 + $0x159] sm:$0xff]
      %v1666 = vld [vmem:[%s489 + $0x169] sm:$0xff]
      %v1667 = vld [vmem:[%s489 + $0x171] sm:$0xff]
      %v1668 = vpack.c.bf16 %v1637, %v1636
      %v1669 = vpack.c.bf16 %v1639, %v1638
      %v1670 = vpack.c.bf16 %v1641, %v1640
      %v1671 = vpack.c.bf16 %v1643, %v1642
      %v1672 = vpack.c.bf16 %v1645, %v1644
      %v1673 = vpack.c.bf16 %v1647, %v1646
      %v1674 = vpack.c.bf16 %v1649, %v1648
      %v1675 = vpack.c.bf16 %v1651, %v1650
      %v1676 = vpack.c.bf16 %v1653, %v1652
      %v1677 = vpack.c.bf16 %v1655, %v1654
      %v1678 = vpack.c.bf16 %v1657, %v1656
      %v1679 = vpack.c.bf16 %v1659, %v1658
      %v1680 = vpack.c.bf16 %v1661, %v1660
      %v1681 = vpack.c.bf16 %v1663, %v1662
      %v1682 = vpack.c.bf16 %v1665, %v1664
      %v1683 = vpack.c.bf16 %v1667, %v1666
      %v1685 = vunpack.c.l.b16 %v1342
      %v1686 = vpack.c.b16 %v1685, %v1685
      %v1687 = vrot.slane %v1686, 2
      %v1689 = vsel %vm443, %v1668, 0
      %v1692 = vsel %vm443, %v1669, 0
      %v1695 = vsel %vm443, %v1670, 0
      %v1698 = vsel %vm443, %v1671, 0
      %v1701 = vsel %vm443, %v1672, 0
      %v1704 = vsel %vm443, %v1673, 0
      %v1707 = vsel %vm443, %v1674, 0
      %v1710 = vsel %vm443, %v1675, 0
      %v1713 = vsel %vm443, %v1676, 0
      %v1716 = vsel %vm443, %v1677, 0
      %v1719 = vsel %vm443, %v1678, 0
      %v1722 = vsel %vm443, %v1679, 0
      %v1725 = vsel %vm443, %v1680, 0
      %v1728 = vsel %vm443, %v1681, 0
      %v1731 = vsel %vm443, %v1682, 0
      %v1734 = vsel %vm443, %v1683, 0
      %v1737 = vsel %vm672, %v1687, 0
      %1739 = vmatprep.subr.bf16.mxu0 0
      %1740 = vmatpush1.bf16.msra.mxu0 %v1737
      %1741 = vmatprep.subr.bf16.mxu0 0
      %1742 = vmatpush1.bf16.msra.mxu0 0
      %1743 = vmatprep.subr.bf16.mxu0 0
      %1744 = vmatpush1.bf16.msra.mxu0 0
      %1745 = vmatprep.subr.bf16.mxu0 0
      %1746 = vmatpush1.bf16.msra.mxu0 0
      %1747 = vmatprep.subr.bf16.mxu0 0
      %1748 = vmatpush1.bf16.msra.mxu0 0
      %1749 = vmatprep.subr.bf16.mxu0 0
      %1750 = vmatpush1.bf16.msra.mxu0 0
      %1751 = vmatprep.subr.bf16.mxu0 0
      %1752 = vmatpush1.bf16.msra.mxu0 0
      %1753 = vmatprep.subr.bf16.mxu0 0
      %1754 = vmatpush1.bf16.msra.mxu0 0
      %1755 = vmatprep.subr.bf16.mxu0 0
      %1756 = vmatpush1.bf16.msra.mxu0 0
      %1757 = vmatprep.subr.bf16.mxu0 0
      %1758 = vmatpush1.bf16.msra.mxu0 0
      %1759 = vmatprep.subr.bf16.mxu0 0
      %1760 = vmatpush1.bf16.msra.mxu0 0
      %1761 = vmatprep.subr.bf16.mxu0 0
      %1762 = vmatpush1.bf16.msra.mxu0 0
      %1763 = vmatprep.subr.bf16.mxu0 0
      %1764 = vmatpush1.bf16.msra.mxu0 0
      %1765 = vmatprep.subr.bf16.mxu0 0
      %1766 = vmatpush1.bf16.msra.mxu0 0
      %1767 = vmatprep.subr.bf16.mxu0 0
      %1768 = vmatpush1.bf16.msra.mxu0 0
      %1769 = vmatprep.subr.bf16.mxu0 0
      %1770 = vmatpush1.bf16.msra.mxu0 0
      %1771 = vmatprep.mubr.bf16.mxu0 0
      %1772 = vmatmul.mubr.bf16.gmra.mrb[0].mxu0 %v1689
      %v1773 = vpop.f32.mrb[0].mxu0
      %v1774 = vadd.f32 0.0, %v1773
      %v1775 = vpop.f32.mrb[0].mxu0
      %v1776 = vpop.f32.mrb[0].mxu0
      %v1777 = vadd.f32 0.0, %v1776
      %v1778 = vpop.f32.mrb[0].mxu0
      %1779 = vmatprep.mubr.bf16.mxu0 0
      %1780 = vmatmul.mubr.bf16.gmra.mrb[0].mxu0 %v1692
      %v1781 = vpop.f32.mrb[0].mxu0
      %v1782 = vadd.f32 0.0, %v1781
      %v1783 = vpop.f32.mrb[0].mxu0
      %v1784 = vpop.f32.mrb[0].mxu0
      %v1785 = vadd.f32 0.0, %v1784
      %v1786 = vpop.f32.mrb[0].mxu0
      %1787 = vmatprep.mubr.bf16.mxu0 0
      %1788 = vmatmul.mubr.bf16.gmra.mrb[0].mxu0 %v1695
      %v1789 = vpop.f32.mrb[0].mxu0
      %v1790 = vadd.f32 0.0, %v1789
      %v1791 = vpop.f32.mrb[0].mxu0
      %v1792 = vpop.f32.mrb[0].mxu0
      %v1793 = vadd.f32 0.0, %v1792
      %v1794 = vpop.f32.mrb[0].mxu0
      %1795 = vmatprep.mubr.bf16.mxu0 0
      %1796 = vmatmul.mubr.bf16.gmra.mrb[0].mxu0 %v1698
      %v1797 = vpop.f32.mrb[0].mxu0
      %v1798 = vadd.f32 0.0, %v1797
      %v1799 = vpop.f32.mrb[0].mxu0
      %v1800 = vpop.f32.mrb[0].mxu0
      %v1801 = vadd.f32 0.0, %v1800
      %v1802 = vpop.f32.mrb[0].mxu0
      %1803 = vmatprep.mubr.bf16.mxu0 0
      %1804 = vmatmul.mubr.bf16.gmra.mrb[0].mxu0 %v1701
      %v1805 = vpop.f32.mrb[0].mxu0
      %v1806 = vadd.f32 0.0, %v1805
      %v1807 = vpop.f32.mrb[0].mxu0
      %v1808 = vpop.f32.mrb[0].mxu0
      %v1809 = vadd.f32 0.0, %v1808
      %v1810 = vpop.f32.mrb[0].mxu0
      %1811 = vmatprep.mubr.bf16.mxu0 0
      %1812 = vmatmul.mubr.bf16.gmra.mrb[0].mxu0 %v1704
      %v1813 = vpop.f32.mrb[0].mxu0
      %v1814 = vadd.f32 0.0, %v1813
      %v1815 = vpop.f32.mrb[0].mxu0
      %v1816 = vpop.f32.mrb[0].mxu0
      %v1817 = vadd.f32 0.0, %v1816
      %v1818 = vpop.f32.mrb[0].mxu0
      %1819 = vmatprep.mubr.bf16.mxu0 0
      %1820 = vmatmul.mubr.bf16.gmra.mrb[0].mxu0 %v1707
      %v1821 = vpop.f32.mrb[0].mxu0
      %v1822 = vadd.f32 0.0, %v1821
      %v1823 = vpop.f32.mrb[0].mxu0
      %v1824 = vpop.f32.mrb[0].mxu0
      %v1825 = vadd.f32 0.0, %v1824
      %v1826 = vpop.f32.mrb[0].mxu0
      %1827 = vmatprep.mubr.bf16.mxu0 0
      %1828 = vmatmul.mubr.bf16.gmra.mrb[0].mxu0 %v1710
      %v1829 = vpop.f32.mrb[0].mxu0
      %v1830 = vadd.f32 0.0, %v1829
      %v1831 = vpop.f32.mrb[0].mxu0
      %v1832 = vpop.f32.mrb[0].mxu0
      %v1833 = vadd.f32 0.0, %v1832
      %v1834 = vpop.f32.mrb[0].mxu0
      %1835 = vmatprep.mubr.bf16.mxu0 0
      %1836 = vmatmul.mubr.bf16.gmra.mrb[0].mxu0 %v1713
      %v1837 = vpop.f32.mrb[0].mxu0
      %v1838 = vadd.f32 0.0, %v1837
      %v1839 = vpop.f32.mrb[0].mxu0
      %v1840 = vpop.f32.mrb[0].mxu0
      %v1841 = vadd.f32 0.0, %v1840
      %v1842 = vpop.f32.mrb[0].mxu0
      %1843 = vmatprep.mubr.bf16.mxu0 0
      %1844 = vmatmul.mubr.bf16.gmra.mrb[0].mxu0 %v1716
      %v1845 = vpop.f32.mrb[0].mxu0
      %v1846 = vadd.f32 0.0, %v1845
      %v1847 = vpop.f32.mrb[0].mxu0
      %v1848 = vpop.f32.mrb[0].mxu0
      %v1849 = vadd.f32 0.0, %v1848
      %v1850 = vpop.f32.mrb[0].mxu0
      %1851 = vmatprep.mubr.bf16.mxu0 0
      %1852 = vmatmul.mubr.bf16.gmra.mrb[0].mxu0 %v1719
      %v1853 = vpop.f32.mrb[0].mxu0
      %v1854 = vadd.f32 0.0, %v1853
      %v1855 = vpop.f32.mrb[0].mxu0
      %v1856 = vpop.f32.mrb[0].mxu0
      %v1857 = vadd.f32 0.0, %v1856
      %v1858 = vpop.f32.mrb[0].mxu0
      %1859 = vmatprep.mubr.bf16.mxu0 0
      %1860 = vmatmul.mubr.bf16.gmra.mrb[0].mxu0 %v1722
      %v1861 = vpop.f32.mrb[0].mxu0
      %v1862 = vadd.f32 0.0, %v1861
      %v1863 = vpop.f32.mrb[0].mxu0
      %v1864 = vpop.f32.mrb[0].mxu0
      %v1865 = vadd.f32 0.0, %v1864
      %v1866 = vpop.f32.mrb[0].mxu0
      %1867 = vmatprep.mubr.bf16.mxu0 0
      %1868 = vmatmul.mubr.bf16.gmra.mrb[0].mxu0 %v1725
      %v1869 = vpop.f32.mrb[0].mxu0
      %v1870 = vadd.f32 0.0, %v1869
      %v1871 = vpop.f32.mrb[0].mxu0
      %v1872 = vpop.f32.mrb[0].mxu0
      %v1873 = vadd.f32 0.0, %v1872
      %v1874 = vpop.f32.mrb[0].mxu0
      %1875 = vmatprep.mubr.bf16.mxu0 0
      %1876 = vmatmul.mubr.bf16.gmra.mrb[0].mxu0 %v1728
      %v1877 = vpop.f32.mrb[0].mxu0
      %v1878 = vadd.f32 0.0, %v1877
      %v1879 = vpop.f32.mrb[0].mxu0
      %v1880 = vpop.f32.mrb[0].mxu0
      %v1881 = vadd.f32 0.0, %v1880
      %v1882 = vpop.f32.mrb[0].mxu0
      %1883 = vmatprep.mubr.bf16.mxu0 0
      %1884 = vmatmul.mubr.bf16.gmra.mrb[0].mxu0 %v1731
      %v1885 = vpop.f32.mrb[0].mxu0
      %v1886 = vadd.f32 0.0, %v1885
      %v1887 = vpop.f32.mrb[0].mxu0
      %v1888 = vpop.f32.mrb[0].mxu0
      %v1889 = vadd.f32 0.0, %v1888
      %v1890 = vpop.f32.mrb[0].mxu0
      %1891 = vmatprep.mubr.bf16.mxu0 0
      %1892 = vmatmul.mubr.bf16.gmra.mrb[0].mxu0 %v1734
      %v1893 = vpop.f32.mrb[0].mxu0
      %v1894 = vadd.f32 0.0, %v1893
      %v1895 = vpop.f32.mrb[0].mxu0
      %v1896 = vpop.f32.mrb[0].mxu0
      %v1897 = vadd.f32 0.0, %v1896
      %v1898 = vpop.f32.mrb[0].mxu0
      %1899 = vdwg.mxu0
      %v1900 = vadd.f32 %v1604, %v1774
      %v1901 = vadd.f32 %v1605, %v1777
      %v1902 = vadd.f32 %v1606, %v1782
      %v1903 = vadd.f32 %v1607, %v1785
      %v1904 = vadd.f32 %v1608, %v1790
      %v1905 = vadd.f32 %v1609, %v1793
      %v1906 = vadd.f32 %v1610, %v1798
      %v1907 = vadd.f32 %v1611, %v1801
      %v1908 = vadd.f32 %v1612, %v1806
      %v1909 = vadd.f32 %v1613, %v1809
      %v1910 = vadd.f32 %v1614, %v1814
      %v1911 = vadd.f32 %v1615, %v1817
      %v1912 = vadd.f32 %v1616, %v1822
      %v1913 = vadd.f32 %v1617, %v1825
      %v1914 = vadd.f32 %v1618, %v1830
      %v1915 = vadd.f32 %v1619, %v1833
      %v1916 = vadd.f32 %v1620, %v1838
      %v1917 = vadd.f32 %v1621, %v1841
      %v1918 = vadd.f32 %v1622, %v1846
      %v1919 = vadd.f32 %v1623, %v1849
      %v1920 = vadd.f32 %v1624, %v1854
      %v1921 = vadd.f32 %v1625, %v1857
      %v1922 = vadd.f32 %v1626, %v1862
      %v1923 = vadd.f32 %v1627, %v1865
      %v1924 = vadd.f32 %v1628, %v1870
      %v1925 = vadd.f32 %v1629, %v1873
      %v1926 = vadd.f32 %v1630, %v1878
      %v1927 = vadd.f32 %v1631, %v1881
      %v1928 = vadd.f32 %v1632, %v1886
      %v1929 = vadd.f32 %v1633, %v1889
      %v1930 = vadd.f32 %v1634, %v1894
      %v1931 = vadd.f32 %v1635, %v1897
      %v1932 = vld [vmem:[%s489 + $0x2] sm:$0xff]
      %v1933 = vld [vmem:[%s489 + $0xa] sm:$0xff]
      %v1934 = vld [vmem:[%s489 + $0x1a] sm:$0xff]
      %v1935 = vld [vmem:[%s489 + $0x22] sm:$0xff]
      %v1936 = vld [vmem:[%s489 + $0x32] sm:$0xff]
      %v1937 = vld [vmem:[%s489 + $0x3a] sm:$0xff]
      %v1938 = vld [vmem:[%s489 + $0x4a] sm:$0xff]
      %v1939 = vld [vmem:[%s489 + $0x52] sm:$0xff]
      %v1940 = vld [vmem:[%s489 + $0x62] sm:$0xff]
      %v1941 = vld [vmem:[%s489 + $0x6a] sm:$0xff]
      %v1942 = vld [vmem:[%s489 + $0x7a] sm:$0xff]
      %v1943 = vld [vmem:[%s489 + $0x82] sm:$0xff]
      %v1944 = vld [vmem:[%s489 + $0x92] sm:$0xff]
      %v1945 = vld [vmem:[%s489 + $0x9a] sm:$0xff]
      %v1946 = vld [vmem:[%s489 + $0xaa] sm:$0xff]
      %v1947 = vld [vmem:[%s489 + $0xb2] sm:$0xff]
      %v1948 = vld [vmem:[%s489 + $0xc2] sm:$0xff]
      %v1949 = vld [vmem:[%s489 + $0xca] sm:$0xff]
      %v1950 = vld [vmem:[%s489 + $0xda] sm:$0xff]
      %v1951 = vld [vmem:[%s489 + $0xe2] sm:$0xff]
      %v1952 = vld [vmem:[%s489 + $0xf2] sm:$0xff]
      %v1953 = vld [vmem:[%s489 + $0xfa] sm:$0xff]
      %v1954 = vld [vmem:[%s489 + $0x10a] sm:$0xff]
      %v1955 = vld [vmem:[%s489 + $0x112] sm:$0xff]
      %v1956 = vld [vmem:[%s489 + $0x122] sm:$0xff]
      %v1957 = vld [vmem:[%s489 + $0x12a] sm:$0xff]
      %v1958 = vld [vmem:[%s489 + $0x13a] sm:$0xff]
      %v1959 = vld [vmem:[%s489 + $0x142] sm:$0xff]
      %v1960 = vld [vmem:[%s489 + $0x152] sm:$0xff]
      %v1961 = vld [vmem:[%s489 + $0x15a] sm:$0xff]
      %v1962 = vld [vmem:[%s489 + $0x16a] sm:$0xff]
      %v1963 = vld [vmem:[%s489 + $0x172] sm:$0xff]
      %v1964 = vpack.c.bf16 %v1933, %v1932
      %v1965 = vpack.c.bf16 %v1935, %v1934
      %v1966 = vpack.c.bf16 %v1937, %v1936
      %v1967 = vpack.c.bf16 %v1939, %v1938
      %v1968 = vpack.c.bf16 %v1941, %v1940
      %v1969 = vpack.c.bf16 %v1943, %v1942
      %v1970 = vpack.c.bf16 %v1945, %v1944
      %v1971 = vpack.c.bf16 %v1947, %v1946
      %v1972 = vpack.c.bf16 %v1949, %v1948
      %v1973 = vpack.c.bf16 %v1951, %v1950
      %v1974 = vpack.c.bf16 %v1953, %v1952
      %v1975 = vpack.c.bf16 %v1955, %v1954
      %v1976 = vpack.c.bf16 %v1957, %v1956
      %v1977 = vpack.c.bf16 %v1959, %v1958
      %v1978 = vpack.c.bf16 %v1961, %v1960
      %v1979 = vpack.c.bf16 %v1963, %v1962
      %v1981 = vsel %vm443, %v1964, 0
      %v1984 = vsel %vm443, %v1965, 0
      %v1987 = vsel %vm443, %v1966, 0
      %v1990 = vsel %vm443, %v1967, 0
      %v1993 = vsel %vm443, %v1968, 0
      %v1996 = vsel %vm443, %v1969, 0
      %v1999 = vsel %vm443, %v1970, 0
      %v2002 = vsel %vm443, %v1971, 0
      %v2005 = vsel %vm443, %v1972, 0
      %v2008 = vsel %vm443, %v1973, 0
      %v2011 = vsel %vm443, %v1974, 0
      %v2014 = vsel %vm443, %v1975, 0
      %v2017 = vsel %vm443, %v1976, 0
      %v2020 = vsel %vm443, %v1977, 0
      %v2023 = vsel %vm443, %v1978, 0
      %v2026 = vsel %vm443, %v1979, 0
      %v2029 = vsel %vm672, %v1343, 0
      %2031 = vmatprep.subr.bf16.mxu0 0
      %2032 = vmatpush1.bf16.msra.mxu0 %v2029
      %2033 = vmatprep.subr.bf16.mxu0 0
      %2034 = vmatpush1.bf16.msra.mxu0 0
      %2035 = vmatprep.subr.bf16.mxu0 0
      %2036 = vmatpush1.bf16.msra.mxu0 0
      %2037 = vmatprep.subr.bf16.mxu0 0
      %2038 = vmatpush1.bf16.msra.mxu0 0
      %2039 = vmatprep.subr.bf16.mxu0 0
      %2040 = vmatpush1.bf16.msra.mxu0 0
      %2041 = vmatprep.subr.bf16.mxu0 0
      %2042 = vmatpush1.bf16.msra.mxu0 0
      %2043 = vmatprep.subr.bf16.mxu0 0
      %2044 = vmatpush1.bf16.msra.mxu0 0
      %2045 = vmatprep.subr.bf16.mxu0 0
      %2046 = vmatpush1.bf16.msra.mxu0 0
      %2047 = vmatprep.subr.bf16.mxu0 0
      %2048 = vmatpush1.bf16.msra.mxu0 0
      %2049 = vmatprep.subr.bf16.mxu0 0
      %2050 = vmatpush1.bf16.msra.mxu0 0
      %2051 = vmatprep.subr.bf16.mxu0 0
      %2052 = vmatpush1.bf16.msra.mxu0 0
      %2053 = vmatprep.subr.bf16.mxu0 0
      %2054 = vmatpush1.bf16.msra.mxu0 0
      %2055 = vmatprep.subr.bf16.mxu0 0
      %2056 = vmatpush1.bf16.msra.mxu0 0
      %2057 = vmatprep.subr.bf16.mxu0 0
      %2058 = vmatpush1.bf16.msra.mxu0 0
      %2059 = vmatprep.subr.bf16.mxu0 0
      %2060 = vmatpush1.bf16.msra.mxu0 0
      %2061 = vmatprep.subr.bf16.mxu0 0
      %2062 = vmatpush1.bf16.msra.mxu0 0
      %2063 = vmatprep.mubr.bf16.mxu0 0
      %2064 = vmatmul.mubr.bf16.gmra.mrb[0].mxu0 %v1981
      %v2065 = vpop.f32.mrb[0].mxu0
      %v2066 = vadd.f32 0.0, %v2065
      %v2067 = vpop.f32.mrb[0].mxu0
      %v2068 = vpop.f32.mrb[0].mxu0
      %v2069 = vadd.f32 0.0, %v2068
      %v2070 = vpop.f32.mrb[0].mxu0
      %2071 = vmatprep.mubr.bf16.mxu0 0
      %2072 = vmatmul.mubr.bf16.gmra.mrb[0].mxu0 %v1984
      %v2073 = vpop.f32.mrb[0].mxu0
      %v2074 = vadd.f32 0.0, %v2073
      %v2075 = vpop.f32.mrb[0].mxu0
      %v2076 = vpop.f32.mrb[0].mxu0
      %v2077 = vadd.f32 0.0, %v2076
      %v2078 = vpop.f32.mrb[0].mxu0
      %2079 = vmatprep.mubr.bf16.mxu0 0
      %2080 = vmatmul.mubr.bf16.gmra.mrb[0].mxu0 %v1987
      %v2081 = vpop.f32.mrb[0].mxu0
      %v2082 = vadd.f32 0.0, %v2081
      %v2083 = vpop.f32.mrb[0].mxu0
      %v2084 = vpop.f32.mrb[0].mxu0
      %v2085 = vadd.f32 0.0, %v2084
      %v2086 = vpop.f32.mrb[0].mxu0
      %2087 = vmatprep.mubr.bf16.mxu0 0
      %2088 = vmatmul.mubr.bf16.gmra.mrb[0].mxu0 %v1990
      %v2089 = vpop.f32.mrb[0].mxu0
      %v2090 = vadd.f32 0.0, %v2089
      %v2091 = vpop.f32.mrb[0].mxu0
      %v2092 = vpop.f32.mrb[0].mxu0
      %v2093 = vadd.f32 0.0, %v2092
      %v2094 = vpop.f32.mrb[0].mxu0
      %2095 = vmatprep.mubr.bf16.mxu0 0
      %2096 = vmatmul.mubr.bf16.gmra.mrb[0].mxu0 %v1993
      %v2097 = vpop.f32.mrb[0].mxu0
      %v2098 = vadd.f32 0.0, %v2097
      %v2099 = vpop.f32.mrb[0].mxu0
      %v2100 = vpop.f32.mrb[0].mxu0
      %v2101 = vadd.f32 0.0, %v2100
      %v2102 = vpop.f32.mrb[0].mxu0
      %2103 = vmatprep.mubr.bf16.mxu0 0
      %2104 = vmatmul.mubr.bf16.gmra.mrb[0].mxu0 %v1996
      %v2105 = vpop.f32.mrb[0].mxu0
      %v2106 = vadd.f32 0.0, %v2105
      %v2107 = vpop.f32.mrb[0].mxu0
      %v2108 = vpop.f32.mrb[0].mxu0
      %v2109 = vadd.f32 0.0, %v2108
      %v2110 = vpop.f32.mrb[0].mxu0
      %2111 = vmatprep.mubr.bf16.mxu0 0
      %2112 = vmatmul.mubr.bf16.gmra.mrb[0].mxu0 %v1999
      %v2113 = vpop.f32.mrb[0].mxu0
      %v2114 = vadd.f32 0.0, %v2113
      %v2115 = vpop.f32.mrb[0].mxu0
      %v2116 = vpop.f32.mrb[0].mxu0
      %v2117 = vadd.f32 0.0, %v2116
      %v2118 = vpop.f32.mrb[0].mxu0
      %2119 = vmatprep.mubr.bf16.mxu0 0
      %2120 = vmatmul.mubr.bf16.gmra.mrb[0].mxu0 %v2002
      %v2121 = vpop.f32.mrb[0].mxu0
      %v2122 = vadd.f32 0.0, %v2121
      %v2123 = vpop.f32.mrb[0].mxu0
      %v2124 = vpop.f32.mrb[0].mxu0
      %v2125 = vadd.f32 0.0, %v2124
      %v2126 = vpop.f32.mrb[0].mxu0
      %2127 = vmatprep.mubr.bf16.mxu0 0
      %2128 = vmatmul.mubr.bf16.gmra.mrb[0].mxu0 %v2005
      %v2129 = vpop.f32.mrb[0].mxu0
      %v2130 = vadd.f32 0.0, %v2129
      %v2131 = vpop.f32.mrb[0].mxu0
      %v2132 = vpop.f32.mrb[0].mxu0
      %v2133 = vadd.f32 0.0, %v2132
      %v2134 = vpop.f32.mrb[0].mxu0
      %2135 = vmatprep.mubr.bf16.mxu0 0
      %2136 = vmatmul.mubr.bf16.gmra.mrb[0].mxu0 %v2008
      %v2137 = vpop.f32.mrb[0].mxu0
      %v2138 = vadd.f32 0.0, %v2137
      %v2139 = vpop.f32.mrb[0].mxu0
      %v2140 = vpop.f32.mrb[0].mxu0
      %v2141 = vadd.f32 0.0, %v2140
      %v2142 = vpop.f32.mrb[0].mxu0
      %2143 = vmatprep.mubr.bf16.mxu0 0
      %2144 = vmatmul.mubr.bf16.gmra.mrb[0].mxu0 %v2011
      %v2145 = vpop.f32.mrb[0].mxu0
      %v2146 = vadd.f32 0.0, %v2145
      %v2147 = vpop.f32.mrb[0].mxu0
      %v2148 = vpop.f32.mrb[0].mxu0
      %v2149 = vadd.f32 0.0, %v2148
      %v2150 = vpop.f32.mrb[0].mxu0
      %2151 = vmatprep.mubr.bf16.mxu0 0
      %2152 = vmatmul.mubr.bf16.gmra.mrb[0].mxu0 %v2014
      %v2153 = vpop.f32.mrb[0].mxu0
      %v2154 = vadd.f32 0.0, %v2153
      %v2155 = vpop.f32.mrb[0].mxu0
      %v2156 = vpop.f32.mrb[0].mxu0
      %v2157 = vadd.f32 0.0, %v2156
      %v2158 = vpop.f32.mrb[0].mxu0
      %2159 = vmatprep.mubr.bf16.mxu0 0
      %2160 = vmatmul.mubr.bf16.gmra.mrb[0].mxu0 %v2017
      %v2161 = vpop.f32.mrb[0].mxu0
      %v2162 = vadd.f32 0.0, %v2161
      %v2163 = vpop.f32.mrb[0].mxu0
      %v2164 = vpop.f32.mrb[0].mxu0
      %v2165 = vadd.f32 0.0, %v2164
      %v2166 = vpop.f32.mrb[0].mxu0
      %2167 = vmatprep.mubr.bf16.mxu0 0
      %2168 = vmatmul.mubr.bf16.gmra.mrb[0].mxu0 %v2020
      %v2169 = vpop.f32.mrb[0].mxu0
      %v2170 = vadd.f32 0.0, %v2169
      %v2171 = vpop.f32.mrb[0].mxu0
      %v2172 = vpop.f32.mrb[0].mxu0
      %v2173 = vadd.f32 0.0, %v2172
      %v2174 = vpop.f32.mrb[0].mxu0
      %2175 = vmatprep.mubr.bf16.mxu0 0
      %2176 = vmatmul.mubr.bf16.gmra.mrb[0].mxu0 %v2023
      %v2177 = vpop.f32.mrb[0].mxu0
      %v2178 = vadd.f32 0.0, %v2177
      %v2179 = vpop.f32.mrb[0].mxu0
      %v2180 = vpop.f32.mrb[0].mxu0
      %v2181 = vadd.f32 0.0, %v2180
      %v2182 = vpop.f32.mrb[0].mxu0
      %2183 = vmatprep.mubr.bf16.mxu0 0
      %2184 = vmatmul.mubr.bf16.gmra.mrb[0].mxu0 %v2026
      %v2185 = vpop.f32.mrb[0].mxu0
      %v2186 = vadd.f32 0.0, %v2185
      %v2187 = vpop.f32.mrb[0].mxu0
      %v2188 = vpop.f32.mrb[0].mxu0
      %v2189 = vadd.f32 0.0, %v2188
      %v2190 = vpop.f32.mrb[0].mxu0
      %2191 = vdwg.mxu0
      %v2192 = vadd.f32 %v1900, %v2066
      %v2193 = vadd.f32 %v1901, %v2069
      %v2194 = vadd.f32 %v1902, %v2074
      %v2195 = vadd.f32 %v1903, %v2077
      %v2196 = vadd.f32 %v1904, %v2082
      %v2197 = vadd.f32 %v1905, %v2085
      %v2198 = vadd.f32 %v1906, %v2090
      %v2199 = vadd.f32 %v1907, %v2093
      %v2200 = vadd.f32 %v1908, %v2098
      %v2201 = vadd.f32 %v1909, %v2101
      %v2202 = vadd.f32 %v1910, %v2106
      %v2203 = vadd.f32 %v1911, %v2109
      %v2204 = vadd.f32 %v1912, %v2114
      %v2205 = vadd.f32 %v1913, %v2117
      %v2206 = vadd.f32 %v1914, %v2122
      %v2207 = vadd.f32 %v1915, %v2125
      %v2208 = vadd.f32 %v1916, %v2130
      %v2209 = vadd.f32 %v1917, %v2133
      %v2210 = vadd.f32 %v1918, %v2138
      %v2211 = vadd.f32 %v1919, %v2141
      %v2212 = vadd.f32 %v1920, %v2146
      %v2213 = vadd.f32 %v1921, %v2149
      %v2214 = vadd.f32 %v1922, %v2154
      %v2215 = vadd.f32 %v1923, %v2157
      %v2216 = vadd.f32 %v1924, %v2162
      %v2217 = vadd.f32 %v1925, %v2165
      %v2218 = vadd.f32 %v1926, %v2170
      %v2219 = vadd.f32 %v1927, %v2173
      %v2220 = vadd.f32 %v1928, %v2178
      %v2221 = vadd.f32 %v1929, %v2181
      %v2222 = vadd.f32 %v1930, %v2186
      %v2223 = vadd.f32 %v1931, %v2189
      %s2224 = scalar_lea.vmem %s3, 16
      %v2225 = vld [vmem:[%s2224] sm:$0xf]
      %v2226 = vld [vmem:[%s2224 + $0x4] sm:$0x3]
      %s2227 = scalar_lea.vmem [#allocation2], 48
      %v2228 = vld [vmem:[%s2227] sm:$0xff]
      %v2229 = vld [vmem:[%s2227 + $0x8] sm:$0xff]
      %v2230 = vld [vmem:[%s2227 + $0x18] sm:$0xff]
      %v2231 = vld [vmem:[%s2227 + $0x20] sm:$0xff]
      %v2232 = vld [vmem:[%s2227 + $0x30] sm:$0xff]
      %v2233 = vld [vmem:[%s2227 + $0x38] sm:$0xff]
      %v2234 = vld [vmem:[%s2227 + $0x48] sm:$0xff]
      %v2235 = vld [vmem:[%s2227 + $0x50] sm:$0xff]
      %v2236 = vld [vmem:[%s2227 + $0x60] sm:$0xff]
      %v2237 = vld [vmem:[%s2227 + $0x68] sm:$0xff]
      %v2238 = vld [vmem:[%s2227 + $0x78] sm:$0xff]
      %v2239 = vld [vmem:[%s2227 + $0x80] sm:$0xff]
      %v2240 = vld [vmem:[%s2227 + $0x90] sm:$0xff]
      %v2241 = vld [vmem:[%s2227 + $0x98] sm:$0xff]
      %v2242 = vld [vmem:[%s2227 + $0xa8] sm:$0xff]
      %v2243 = vld [vmem:[%s2227 + $0xb0] sm:$0xff]
      %v2244 = vld [vmem:[%s2227 + $0xc0] sm:$0xff]
      %v2245 = vld [vmem:[%s2227 + $0xc8] sm:$0xff]
      %v2246 = vld [vmem:[%s2227 + $0xd8] sm:$0xff]
      %v2247 = vld [vmem:[%s2227 + $0xe0] sm:$0xff]
      %v2248 = vld [vmem:[%s2227 + $0xf0] sm:$0xff]
      %v2249 = vld [vmem:[%s2227 + $0xf8] sm:$0xff]
      %v2250 = vld [vmem:[%s2227 + $0x108] sm:$0xff]
      %v2251 = vld [vmem:[%s2227 + $0x110] sm:$0xff]
      %v2252 = vld [vmem:[%s2227 + $0x120] sm:$0xff]
      %v2253 = vld [vmem:[%s2227 + $0x128] sm:$0xff]
      %v2254 = vld [vmem:[%s2227 + $0x138] sm:$0xff]
      %v2255 = vld [vmem:[%s2227 + $0x140] sm:$0xff]
      %v2256 = vld [vmem:[%s2227 + $0x150] sm:$0xff]
      %v2257 = vld [vmem:[%s2227 + $0x158] sm:$0xff]
      %v2258 = vld [vmem:[%s2227 + $0x168] sm:$0xff]
      %v2259 = vld [vmem:[%s2227 + $0x170] sm:$0xff]
      %v2260 = vpack.c.bf16 %v2229, %v2228
      %v2261 = vpack.c.bf16 %v2231, %v2230
      %v2262 = vpack.c.bf16 %v2233, %v2232
      %v2263 = vpack.c.bf16 %v2235, %v2234
      %v2264 = vpack.c.bf16 %v2237, %v2236
      %v2265 = vpack.c.bf16 %v2239, %v2238
      %v2266 = vpack.c.bf16 %v2241, %v2240
      %v2267 = vpack.c.bf16 %v2243, %v2242
      %v2268 = vpack.c.bf16 %v2245, %v2244
      %v2269 = vpack.c.bf16 %v2247, %v2246
      %v2270 = vpack.c.bf16 %v2249, %v2248
      %v2271 = vpack.c.bf16 %v2251, %v2250
      %v2272 = vpack.c.bf16 %v2253, %v2252
      %v2273 = vpack.c.bf16 %v2255, %v2254
      %v2274 = vpack.c.bf16 %v2257, %v2256
      %v2275 = vpack.c.bf16 %v2259, %v2258
      %v2277 = vsel %vm443, %v2260, 0
      %v2280 = vsel %vm443, %v2261, 0
      %v2283 = vsel %vm443, %v2262, 0
      %v2286 = vsel %vm443, %v2263, 0
      %v2289 = vsel %vm443, %v2264, 0
      %v2292 = vsel %vm443, %v2265, 0
      %v2295 = vsel %vm443, %v2266, 0
      %v2298 = vsel %vm443, %v2267, 0
      %v2301 = vsel %vm443, %v2268, 0
      %v2304 = vsel %vm443, %v2269, 0
      %v2307 = vsel %vm443, %v2270, 0
      %v2310 = vsel %vm443, %v2271, 0
      %v2313 = vsel %vm443, %v2272, 0
      %v2316 = vsel %vm443, %v2273, 0
      %v2319 = vsel %vm443, %v2274, 0
      %v2322 = vsel %vm443, %v2275, 0
      %v2325 = vsel %vm672, %v2225, 0
      %2327 = vmatprep.subr.bf16.mxu0 0
      %2328 = vmatpush1.bf16.msra.mxu0 %v2325
      %2329 = vmatprep.subr.bf16.mxu0 0
      %2330 = vmatpush1.bf16.msra.mxu0 0
      %2331 = vmatprep.subr.bf16.mxu0 0
      %2332 = vmatpush1.bf16.msra.mxu0 0
      %2333 = vmatprep.subr.bf16.mxu0 0
      %2334 = vmatpush1.bf16.msra.mxu0 0
      %2335 = vmatprep.subr.bf16.mxu0 0
      %2336 = vmatpush1.bf16.msra.mxu0 0
      %2337 = vmatprep.subr.bf16.mxu0 0
      %2338 = vmatpush1.bf16.msra.mxu0 0
      %2339 = vmatprep.subr.bf16.mxu0 0
      %2340 = vmatpush1.bf16.msra.mxu0 0
      %2341 = vmatprep.subr.bf16.mxu0 0
      %2342 = vmatpush1.bf16.msra.mxu0 0
      %2343 = vmatprep.subr.bf16.mxu0 0
      %2344 = vmatpush1.bf16.msra.mxu0 0
      %2345 = vmatprep.subr.bf16.mxu0 0
      %2346 = vmatpush1.bf16.msra.mxu0 0
      %2347 = vmatprep.subr.bf16.mxu0 0
      %2348 = vmatpush1.bf16.msra.mxu0 0
      %2349 = vmatprep.subr.bf16.mxu0 0
      %2350 = vmatpush1.bf16.msra.mxu0 0
      %2351 = vmatprep.subr.bf16.mxu0 0
      %2352 = vmatpush1.bf16.msra.mxu0 0
      %2353 = vmatprep.subr.bf16.mxu0 0
      %2354 = vmatpush1.bf16.msra.mxu0 0
      %2355 = vmatprep.subr.bf16.mxu0 0
      %2356 = vmatpush1.bf16.msra.mxu0 0
      %2357 = vmatprep.subr.bf16.mxu0 0
      %2358 = vmatpush1.bf16.msra.mxu0 0
      %2359 = vmatprep.mubr.bf16.mxu0 0
      %2360 = vmatmul.mubr.bf16.gmra.mrb[0].mxu0 %v2277
      %v2361 = vpop.f32.mrb[0].mxu0
      %v2362 = vadd.f32 0.0, %v2361
      %v2363 = vpop.f32.mrb[0].mxu0
      %v2364 = vpop.f32.mrb[0].mxu0
      %v2365 = vadd.f32 0.0, %v2364
      %v2366 = vpop.f32.mrb[0].mxu0
      %2367 = vmatprep.mubr.bf16.mxu0 0
      %2368 = vmatmul.mubr.bf16.gmra.mrb[0].mxu0 %v2280
      %v2369 = vpop.f32.mrb[0].mxu0
      %v2370 = vadd.f32 0.0, %v2369
      %v2371 = vpop.f32.mrb[0].mxu0
      %v2372 = vpop.f32.mrb[0].mxu0
      %v2373 = vadd.f32 0.0, %v2372
      %v2374 = vpop.f32.mrb[0].mxu0
      %2375 = vmatprep.mubr.bf16.mxu0 0
      %2376 = vmatmul.mubr.bf16.gmra.mrb[0].mxu0 %v2283
      %v2377 = vpop.f32.mrb[0].mxu0
      %v2378 = vadd.f32 0.0, %v2377
      %v2379 = vpop.f32.mrb[0].mxu0
      %v2380 = vpop.f32.mrb[0].mxu0
      %v2381 = vadd.f32 0.0, %v2380
      %v2382 = vpop.f32.mrb[0].mxu0
      %2383 = vmatprep.mubr.bf16.mxu0 0
      %2384 = vmatmul.mubr.bf16.gmra.mrb[0].mxu0 %v2286
      %v2385 = vpop.f32.mrb[0].mxu0
      %v2386 = vadd.f32 0.0, %v2385
      %v2387 = vpop.f32.mrb[0].mxu0
      %v2388 = vpop.f32.mrb[0].mxu0
      %v2389 = vadd.f32 0.0, %v2388
      %v2390 = vpop.f32.mrb[0].mxu0
      %2391 = vmatprep.mubr.bf16.mxu0 0
      %2392 = vmatmul.mubr.bf16.gmra.mrb[0].mxu0 %v2289
      %v2393 = vpop.f32.mrb[0].mxu0
      %v2394 = vadd.f32 0.0, %v2393
      %v2395 = vpop.f32.mrb[0].mxu0
      %v2396 = vpop.f32.mrb[0].mxu0
      %v2397 = vadd.f32 0.0, %v2396
      %v2398 = vpop.f32.mrb[0].mxu0
      %2399 = vmatprep.mubr.bf16.mxu0 0
      %2400 = vmatmul.mubr.bf16.gmra.mrb[0].mxu0 %v2292
      %v2401 = vpop.f32.mrb[0].mxu0
      %v2402 = vadd.f32 0.0, %v2401
      %v2403 = vpop.f32.mrb[0].mxu0
      %v2404 = vpop.f32.mrb[0].mxu0
      %v2405 = vadd.f32 0.0, %v2404
      %v2406 = vpop.f32.mrb[0].mxu0
      %2407 = vmatprep.mubr.bf16.mxu0 0
      %2408 = vmatmul.mubr.bf16.gmra.mrb[0].mxu0 %v2295
      %v2409 = vpop.f32.mrb[0].mxu0
      %v2410 = vadd.f32 0.0, %v2409
      %v2411 = vpop.f32.mrb[0].mxu0
      %v2412 = vpop.f32.mrb[0].mxu0
      %v2413 = vadd.f32 0.0, %v2412
      %v2414 = vpop.f32.mrb[0].mxu0
      %2415 = vmatprep.mubr.bf16.mxu0 0
      %2416 = vmatmul.mubr.bf16.gmra.mrb[0].mxu0 %v2298
      %v2417 = vpop.f32.mrb[0].mxu0
      %v2418 = vadd.f32 0.0, %v2417
      %v2419 = vpop.f32.mrb[0].mxu0
      %v2420 = vpop.f32.mrb[0].mxu0
      %v2421 = vadd.f32 0.0, %v2420
      %v2422 = vpop.f32.mrb[0].mxu0
      %2423 = vmatprep.mubr.bf16.mxu0 0
      %2424 = vmatmul.mubr.bf16.gmra.mrb[0].mxu0 %v2301
      %v2425 = vpop.f32.mrb[0].mxu0
      %v2426 = vadd.f32 0.0, %v2425
      %v2427 = vpop.f32.mrb[0].mxu0
      %v2428 = vpop.f32.mrb[0].mxu0
      %v2429 = vadd.f32 0.0, %v2428
      %v2430 = vpop.f32.mrb[0].mxu0
      %2431 = vmatprep.mubr.bf16.mxu0 0
      %2432 = vmatmul.mubr.bf16.gmra.mrb[0].mxu0 %v2304
      %v2433 = vpop.f32.mrb[0].mxu0
      %v2434 = vadd.f32 0.0, %v2433
      %v2435 = vpop.f32.mrb[0].mxu0
      %v2436 = vpop.f32.mrb[0].mxu0
      %v2437 = vadd.f32 0.0, %v2436
      %v2438 = vpop.f32.mrb[0].mxu0
      %2439 = vmatprep.mubr.bf16.mxu0 0
      %2440 = vmatmul.mubr.bf16.gmra.mrb[0].mxu0 %v2307
      %v2441 = vpop.f32.mrb[0].mxu0
      %v2442 = vadd.f32 0.0, %v2441
      %v2443 = vpop.f32.mrb[0].mxu0
      %v2444 = vpop.f32.mrb[0].mxu0
      %v2445 = vadd.f32 0.0, %v2444
      %v2446 = vpop.f32.mrb[0].mxu0
      %2447 = vmatprep.mubr.bf16.mxu0 0
      %2448 = vmatmul.mubr.bf16.gmra.mrb[0].mxu0 %v2310
      %v2449 = vpop.f32.mrb[0].mxu0
      %v2450 = vadd.f32 0.0, %v2449
      %v2451 = vpop.f32.mrb[0].mxu0
      %v2452 = vpop.f32.mrb[0].mxu0
      %v2453 = vadd.f32 0.0, %v2452
      %v2454 = vpop.f32.mrb[0].mxu0
      %2455 = vmatprep.mubr.bf16.mxu0 0
      %2456 = vmatmul.mubr.bf16.gmra.mrb[0].mxu0 %v2313
      %v2457 = vpop.f32.mrb[0].mxu0
      %v2458 = vadd.f32 0.0, %v2457
      %v2459 = vpop.f32.mrb[0].mxu0
      %v2460 = vpop.f32.mrb[0].mxu0
      %v2461 = vadd.f32 0.0, %v2460
      %v2462 = vpop.f32.mrb[0].mxu0
      %2463 = vmatprep.mubr.bf16.mxu0 0
      %2464 = vmatmul.mubr.bf16.gmra.mrb[0].mxu0 %v2316
      %v2465 = vpop.f32.mrb[0].mxu0
      %v2466 = vadd.f32 0.0, %v2465
      %v2467 = vpop.f32.mrb[0].mxu0
      %v2468 = vpop.f32.mrb[0].mxu0
      %v2469 = vadd.f32 0.0, %v2468
      %v2470 = vpop.f32.mrb[0].mxu0
      %2471 = vmatprep.mubr.bf16.mxu0 0
      %2472 = vmatmul.mubr.bf16.gmra.mrb[0].mxu0 %v2319
      %v2473 = vpop.f32.mrb[0].mxu0
      %v2474 = vadd.f32 0.0, %v2473
      %v2475 = vpop.f32.mrb[0].mxu0
      %v2476 = vpop.f32.mrb[0].mxu0
      %v2477 = vadd.f32 0.0, %v2476
      %v2478 = vpop.f32.mrb[0].mxu0
      %2479 = vmatprep.mubr.bf16.mxu0 0
      %2480 = vmatmul.mubr.bf16.gmra.mrb[0].mxu0 %v2322
      %v2481 = vpop.f32.mrb[0].mxu0
      %v2482 = vadd.f32 0.0, %v2481
      %v2483 = vpop.f32.mrb[0].mxu0
      %v2484 = vpop.f32.mrb[0].mxu0
      %v2485 = vadd.f32 0.0, %v2484
      %v2486 = vpop.f32.mrb[0].mxu0
      %2487 = vdwg.mxu0
      %v2488 = vadd.f32 %v2192, %v2362
      %v2489 = vadd.f32 %v2193, %v2365
      %v2490 = vadd.f32 %v2194, %v2370
      %v2491 = vadd.f32 %v2195, %v2373
      %v2492 = vadd.f32 %v2196, %v2378
      %v2493 = vadd.f32 %v2197, %v2381
      %v2494 = vadd.f32 %v2198, %v2386
      %v2495 = vadd.f32 %v2199, %v2389
      %v2496 = vadd.f32 %v2200, %v2394
      %v2497 = vadd.f32 %v2201, %v2397
      %v2498 = vadd.f32 %v2202, %v2402
      %v2499 = vadd.f32 %v2203, %v2405
      %v2500 = vadd.f32 %v2204, %v2410
      %v2501 = vadd.f32 %v2205, %v2413
      %v2502 = vadd.f32 %v2206, %v2418
      %v2503 = vadd.f32 %v2207, %v2421
      %v2504 = vadd.f32 %v2208, %v2426
      %v2505 = vadd.f32 %v2209, %v2429
      %v2506 = vadd.f32 %v2210, %v2434
      %v2507 = vadd.f32 %v2211, %v2437
      %v2508 = vadd.f32 %v2212, %v2442
      %v2509 = vadd.f32 %v2213, %v2445
      %v2510 = vadd.f32 %v2214, %v2450
      %v2511 = vadd.f32 %v2215, %v2453
      %v2512 = vadd.f32 %v2216, %v2458
      %v2513 = vadd.f32 %v2217, %v2461
      %v2514 = vadd.f32 %v2218, %v2466
      %v2515 = vadd.f32 %v2219, %v2469
      %v2516 = vadd.f32 %v2220, %v2474
      %v2517 = vadd.f32 %v2221, %v2477
      %v2518 = vadd.f32 %v2222, %v2482
      %v2519 = vadd.f32 %v2223, %v2485
      %v2520 = vld [vmem:[%s2227 + $0x1] sm:$0xff]
      %v2521 = vld [vmem:[%s2227 + $0x9] sm:$0xff]
      %v2522 = vld [vmem:[%s2227 + $0x19] sm:$0xff]
      %v2523 = vld [vmem:[%s2227 + $0x21] sm:$0xff]
      %v2524 = vld [vmem:[%s2227 + $0x31] sm:$0xff]
      %v2525 = vld [vmem:[%s2227 + $0x39] sm:$0xff]
      %v2526 = vld [vmem:[%s2227 + $0x49] sm:$0xff]
      %v2527 = vld [vmem:[%s2227 + $0x51] sm:$0xff]
      %v2528 = vld [vmem:[%s2227 + $0x61] sm:$0xff]
      %v2529 = vld [vmem:[%s2227 + $0x69] sm:$0xff]
      %v2530 = vld [vmem:[%s2227 + $0x79] sm:$0xff]
      %v2531 = vld [vmem:[%s2227 + $0x81] sm:$0xff]
      %v2532 = vld [vmem:[%s2227 + $0x91] sm:$0xff]
      %v2533 = vld [vmem:[%s2227 + $0x99] sm:$0xff]
      %v2534 = vld [vmem:[%s2227 + $0xa9] sm:$0xff]
      %v2535 = vld [vmem:[%s2227 + $0xb1] sm:$0xff]
      %v2536 = vld [vmem:[%s2227 + $0xc1] sm:$0xff]
      %v2537 = vld [vmem:[%s2227 + $0xc9] sm:$0xff]
      %v2538 = vld [vmem:[%s2227 + $0xd9] sm:$0xff]
      %v2539 = vld [vmem:[%s2227 + $0xe1] sm:$0xff]
      %v2540 = vld [vmem:[%s2227 + $0xf1] sm:$0xff]
      %v2541 = vld [vmem:[%s2227 + $0xf9] sm:$0xff]
      %v2542 = vld [vmem:[%s2227 + $0x109] sm:$0xff]
      %v2543 = vld [vmem:[%s2227 + $0x111] sm:$0xff]
      %v2544 = vld [vmem:[%s2227 + $0x121] sm:$0xff]
      %v2545 = vld [vmem:[%s2227 + $0x129] sm:$0xff]
      %v2546 = vld [vmem:[%s2227 + $0x139] sm:$0xff]
      %v2547 = vld [vmem:[%s2227 + $0x141] sm:$0xff]
      %v2548 = vld [vmem:[%s2227 + $0x151] sm:$0xff]
      %v2549 = vld [vmem:[%s2227 + $0x159] sm:$0xff]
      %v2550 = vld [vmem:[%s2227 + $0x169] sm:$0xff]
      %v2551 = vld [vmem:[%s2227 + $0x171] sm:$0xff]
      %v2552 = vpack.c.bf16 %v2521, %v2520
      %v2553 = vpack.c.bf16 %v2523, %v2522
      %v2554 = vpack.c.bf16 %v2525, %v2524
      %v2555 = vpack.c.bf16 %v2527, %v2526
      %v2556 = vpack.c.bf16 %v2529, %v2528
      %v2557 = vpack.c.bf16 %v2531, %v2530
      %v2558 = vpack.c.bf16 %v2533, %v2532
      %v2559 = vpack.c.bf16 %v2535, %v2534
      %v2560 = vpack.c.bf16 %v2537, %v2536
      %v2561 = vpack.c.bf16 %v2539, %v2538
      %v2562 = vpack.c.bf16 %v2541, %v2540
      %v2563 = vpack.c.bf16 %v2543, %v2542
      %v2564 = vpack.c.bf16 %v2545, %v2544
      %v2565 = vpack.c.bf16 %v2547, %v2546
      %v2566 = vpack.c.bf16 %v2549, %v2548
      %v2567 = vpack.c.bf16 %v2551, %v2550
      %v2569 = vunpack.c.l.b16 %v2225
      %v2570 = vpack.c.b16 %v2569, %v2569
      %v2571 = vrot.slane %v2570, 2
      %v2573 = vsel %vm443, %v2552, 0
      %v2576 = vsel %vm443, %v2553, 0
      %v2579 = vsel %vm443, %v2554, 0
      %v2582 = vsel %vm443, %v2555, 0
      %v2585 = vsel %vm443, %v2556, 0
      %v2588 = vsel %vm443, %v2557, 0
      %v2591 = vsel %vm443, %v2558, 0
      %v2594 = vsel %vm443, %v2559, 0
      %v2597 = vsel %vm443, %v2560, 0
      %v2600 = vsel %vm443, %v2561, 0
      %v2603 = vsel %vm443, %v2562, 0
      %v2606 = vsel %vm443, %v2563, 0
      %v2609 = vsel %vm443, %v2564, 0
      %v2612 = vsel %vm443, %v2565, 0
      %v2615 = vsel %vm443, %v2566, 0
      %v2618 = vsel %vm443, %v2567, 0
      %v2621 = vsel %vm672, %v2571, 0
      %2623 = vmatprep.subr.bf16.mxu0 0
      %2624 = vmatpush1.bf16.msra.mxu0 %v2621
      %2625 = vmatprep.subr.bf16.mxu0 0
      %2626 = vmatpush1.bf16.msra.mxu0 0
      %2627 = vmatprep.subr.bf16.mxu0 0
      %2628 = vmatpush1.bf16.msra.mxu0 0
      %2629 = vmatprep.subr.bf16.mxu0 0
      %2630 = vmatpush1.bf16.msra.mxu0 0
      %2631 = vmatprep.subr.bf16.mxu0 0
      %2632 = vmatpush1.bf16.msra.mxu0 0
      %2633 = vmatprep.subr.bf16.mxu0 0
      %2634 = vmatpush1.bf16.msra.mxu0 0
      %2635 = vmatprep.subr.bf16.mxu0 0
      %2636 = vmatpush1.bf16.msra.mxu0 0
      %2637 = vmatprep.subr.bf16.mxu0 0
      %2638 = vmatpush1.bf16.msra.mxu0 0
      %2639 = vmatprep.subr.bf16.mxu0 0
      %2640 = vmatpush1.bf16.msra.mxu0 0
      %2641 = vmatprep.subr.bf16.mxu0 0
      %2642 = vmatpush1.bf16.msra.mxu0 0
      %2643 = vmatprep.subr.bf16.mxu0 0
      %2644 = vmatpush1.bf16.msra.mxu0 0
      %2645 = vmatprep.subr.bf16.mxu0 0
      %2646 = vmatpush1.bf16.msra.mxu0 0
      %2647 = vmatprep.subr.bf16.mxu0 0
      %2648 = vmatpush1.bf16.msra.mxu0 0
      %2649 = vmatprep.subr.bf16.mxu0 0
      %2650 = vmatpush1.bf16.msra.mxu0 0
      %2651 = vmatprep.subr.bf16.mxu0 0
      %2652 = vmatpush1.bf16.msra.mxu0 0
      %2653 = vmatprep.subr.bf16.mxu0 0
      %2654 = vmatpush1.bf16.msra.mxu0 0
      %2655 = vmatprep.mubr.bf16.mxu0 0
      %2656 = vmatmul.mubr.bf16.gmra.mrb[0].mxu0 %v2573
      %v2657 = vpop.f32.mrb[0].mxu0
      %v2658 = vadd.f32 0.0, %v2657
      %v2659 = vpop.f32.mrb[0].mxu0
      %v2660 = vpop.f32.mrb[0].mxu0
      %v2661 = vadd.f32 0.0, %v2660
      %v2662 = vpop.f32.mrb[0].mxu0
      %2663 = vmatprep.mubr.bf16.mxu0 0
      %2664 = vmatmul.mubr.bf16.gmra.mrb[0].mxu0 %v2576
      %v2665 = vpop.f32.mrb[0].mxu0
      %v2666 = vadd.f32 0.0, %v2665
      %v2667 = vpop.f32.mrb[0].mxu0
      %v2668 = vpop.f32.mrb[0].mxu0
      %v2669 = vadd.f32 0.0, %v2668
      %v2670 = vpop.f32.mrb[0].mxu0
      %2671 = vmatprep.mubr.bf16.mxu0 0
      %2672 = vmatmul.mubr.bf16.gmra.mrb[0].mxu0 %v2579
      %v2673 = vpop.f32.mrb[0].mxu0
      %v2674 = vadd.f32 0.0, %v2673
      %v2675 = vpop.f32.mrb[0].mxu0
      %v2676 = vpop.f32.mrb[0].mxu0
      %v2677 = vadd.f32 0.0, %v2676
      %v2678 = vpop.f32.mrb[0].mxu0
      %2679 = vmatprep.mubr.bf16.mxu0 0
      %2680 = vmatmul.mubr.bf16.gmra.mrb[0].mxu0 %v2582
      %v2681 = vpop.f32.mrb[0].mxu0
      %v2682 = vadd.f32 0.0, %v2681
      %v2683 = vpop.f32.mrb[0].mxu0
      %v2684 = vpop.f32.mrb[0].mxu0
      %v2685 = vadd.f32 0.0, %v2684
      %v2686 = vpop.f32.mrb[0].mxu0
      %2687 = vmatprep.mubr.bf16.mxu0 0
      %2688 = vmatmul.mubr.bf16.gmra.mrb[0].mxu0 %v2585
      %v2689 = vpop.f32.mrb[0].mxu0
      %v2690 = vadd.f32 0.0, %v2689
      %v2691 = vpop.f32.mrb[0].mxu0
      %v2692 = vpop.f32.mrb[0].mxu0
      %v2693 = vadd.f32 0.0, %v2692
      %v2694 = vpop.f32.mrb[0].mxu0
      %2695 = vmatprep.mubr.bf16.mxu0 0
      %2696 = vmatmul.mubr.bf16.gmra.mrb[0].mxu0 %v2588
      %v2697 = vpop.f32.mrb[0].mxu0
      %v2698 = vadd.f32 0.0, %v2697
      %v2699 = vpop.f32.mrb[0].mxu0
      %v2700 = vpop.f32.mrb[0].mxu0
      %v2701 = vadd.f32 0.0, %v2700
      %v2702 = vpop.f32.mrb[0].mxu0
      %2703 = vmatprep.mubr.bf16.mxu0 0
      %2704 = vmatmul.mubr.bf16.gmra.mrb[0].mxu0 %v2591
      %v2705 = vpop.f32.mrb[0].mxu0
      %v2706 = vadd.f32 0.0, %v2705
      %v2707 = vpop.f32.mrb[0].mxu0
      %v2708 = vpop.f32.mrb[0].mxu0
      %v2709 = vadd.f32 0.0, %v2708
      %v2710 = vpop.f32.mrb[0].mxu0
      %2711 = vmatprep.mubr.bf16.mxu0 0
      %2712 = vmatmul.mubr.bf16.gmra.mrb[0].mxu0 %v2594
      %v2713 = vpop.f32.mrb[0].mxu0
      %v2714 = vadd.f32 0.0, %v2713
      %v2715 = vpop.f32.mrb[0].mxu0
      %v2716 = vpop.f32.mrb[0].mxu0
      %v2717 = vadd.f32 0.0, %v2716
      %v2718 = vpop.f32.mrb[0].mxu0
      %2719 = vmatprep.mubr.bf16.mxu0 0
      %2720 = vmatmul.mubr.bf16.gmra.mrb[0].mxu0 %v2597
      %v2721 = vpop.f32.mrb[0].mxu0
      %v2722 = vadd.f32 0.0, %v2721
      %v2723 = vpop.f32.mrb[0].mxu0
      %v2724 = vpop.f32.mrb[0].mxu0
      %v2725 = vadd.f32 0.0, %v2724
      %v2726 = vpop.f32.mrb[0].mxu0
      %2727 = vmatprep.mubr.bf16.mxu0 0
      %2728 = vmatmul.mubr.bf16.gmra.mrb[0].mxu0 %v2600
      %v2729 = vpop.f32.mrb[0].mxu0
      %v2730 = vadd.f32 0.0, %v2729
      %v2731 = vpop.f32.mrb[0].mxu0
      %v2732 = vpop.f32.mrb[0].mxu0
      %v2733 = vadd.f32 0.0, %v2732
      %v2734 = vpop.f32.mrb[0].mxu0
      %2735 = vmatprep.mubr.bf16.mxu0 0
      %2736 = vmatmul.mubr.bf16.gmra.mrb[0].mxu0 %v2603
      %v2737 = vpop.f32.mrb[0].mxu0
      %v2738 = vadd.f32 0.0, %v2737
      %v2739 = vpop.f32.mrb[0].mxu0
      %v2740 = vpop.f32.mrb[0].mxu0
      %v2741 = vadd.f32 0.0, %v2740
      %v2742 = vpop.f32.mrb[0].mxu0
      %2743 = vmatprep.mubr.bf16.mxu0 0
      %2744 = vmatmul.mubr.bf16.gmra.mrb[0].mxu0 %v2606
      %v2745 = vpop.f32.mrb[0].mxu0
      %v2746 = vadd.f32 0.0, %v2745
      %v2747 = vpop.f32.mrb[0].mxu0
      %v2748 = vpop.f32.mrb[0].mxu0
      %v2749 = vadd.f32 0.0, %v2748
      %v2750 = vpop.f32.mrb[0].mxu0
      %2751 = vmatprep.mubr.bf16.mxu0 0
      %2752 = vmatmul.mubr.bf16.gmra.mrb[0].mxu0 %v2609
      %v2753 = vpop.f32.mrb[0].mxu0
      %v2754 = vadd.f32 0.0, %v2753
      %v2755 = vpop.f32.mrb[0].mxu0
      %v2756 = vpop.f32.mrb[0].mxu0
      %v2757 = vadd.f32 0.0, %v2756
      %v2758 = vpop.f32.mrb[0].mxu0
      %2759 = vmatprep.mubr.bf16.mxu0 0
      %2760 = vmatmul.mubr.bf16.gmra.mrb[0].mxu0 %v2612
      %v2761 = vpop.f32.mrb[0].mxu0
      %v2762 = vadd.f32 0.0, %v2761
      %v2763 = vpop.f32.mrb[0].mxu0
      %v2764 = vpop.f32.mrb[0].mxu0
      %v2765 = vadd.f32 0.0, %v2764
      %v2766 = vpop.f32.mrb[0].mxu0
      %2767 = vmatprep.mubr.bf16.mxu0 0
      %2768 = vmatmul.mubr.bf16.gmra.mrb[0].mxu0 %v2615
      %v2769 = vpop.f32.mrb[0].mxu0
      %v2770 = vadd.f32 0.0, %v2769
      %v2771 = vpop.f32.mrb[0].mxu0
      %v2772 = vpop.f32.mrb[0].mxu0
      %v2773 = vadd.f32 0.0, %v2772
      %v2774 = vpop.f32.mrb[0].mxu0
      %2775 = vmatprep.mubr.bf16.mxu0 0
      %2776 = vmatmul.mubr.bf16.gmra.mrb[0].mxu0 %v2618
      %v2777 = vpop.f32.mrb[0].mxu0
      %v2778 = vadd.f32 0.0, %v2777
      %v2779 = vpop.f32.mrb[0].mxu0
      %v2780 = vpop.f32.mrb[0].mxu0
      %v2781 = vadd.f32 0.0, %v2780
      %v2782 = vpop.f32.mrb[0].mxu0
      %2783 = vdwg.mxu0
      %v2784 = vadd.f32 %v2488, %v2658
      %v2785 = vadd.f32 %v2489, %v2661
      %v2786 = vadd.f32 %v2490, %v2666
      %v2787 = vadd.f32 %v2491, %v2669
      %v2788 = vadd.f32 %v2492, %v2674
      %v2789 = vadd.f32 %v2493, %v2677
      %v2790 = vadd.f32 %v2494, %v2682
      %v2791 = vadd.f32 %v2495, %v2685
      %v2792 = vadd.f32 %v2496, %v2690
      %v2793 = vadd.f32 %v2497, %v2693
      %v2794 = vadd.f32 %v2498, %v2698
      %v2795 = vadd.f32 %v2499, %v2701
      %v2796 = vadd.f32 %v2500, %v2706
      %v2797 = vadd.f32 %v2501, %v2709
      %v2798 = vadd.f32 %v2502, %v2714
      %v2799 = vadd.f32 %v2503, %v2717
      %v2800 = vadd.f32 %v2504, %v2722
      %v2801 = vadd.f32 %v2505, %v2725
      %v2802 = vadd.f32 %v2506, %v2730
      %v2803 = vadd.f32 %v2507, %v2733
      %v2804 = vadd.f32 %v2508, %v2738
      %v2805 = vadd.f32 %v2509, %v2741
      %v2806 = vadd.f32 %v2510, %v2746
      %v2807 = vadd.f32 %v2511, %v2749
      %v2808 = vadd.f32 %v2512, %v2754
      %v2809 = vadd.f32 %v2513, %v2757
      %v2810 = vadd.f32 %v2514, %v2762
      %v2811 = vadd.f32 %v2515, %v2765
      %v2812 = vadd.f32 %v2516, %v2770
      %v2813 = vadd.f32 %v2517, %v2773
      %v2814 = vadd.f32 %v2518, %v2778
      %v2815 = vadd.f32 %v2519, %v2781
      %v2816 = vld [vmem:[%s2227 + $0x2] sm:$0xff]
      %v2817 = vld [vmem:[%s2227 + $0xa] sm:$0xff]
      %v2818 = vld [vmem:[%s2227 + $0x1a] sm:$0xff]
      %v2819 = vld [vmem:[%s2227 + $0x22] sm:$0xff]
      %v2820 = vld [vmem:[%s2227 + $0x32] sm:$0xff]
      %v2821 = vld [vmem:[%s2227 + $0x3a] sm:$0xff]
      %v2822 = vld [vmem:[%s2227 + $0x4a] sm:$0xff]
      %v2823 = vld [vmem:[%s2227 + $0x52] sm:$0xff]
      %v2824 = vld [vmem:[%s2227 + $0x62] sm:$0xff]
      %v2825 = vld [vmem:[%s2227 + $0x6a] sm:$0xff]
      %v2826 = vld [vmem:[%s2227 + $0x7a] sm:$0xff]
      %v2827 = vld [vmem:[%s2227 + $0x82] sm:$0xff]
      %v2828 = vld [vmem:[%s2227 + $0x92] sm:$0xff]
      %v2829 = vld [vmem:[%s2227 + $0x9a] sm:$0xff]
      %v2830 = vld [vmem:[%s2227 + $0xaa] sm:$0xff]
      %v2831 = vld [vmem:[%s2227 + $0xb2] sm:$0xff]
      %v2832 = vld [vmem:[%s2227 + $0xc2] sm:$0xff]
      %v2833 = vld [vmem:[%s2227 + $0xca] sm:$0xff]
      %v2834 = vld [vmem:[%s2227 + $0xda] sm:$0xff]
      %v2835 = vld [vmem:[%s2227 + $0xe2] sm:$0xff]
      %v2836 = vld [vmem:[%s2227 + $0xf2] sm:$0xff]
      %v2837 = vld [vmem:[%s2227 + $0xfa] sm:$0xff]
      %v2838 = vld [vmem:[%s2227 + $0x10a] sm:$0xff]
      %v2839 = vld [vmem:[%s2227 + $0x112] sm:$0xff]
      %v2840 = vld [vmem:[%s2227 + $0x122] sm:$0xff]
      %v2841 = vld [vmem:[%s2227 + $0x12a] sm:$0xff]
      %v2842 = vld [vmem:[%s2227 + $0x13a] sm:$0xff]
      %v2843 = vld [vmem:[%s2227 + $0x142] sm:$0xff]
      %v2844 = vld [vmem:[%s2227 + $0x152] sm:$0xff]
      %v2845 = vld [vmem:[%s2227 + $0x15a] sm:$0xff]
      %v2846 = vld [vmem:[%s2227 + $0x16a] sm:$0xff]
      %v2847 = vld [vmem:[%s2227 + $0x172] sm:$0xff]
      %v2848 = vpack.c.bf16 %v2817, %v2816
      %v2849 = vpack.c.bf16 %v2819, %v2818
      %v2850 = vpack.c.bf16 %v2821, %v2820
      %v2851 = vpack.c.bf16 %v2823, %v2822
      %v2852 = vpack.c.bf16 %v2825, %v2824
      %v2853 = vpack.c.bf16 %v2827, %v2826
      %v2854 = vpack.c.bf16 %v2829, %v2828
      %v2855 = vpack.c.bf16 %v2831, %v2830
      %v2856 = vpack.c.bf16 %v2833, %v2832
      %v2857 = vpack.c.bf16 %v2835, %v2834
      %v2858 = vpack.c.bf16 %v2837, %v2836
      %v2859 = vpack.c.bf16 %v2839, %v2838
      %v2860 = vpack.c.bf16 %v2841, %v2840
      %v2861 = vpack.c.bf16 %v2843, %v2842
      %v2862 = vpack.c.bf16 %v2845, %v2844
      %v2863 = vpack.c.bf16 %v2847, %v2846
      %v2865 = vsel %vm443, %v2848, 0
      %v2868 = vsel %vm443, %v2849, 0
      %v2871 = vsel %vm443, %v2850, 0
      %v2874 = vsel %vm443, %v2851, 0
      %v2877 = vsel %vm443, %v2852, 0
      %v2880 = vsel %vm443, %v2853, 0
      %v2883 = vsel %vm443, %v2854, 0
      %v2886 = vsel %vm443, %v2855, 0
      %v2889 = vsel %vm443, %v2856, 0
      %v2892 = vsel %vm443, %v2857, 0
      %v2895 = vsel %vm443, %v2858, 0
      %v2898 = vsel %vm443, %v2859, 0
      %v2901 = vsel %vm443, %v2860, 0
      %v2904 = vsel %vm443, %v2861, 0
      %v2907 = vsel %vm443, %v2862, 0
      %v2910 = vsel %vm443, %v2863, 0
      %v2913 = vsel %vm672, %v2226, 0
      %2915 = vmatprep.subr.bf16.mxu0 0
      %2916 = vmatpush1.bf16.msra.mxu0 %v2913
      %2917 = vmatprep.subr.bf16.mxu0 0
      %2918 = vmatpush1.bf16.msra.mxu0 0
      %2919 = vmatprep.subr.bf16.mxu0 0
      %2920 = vmatpush1.bf16.msra.mxu0 0
      %2921 = vmatprep.subr.bf16.mxu0 0
      %2922 = vmatpush1.bf16.msra.mxu0 0
      %2923 = vmatprep.subr.bf16.mxu0 0
      %2924 = vmatpush1.bf16.msra.mxu0 0
      %2925 = vmatprep.subr.bf16.mxu0 0
      %2926 = vmatpush1.bf16.msra.mxu0 0
      %2927 = vmatprep.subr.bf16.mxu0 0
      %2928 = vmatpush1.bf16.msra.mxu0 0
      %2929 = vmatprep.subr.bf16.mxu0 0
      %2930 = vmatpush1.bf16.msra.mxu0 0
      %2931 = vmatprep.subr.bf16.mxu0 0
      %2932 = vmatpush1.bf16.msra.mxu0 0
      %2933 = vmatprep.subr.bf16.mxu0 0
      %2934 = vmatpush1.bf16.msra.mxu0 0
      %2935 = vmatprep.subr.bf16.mxu0 0
      %2936 = vmatpush1.bf16.msra.mxu0 0
      %2937 = vmatprep.subr.bf16.mxu0 0
      %2938 = vmatpush1.bf16.msra.mxu0 0
      %2939 = vmatprep.subr.bf16.mxu0 0
      %2940 = vmatpush1.bf16.msra.mxu0 0
      %2941 = vmatprep.subr.bf16.mxu0 0
      %2942 = vmatpush1.bf16.msra.mxu0 0
      %2943 = vmatprep.subr.bf16.mxu0 0
      %2944 = vmatpush1.bf16.msra.mxu0 0
      %2945 = vmatprep.subr.bf16.mxu0 0
      %2946 = vmatpush1.bf16.msra.mxu0 0
      %2947 = vmatprep.mubr.bf16.mxu0 0
      %2948 = vmatmul.mubr.bf16.gmra.mrb[0].mxu0 %v2865
      %v2949 = vpop.f32.mrb[0].mxu0
      %v2950 = vadd.f32 0.0, %v2949
      %v2951 = vpop.f32.mrb[0].mxu0
      %v2952 = vpop.f32.mrb[0].mxu0
      %v2953 = vadd.f32 0.0, %v2952
      %v2954 = vpop.f32.mrb[0].mxu0
      %2955 = vmatprep.mubr.bf16.mxu0 0
      %2956 = vmatmul.mubr.bf16.gmra.mrb[0].mxu0 %v2868
      %v2957 = vpop.f32.mrb[0].mxu0
      %v2958 = vadd.f32 0.0, %v2957
      %v2959 = vpop.f32.mrb[0].mxu0
      %v2960 = vpop.f32.mrb[0].mxu0
      %v2961 = vadd.f32 0.0, %v2960
      %v2962 = vpop.f32.mrb[0].mxu0
      %2963 = vmatprep.mubr.bf16.mxu0 0
      %2964 = vmatmul.mubr.bf16.gmra.mrb[0].mxu0 %v2871
      %v2965 = vpop.f32.mrb[0].mxu0
      %v2966 = vadd.f32 0.0, %v2965
      %v2967 = vpop.f32.mrb[0].mxu0
      %v2968 = vpop.f32.mrb[0].mxu0
      %v2969 = vadd.f32 0.0, %v2968
      %v2970 = vpop.f32.mrb[0].mxu0
      %2971 = vmatprep.mubr.bf16.mxu0 0
      %2972 = vmatmul.mubr.bf16.gmra.mrb[0].mxu0 %v2874
      %v2973 = vpop.f32.mrb[0].mxu0
      %v2974 = vadd.f32 0.0, %v2973
      %v2975 = vpop.f32.mrb[0].mxu0
      %v2976 = vpop.f32.mrb[0].mxu0
      %v2977 = vadd.f32 0.0, %v2976
      %v2978 = vpop.f32.mrb[0].mxu0
      %2979 = vmatprep.mubr.bf16.mxu0 0
      %2980 = vmatmul.mubr.bf16.gmra.mrb[0].mxu0 %v2877
      %v2981 = vpop.f32.mrb[0].mxu0
      %v2982 = vadd.f32 0.0, %v2981
      %v2983 = vpop.f32.mrb[0].mxu0
      %v2984 = vpop.f32.mrb[0].mxu0
      %v2985 = vadd.f32 0.0, %v2984
      %v2986 = vpop.f32.mrb[0].mxu0
      %2987 = vmatprep.mubr.bf16.mxu0 0
      %2988 = vmatmul.mubr.bf16.gmra.mrb[0].mxu0 %v2880
      %v2989 = vpop.f32.mrb[0].mxu0
      %v2990 = vadd.f32 0.0, %v2989
      %v2991 = vpop.f32.mrb[0].mxu0
      %v2992 = vpop.f32.mrb[0].mxu0
      %v2993 = vadd.f32 0.0, %v2992
      %v2994 = vpop.f32.mrb[0].mxu0
      %2995 = vmatprep.mubr.bf16.mxu0 0
      %2996 = vmatmul.mubr.bf16.gmra.mrb[0].mxu0 %v2883
      %v2997 = vpop.f32.mrb[0].mxu0
      %v2998 = vadd.f32 0.0, %v2997
      %v2999 = vpop.f32.mrb[0].mxu0
      %v3000 = vpop.f32.mrb[0].mxu0
      %v3001 = vadd.f32 0.0, %v3000
      %v3002 = vpop.f32.mrb[0].mxu0
      %3003 = vmatprep.mubr.bf16.mxu0 0
      %3004 = vmatmul.mubr.bf16.gmra.mrb[0].mxu0 %v2886
      %v3005 = vpop.f32.mrb[0].mxu0
      %v3006 = vadd.f32 0.0, %v3005
      %v3007 = vpop.f32.mrb[0].mxu0
      %v3008 = vpop.f32.mrb[0].mxu0
      %v3009 = vadd.f32 0.0, %v3008
      %v3010 = vpop.f32.mrb[0].mxu0
      %3011 = vmatprep.mubr.bf16.mxu0 0
      %3012 = vmatmul.mubr.bf16.gmra.mrb[0].mxu0 %v2889
      %v3013 = vpop.f32.mrb[0].mxu0
      %v3014 = vadd.f32 0.0, %v3013
      %v3015 = vpop.f32.mrb[0].mxu0
      %v3016 = vpop.f32.mrb[0].mxu0
      %v3017 = vadd.f32 0.0, %v3016
      %v3018 = vpop.f32.mrb[0].mxu0
      %3019 = vmatprep.mubr.bf16.mxu0 0
      %3020 = vmatmul.mubr.bf16.gmra.mrb[0].mxu0 %v2892
      %v3021 = vpop.f32.mrb[0].mxu0
      %v3022 = vadd.f32 0.0, %v3021
      %v3023 = vpop.f32.mrb[0].mxu0
      %v3024 = vpop.f32.mrb[0].mxu0
      %v3025 = vadd.f32 0.0, %v3024
      %v3026 = vpop.f32.mrb[0].mxu0
      %3027 = vmatprep.mubr.bf16.mxu0 0
      %3028 = vmatmul.mubr.bf16.gmra.mrb[0].mxu0 %v2895
      %v3029 = vpop.f32.mrb[0].mxu0
      %v3030 = vadd.f32 0.0, %v3029
      %v3031 = vpop.f32.mrb[0].mxu0
      %v3032 = vpop.f32.mrb[0].mxu0
      %v3033 = vadd.f32 0.0, %v3032
      %v3034 = vpop.f32.mrb[0].mxu0
      %3035 = vmatprep.mubr.bf16.mxu0 0
      %3036 = vmatmul.mubr.bf16.gmra.mrb[0].mxu0 %v2898
      %v3037 = vpop.f32.mrb[0].mxu0
      %v3038 = vadd.f32 0.0, %v3037
      %v3039 = vpop.f32.mrb[0].mxu0
      %v3040 = vpop.f32.mrb[0].mxu0
      %v3041 = vadd.f32 0.0, %v3040
      %v3042 = vpop.f32.mrb[0].mxu0
      %3043 = vmatprep.mubr.bf16.mxu0 0
      %3044 = vmatmul.mubr.bf16.gmra.mrb[0].mxu0 %v2901
      %v3045 = vpop.f32.mrb[0].mxu0
      %v3046 = vadd.f32 0.0, %v3045
      %v3047 = vpop.f32.mrb[0].mxu0
      %v3048 = vpop.f32.mrb[0].mxu0
      %v3049 = vadd.f32 0.0, %v3048
      %v3050 = vpop.f32.mrb[0].mxu0
      %3051 = vmatprep.mubr.bf16.mxu0 0
      %3052 = vmatmul.mubr.bf16.gmra.mrb[0].mxu0 %v2904
      %v3053 = vpop.f32.mrb[0].mxu0
      %v3054 = vadd.f32 0.0, %v3053
      %v3055 = vpop.f32.mrb[0].mxu0
      %v3056 = vpop.f32.mrb[0].mxu0
      %v3057 = vadd.f32 0.0, %v3056
      %v3058 = vpop.f32.mrb[0].mxu0
      %3059 = vmatprep.mubr.bf16.mxu0 0
      %3060 = vmatmul.mubr.bf16.gmra.mrb[0].mxu0 %v2907
      %v3061 = vpop.f32.mrb[0].mxu0
      %v3062 = vadd.f32 0.0, %v3061
      %v3063 = vpop.f32.mrb[0].mxu0
      %v3064 = vpop.f32.mrb[0].mxu0
      %v3065 = vadd.f32 0.0, %v3064
      %v3066 = vpop.f32.mrb[0].mxu0
      %3067 = vmatprep.mubr.bf16.mxu0 0
      %3068 = vmatmul.mubr.bf16.gmra.mrb[0].mxu0 %v2910
      %v3069 = vpop.f32.mrb[0].mxu0
      %v3070 = vadd.f32 0.0, %v3069
      %v3071 = vpop.f32.mrb[0].mxu0
      %v3072 = vpop.f32.mrb[0].mxu0
      %v3073 = vadd.f32 0.0, %v3072
      %v3074 = vpop.f32.mrb[0].mxu0
      %3075 = vdwg.mxu0
      %v3076 = vadd.f32 %v2784, %v2950
      %v3077 = vadd.f32 %v2785, %v2953
      %v3078 = vadd.f32 %v2786, %v2958
      %v3079 = vadd.f32 %v2787, %v2961
      %v3080 = vadd.f32 %v2788, %v2966
      %v3081 = vadd.f32 %v2789, %v2969
      %v3082 = vadd.f32 %v2790, %v2974
      %v3083 = vadd.f32 %v2791, %v2977
      %v3084 = vadd.f32 %v2792, %v2982
      %v3085 = vadd.f32 %v2793, %v2985
      %v3086 = vadd.f32 %v2794, %v2990
      %v3087 = vadd.f32 %v2795, %v2993
      %v3088 = vadd.f32 %v2796, %v2998
      %v3089 = vadd.f32 %v2797, %v3001
      %v3090 = vadd.f32 %v2798, %v3006
      %v3091 = vadd.f32 %v2799, %v3009
      %v3092 = vadd.f32 %v2800, %v3014
      %v3093 = vadd.f32 %v2801, %v3017
      %v3094 = vadd.f32 %v2802, %v3022
      %v3095 = vadd.f32 %v2803, %v3025
      %v3096 = vadd.f32 %v2804, %v3030
      %v3097 = vadd.f32 %v2805, %v3033
      %v3098 = vadd.f32 %v2806, %v3038
      %v3099 = vadd.f32 %v2807, %v3041
      %v3100 = vadd.f32 %v2808, %v3046
      %v3101 = vadd.f32 %v2809, %v3049
      %v3102 = vadd.f32 %v2810, %v3054
      %v3103 = vadd.f32 %v2811, %v3057
      %v3104 = vadd.f32 %v2812, %v3062
      %v3105 = vadd.f32 %v2813, %v3065
      %v3106 = vadd.f32 %v2814, %v3070
      %v3107 = vadd.f32 %v2815, %v3073
      %v3108 = vld [vmem:[%s4] sm:$0x1]
      %v3110 = vlaneseq
      %v3111 = vshrl.u32 %v3110, 7
      %v3112 = vsub.s32 0, %v3111
      %v3113 = vrot.slane %v3108, %v3112
      %v3115 = vadd.f32 %v3076, %v3113
      %v3116 = vadd.f32 %v3077, %v3113
      %v3117 = vadd.f32 %v3078, %v3113
      %v3118 = vadd.f32 %v3079, %v3113
      %v3119 = vadd.f32 %v3080, %v3113
      %v3120 = vadd.f32 %v3081, %v3113
      %v3121 = vadd.f32 %v3082, %v3113
      %v3122 = vadd.f32 %v3083, %v3113
      %v3123 = vadd.f32 %v3084, %v3113
      %v3124 = vadd.f32 %v3085, %v3113
      %v3125 = vadd.f32 %v3086, %v3113
      %v3126 = vadd.f32 %v3087, %v3113
      %v3127 = vadd.f32 %v3088, %v3113
      %v3128 = vadd.f32 %v3089, %v3113
      %v3129 = vadd.f32 %v3090, %v3113
      %v3130 = vadd.f32 %v3091, %v3113
      %v3131 = vadd.f32 %v3092, %v3113
      %v3132 = vadd.f32 %v3093, %v3113
      %v3133 = vadd.f32 %v3094, %v3113
      %v3134 = vadd.f32 %v3095, %v3113
      %v3135 = vadd.f32 %v3096, %v3113
      %v3136 = vadd.f32 %v3097, %v3113
      %v3137 = vadd.f32 %v3098, %v3113
      %v3138 = vadd.f32 %v3099, %v3113
      %v3139 = vadd.f32 %v3100, %v3113
      %v3140 = vadd.f32 %v3101, %v3113
      %v3141 = vadd.f32 %v3102, %v3113
      %v3142 = vadd.f32 %v3103, %v3113
      %v3143 = vadd.f32 %v3104, %v3113
      %v3144 = vadd.f32 %v3105, %v3113
      %v3145 = vadd.f32 %v3106, %v3113
      %v3146 = vadd.f32 %v3107, %v3113
      %v3147 = vadd.f32 %v3115, %v3116
      %v3148 = vadd.f32 %v3147, %v3117
      %v3149 = vadd.f32 %v3148, %v3118
      %v3150 = vadd.f32 %v3149, %v3119
      %v3151 = vadd.f32 %v3150, %v3120
      %v3152 = vadd.f32 %v3151, %v3121
      %v3153 = vadd.f32 %v3152, %v3122
      %v3154 = vadd.f32 %v3153, %v3123
      %v3155 = vadd.f32 %v3154, %v3124
      %v3156 = vadd.f32 %v3155, %v3125
      %v3157 = vadd.f32 %v3156, %v3126
      %v3158 = vadd.f32 %v3157, %v3127
      %v3159 = vadd.f32 %v3158, %v3128
      %v3160 = vadd.f32 %v3159, %v3129
      %v3161 = vadd.f32 %v3160, %v3130
      %v3162 = vadd.f32 %v3161, %v3131
      %v3163 = vadd.f32 %v3162, %v3132
      %v3164 = vadd.f32 %v3163, %v3133
      %v3165 = vadd.f32 %v3164, %v3134
      %v3166 = vadd.f32 %v3165, %v3135
      %v3167 = vadd.f32 %v3166, %v3136
      %v3168 = vadd.f32 %v3167, %v3137
      %v3169 = vadd.f32 %v3168, %v3138
      %v3170 = vadd.f32 %v3169, %v3139
      %v3171 = vadd.f32 %v3170, %v3140
      %v3172 = vadd.f32 %v3171, %v3141
      %v3173 = vadd.f32 %v3172, %v3142
      %v3174 = vadd.f32 %v3173, %v3143
      %v3175 = vadd.f32 %v3174, %v3144
      %v3176 = vadd.f32 %v3175, %v3145
      %v3177 = vadd.f32 %v3176, %v3146
      %v3178 = vrot.slane %v3177, 4
      %v3179 = vadd.f32 %v3177, %v3178
      %v3180 = vrot.slane %v3179, 2
      %v3181 = vadd.f32 %v3179, %v3180
      %v3182 = vrot.slane %v3181, 1
      %v3183 = vadd.f32 %v3181, %v3182
      %v3184 = vrcp.pop 256.0
      %v3185 = vmul.f32 %v3183, %v3184
      %v3186 = vsub.f32 %v3115, %v3185
      %v3187 = vsub.f32 %v3116, %v3185
      %v3188 = vsub.f32 %v3117, %v3185
      %v3189 = vsub.f32 %v3118, %v3185
      %v3190 = vsub.f32 %v3119, %v3185
      %v3191 = vsub.f32 %v3120, %v3185
      %v3192 = vsub.f32 %v3121, %v3185
      %v3193 = vsub.f32 %v3122, %v3185
      %v3194 = vsub.f32 %v3123, %v3185
      %v3195 = vsub.f32 %v3124, %v3185
      %v3196 = vsub.f32 %v3125, %v3185
      %v3197 = vsub.f32 %v3126, %v3185
      %v3198 = vsub.f32 %v3127, %v3185
      %v3199 = vsub.f32 %v3128, %v3185
      %v3200 = vsub.f32 %v3129, %v3185
      %v3201 = vsub.f32 %v3130, %v3185
      %v3202 = vsub.f32 %v3131, %v3185
      %v3203 = vsub.f32 %v3132, %v3185
      %v3204 = vsub.f32 %v3133, %v3185
      %v3205 = vsub.f32 %v3134, %v3185
      %v3206 = vsub.f32 %v3135, %v3185
      %v3207 = vsub.f32 %v3136, %v3185
      %v3208 = vsub.f32 %v3137, %v3185
      %v3209 = vsub.f32 %v3138, %v3185
      %v3210 = vsub.f32 %v3139, %v3185
      %v3211 = vsub.f32 %v3140, %v3185
      %v3212 = vsub.f32 %v3141, %v3185
      %v3213 = vsub.f32 %v3142, %v3185
      %v3214 = vsub.f32 %v3143, %v3185
      %v3215 = vsub.f32 %v3144, %v3185
      %v3216 = vsub.f32 %v3145, %v3185
      %v3217 = vsub.f32 %v3146, %v3185
      %v3218 = vmul.f32 %v3186, %v3186
      %v3219 = vmul.f32 %v3187, %v3187
      %v3220 = vmul.f32 %v3188, %v3188
      %v3221 = vmul.f32 %v3189, %v3189
      %v3222 = vmul.f32 %v3190, %v3190
      %v3223 = vmul.f32 %v3191, %v3191
      %v3224 = vmul.f32 %v3192, %v3192
      %v3225 = vmul.f32 %v3193, %v3193
      %v3226 = vmul.f32 %v3194, %v3194
      %v3227 = vmul.f32 %v3195, %v3195
      %v3228 = vmul.f32 %v3196, %v3196
      %v3229 = vmul.f32 %v3197, %v3197
      %v3230 = vmul.f32 %v3198, %v3198
      %v3231 = vmul.f32 %v3199, %v3199
      %v3232 = vmul.f32 %v3200, %v3200
      %v3233 = vmul.f32 %v3201, %v3201
      %v3234 = vmul.f32 %v3202, %v3202
      %v3235 = vmul.f32 %v3203, %v3203
      %v3236 = vmul.f32 %v3204, %v3204
      %v3237 = vmul.f32 %v3205, %v3205
      %v3238 = vmul.f32 %v3206, %v3206
      %v3239 = vmul.f32 %v3207, %v3207
      %v3240 = vmul.f32 %v3208, %v3208
      %v3241 = vmul.f32 %v3209, %v3209
      %v3242 = vmul.f32 %v3210, %v3210
      %v3243 = vmul.f32 %v3211, %v3211
      %v3244 = vmul.f32 %v3212, %v3212
      %v3245 = vmul.f32 %v3213, %v3213
      %v3246 = vmul.f32 %v3214, %v3214
      %v3247 = vmul.f32 %v3215, %v3215
      %v3248 = vmul.f32 %v3216, %v3216
      %v3249 = vmul.f32 %v3217, %v3217
      %v3250 = vadd.f32 %v3218, %v3219
      %v3251 = vadd.f32 %v3250, %v3220
      %v3252 = vadd.f32 %v3251, %v3221
      %v3253 = vadd.f32 %v3252, %v3222
      %v3254 = vadd.f32 %v3253, %v3223
      %v3255 = vadd.f32 %v3254, %v3224
      %v3256 = vadd.f32 %v3255, %v3225
      %v3257 = vadd.f32 %v3256, %v3226
      %v3258 = vadd.f32 %v3257, %v3227
      %v3259 = vadd.f32 %v3258, %v3228
      %v3260 = vadd.f32 %v3259, %v3229
      %v3261 = vadd.f32 %v3260, %v3230
      %v3262 = vadd.f32 %v3261, %v3231
      %v3263 = vadd.f32 %v3262, %v3232
      %v3264 = vadd.f32 %v3263, %v3233
      %v3265 = vadd.f32 %v3264, %v3234
      %v3266 = vadd.f32 %v3265, %v3235
      %v3267 = vadd.f32 %v3266, %v3236
      %v3268 = vadd.f32 %v3267, %v3237
      %v3269 = vadd.f32 %v3268, %v3238
      %v3270 = vadd.f32 %v3269, %v3239
      %v3271 = vadd.f32 %v3270, %v3240
      %v3272 = vadd.f32 %v3271, %v3241
      %v3273 = vadd.f32 %v3272, %v3242
      %v3274 = vadd.f32 %v3273, %v3243
      %v3275 = vadd.f32 %v3274, %v3244
      %v3276 = vadd.f32 %v3275, %v3245
      %v3277 = vadd.f32 %v3276, %v3246
      %v3278 = vadd.f32 %v3277, %v3247
      %v3279 = vadd.f32 %v3278, %v3248
      %v3280 = vadd.f32 %v3279, %v3249
      %v3281 = vrot.slane %v3280, 4
      %v3282 = vadd.f32 %v3280, %v3281
      %v3283 = vrot.slane %v3282, 2
      %v3284 = vadd.f32 %v3282, %v3283
      %v3285 = vrot.slane %v3284, 1
      %v3286 = vadd.f32 %v3284, %v3285
      %3287 = vst [vmem:[%s295] sm:$0xff] %v3185
      %3288 = vst [vmem:[%s299] sm:$0xff] %v3286
      %v3289 = vpack.c.bf16 %v3116, %v3115
      %v3290 = vpack.c.bf16 %v3118, %v3117
      %v3291 = vpack.c.bf16 %v3120, %v3119
      %v3292 = vpack.c.bf16 %v3122, %v3121
      %v3293 = vpack.c.bf16 %v3124, %v3123
      %v3294 = vpack.c.bf16 %v3126, %v3125
      %v3295 = vpack.c.bf16 %v3128, %v3127
      %v3296 = vpack.c.bf16 %v3130, %v3129
      %v3297 = vpack.c.bf16 %v3132, %v3131
      %v3298 = vpack.c.bf16 %v3134, %v3133
      %v3299 = vpack.c.bf16 %v3136, %v3135
      %v3300 = vpack.c.bf16 %v3138, %v3137
      %v3301 = vpack.c.bf16 %v3140, %v3139
      %v3302 = vpack.c.bf16 %v3142, %v3141
      %v3303 = vpack.c.bf16 %v3144, %v3143
      %v3304 = vpack.c.bf16 %v3146, %v3145
      %v3321 = vunpack.c.l.b16 %v3289
      %v3322 = vunpack.c.h.b16 %v3289
      %v3323 = vunpack.c.l.b16 %v3290
      %v3324 = vunpack.c.h.b16 %v3290
      %v3325 = vunpack.c.l.b16 %v3291
      %v3326 = vunpack.c.h.b16 %v3291
      %v3327 = vunpack.c.l.b16 %v3292
      %v3328 = vunpack.c.h.b16 %v3292
      %v3329 = vunpack.c.l.b16 %v3293
      %v3330 = vunpack.c.h.b16 %v3293
      %v3331 = vunpack.c.l.b16 %v3294
      %v3332 = vunpack.c.h.b16 %v3294
      %v3333 = vunpack.c.l.b16 %v3295
      %v3334 = vunpack.c.h.b16 %v3295
      %v3335 = vunpack.c.l.b16 %v3296
      %v3336 = vunpack.c.h.b16 %v3296
      %v3337 = vunpack.c.l.b16 %v3297
      %v3338 = vunpack.c.h.b16 %v3297
      %v3339 = vunpack.c.l.b16 %v3298
      %v3340 = vunpack.c.h.b16 %v3298
      %v3341 = vunpack.c.l.b16 %v3299
      %v3342 = vunpack.c.h.b16 %v3299
      %v3343 = vunpack.c.l.b16 %v3300
      %v3344 = vunpack.c.h.b16 %v3300
      %v3345 = vunpack.c.l.b16 %v3301
      %v3346 = vunpack.c.h.b16 %v3301
      %v3347 = vunpack.c.l.b16 %v3302
      %v3348 = vunpack.c.h.b16 %v3302
      %v3349 = vunpack.c.l.b16 %v3303
      %v3350 = vunpack.c.h.b16 %v3303
      %v3351 = vunpack.c.l.b16 %v3304
      %v3352 = vunpack.c.h.b16 %v3304
      %v3353 = vpack.c.b16 %v3321, %v3321
      %v3354 = vpack.c.b16 %v3322, %v3322
      %v3355 = vpack.c.b16 %v3323, %v3323
      %v3356 = vpack.c.b16 %v3324, %v3324
      %v3357 = vpack.c.b16 %v3325, %v3325
      %v3358 = vpack.c.b16 %v3326, %v3326
      %v3359 = vpack.c.b16 %v3327, %v3327
      %v3360 = vpack.c.b16 %v3328, %v3328
      %v3361 = vpack.c.b16 %v3329, %v3329
      %v3362 = vpack.c.b16 %v3330, %v3330
      %v3363 = vpack.c.b16 %v3331, %v3331
      %v3364 = vpack.c.b16 %v3332, %v3332
      %v3365 = vpack.c.b16 %v3333, %v3333
      %v3366 = vpack.c.b16 %v3334, %v3334
      %v3367 = vpack.c.b16 %v3335, %v3335
      %v3368 = vpack.c.b16 %v3336, %v3336
      %v3369 = vpack.c.b16 %v3337, %v3337
      %v3370 = vpack.c.b16 %v3338, %v3338
      %v3371 = vpack.c.b16 %v3339, %v3339
      %v3372 = vpack.c.b16 %v3340, %v3340
      %v3373 = vpack.c.b16 %v3341, %v3341
      %v3374 = vpack.c.b16 %v3342, %v3342
      %v3375 = vpack.c.b16 %v3343, %v3343
      %v3376 = vpack.c.b16 %v3344, %v3344
      %v3377 = vpack.c.b16 %v3345, %v3345
      %v3378 = vpack.c.b16 %v3346, %v3346
      %v3379 = vpack.c.b16 %v3347, %v3347
      %v3380 = vpack.c.b16 %v3348, %v3348
      %v3381 = vpack.c.b16 %v3349, %v3349
      %v3382 = vpack.c.b16 %v3350, %v3350
      %v3383 = vpack.c.b16 %v3351, %v3351
      %v3384 = vpack.c.b16 %v3352, %v3352
      %3417 = vst [vmem:[%s291] sm:$0xf] %v3353
      %3418 = vst [vmem:[%s291 + $0x4] sm:$0xf] %v3354
      %3419 = vst [vmem:[%s291 + $0x8] sm:$0xf] %v3355
      %3420 = vst [vmem:[%s291 + $0xc] sm:$0xf] %v3356
      %3421 = vst [vmem:[%s291 + $0x10] sm:$0xf] %v3357
      %3422 = vst [vmem:[%s291 + $0x14] sm:$0xf] %v3358
      %3423 = vst [vmem:[%s291 + $0x18] sm:$0xf] %v3359
      %3424 = vst [vmem:[%s291 + $0x1c] sm:$0xf] %v3360
      %3425 = vst [vmem:[%s291 + $0x20] sm:$0xf] %v3361
      %3426 = vst [vmem:[%s291 + $0x24] sm:$0xf] %v3362
      %3427 = vst [vmem:[%s291 + $0x28] sm:$0xf] %v3363
      %3428 = vst [vmem:[%s291 + $0x2c] sm:$0xf] %v3364
      %3429 = vst [vmem:[%s291 + $0x30] sm:$0xf] %v3365
      %3430 = vst [vmem:[%s291 + $0x34] sm:$0xf] %v3366
      %3431 = vst [vmem:[%s291 + $0x38] sm:$0xf] %v3367
      %3432 = vst [vmem:[%s291 + $0x3c] sm:$0xf] %v3368
      %3433 = vst [vmem:[%s291 + $0x40] sm:$0xf] %v3369
      %3434 = vst [vmem:[%s291 + $0x44] sm:$0xf] %v3370
      %3435 = vst [vmem:[%s291 + $0x48] sm:$0xf] %v3371
      %3436 = vst [vmem:[%s291 + $0x4c] sm:$0xf] %v3372
      %3437 = vst [vmem:[%s291 + $0x50] sm:$0xf] %v3373
      %3438 = vst [vmem:[%s291 + $0x54] sm:$0xf] %v3374
      %3439 = vst [vmem:[%s291 + $0x58] sm:$0xf] %v3375
      %3440 = vst [vmem:[%s291 + $0x5c] sm:$0xf] %v3376
      %3441 = vst [vmem:[%s291 + $0x60] sm:$0xf] %v3377
      %3442 = vst [vmem:[%s291 + $0x64] sm:$0xf] %v3378
      %3443 = vst [vmem:[%s291 + $0x68] sm:$0xf] %v3379
      %3444 = vst [vmem:[%s291 + $0x6c] sm:$0xf] %v3380
      %3445 = vst [vmem:[%s291 + $0x70] sm:$0xf] %v3381
      %3446 = vst [vmem:[%s291 + $0x74] sm:$0xf] %v3382
      %3447 = vst [vmem:[%s291 + $0x78] sm:$0xf] %v3383
      %3448 = vst [vmem:[%s291 + $0x7c] sm:$0xf] %v3384
      %p3449 = scmp.lt.s32.totalorder %s19, 1
      %s3450 = scalar_select %p3449, %s19, 1
      %s3451 = smul.addr %s3450, 32
      %s3452 = smul.addr %s3451, 4
      %s3453 = scalar_lea.vmem %s5, %s3452
      %p3454 = scmp.lt.s32.totalorder %s19, 1
      %s3455 = scalar_select %p3454, %s19, 1
      %s3456 = smul.addr %s3455, 8
      %s3457 = scalar_lea.vmem %s6, %s3456
      %p3458 = scmp.lt.s32.totalorder %s19, 1
      %s3459 = scalar_select %p3458, %s19, 1
      %s3460 = smul.addr %s3459, 8
      %s3461 = scalar_lea.vmem %s7, %s3460
      // Predicated region
      $region41: #{resu_block_forward.4} parent=39 // pred_check
        %p3462 = pneg %p147
      $region42: #{resu_block_forward.4} parent=39 // pred_check_branch
        %3464 = sbr.rel (%p3462) target = $region44
      $region43: #{resu_block_forward.4} parent=39 // pred_region
        _
      $region44: #{resu_block_forward.4} parent=39 // pred_fallthru
        _
      // Predicated region
      $region45: #{resu_block_forward.4} parent=39 // pred_check
        %p3465 = pneg %p173
      $region46: #{resu_block_forward.4} parent=39 // pred_check_branch
        %3467 = sbr.rel (%p3465) target = $region48
      $region47: #{resu_block_forward.4} parent=39 // pred_region
        _
      $region48: #{resu_block_forward.4} parent=39 // pred_fallthru
        _
      // Predicated region
      $region49: #{resu_block_forward.4} parent=39 // pred_check
        %p3468 = pneg %p199
      $region50: #{resu_block_forward.4} parent=39 // pred_check_branch
        %3470 = sbr.rel (%p3468) target = $region52
      $region51: #{resu_block_forward.4} parent=39 // pred_region
        _
      $region52: #{resu_block_forward.4} parent=39 // pred_fallthru
        _
    $region40: #{resu_block_forward.4} parent=5 // pred_fallthru
      _
    %p3471 = scmp.le.s32.totalorder 2, %s14
    // Predicated region
    $region53: #{resu_block_forward.4} parent=5 // pred_check
      %p3472 = pneg %p3471
    $region54: #{resu_block_forward.4} parent=5 // pred_check_branch
      %3474 = sbr.rel (%p3472) target = $region56
    $region55: #{resu_block_forward.4} parent=5 // pred_region
      %s3475 = ssub.s32 %s14, 2
      // Predicated region
      $region57: #{resu_block_forward.4} parent=55 // pred_check
        %p3476 = pneg %p153
      $region58: #{resu_block_forward.4} parent=55 // pred_check_branch
        %3478 = sbr.rel (%p3476) target = $region60
      $region59: #{resu_block_forward.4} parent=55 // pred_region
        %p3479 = scmp.lt.s32.totalorder %s20, 1
        %s3480 = scalar_select %p3479, %s20, 1
        %s3481 = smul.addr %s3480, 32
        %s3482 = smul.addr %s3481, 4
        %s3483 = scalar_lea.vmem %s5, %s3482
      $region60: #{resu_block_forward.4} parent=55 // pred_fallthru
        _
      // Predicated region
      $region61: #{resu_block_forward.4} parent=55 // pred_check
        %p3484 = pneg %p179
      $region62: #{resu_block_forward.4} parent=55 // pred_check_branch
        %3486 = sbr.rel (%p3484) target = $region64
      $region63: #{resu_block_forward.4} parent=55 // pred_region
        %p3487 = scmp.lt.s32.totalorder %s20, 1
        %s3488 = scalar_select %p3487, %s20, 1
        %s3489 = smul.addr %s3488, 8
        %s3490 = scalar_lea.vmem %s6, %s3489
      $region64: #{resu_block_forward.4} parent=55 // pred_fallthru
        _
      // Predicated region
      $region65: #{resu_block_forward.4} parent=55 // pred_check
        %p3491 = pneg %p205
      $region66: #{resu_block_forward.4} parent=55 // pred_check_branch
        %3493 = sbr.rel (%p3491) target = $region68
      $region67: #{resu_block_forward.4} parent=55 // pred_region
        %p3494 = scmp.lt.s32.totalorder %s20, 1
        %s3495 = scalar_select %p3494, %s20, 1
        %s3496 = smul.addr %s3495, 8
        %s3497 = scalar_lea.vmem %s7, %s3496
      $region68: #{resu_block_forward.4} parent=55 // pred_fallthru
        _
    $region56: #{resu_block_forward.4} parent=5 // pred_fallthru
      _
  $region6: #{resu_block_forward.4} parent=0 // loop_footer
    %s18 = sadd.s32 1, %s14
  $region7: #{resu_block_forward.4} parent=0 // loop_footer_branch
    %13 = sbr.rel target = $region3
  $region8: #{resu_block_forward.4} parent=0 // loop_exit
    _

// kernel: resu_block_forward.5
$region0: #{resu_block_forward.5}
  #allocation0 [shape = 'u32[]', space=smem, size = 0x4, offset = 0x4, fixed_abs, tag = 'smem constant byte address 0x4 - core index']
  #allocation1 [shape = 'u32[144,128]{1,0:T(1,128)}', space=vmem, size = 0x12000, scoped, tag = 'internal scratch']
  #allocation2 [shape = 'f32[18,18,128]{2,1,0:T(8,128)}', space=vmem, size = 0x36000, scoped, tag = 'scratch operand']
  %s0 = inlined_call_operand.vmem [shape: bf16[2,256,128], index: 0, kind: input, shape index: {}]
  %s1 = inlined_call_operand.vmem [shape: bf16[2,256,128], index: 1, kind: input, shape index: {}]
  %s2 = inlined_call_operand.vmem [shape: f32[1,128], index: 2, kind: input, shape index: {}]
  %s3 = inlined_call_operand.vmem [shape: f32[1,128], index: 3, kind: input, shape index: {}]
  %s4 = inlined_call_operand.vmem [shape: bf16[3,384,128], index: 4, kind: input, shape index: {}]
  %s5 = inlined_call_operand.vmem [shape: f32[1,128], index: 5, kind: input, shape index: {}]
  %s6 = inlined_call_operand.vmem [shape: f32[2,256,128], index: 6, kind: output, shape index: {}]
  %s7 = sld [smem:[#allocation0]]
  $region57: #{resu_block_forward.5} parent=0
    _
  %s9 = ssub.s32 1, %s7
  %s10 = scalar_select 0, %s9, %s7
  loop: start=0, step=1, limit=4
  $region2: #{resu_block_forward.5} parent=0 // loop_pre_header
    _
  $region3: #{resu_block_forward.5} parent=0 // loop_header
    %s12 = sphi 0, %s16
    %p13 = scmp.ge.s32.totalorder %s12, 4
    %s22 = sphi 0, %s24
    %s25 = sphi 0, %s22
    %s26 = sphi 0, %s25
    %s42 = sphi 0, %s26
    %s48 = sphi 0, %s50
    %s51 = sphi 0, %s48
    %s52 = sphi 0, %s51
    %s68 = sphi 0, %s52
    %s72 = sphi 0, %s72
    %s74 = sphi 0, %s72
    %s75 = sphi 0, %s74
    %s89 = sphi 0, %s75
    %s93 = sphi 0, %s93
    %s95 = sphi 0, %s93
    %s96 = sphi 0, %s95
    %s110 = sphi 0, %s96
    %s114 = sphi 0, %s114
    %s116 = sphi 0, %s114
    %s117 = sphi 0, %s116
    %s131 = sphi 0, %s117
    %s135 = sphi 0, %s135
    %s137 = sphi 0, %s135
    %s138 = sphi 0, %s137
    %s152 = sphi 0, %s138
    %s158 = sphi 0, %s160
    %s161 = sphi 0, %s158
    %s162 = sphi 0, %s161
    %s178 = sphi 0, %s162
  $region4: #{resu_block_forward.5} parent=0 // loop_header_branch
    %15 = sbr.rel (%p13) target = $region8
  $region5: #{resu_block_forward.5} parent=0 // loop_body
    %s17 = ssub.s32 %s12, 1
    %s18 = ssub.s32 %s12, 2
    %s19 = sadd.s32 %s12, 1
    %s20 = ssub.s32 %s12, %s19
    %p21 = scmp.eq.s32.totalorder %s20, 0
    %s23 = sadd.s32 %s22, 1
    %s24 = scalar_select %p21, %s22, %s23
    %p27 = pneg %p21
    %p28 = scmp.eq.s32.totalorder %s12, 1
    %p29 = por %p27, %p28
    %p30 = scmp.ne.s32.totalorder %s22, %s25
    %p31 = scmp.eq.s32.totalorder %s12, 0
    %p32 = por %p30, %p31
    %p33 = scmp.ne.s32.totalorder %s22, %s25
    %p34 = scmp.eq.s32.totalorder %s17, 1
    %p35 = por %p33, %p34
    %p36 = scmp.ne.s32.totalorder %s25, %s26
    %p37 = scmp.eq.s32.totalorder %s17, 0
    %p38 = por %p36, %p37
    %p39 = scmp.ne.s32.totalorder %s25, %s26
    %p40 = scmp.eq.s32.totalorder %s18, 1
    %p41 = por %p39, %p40
    %p43 = scmp.ne.s32.totalorder %s26, %s42
    %p44 = scmp.eq.s32.totalorder %s18, 0
    %p45 = por %p43, %p44
    %s46 = ssub.s32 %s12, %s19
    %p47 = scmp.eq.s32.totalorder %s46, 0
    %s49 = sadd.s32 %s48, 1
    %s50 = scalar_select %p47, %s48, %s49
    %p53 = pneg %p47
    %p54 = scmp.eq.s32.totalorder %s12, 1
    %p55 = por %p53, %p54
    %p56 = scmp.ne.s32.totalorder %s48, %s51
    %p57 = scmp.eq.s32.totalorder %s12, 0
    %p58 = por %p56, %p57
    %p59 = scmp.ne.s32.totalorder %s48, %s51
    %p60 = scmp.eq.s32.totalorder %s17, 1
    %p61 = por %p59, %p60
    %p62 = scmp.ne.s32.totalorder %s51, %s52
    %p63 = scmp.eq.s32.totalorder %s17, 0
    %p64 = por %p62, %p63
    %p65 = scmp.ne.s32.totalorder %s51, %s52
    %p66 = scmp.eq.s32.totalorder %s18, 1
    %p67 = por %p65, %p66
    %p69 = scmp.ne.s32.totalorder %s52, %s68
    %p70 = scmp.eq.s32.totalorder %s18, 0
    %p71 = por %p69, %p70
    %s73 = sadd.s32 %s72, 1
    %p76 = scmp.eq.s32.totalorder %s12, 1
    %p77 = scmp.ne.s32.totalorder %s72, %s74
    %p78 = scmp.eq.s32.totalorder %s12, 0
    %p79 = por %p77, %p78
    %p80 = scmp.ne.s32.totalorder %s72, %s74
    %p81 = scmp.eq.s32.totalorder %s17, 1
    %p82 = por %p80, %p81
    %p83 = scmp.ne.s32.totalorder %s74, %s75
    %p84 = scmp.eq.s32.totalorder %s17, 0
    %p85 = por %p83, %p84
    %p86 = scmp.ne.s32.totalorder %s74, %s75
    %p87 = scmp.eq.s32.totalorder %s18, 1
    %p88 = por %p86, %p87
    %p90 = scmp.ne.s32.totalorder %s75, %s89
    %p91 = scmp.eq.s32.totalorder %s18, 0
    %p92 = por %p90, %p91
    %s94 = sadd.s32 %s93, 1
    %p97 = scmp.eq.s32.totalorder %s12, 1
    %p98 = scmp.ne.s32.totalorder %s93, %s95
    %p99 = scmp.eq.s32.totalorder %s12, 0
    %p100 = por %p98, %p99
    %p101 = scmp.ne.s32.totalorder %s93, %s95
    %p102 = scmp.eq.s32.totalorder %s17, 1
    %p103 = por %p101, %p102
    %p104 = scmp.ne.s32.totalorder %s95, %s96
    %p105 = scmp.eq.s32.totalorder %s17, 0
    %p106 = por %p104, %p105
    %p107 = scmp.ne.s32.totalorder %s95, %s96
    %p108 = scmp.eq.s32.totalorder %s18, 1
    %p109 = por %p107, %p108
    %p111 = scmp.ne.s32.totalorder %s96, %s110
    %p112 = scmp.eq.s32.totalorder %s18, 0
    %p113 = por %p111, %p112
    %s115 = sadd.s32 %s114, 1
    %p118 = scmp.eq.s32.totalorder %s12, 1
    %p119 = scmp.ne.s32.totalorder %s114, %s116
    %p120 = scmp.eq.s32.totalorder %s12, 0
    %p121 = por %p119, %p120
    %p122 = scmp.ne.s32.totalorder %s114, %s116
    %p123 = scmp.eq.s32.totalorder %s17, 1
    %p124 = por %p122, %p123
    %p125 = scmp.ne.s32.totalorder %s116, %s117
    %p126 = scmp.eq.s32.totalorder %s17, 0
    %p127 = por %p125, %p126
    %p128 = scmp.ne.s32.totalorder %s116, %s117
    %p129 = scmp.eq.s32.totalorder %s18, 1
    %p130 = por %p128, %p129
    %p132 = scmp.ne.s32.totalorder %s117, %s131
    %p133 = scmp.eq.s32.totalorder %s18, 0
    %p134 = por %p132, %p133
    %s136 = sadd.s32 %s135, 1
    %p139 = scmp.eq.s32.totalorder %s12, 1
    %p140 = scmp.ne.s32.totalorder %s135, %s137
    %p141 = scmp.eq.s32.totalorder %s12, 0
    %p142 = por %p140, %p141
    %p143 = scmp.ne.s32.totalorder %s135, %s137
    %p144 = scmp.eq.s32.totalorder %s17, 1
    %p145 = por %p143, %p144
    %p146 = scmp.ne.s32.totalorder %s137, %s138
    %p147 = scmp.eq.s32.totalorder %s17, 0
    %p148 = por %p146, %p147
    %p149 = scmp.ne.s32.totalorder %s137, %s138
    %p150 = scmp.eq.s32.totalorder %s18, 1
    %p151 = por %p149, %p150
    %p153 = scmp.ne.s32.totalorder %s138, %s152
    %p154 = scmp.eq.s32.totalorder %s18, 0
    %p155 = por %p153, %p154
    %s156 = ssub.s32 %s12, %s19
    %p157 = scmp.eq.s32.totalorder %s156, 0
    %s159 = sadd.s32 %s158, 1
    %s160 = scalar_select %p157, %s158, %s159
    %p163 = pneg %p157
    %p164 = scmp.eq.s32.totalorder %s12, 1
    %p165 = por %p163, %p164
    %p166 = scmp.ne.s32.totalorder %s158, %s161
    %p167 = scmp.eq.s32.totalorder %s12, 0
    %p168 = por %p166, %p167
    %p169 = scmp.ne.s32.totalorder %s158, %s161
    %p170 = scmp.eq.s32.totalorder %s17, 1
    %p171 = por %p169, %p170
    %p172 = scmp.ne.s32.totalorder %s161, %s162
    %p173 = scmp.eq.s32.totalorder %s17, 0
    %p174 = por %p172, %p173
    %p175 = scmp.ne.s32.totalorder %s161, %s162
    %p176 = scmp.eq.s32.totalorder %s18, 1
    %p177 = por %p175, %p176
    %p179 = scmp.ne.s32.totalorder %s162, %s178
    %p180 = scmp.eq.s32.totalorder %s18, 0
    %p181 = por %p179, %p180
    %p182 = scmp.le.s32.totalorder 1, %s12
    %p183 = scmp.lt.s32.totalorder %s12, 3
    %p184 = pnand %p182, %p183
    %p185 = pneg %p184
    // Predicated region
    $region9: #{resu_block_forward.5} parent=5 // pred_check
      _
    $region10: #{resu_block_forward.5} parent=5 // pred_check_branch
      %187 = sbr.rel (%p184) target = $region12
    $region11: #{resu_block_forward.5} parent=5 // pred_region
      %s188 = ssub.s32 %s12, 1
      // Predicated region
      $region13: #{resu_block_forward.5} parent=11 // pred_check
        %p189 = pneg %p85
      $region14: #{resu_block_forward.5} parent=11 // pred_check_branch
        %191 = sbr.rel (%p189) target = $region16
      $region15: #{resu_block_forward.5} parent=11 // pred_region
        _
      $region16: #{resu_block_forward.5} parent=11 // pred_fallthru
        _
      // Predicated region
      $region17: #{resu_block_forward.5} parent=11 // pred_check
        %p192 = pneg %p106
      $region18: #{resu_block_forward.5} parent=11 // pred_check_branch
        %194 = sbr.rel (%p192) target = $region20
      $region19: #{resu_block_forward.5} parent=11 // pred_region
        _
      $region20: #{resu_block_forward.5} parent=11 // pred_fallthru
        _
      // Predicated region
      $region21: #{resu_block_forward.5} parent=11 // pred_check
        %p195 = pneg %p127
      $region22: #{resu_block_forward.5} parent=11 // pred_check_branch
        %197 = sbr.rel (%p195) target = $region24
      $region23: #{resu_block_forward.5} parent=11 // pred_region
        _
      $region24: #{resu_block_forward.5} parent=11 // pred_fallthru
        _
      // Predicated region
      $region25: #{resu_block_forward.5} parent=11 // pred_check
        %p198 = pneg %p148
      $region26: #{resu_block_forward.5} parent=11 // pred_check_branch
        %200 = sbr.rel (%p198) target = $region28
      $region27: #{resu_block_forward.5} parent=11 // pred_region
        _
      $region28: #{resu_block_forward.5} parent=11 // pred_fallthru
        _
    $region12: #{resu_block_forward.5} parent=5 // pred_fallthru
      _
    %p201 = scmp.lt.s32.totalorder %s12, 2
    // Predicated region
    $region29: #{resu_block_forward.5} parent=5 // pred_check
      %p202 = pneg %p201
    $region30: #{resu_block_forward.5} parent=5 // pred_check_branch
      %204 = sbr.rel (%p202) target = $region32
    $region31: #{resu_block_forward.5} parent=5 // pred_region
      // Predicated region
      $region33: #{resu_block_forward.5} parent=31 // pred_check
        %p205 = pneg %p32
      $region34: #{resu_block_forward.5} parent=31 // pred_check_branch
        %207 = sbr.rel (%p205) target = $region36
      $region35: #{resu_block_forward.5} parent=31 // pred_region
        %p208 = scmp.lt.s32.totalorder %s12, 1
        %s209 = scalar_select %p208, %s12, 1
        %s210 = smul.addr %s209, 32
        %s211 = smul.addr %s210, 4
        %s212 = scalar_lea.vmem %s0, %s211
      $region36: #{resu_block_forward.5} parent=31 // pred_fallthru
        _
      // Predicated region
      $region37: #{resu_block_forward.5} parent=31 // pred_check
        %p213 = pneg %p58
      $region38: #{resu_block_forward.5} parent=31 // pred_check_branch
        %215 = sbr.rel (%p213) target = $region40
      $region39: #{resu_block_forward.5} parent=31 // pred_region
        %p216 = scmp.lt.s32.totalorder %s12, 1
        %s217 = scalar_select %p216, %s12, 1
        %s218 = smul.addr %s217, 32
        %s219 = smul.addr %s218, 4
        %s220 = scalar_lea.vmem %s1, %s219
      $region40: #{resu_block_forward.5} parent=31 // pred_fallthru
        _
    $region32: #{resu_block_forward.5} parent=5 // pred_fallthru
      _
    %p221 = scmp.le.s32.totalorder 1, %s12
    %p222 = scmp.lt.s32.totalorder %s12, 3
    %p223 = pnand %p221, %p222
    %p224 = pneg %p223
    // Predicated region
    $region41: #{resu_block_forward.5} parent=5 // pred_check
      _
    $region42: #{resu_block_forward.5} parent=5 // pred_check_branch
      %226 = sbr.rel (%p223) target = $region44
    $region43: #{resu_block_forward.5} parent=5 // pred_region
      %s227 = ssub.s32 %s12, 1
      %p228 = scmp.lt.s32.totalorder %s17, 1
      %s229 = scalar_select %p228, %s17, 1
      %s230 = smul.addr %s229, 32
      %s231 = smul.addr %s230, 4
      %s232 = scalar_lea.vmem %s0, %s231
      %p233 = pneg %p38
      %p234 = pneg %p35
      %p235 = scmp.lt.s32.totalorder %s17, 1
      %s236 = scalar_select %p235, %s17, 1
      %s237 = smul.addr %s236, 32
      %s238 = smul.addr %s237, 4
      %s239 = scalar_lea.vmem %s1, %s238
      %p240 = pneg %p64
      %p241 = pneg %p61
      %p242 = pneg %p85
      %p243 = pneg %p82
      %p244 = pneg %p106
      %p245 = pneg %p103
      %p246 = pneg %p127
      %p247 = pneg %p124
      %p248 = pneg %p148
      %p249 = pneg %p145
      %p250 = pneg %p174
      %p251 = pneg %p171
      %p252 = scmp.lt.s32.totalorder %s17, 1
      %s253 = scalar_select %p252, %s17, 1
      %s254 = smul.addr %s253, 32
      %s255 = smul.addr %s254, 8
      %s256 = scalar_lea.vmem %s6, %s255
      %p257 = scmp.lt.s32.totalorder %s17, 1
      %s258 = scalar_select %p257, %s17, 1
      %s259 = smul.addr %s258, 32
      %s260 = smul.addr %s259, 4
      %s261 = scalar_lea.vmem %s0, %s260
      %p262 = scmp.lt.s32.totalorder %s17, 1
      %s263 = scalar_select %p262, %s17, 1
      %s264 = smul.addr %s263, 32
      %s265 = smul.addr %s264, 4
      %s266 = scalar_lea.vmem %s1, %s265
      %p267 = scmp.lt.s32.totalorder %s17, 1
      %s268 = scalar_select %p267, %s17, 1
      %s269 = smul.addr %s268, 32
      %s270 = smul.addr %s269, 8
      %s271 = scalar_lea.vmem %s6, %s270
      %v273 = vld [vmem:[%s261] sm:$0xf]
      %v274 = vld [vmem:[%s261 + $0x4] sm:$0xf]
      %v275 = vld [vmem:[%s261 + $0x8] sm:$0xf]
      %v276 = vld [vmem:[%s261 + $0xc] sm:$0xf]
      %v277 = vld [vmem:[%s261 + $0x10] sm:$0xf]
      %v278 = vld [vmem:[%s261 + $0x14] sm:$0xf]
      %v279 = vld [vmem:[%s261 + $0x18] sm:$0xf]
      %v280 = vld [vmem:[%s261 + $0x1c] sm:$0xf]
      %v281 = vld [vmem:[%s261 + $0x20] sm:$0xf]
      %v282 = vld [vmem:[%s261 + $0x24] sm:$0xf]
      %v283 = vld [vmem:[%s261 + $0x28] sm:$0xf]
      %v284 = vld [vmem:[%s261 + $0x2c] sm:$0xf]
      %v285 = vld [vmem:[%s261 + $0x30] sm:$0xf]
      %v286 = vld [vmem:[%s261 + $0x34] sm:$0xf]
      %v287 = vld [vmem:[%s261 + $0x38] sm:$0xf]
      %v288 = vld [vmem:[%s261 + $0x3c] sm:$0xf]
      %v289 = vld [vmem:[%s261 + $0x40] sm:$0xf]
      %v290 = vld [vmem:[%s261 + $0x44] sm:$0xf]
      %v291 = vld [vmem:[%s261 + $0x48] sm:$0xf]
      %v292 = vld [vmem:[%s261 + $0x4c] sm:$0xf]
      %v293 = vld [vmem:[%s261 + $0x50] sm:$0xf]
      %v294 = vld [vmem:[%s261 + $0x54] sm:$0xf]
      %v295 = vld [vmem:[%s261 + $0x58] sm:$0xf]
      %v296 = vld [vmem:[%s261 + $0x5c] sm:$0xf]
      %v297 = vld [vmem:[%s261 + $0x60] sm:$0xf]
      %v298 = vld [vmem:[%s261 + $0x64] sm:$0xf]
      %v299 = vld [vmem:[%s261 + $0x68] sm:$0xf]
      %v300 = vld [vmem:[%s261 + $0x6c] sm:$0xf]
      %v301 = vld [vmem:[%s261 + $0x70] sm:$0xf]
      %v302 = vld [vmem:[%s261 + $0x74] sm:$0xf]
      %v303 = vld [vmem:[%s261 + $0x78] sm:$0xf]
      %v304 = vld [vmem:[%s261 + $0x7c] sm:$0xf]
      %v305 = vunpack.c.l.bf16 %v273
      %v306 = vunpack.c.l.bf16 %v274
      %v307 = vunpack.c.l.bf16 %v275
      %v308 = vunpack.c.l.bf16 %v276
      %v309 = vunpack.c.l.bf16 %v277
      %v310 = vunpack.c.l.bf16 %v278
      %v311 = vunpack.c.l.bf16 %v279
      %v312 = vunpack.c.l.bf16 %v280
      %v313 = vunpack.c.l.bf16 %v281
      %v314 = vunpack.c.l.bf16 %v282
      %v315 = vunpack.c.l.bf16 %v283
      %v316 = vunpack.c.l.bf16 %v284
      %v317 = vunpack.c.l.bf16 %v285
      %v318 = vunpack.c.l.bf16 %v286
      %v319 = vunpack.c.l.bf16 %v287
      %v320 = vunpack.c.l.bf16 %v288
      %v321 = vunpack.c.l.bf16 %v289
      %v322 = vunpack.c.l.bf16 %v290
      %v323 = vunpack.c.l.bf16 %v291
      %v324 = vunpack.c.l.bf16 %v292
      %v325 = vunpack.c.l.bf16 %v293
      %v326 = vunpack.c.l.bf16 %v294
      %v327 = vunpack.c.l.bf16 %v295
      %v328 = vunpack.c.l.bf16 %v296
      %v329 = vunpack.c.l.bf16 %v297
      %v330 = vunpack.c.l.bf16 %v298
      %v331 = vunpack.c.l.bf16 %v299
      %v332 = vunpack.c.l.bf16 %v300
      %v333 = vunpack.c.l.bf16 %v301
      %v334 = vunpack.c.l.bf16 %v302
      %v335 = vunpack.c.l.bf16 %v303
      %v336 = vunpack.c.l.bf16 %v304
      %v337 = vld [vmem:[%s2] sm:$0x1]
      %v339 = vlaneseq
      %v340 = vshrl.u32 %v339, 7
      %v341 = vsub.s32 0, %v340
      %v342 = vrot.slane %v337, %v341
      %v344 = vmul.f32 %v305, %v342
      %v345 = vmul.f32 %v306, %v342
      %v346 = vmul.f32 %v307, %v342
      %v347 = vmul.f32 %v308, %v342
      %v348 = vmul.f32 %v309, %v342
      %v349 = vmul.f32 %v310, %v342
      %v350 = vmul.f32 %v311, %v342
      %v351 = vmul.f32 %v312, %v342
      %v352 = vmul.f32 %v313, %v342
      %v353 = vmul.f32 %v314, %v342
      %v354 = vmul.f32 %v315, %v342
      %v355 = vmul.f32 %v316, %v342
      %v356 = vmul.f32 %v317, %v342
      %v357 = vmul.f32 %v318, %v342
      %v358 = vmul.f32 %v319, %v342
      %v359 = vmul.f32 %v320, %v342
      %v360 = vmul.f32 %v321, %v342
      %v361 = vmul.f32 %v322, %v342
      %v362 = vmul.f32 %v323, %v342
      %v363 = vmul.f32 %v324, %v342
      %v364 = vmul.f32 %v325, %v342
      %v365 = vmul.f32 %v326, %v342
      %v366 = vmul.f32 %v327, %v342
      %v367 = vmul.f32 %v328, %v342
      %v368 = vmul.f32 %v329, %v342
      %v369 = vmul.f32 %v330, %v342
      %v370 = vmul.f32 %v331, %v342
      %v371 = vmul.f32 %v332, %v342
      %v372 = vmul.f32 %v333, %v342
      %v373 = vmul.f32 %v334, %v342
      %v374 = vmul.f32 %v335, %v342
      %v375 = vmul.f32 %v336, %v342
      %v376 = vld [vmem:[%s3] sm:$0x1]
      %v378 = vlaneseq
      %v379 = vshrl.u32 %v378, 7
      %v380 = vsub.s32 0, %v379
      %v381 = vrot.slane %v376, %v380
      %v383 = vadd.f32 %v344, %v381
      %v384 = vadd.f32 %v345, %v381
      %v385 = vadd.f32 %v346, %v381
      %v386 = vadd.f32 %v347, %v381
      %v387 = vadd.f32 %v348, %v381
      %v388 = vadd.f32 %v349, %v381
      %v389 = vadd.f32 %v350, %v381
      %v390 = vadd.f32 %v351, %v381
      %v391 = vadd.f32 %v352, %v381
      %v392 = vadd.f32 %v353, %v381
      %v393 = vadd.f32 %v354, %v381
      %v394 = vadd.f32 %v355, %v381
      %v395 = vadd.f32 %v356, %v381
      %v396 = vadd.f32 %v357, %v381
      %v397 = vadd.f32 %v358, %v381
      %v398 = vadd.f32 %v359, %v381
      %v399 = vadd.f32 %v360, %v381
      %v400 = vadd.f32 %v361, %v381
      %v401 = vadd.f32 %v362, %v381
      %v402 = vadd.f32 %v363, %v381
      %v403 = vadd.f32 %v364, %v381
      %v404 = vadd.f32 %v365, %v381
      %v405 = vadd.f32 %v366, %v381
      %v406 = vadd.f32 %v367, %v381
      %v407 = vadd.f32 %v368, %v381
      %v408 = vadd.f32 %v369, %v381
      %v409 = vadd.f32 %v370, %v381
      %v410 = vadd.f32 %v371, %v381
      %v411 = vadd.f32 %v372, %v381
      %v412 = vadd.f32 %v373, %v381
      %v413 = vadd.f32 %v374, %v381
      %v414 = vadd.f32 %v375, %v381
      %v415 = vmax.f32 %v383, 0.0
      %v416 = vmax.f32 %v384, 0.0
      %v417 = vmax.f32 %v385, 0.0
      %v418 = vmax.f32 %v386, 0.0
      %v419 = vmax.f32 %v387, 0.0
      %v420 = vmax.f32 %v388, 0.0
      %v421 = vmax.f32 %v389, 0.0
      %v422 = vmax.f32 %v390, 0.0
      %v423 = vmax.f32 %v391, 0.0
      %v424 = vmax.f32 %v392, 0.0
      %v425 = vmax.f32 %v393, 0.0
      %v426 = vmax.f32 %v394, 0.0
      %v427 = vmax.f32 %v395, 0.0
      %v428 = vmax.f32 %v396, 0.0
      %v429 = vmax.f32 %v397, 0.0
      %v430 = vmax.f32 %v398, 0.0
      %v431 = vmax.f32 %v399, 0.0
      %v432 = vmax.f32 %v400, 0.0
      %v433 = vmax.f32 %v401, 0.0
      %v434 = vmax.f32 %v402, 0.0
      %v435 = vmax.f32 %v403, 0.0
      %v436 = vmax.f32 %v404, 0.0
      %v437 = vmax.f32 %v405, 0.0
      %v438 = vmax.f32 %v406, 0.0
      %v439 = vmax.f32 %v407, 0.0
      %v440 = vmax.f32 %v408, 0.0
      %v441 = vmax.f32 %v409, 0.0
      %v442 = vmax.f32 %v410, 0.0
      %v443 = vmax.f32 %v411, 0.0
      %v444 = vmax.f32 %v412, 0.0
      %v445 = vmax.f32 %v413, 0.0
      %v446 = vmax.f32 %v414, 0.0
      %447 = vst [vmem:[#allocation2] sm:$0xff] 0.0
      %448 = vst [vmem:[#allocation2 + $0x8] sm:$0xff] 0.0
      %449 = vst [vmem:[#allocation2 + $0x10] sm:$0x3] 0.0
      %s450 = scalar_lea.vmem [#allocation2], 408
      %451 = vst [vmem:[%s450] sm:$0xff] 0.0
      %452 = vst [vmem:[%s450 + $0x8] sm:$0xff] 0.0
      %453 = vst [vmem:[%s450 + $0x10] sm:$0x3] 0.0
      %454 = vst [vmem:[#allocation2] sm:$0x1] 0.0
      %455 = vst [vmem:[#allocation2 + $0x18] sm:$0x1] 0.0
      %456 = vst [vmem:[#allocation2 + $0x30] sm:$0x1] 0.0
      %457 = vst [vmem:[#allocation2 + $0x48] sm:$0x1] 0.0
      %458 = vst [vmem:[#allocation2 + $0x60] sm:$0x1] 0.0
      %459 = vst [vmem:[#allocation2 + $0x78] sm:$0x1] 0.0
      %460 = vst [vmem:[#allocation2 + $0x90] sm:$0x1] 0.0
      %461 = vst [vmem:[#allocation2 + $0xa8] sm:$0x1] 0.0
      %462 = vst [vmem:[#allocation2 + $0xc0] sm:$0x1] 0.0
      %463 = vst [vmem:[#allocation2 + $0xd8] sm:$0x1] 0.0
      %464 = vst [vmem:[#allocation2 + $0xf0] sm:$0x1] 0.0
      %465 = vst [vmem:[#allocation2 + $0x108] sm:$0x1] 0.0
      %466 = vst [vmem:[#allocation2 + $0x120] sm:$0x1] 0.0
      %467 = vst [vmem:[#allocation2 + $0x138] sm:$0x1] 0.0
      %468 = vst [vmem:[#allocation2 + $0x150] sm:$0x1] 0.0
      %469 = vst [vmem:[#allocation2 + $0x168] sm:$0x1] 0.0
      %470 = vst [vmem:[#allocation2 + $0x180] sm:$0x1] 0.0
      %471 = vst [vmem:[#allocation2 + $0x198] sm:$0x1] 0.0
      %472 = vst [vmem:[#allocation2 + $0x11] sm:$0x1] 0.0
      %473 = vst [vmem:[#allocation2 + $0x29] sm:$0x1] 0.0
      %474 = vst [vmem:[#allocation2 + $0x41] sm:$0x1] 0.0
      %475 = vst [vmem:[#allocation2 + $0x59] sm:$0x1] 0.0
      %476 = vst [vmem:[#allocation2 + $0x71] sm:$0x1] 0.0
      %477 = vst [vmem:[#allocation2 + $0x89] sm:$0x1] 0.0
      %478 = vst [vmem:[#allocation2 + $0xa1] sm:$0x1] 0.0
      %479 = vst [vmem:[#allocation2 + $0xb9] sm:$0x1] 0.0
      %480 = vst [vmem:[#allocation2 + $0xd1] sm:$0x1] 0.0
      %481 = vst [vmem:[#allocation2 + $0xe9] sm:$0x1] 0.0
      %482 = vst [vmem:[#allocation2 + $0x101] sm:$0x1] 0.0
      %483 = vst [vmem:[#allocation2 + $0x119] sm:$0x1] 0.0
      %484 = vst [vmem:[#allocation2 + $0x131] sm:$0x1] 0.0
      %485 = vst [vmem:[#allocation2 + $0x149] sm:$0x1] 0.0
      %486 = vst [vmem:[#allocation2 + $0x161] sm:$0x1] 0.0
      %487 = vst [vmem:[#allocation2 + $0x179] sm:$0x1] 0.0
      %488 = vst [vmem:[#allocation2 + $0x191] sm:$0x1] 0.0
      %489 = vst [vmem:[#allocation2 + $0x1a9] sm:$0x1] 0.0
      %s490 = scalar_lea.vmem [#allocation2], 24
      %491 = vst [vmem:[%s490 + $0x1] sm:$0xff] %v415
      %492 = vst [vmem:[%s490 + $0x9] sm:$0xff] %v416
      %493 = vst [vmem:[%s490 + $0x19] sm:$0xff] %v417
      %494 = vst [vmem:[%s490 + $0x21] sm:$0xff] %v418
      %495 = vst [vmem:[%s490 + $0x31] sm:$0xff] %v419
      %496 = vst [vmem:[%s490 + $0x39] sm:$0xff] %v420
      %497 = vst [vmem:[%s490 + $0x49] sm:$0xff] %v421
      %498 = vst [vmem:[%s490 + $0x51] sm:$0xff] %v422
      %499 = vst [vmem:[%s490 + $0x61] sm:$0xff] %v423
      %500 = vst [vmem:[%s490 + $0x69] sm:$0xff] %v424
      %501 = vst [vmem:[%s490 + $0x79] sm:$0xff] %v425
      %502 = vst [vmem:[%s490 + $0x81] sm:$0xff] %v426
      %503 = vst [vmem:[%s490 + $0x91] sm:$0xff] %v427
      %504 = vst [vmem:[%s490 + $0x99] sm:$0xff] %v428
      %505 = vst [vmem:[%s490 + $0xa9] sm:$0xff] %v429
      %506 = vst [vmem:[%s490 + $0xb1] sm:$0xff] %v430
      %507 = vst [vmem:[%s490 + $0xc1] sm:$0xff] %v431
      %508 = vst [vmem:[%s490 + $0xc9] sm:$0xff] %v432
      %509 = vst [vmem:[%s490 + $0xd9] sm:$0xff] %v433
      %510 = vst [vmem:[%s490 + $0xe1] sm:$0xff] %v434
      %511 = vst [vmem:[%s490 + $0xf1] sm:$0xff] %v435
      %512 = vst [vmem:[%s490 + $0xf9] sm:$0xff] %v436
      %513 = vst [vmem:[%s490 + $0x109] sm:$0xff] %v437
      %514 = vst [vmem:[%s490 + $0x111] sm:$0xff] %v438
      %515 = vst [vmem:[%s490 + $0x121] sm:$0xff] %v439
      %516 = vst [vmem:[%s490 + $0x129] sm:$0xff] %v440
      %517 = vst [vmem:[%s490 + $0x139] sm:$0xff] %v441
      %518 = vst [vmem:[%s490 + $0x141] sm:$0xff] %v442
      %519 = vst [vmem:[%s490 + $0x151] sm:$0xff] %v443
      %520 = vst [vmem:[%s490 + $0x159] sm:$0xff] %v444
      %521 = vst [vmem:[%s490 + $0x169] sm:$0xff] %v445
      %522 = vst [vmem:[%s490 + $0x171] sm:$0xff] %v446
      %v523 = vld [vmem:[#allocation2] sm:$0xff]
      %v524 = vld [vmem:[#allocation2 + $0x8] sm:$0xff]
      %v525 = vld [vmem:[#allocation2 + $0x18] sm:$0xff]
      %v526 = vld [vmem:[#allocation2 + $0x20] sm:$0xff]
      %v527 = vld [vmem:[#allocation2 + $0x30] sm:$0xff]
      %v528 = vld [vmem:[#allocation2 + $0x38] sm:$0xff]
      %v529 = vld [vmem:[#allocation2 + $0x48] sm:$0xff]
      %v530 = vld [vmem:[#allocation2 + $0x50] sm:$0xff]
      %v531 = vld [vmem:[#allocation2 + $0x60] sm:$0xff]
      %v532 = vld [vmem:[#allocation2 + $0x68] sm:$0xff]
      %v533 = vld [vmem:[#allocation2 + $0x78] sm:$0xff]
      %v534 = vld [vmem:[#allocation2 + $0x80] sm:$0xff]
      %v535 = vld [vmem:[#allocation2 + $0x90] sm:$0xff]
      %v536 = vld [vmem:[#allocation2 + $0x98] sm:$0xff]
      %v537 = vld [vmem:[#allocation2 + $0xa8] sm:$0xff]
      %v538 = vld [vmem:[#allocation2 + $0xb0] sm:$0xff]
      %v539 = vld [vmem:[#allocation2 + $0xc0] sm:$0xff]
      %v540 = vld [vmem:[#allocation2 + $0xc8] sm:$0xff]
      %v541 = vld [vmem:[#allocation2 + $0xd8] sm:$0xff]
      %v542 = vld [vmem:[#allocation2 + $0xe0] sm:$0xff]
      %v543 = vld [vmem:[#allocation2 + $0xf0] sm:$0xff]
      %v544 = vld [vmem:[#allocation2 + $0xf8] sm:$0xff]
      %v545 = vld [vmem:[#allocation2 + $0x108] sm:$0xff]
      %v546 = vld [vmem:[#allocation2 + $0x110] sm:$0xff]
      %v547 = vld [vmem:[#allocation2 + $0x120] sm:$0xff]
      %v548 = vld [vmem:[#allocation2 + $0x128] sm:$0xff]
      %v549 = vld [vmem:[#allocation2 + $0x138] sm:$0xff]
      %v550 = vld [vmem:[#allocation2 + $0x140] sm:$0xff]
      %v551 = vld [vmem:[#allocation2 + $0x150] sm:$0xff]
      %v552 = vld [vmem:[#allocation2 + $0x158] sm:$0xff]
      %v553 = vld [vmem:[#allocation2 + $0x168] sm:$0xff]
      %v554 = vld [vmem:[#allocation2 + $0x170] sm:$0xff]
      %v555 = vld [vmem:[#allocation2 + $0x1] sm:$0xff]
      %v556 = vld [vmem:[#allocation2 + $0x9] sm:$0xff]
      %v557 = vld [vmem:[#allocation2 + $0x19] sm:$0xff]
      %v558 = vld [vmem:[#allocation2 + $0x21] sm:$0xff]
      %v559 = vld [vmem:[#allocation2 + $0x31] sm:$0xff]
      %v560 = vld [vmem:[#allocation2 + $0x39] sm:$0xff]
      %v561 = vld [vmem:[#allocation2 + $0x49] sm:$0xff]
      %v562 = vld [vmem:[#allocation2 + $0x51] sm:$0xff]
      %v563 = vld [vmem:[#allocation2 + $0x61] sm:$0xff]
      %v564 = vld [vmem:[#allocation2 + $0x69] sm:$0xff]
      %v565 = vld [vmem:[#allocation2 + $0x79] sm:$0xff]
      %v566 = vld [vmem:[#allocation2 + $0x81] sm:$0xff]
      %v567 = vld [vmem:[#allocation2 + $0x91] sm:$0xff]
      %v568 = vld [vmem:[#allocation2 + $0x99] sm:$0xff]
      %v569 = vld [vmem:[#allocation2 + $0xa9] sm:$0xff]
      %v570 = vld [vmem:[#allocation2 + $0xb1] sm:$0xff]
      %v571 = vld [vmem:[#allocation2 + $0xc1] sm:$0xff]
      %v572 = vld [vmem:[#allocation2 + $0xc9] sm:$0xff]
      %v573 = vld [vmem:[#allocation2 + $0xd9] sm:$0xff]
      %v574 = vld [vmem:[#allocation2 + $0xe1] sm:$0xff]
      %v575 = vld [vmem:[#allocation2 + $0xf1] sm:$0xff]
      %v576 = vld [vmem:[#allocation2 + $0xf9] sm:$0xff]
      %v577 = vld [vmem:[#allocation2 + $0x109] sm:$0xff]
      %v578 = vld [vmem:[#allocation2 + $0x111] sm:$0xff]
      %v579 = vld [vmem:[#allocation2 + $0x121] sm:$0xff]
      %v580 = vld [vmem:[#allocation2 + $0x129] sm:$0xff]
      %v581 = vld [vmem:[#allocation2 + $0x139] sm:$0xff]
      %v582 = vld [vmem:[#allocation2 + $0x141] sm:$0xff]
      %v583 = vld [vmem:[#allocation2 + $0x151] sm:$0xff]
      %v584 = vld [vmem:[#allocation2 + $0x159] sm:$0xff]
      %v585 = vld [vmem:[#allocation2 + $0x169] sm:$0xff]
      %v586 = vld [vmem:[#allocation2 + $0x171] sm:$0xff]
      %v587 = vld [vmem:[#allocation2 + $0x2] sm:$0xff]
      %v588 = vld [vmem:[#allocation2 + $0xa] sm:$0xff]
      %v589 = vld [vmem:[#allocation2 + $0x1a] sm:$0xff]
      %v590 = vld [vmem:[#allocation2 + $0x22] sm:$0xff]
      %v591 = vld [vmem:[#allocation2 + $0x32] sm:$0xff]
      %v592 = vld [vmem:[#allocation2 + $0x3a] sm:$0xff]
      %v593 = vld [vmem:[#allocation2 + $0x4a] sm:$0xff]
      %v594 = vld [vmem:[#allocation2 + $0x52] sm:$0xff]
      %v595 = vld [vmem:[#allocation2 + $0x62] sm:$0xff]
      %v596 = vld [vmem:[#allocation2 + $0x6a] sm:$0xff]
      %v597 = vld [vmem:[#allocation2 + $0x7a] sm:$0xff]
      %v598 = vld [vmem:[#allocation2 + $0x82] sm:$0xff]
      %v599 = vld [vmem:[#allocation2 + $0x92] sm:$0xff]
      %v600 = vld [vmem:[#allocation2 + $0x9a] sm:$0xff]
      %v601 = vld [vmem:[#allocation2 + $0xaa] sm:$0xff]
      %v602 = vld [vmem:[#allocation2 + $0xb2] sm:$0xff]
      %v603 = vld [vmem:[#allocation2 + $0xc2] sm:$0xff]
      %v604 = vld [vmem:[#allocation2 + $0xca] sm:$0xff]
      %v605 = vld [vmem:[#allocation2 + $0xda] sm:$0xff]
      %v606 = vld [vmem:[#allocation2 + $0xe2] sm:$0xff]
      %v607 = vld [vmem:[#allocation2 + $0xf2] sm:$0xff]
      %v608 = vld [vmem:[#allocation2 + $0xfa] sm:$0xff]
      %v609 = vld [vmem:[#allocation2 + $0x10a] sm:$0xff]
      %v610 = vld [vmem:[#allocation2 + $0x112] sm:$0xff]
      %v611 = vld [vmem:[#allocation2 + $0x122] sm:$0xff]
      %v612 = vld [vmem:[#allocation2 + $0x12a] sm:$0xff]
      %v613 = vld [vmem:[#allocation2 + $0x13a] sm:$0xff]
      %v614 = vld [vmem:[#allocation2 + $0x142] sm:$0xff]
      %v615 = vld [vmem:[#allocation2 + $0x152] sm:$0xff]
      %v616 = vld [vmem:[#allocation2 + $0x15a] sm:$0xff]
      %v617 = vld [vmem:[#allocation2 + $0x16a] sm:$0xff]
      %v618 = vld [vmem:[#allocation2 + $0x172] sm:$0xff]
      %v619 = vpack.c.bf16 %v524, %v523
      %v620 = vpack.c.bf16 %v556, %v555
      %v621 = vpack.c.bf16 %v588, %v587
      %v622 = vpack.c.bf16 %v526, %v525
      %v623 = vpack.c.bf16 %v558, %v557
      %v624 = vpack.c.bf16 %v590, %v589
      %v625 = vpack.c.bf16 %v528, %v527
      %v626 = vpack.c.bf16 %v560, %v559
      %v627 = vpack.c.bf16 %v592, %v591
      %v628 = vpack.c.bf16 %v530, %v529
      %v629 = vpack.c.bf16 %v562, %v561
      %v630 = vpack.c.bf16 %v594, %v593
      %v631 = vpack.c.bf16 %v532, %v531
      %v632 = vpack.c.bf16 %v564, %v563
      %v633 = vpack.c.bf16 %v596, %v595
      %v634 = vpack.c.bf16 %v534, %v533
      %v635 = vpack.c.bf16 %v566, %v565
      %v636 = vpack.c.bf16 %v598, %v597
      %v637 = vpack.c.bf16 %v536, %v535
      %v638 = vpack.c.bf16 %v568, %v567
      %v639 = vpack.c.bf16 %v600, %v599
      %v640 = vpack.c.bf16 %v538, %v537
      %v641 = vpack.c.bf16 %v570, %v569
      %v642 = vpack.c.bf16 %v602, %v601
      %v643 = vpack.c.bf16 %v540, %v539
      %v644 = vpack.c.bf16 %v572, %v571
      %v645 = vpack.c.bf16 %v604, %v603
      %v646 = vpack.c.bf16 %v542, %v541
      %v647 = vpack.c.bf16 %v574, %v573
      %v648 = vpack.c.bf16 %v606, %v605
      %v649 = vpack.c.bf16 %v544, %v543
      %v650 = vpack.c.bf16 %v576, %v575
      %v651 = vpack.c.bf16 %v608, %v607
      %v652 = vpack.c.bf16 %v546, %v545
      %v653 = vpack.c.bf16 %v578, %v577
      %v654 = vpack.c.bf16 %v610, %v609
      %v655 = vpack.c.bf16 %v548, %v547
      %v656 = vpack.c.bf16 %v580, %v579
      %v657 = vpack.c.bf16 %v612, %v611
      %v658 = vpack.c.bf16 %v550, %v549
      %v659 = vpack.c.bf16 %v582, %v581
      %v660 = vpack.c.bf16 %v614, %v613
      %v661 = vpack.c.bf16 %v552, %v551
      %v662 = vpack.c.bf16 %v584, %v583
      %v663 = vpack.c.bf16 %v616, %v615
      %v664 = vpack.c.bf16 %v554, %v553
      %v665 = vpack.c.bf16 %v586, %v585
      %v666 = vpack.c.bf16 %v618, %v617
      %v667 = vld [vmem:[%s4] sm:$0xf]
      %v668 = vld [vmem:[%s4 + $0x4] sm:$0xf]
      %v669 = vld [vmem:[%s4 + $0x8] sm:$0xf]
      %v670 = vld [vmem:[%s4 + $0xc] sm:$0xf]
      %v671 = vld [vmem:[%s4 + $0x10] sm:$0xf]
      %v672 = vld [vmem:[%s4 + $0x14] sm:$0xf]
      %v673 = vld [vmem:[%s4 + $0x18] sm:$0xf]
      %v674 = vld [vmem:[%s4 + $0x1c] sm:$0xf]
      %v675 = vld [vmem:[%s4 + $0x20] sm:$0xf]
      %v676 = vld [vmem:[%s4 + $0x24] sm:$0xf]
      %v677 = vld [vmem:[%s4 + $0x28] sm:$0xf]
      %v678 = vld [vmem:[%s4 + $0x2c] sm:$0xf]
      %v679 = vld [vmem:[%s4 + $0x30] sm:$0xf]
      %v680 = vld [vmem:[%s4 + $0x34] sm:$0xf]
      %v681 = vld [vmem:[%s4 + $0x38] sm:$0xf]
      %v682 = vld [vmem:[%s4 + $0x3c] sm:$0xf]
      %v683 = vld [vmem:[%s4 + $0x40] sm:$0xf]
      %v684 = vld [vmem:[%s4 + $0x44] sm:$0xf]
      %v685 = vld [vmem:[%s4 + $0x48] sm:$0xf]
      %v686 = vld [vmem:[%s4 + $0x4c] sm:$0xf]
      %v687 = vld [vmem:[%s4 + $0x50] sm:$0xf]
      %v688 = vld [vmem:[%s4 + $0x54] sm:$0xf]
      %v689 = vld [vmem:[%s4 + $0x58] sm:$0xf]
      %v690 = vld [vmem:[%s4 + $0x5c] sm:$0xf]
      %v691 = vld [vmem:[%s4 + $0x60] sm:$0xf]
      %v692 = vld [vmem:[%s4 + $0x64] sm:$0xf]
      %v693 = vld [vmem:[%s4 + $0x68] sm:$0xf]
      %v694 = vld [vmem:[%s4 + $0x6c] sm:$0xf]
      %v695 = vld [vmem:[%s4 + $0x70] sm:$0xf]
      %v696 = vld [vmem:[%s4 + $0x74] sm:$0xf]
      %v697 = vld [vmem:[%s4 + $0x78] sm:$0xf]
      %v698 = vld [vmem:[%s4 + $0x7c] sm:$0xf]
      %v699 = vld [vmem:[%s4 + $0x80] sm:$0xf]
      %v700 = vld [vmem:[%s4 + $0x84] sm:$0xf]
      %v701 = vld [vmem:[%s4 + $0x88] sm:$0xf]
      %v702 = vld [vmem:[%s4 + $0x8c] sm:$0xf]
      %v703 = vld [vmem:[%s4 + $0x90] sm:$0xf]
      %v704 = vld [vmem:[%s4 + $0x94] sm:$0xf]
      %v705 = vld [vmem:[%s4 + $0x98] sm:$0xf]
      %v706 = vld [vmem:[%s4 + $0x9c] sm:$0xf]
      %v707 = vld [vmem:[%s4 + $0xa0] sm:$0xf]
      %v708 = vld [vmem:[%s4 + $0xa4] sm:$0xf]
      %v709 = vld [vmem:[%s4 + $0xa8] sm:$0xf]
      %v710 = vld [vmem:[%s4 + $0xac] sm:$0xf]
      %v711 = vld [vmem:[%s4 + $0xb0] sm:$0xf]
      %v712 = vld [vmem:[%s4 + $0xb4] sm:$0xf]
      %v713 = vld [vmem:[%s4 + $0xb8] sm:$0xf]
      %v714 = vld [vmem:[%s4 + $0xbc] sm:$0xf]
      %v715 = vld [vmem:[%s490] sm:$0xff]
      %v716 = vld [vmem:[%s490 + $0x8] sm:$0xff]
      %v717 = vld [vmem:[%s490 + $0x18] sm:$0xff]
      %v718 = vld [vmem:[%s490 + $0x20] sm:$0xff]
      %v719 = vld [vmem:[%s490 + $0x30] sm:$0xff]
      %v720 = vld [vmem:[%s490 + $0x38] sm:$0xff]
      %v721 = vld [vmem:[%s490 + $0x48] sm:$0xff]
      %v722 = vld [vmem:[%s490 + $0x50] sm:$0xff]
      %v723 = vld [vmem:[%s490 + $0x60] sm:$0xff]
      %v724 = vld [vmem:[%s490 + $0x68] sm:$0xff]
      %v725 = vld [vmem:[%s490 + $0x78] sm:$0xff]
      %v726 = vld [vmem:[%s490 + $0x80] sm:$0xff]
      %v727 = vld [vmem:[%s490 + $0x90] sm:$0xff]
      %v728 = vld [vmem:[%s490 + $0x98] sm:$0xff]
      %v729 = vld [vmem:[%s490 + $0xa8] sm:$0xff]
      %v730 = vld [vmem:[%s490 + $0xb0] sm:$0xff]
      %v731 = vld [vmem:[%s490 + $0xc0] sm:$0xff]
      %v732 = vld [vmem:[%s490 + $0xc8] sm:$0xff]
      %v733 = vld [vmem:[%s490 + $0xd8] sm:$0xff]
      %v734 = vld [vmem:[%s490 + $0xe0] sm:$0xff]
      %v735 = vld [vmem:[%s490 + $0xf0] sm:$0xff]
      %v736 = vld [vmem:[%s490 + $0xf8] sm:$0xff]
      %v737 = vld [vmem:[%s490 + $0x108] sm:$0xff]
      %v738 = vld [vmem:[%s490 + $0x110] sm:$0xff]
      %v739 = vld [vmem:[%s490 + $0x120] sm:$0xff]
      %v740 = vld [vmem:[%s490 + $0x128] sm:$0xff]
      %v741 = vld [vmem:[%s490 + $0x138] sm:$0xff]
      %v742 = vld [vmem:[%s490 + $0x140] sm:$0xff]
      %v743 = vld [vmem:[%s490 + $0x150] sm:$0xff]
      %v744 = vld [vmem:[%s490 + $0x158] sm:$0xff]
      %v745 = vld [vmem:[%s490 + $0x168] sm:$0xff]
      %v746 = vld [vmem:[%s490 + $0x170] sm:$0xff]
      %v747 = vld [vmem:[%s490 + $0x1] sm:$0xff]
      %v748 = vld [vmem:[%s490 + $0x9] sm:$0xff]
      %v749 = vld [vmem:[%s490 + $0x19] sm:$0xff]
      %v750 = vld [vmem:[%s490 + $0x21] sm:$0xff]
      %v751 = vld [vmem:[%s490 + $0x31] sm:$0xff]
      %v752 = vld [vmem:[%s490 + $0x39] sm:$0xff]
      %v753 = vld [vmem:[%s490 + $0x49] sm:$0xff]
      %v754 = vld [vmem:[%s490 + $0x51] sm:$0xff]
      %v755 = vld [vmem:[%s490 + $0x61] sm:$0xff]
      %v756 = vld [vmem:[%s490 + $0x69] sm:$0xff]
      %v757 = vld [vmem:[%s490 + $0x79] sm:$0xff]
      %v758 = vld [vmem:[%s490 + $0x81] sm:$0xff]
      %v759 = vld [vmem:[%s490 + $0x91] sm:$0xff]
      %v760 = vld [vmem:[%s490 + $0x99] sm:$0xff]
      %v761 = vld [vmem:[%s490 + $0xa9] sm:$0xff]
      %v762 = vld [vmem:[%s490 + $0xb1] sm:$0xff]
      %v763 = vld [vmem:[%s490 + $0xc1] sm:$0xff]
      %v764 = vld [vmem:[%s490 + $0xc9] sm:$0xff]
      %v765 = vld [vmem:[%s490 + $0xd9] sm:$0xff]
      %v766 = vld [vmem:[%s490 + $0xe1] sm:$0xff]
      %v767 = vld [vmem:[%s490 + $0xf1] sm:$0xff]
      %v768 = vld [vmem:[%s490 + $0xf9] sm:$0xff]
      %v769 = vld [vmem:[%s490 + $0x109] sm:$0xff]
      %v770 = vld [vmem:[%s490 + $0x111] sm:$0xff]
      %v771 = vld [vmem:[%s490 + $0x121] sm:$0xff]
      %v772 = vld [vmem:[%s490 + $0x129] sm:$0xff]
      %v773 = vld [vmem:[%s490 + $0x139] sm:$0xff]
      %v774 = vld [vmem:[%s490 + $0x141] sm:$0xff]
      %v775 = vld [vmem:[%s490 + $0x151] sm:$0xff]
      %v776 = vld [vmem:[%s490 + $0x159] sm:$0xff]
      %v777 = vld [vmem:[%s490 + $0x169] sm:$0xff]
      %v778 = vld [vmem:[%s490 + $0x171] sm:$0xff]
      %v779 = vld [vmem:[%s490 + $0x2] sm:$0xff]
      %v780 = vld [vmem:[%s490 + $0xa] sm:$0xff]
      %v781 = vld [vmem:[%s490 + $0x1a] sm:$0xff]
      %v782 = vld [vmem:[%s490 + $0x22] sm:$0xff]
      %v783 = vld [vmem:[%s490 + $0x32] sm:$0xff]
      %v784 = vld [vmem:[%s490 + $0x3a] sm:$0xff]
      %v785 = vld [vmem:[%s490 + $0x4a] sm:$0xff]
      %v786 = vld [vmem:[%s490 + $0x52] sm:$0xff]
      %v787 = vld [vmem:[%s490 + $0x62] sm:$0xff]
      %v788 = vld [vmem:[%s490 + $0x6a] sm:$0xff]
      %v789 = vld [vmem:[%s490 + $0x7a] sm:$0xff]
      %v790 = vld [vmem:[%s490 + $0x82] sm:$0xff]
      %v791 = vld [vmem:[%s490 + $0x92] sm:$0xff]
      %v792 = vld [vmem:[%s490 + $0x9a] sm:$0xff]
      %v793 = vld [vmem:[%s490 + $0xaa] sm:$0xff]
      %v794 = vld [vmem:[%s490 + $0xb2] sm:$0xff]
      %v795 = vld [vmem:[%s490 + $0xc2] sm:$0xff]
      %v796 = vld [vmem:[%s490 + $0xca] sm:$0xff]
      %v797 = vld [vmem:[%s490 + $0xda] sm:$0xff]
      %v798 = vld [vmem:[%s490 + $0xe2] sm:$0xff]
      %v799 = vld [vmem:[%s490 + $0xf2] sm:$0xff]
      %v800 = vld [vmem:[%s490 + $0xfa] sm:$0xff]
      %v801 = vld [vmem:[%s490 + $0x10a] sm:$0xff]
      %v802 = vld [vmem:[%s490 + $0x112] sm:$0xff]
      %v803 = vld [vmem:[%s490 + $0x122] sm:$0xff]
      %v804 = vld [vmem:[%s490 + $0x12a] sm:$0xff]
      %v805 = vld [vmem:[%s490 + $0x13a] sm:$0xff]
      %v806 = vld [vmem:[%s490 + $0x142] sm:$0xff]
      %v807 = vld [vmem:[%s490 + $0x152] sm:$0xff]
      %v808 = vld [vmem:[%s490 + $0x15a] sm:$0xff]
      %v809 = vld [vmem:[%s490 + $0x16a] sm:$0xff]
      %v810 = vld [vmem:[%s490 + $0x172] sm:$0xff]
      %v811 = vpack.c.bf16 %v716, %v715
      %v812 = vpack.c.bf16 %v748, %v747
      %v813 = vpack.c.bf16 %v780, %v779
      %v814 = vpack.c.bf16 %v718, %v717
      %v815 = vpack.c.bf16 %v750, %v749
      %v816 = vpack.c.bf16 %v782, %v781
      %v817 = vpack.c.bf16 %v720, %v719
      %v818 = vpack.c.bf16 %v752, %v751
      %v819 = vpack.c.bf16 %v784, %v783
      %v820 = vpack.c.bf16 %v722, %v721
      %v821 = vpack.c.bf16 %v754, %v753
      %v822 = vpack.c.bf16 %v786, %v785
      %v823 = vpack.c.bf16 %v724, %v723
      %v824 = vpack.c.bf16 %v756, %v755
      %v825 = vpack.c.bf16 %v788, %v787
      %v826 = vpack.c.bf16 %v726, %v725
      %v827 = vpack.c.bf16 %v758, %v757
      %v828 = vpack.c.bf16 %v790, %v789
      %v829 = vpack.c.bf16 %v728, %v727
      %v830 = vpack.c.bf16 %v760, %v759
      %v831 = vpack.c.bf16 %v792, %v791
      %v832 = vpack.c.bf16 %v730, %v729
      %v833 = vpack.c.bf16 %v762, %v761
      %v834 = vpack.c.bf16 %v794, %v793
      %v835 = vpack.c.bf16 %v732, %v731
      %v836 = vpack.c.bf16 %v764, %v763
      %v837 = vpack.c.bf16 %v796, %v795
      %v838 = vpack.c.bf16 %v734, %v733
      %v839 = vpack.c.bf16 %v766, %v765
      %v840 = vpack.c.bf16 %v798, %v797
      %v841 = vpack.c.bf16 %v736, %v735
      %v842 = vpack.c.bf16 %v768, %v767
      %v843 = vpack.c.bf16 %v800, %v799
      %v844 = vpack.c.bf16 %v738, %v737
      %v845 = vpack.c.bf16 %v770, %v769
      %v846 = vpack.c.bf16 %v802, %v801
      %v847 = vpack.c.bf16 %v740, %v739
      %v848 = vpack.c.bf16 %v772, %v771
      %v849 = vpack.c.bf16 %v804, %v803
      %v850 = vpack.c.bf16 %v742, %v741
      %v851 = vpack.c.bf16 %v774, %v773
      %v852 = vpack.c.bf16 %v806, %v805
      %v853 = vpack.c.bf16 %v744, %v743
      %v854 = vpack.c.bf16 %v776, %v775
      %v855 = vpack.c.bf16 %v808, %v807
      %v856 = vpack.c.bf16 %v746, %v745
      %v857 = vpack.c.bf16 %v778, %v777
      %v858 = vpack.c.bf16 %v810, %v809
      %s859 = scalar_lea.vmem %s4, 192
      %v860 = vld [vmem:[%s859] sm:$0xf]
      %v861 = vld [vmem:[%s859 + $0x4] sm:$0xf]
      %v862 = vld [vmem:[%s859 + $0x8] sm:$0xf]
      %v863 = vld [vmem:[%s859 + $0xc] sm:$0xf]
      %v864 = vld [vmem:[%s859 + $0x10] sm:$0xf]
      %v865 = vld [vmem:[%s859 + $0x14] sm:$0xf]
      %v866 = vld [vmem:[%s859 + $0x18] sm:$0xf]
      %v867 = vld [vmem:[%s859 + $0x1c] sm:$0xf]
      %v868 = vld [vmem:[%s859 + $0x20] sm:$0xf]
      %v869 = vld [vmem:[%s859 + $0x24] sm:$0xf]
      %v870 = vld [vmem:[%s859 + $0x28] sm:$0xf]
      %v871 = vld [vmem:[%s859 + $0x2c] sm:$0xf]
      %v872 = vld [vmem:[%s859 + $0x30] sm:$0xf]
      %v873 = vld [vmem:[%s859 + $0x34] sm:$0xf]
      %v874 = vld [vmem:[%s859 + $0x38] sm:$0xf]
      %v875 = vld [vmem:[%s859 + $0x3c] sm:$0xf]
      %v876 = vld [vmem:[%s859 + $0x40] sm:$0xf]
      %v877 = vld [vmem:[%s859 + $0x44] sm:$0xf]
      %v878 = vld [vmem:[%s859 + $0x48] sm:$0xf]
      %v879 = vld [vmem:[%s859 + $0x4c] sm:$0xf]
      %v880 = vld [vmem:[%s859 + $0x50] sm:$0xf]
      %v881 = vld [vmem:[%s859 + $0x54] sm:$0xf]
      %v882 = vld [vmem:[%s859 + $0x58] sm:$0xf]
      %v883 = vld [vmem:[%s859 + $0x5c] sm:$0xf]
      %v884 = vld [vmem:[%s859 + $0x60] sm:$0xf]
      %v885 = vld [vmem:[%s859 + $0x64] sm:$0xf]
      %v886 = vld [vmem:[%s859 + $0x68] sm:$0xf]
      %v887 = vld [vmem:[%s859 + $0x6c] sm:$0xf]
      %v888 = vld [vmem:[%s859 + $0x70] sm:$0xf]
      %v889 = vld [vmem:[%s859 + $0x74] sm:$0xf]
      %v890 = vld [vmem:[%s859 + $0x78] sm:$0xf]
      %v891 = vld [vmem:[%s859 + $0x7c] sm:$0xf]
      %v892 = vld [vmem:[%s859 + $0x80] sm:$0xf]
      %v893 = vld [vmem:[%s859 + $0x84] sm:$0xf]
      %v894 = vld [vmem:[%s859 + $0x88] sm:$0xf]
      %v895 = vld [vmem:[%s859 + $0x8c] sm:$0xf]
      %v896 = vld [vmem:[%s859 + $0x90] sm:$0xf]
      %v897 = vld [vmem:[%s859 + $0x94] sm:$0xf]
      %v898 = vld [vmem:[%s859 + $0x98] sm:$0xf]
      %v899 = vld [vmem:[%s859 + $0x9c] sm:$0xf]
      %v900 = vld [vmem:[%s859 + $0xa0] sm:$0xf]
      %v901 = vld [vmem:[%s859 + $0xa4] sm:$0xf]
      %v902 = vld [vmem:[%s859 + $0xa8] sm:$0xf]
      %v903 = vld [vmem:[%s859 + $0xac] sm:$0xf]
      %v904 = vld [vmem:[%s859 + $0xb0] sm:$0xf]
      %v905 = vld [vmem:[%s859 + $0xb4] sm:$0xf]
      %v906 = vld [vmem:[%s859 + $0xb8] sm:$0xf]
      %v907 = vld [vmem:[%s859 + $0xbc] sm:$0xf]
      %v956 = vunpack.c.l.b16 %v860
      %v957 = vunpack.c.l.b16 %v861
      %v958 = vunpack.c.l.b16 %v862
      %v959 = vunpack.c.l.b16 %v863
      %v960 = vunpack.c.l.b16 %v864
      %v961 = vunpack.c.l.b16 %v865
      %v962 = vunpack.c.l.b16 %v866
      %v963 = vunpack.c.l.b16 %v867
      %v964 = vunpack.c.l.b16 %v868
      %v965 = vunpack.c.l.b16 %v869
      %v966 = vunpack.c.l.b16 %v870
      %v967 = vunpack.c.l.b16 %v871
      %v968 = vunpack.c.l.b16 %v872
      %v969 = vunpack.c.l.b16 %v873
      %v970 = vunpack.c.l.b16 %v874
      %v971 = vunpack.c.l.b16 %v875
      %v972 = vunpack.c.l.b16 %v876
      %v973 = vunpack.c.l.b16 %v877
      %v974 = vunpack.c.l.b16 %v878
      %v975 = vunpack.c.l.b16 %v879
      %v976 = vunpack.c.l.b16 %v880
      %v977 = vunpack.c.l.b16 %v881
      %v978 = vunpack.c.l.b16 %v882
      %v979 = vunpack.c.l.b16 %v883
      %v980 = vunpack.c.l.b16 %v884
      %v981 = vunpack.c.l.b16 %v885
      %v982 = vunpack.c.l.b16 %v886
      %v983 = vunpack.c.l.b16 %v887
      %v984 = vunpack.c.l.b16 %v888
      %v985 = vunpack.c.l.b16 %v889
      %v986 = vunpack.c.l.b16 %v890
      %v987 = vunpack.c.l.b16 %v891
      %v988 = vunpack.c.l.b16 %v892
      %v989 = vunpack.c.l.b16 %v893
      %v990 = vunpack.c.l.b16 %v894
      %v991 = vunpack.c.l.b16 %v895
      %v992 = vunpack.c.l.b16 %v896
      %v993 = vunpack.c.l.b16 %v897
      %v994 = vunpack.c.l.b16 %v898
      %v995 = vunpack.c.l.b16 %v899
      %v996 = vunpack.c.l.b16 %v900
      %v997 = vunpack.c.l.b16 %v901
      %v998 = vunpack.c.l.b16 %v902
      %v999 = vunpack.c.l.b16 %v903
      %v1000 = vunpack.c.l.b16 %v904
      %v1001 = vunpack.c.l.b16 %v905
      %v1002 = vunpack.c.l.b16 %v906
      %v1003 = vunpack.c.l.b16 %v907
      %v1004 = vpack.c.b16 %v957, %v956
      %v1005 = vpack.c.b16 %v959, %v958
      %v1006 = vpack.c.b16 %v961, %v960
      %v1007 = vpack.c.b16 %v963, %v962
      %v1008 = vpack.c.b16 %v965, %v964
      %v1009 = vpack.c.b16 %v967, %v966
      %v1010 = vpack.c.b16 %v969, %v968
      %v1011 = vpack.c.b16 %v971, %v970
      %v1012 = vpack.c.b16 %v973, %v972
      %v1013 = vpack.c.b16 %v975, %v974
      %v1014 = vpack.c.b16 %v977, %v976
      %v1015 = vpack.c.b16 %v979, %v978
      %v1016 = vpack.c.b16 %v981, %v980
      %v1017 = vpack.c.b16 %v983, %v982
      %v1018 = vpack.c.b16 %v985, %v984
      %v1019 = vpack.c.b16 %v987, %v986
      %v1020 = vpack.c.b16 %v989, %v988
      %v1021 = vpack.c.b16 %v991, %v990
      %v1022 = vpack.c.b16 %v993, %v992
      %v1023 = vpack.c.b16 %v995, %v994
      %v1024 = vpack.c.b16 %v997, %v996
      %v1025 = vpack.c.b16 %v999, %v998
      %v1026 = vpack.c.b16 %v1001, %v1000
      %v1027 = vpack.c.b16 %v1003, %v1002
      %1052 = vmatprep.subr.bf16.mxu0 0
      %1053 = vmatpush1.bf16.msra.mxu0 %v1004
      %1054 = vmatprep.subr.bf16.mxu0 0
      %1055 = vmatpush1.bf16.msra.mxu0 %v1005
      %1056 = vmatprep.subr.bf16.mxu0 0
      %1057 = vmatpush1.bf16.msra.mxu0 %v1006
      %1058 = vmatprep.subr.bf16.mxu0 0
      %1059 = vmatpush1.bf16.msra.mxu0 %v1007
      %1060 = vmatprep.subr.bf16.mxu0 0
      %1061 = vmatpush1.bf16.msra.mxu0 %v1008
      %1062 = vmatprep.subr.bf16.mxu0 0
      %1063 = vmatpush1.bf16.msra.mxu0 %v1009
      %1064 = vmatprep.subr.bf16.mxu0 0
      %1065 = vmatpush1.bf16.msra.mxu0 %v1010
      %1066 = vmatprep.subr.bf16.mxu0 0
      %1067 = vmatpush1.bf16.msra.mxu0 %v1011
      %1068 = vmatprep.subr.bf16.mxu0 0
      %1069 = vmatpush1.bf16.msra.mxu0 %v1012
      %1070 = vmatprep.subr.bf16.mxu0 0
      %1071 = vmatpush1.bf16.msra.mxu0 %v1013
      %1072 = vmatprep.subr.bf16.mxu0 0
      %1073 = vmatpush1.bf16.msra.mxu0 %v1014
      %1074 = vmatprep.subr.bf16.mxu0 0
      %1075 = vmatpush1.bf16.msra.mxu0 %v1015
      %1076 = vmatprep.subr.bf16.mxu0 0
      %1077 = vmatpush1.bf16.msra.mxu0 %v1016
      %1078 = vmatprep.subr.bf16.mxu0 0
      %1079 = vmatpush1.bf16.msra.mxu0 %v1017
      %1080 = vmatprep.subr.bf16.mxu0 0
      %1081 = vmatpush1.bf16.msra.mxu0 %v1018
      %1082 = vmatprep.subr.bf16.mxu0 0
      %1083 = vmatpush1.bf16.msra.mxu0 %v1019
      %1084 = vmatprep.mubr.bf16.mxu0 %v812
      %1085 = vmatmul.mubr.bf16.gmra.mrb[0].mxu0 %v811
      %v1086 = vpop.f32.mrb[0].mxu0
      %v1087 = vadd.f32 0.0, %v1086
      %v1088 = vpop.f32.mrb[0].mxu0
      %v1089 = vpop.f32.mrb[0].mxu0
      %v1090 = vadd.f32 0.0, %v1089
      %v1091 = vpop.f32.mrb[0].mxu0
      %1092 = vmatprep.mubr.bf16.mxu0 %v815
      %1093 = vmatmul.mubr.bf16.gmra.mrb[0].mxu0 %v814
      %v1094 = vpop.f32.mrb[0].mxu0
      %v1095 = vadd.f32 0.0, %v1094
      %v1096 = vpop.f32.mrb[0].mxu0
      %v1097 = vpop.f32.mrb[0].mxu0
      %v1098 = vadd.f32 0.0, %v1097
      %v1099 = vpop.f32.mrb[0].mxu0
      %1100 = vmatprep.mubr.bf16.mxu0 %v818
      %1101 = vmatmul.mubr.bf16.gmra.mrb[0].mxu0 %v817
      %v1102 = vpop.f32.mrb[0].mxu0
      %v1103 = vadd.f32 0.0, %v1102
      %v1104 = vpop.f32.mrb[0].mxu0
      %v1105 = vpop.f32.mrb[0].mxu0
      %v1106 = vadd.f32 0.0, %v1105
      %v1107 = vpop.f32.mrb[0].mxu0
      %1108 = vmatprep.mubr.bf16.mxu0 %v821
      %1109 = vmatmul.mubr.bf16.gmra.mrb[0].mxu0 %v820
      %v1110 = vpop.f32.mrb[0].mxu0
      %v1111 = vadd.f32 0.0, %v1110
      %v1112 = vpop.f32.mrb[0].mxu0
      %v1113 = vpop.f32.mrb[0].mxu0
      %v1114 = vadd.f32 0.0, %v1113
      %v1115 = vpop.f32.mrb[0].mxu0
      %1116 = vmatprep.mubr.bf16.mxu0 %v824
      %1117 = vmatmul.mubr.bf16.gmra.mrb[0].mxu0 %v823
      %v1118 = vpop.f32.mrb[0].mxu0
      %v1119 = vadd.f32 0.0, %v1118
      %v1120 = vpop.f32.mrb[0].mxu0
      %v1121 = vpop.f32.mrb[0].mxu0
      %v1122 = vadd.f32 0.0, %v1121
      %v1123 = vpop.f32.mrb[0].mxu0
      %1124 = vmatprep.mubr.bf16.mxu0 %v827
      %1125 = vmatmul.mubr.bf16.gmra.mrb[0].mxu0 %v826
      %v1126 = vpop.f32.mrb[0].mxu0
      %v1127 = vadd.f32 0.0, %v1126
      %v1128 = vpop.f32.mrb[0].mxu0
      %v1129 = vpop.f32.mrb[0].mxu0
      %v1130 = vadd.f32 0.0, %v1129
      %v1131 = vpop.f32.mrb[0].mxu0
      %1132 = vmatprep.mubr.bf16.mxu0 %v830
      %1133 = vmatmul.mubr.bf16.gmra.mrb[0].mxu0 %v829
      %v1134 = vpop.f32.mrb[0].mxu0
      %v1135 = vadd.f32 0.0, %v1134
      %v1136 = vpop.f32.mrb[0].mxu0
      %v1137 = vpop.f32.mrb[0].mxu0
      %v1138 = vadd.f32 0.0, %v1137
      %v1139 = vpop.f32.mrb[0].mxu0
      %1140 = vmatprep.mubr.bf16.mxu0 %v833
      %1141 = vmatmul.mubr.bf16.gmra.mrb[0].mxu0 %v832
      %v1142 = vpop.f32.mrb[0].mxu0
      %v1143 = vadd.f32 0.0, %v1142
      %v1144 = vpop.f32.mrb[0].mxu0
      %v1145 = vpop.f32.mrb[0].mxu0
      %v1146 = vadd.f32 0.0, %v1145
      %v1147 = vpop.f32.mrb[0].mxu0
      %1148 = vmatprep.mubr.bf16.mxu0 %v836
      %1149 = vmatmul.mubr.bf16.gmra.mrb[0].mxu0 %v835
      %v1150 = vpop.f32.mrb[0].mxu0
      %v1151 = vadd.f32 0.0, %v1150
      %v1152 = vpop.f32.mrb[0].mxu0
      %v1153 = vpop.f32.mrb[0].mxu0
      %v1154 = vadd.f32 0.0, %v1153
      %v1155 = vpop.f32.mrb[0].mxu0
      %1156 = vmatprep.mubr.bf16.mxu0 %v839
      %1157 = vmatmul.mubr.bf16.gmra.mrb[0].mxu0 %v838
      %v1158 = vpop.f32.mrb[0].mxu0
      %v1159 = vadd.f32 0.0, %v1158
      %v1160 = vpop.f32.mrb[0].mxu0
      %v1161 = vpop.f32.mrb[0].mxu0
      %v1162 = vadd.f32 0.0, %v1161
      %v1163 = vpop.f32.mrb[0].mxu0
      %1164 = vmatprep.mubr.bf16.mxu0 %v842
      %1165 = vmatmul.mubr.bf16.gmra.mrb[0].mxu0 %v841
      %v1166 = vpop.f32.mrb[0].mxu0
      %v1167 = vadd.f32 0.0, %v1166
      %v1168 = vpop.f32.mrb[0].mxu0
      %v1169 = vpop.f32.mrb[0].mxu0
      %v1170 = vadd.f32 0.0, %v1169
      %v1171 = vpop.f32.mrb[0].mxu0
      %1172 = vmatprep.mubr.bf16.mxu0 %v845
      %1173 = vmatmul.mubr.bf16.gmra.mrb[0].mxu0 %v844
      %v1174 = vpop.f32.mrb[0].mxu0
      %v1175 = vadd.f32 0.0, %v1174
      %v1176 = vpop.f32.mrb[0].mxu0
      %v1177 = vpop.f32.mrb[0].mxu0
      %v1178 = vadd.f32 0.0, %v1177
      %v1179 = vpop.f32.mrb[0].mxu0
      %1180 = vmatprep.mubr.bf16.mxu0 %v848
      %1181 = vmatmul.mubr.bf16.gmra.mrb[0].mxu0 %v847
      %v1182 = vpop.f32.mrb[0].mxu0
      %v1183 = vadd.f32 0.0, %v1182
      %v1184 = vpop.f32.mrb[0].mxu0
      %v1185 = vpop.f32.mrb[0].mxu0
      %v1186 = vadd.f32 0.0, %v1185
      %v1187 = vpop.f32.mrb[0].mxu0
      %1188 = vmatprep.mubr.bf16.mxu0 %v851
      %1189 = vmatmul.mubr.bf16.gmra.mrb[0].mxu0 %v850
      %v1190 = vpop.f32.mrb[0].mxu0
      %v1191 = vadd.f32 0.0, %v1190
      %v1192 = vpop.f32.mrb[0].mxu0
      %v1193 = vpop.f32.mrb[0].mxu0
      %v1194 = vadd.f32 0.0, %v1193
      %v1195 = vpop.f32.mrb[0].mxu0
      %1196 = vmatprep.mubr.bf16.mxu0 %v854
      %1197 = vmatmul.mubr.bf16.gmra.mrb[0].mxu0 %v853
      %v1198 = vpop.f32.mrb[0].mxu0
      %v1199 = vadd.f32 0.0, %v1198
      %v1200 = vpop.f32.mrb[0].mxu0
      %v1201 = vpop.f32.mrb[0].mxu0
      %v1202 = vadd.f32 0.0, %v1201
      %v1203 = vpop.f32.mrb[0].mxu0
      %1204 = vmatprep.mubr.bf16.mxu0 %v857
      %1205 = vmatmul.mubr.bf16.gmra.mrb[0].mxu0 %v856
      %v1206 = vpop.f32.mrb[0].mxu0
      %v1207 = vadd.f32 0.0, %v1206
      %v1208 = vpop.f32.mrb[0].mxu0
      %v1209 = vpop.f32.mrb[0].mxu0
      %v1210 = vadd.f32 0.0, %v1209
      %v1211 = vpop.f32.mrb[0].mxu0
      %1212 = vdwg.mxu0
      %1213 = vmatprep.subr.bf16.mxu0 0
      %1214 = vmatpush1.bf16.msra.mxu0 %v1020
      %1215 = vmatprep.subr.bf16.mxu0 0
      %1216 = vmatpush1.bf16.msra.mxu0 %v1021
      %1217 = vmatprep.subr.bf16.mxu0 0
      %1218 = vmatpush1.bf16.msra.mxu0 %v1022
      %1219 = vmatprep.subr.bf16.mxu0 0
      %1220 = vmatpush1.bf16.msra.mxu0 %v1023
      %1221 = vmatprep.subr.bf16.mxu0 0
      %1222 = vmatpush1.bf16.msra.mxu0 %v1024
      %1223 = vmatprep.subr.bf16.mxu0 0
      %1224 = vmatpush1.bf16.msra.mxu0 %v1025
      %1225 = vmatprep.subr.bf16.mxu0 0
      %1226 = vmatpush1.bf16.msra.mxu0 %v1026
      %1227 = vmatprep.subr.bf16.mxu0 0
      %1228 = vmatpush1.bf16.msra.mxu0 %v1027
      %1229 = vmatprep.subr.bf16.mxu0 0
      %1230 = vmatpush1.bf16.msra.mxu0 0
      %1231 = vmatprep.subr.bf16.mxu0 0
      %1232 = vmatpush1.bf16.msra.mxu0 0
      %1233 = vmatprep.subr.bf16.mxu0 0
      %1234 = vmatpush1.bf16.msra.mxu0 0
      %1235 = vmatprep.subr.bf16.mxu0 0
      %1236 = vmatpush1.bf16.msra.mxu0 0
      %1237 = vmatprep.subr.bf16.mxu0 0
      %1238 = vmatpush1.bf16.msra.mxu0 0
      %1239 = vmatprep.subr.bf16.mxu0 0
      %1240 = vmatpush1.bf16.msra.mxu0 0
      %1241 = vmatprep.subr.bf16.mxu0 0
      %1242 = vmatpush1.bf16.msra.mxu0 0
      %1243 = vmatprep.subr.bf16.mxu0 0
      %1244 = vmatpush1.bf16.msra.mxu0 0
      %1245 = vmatprep.mubr.bf16.mxu0 0
      %1246 = vmatmul.mubr.bf16.gmra.mrb[0].mxu0 %v813
      %v1247 = vpop.f32.mrb[0].mxu0
      %v1248 = vadd.f32 %v1087, %v1247
      %v1249 = vpop.f32.mrb[0].mxu0
      %v1250 = vpop.f32.mrb[0].mxu0
      %v1251 = vadd.f32 %v1090, %v1250
      %v1252 = vpop.f32.mrb[0].mxu0
      %1253 = vmatprep.mubr.bf16.mxu0 0
      %1254 = vmatmul.mubr.bf16.gmra.mrb[0].mxu0 %v816
      %v1255 = vpop.f32.mrb[0].mxu0
      %v1256 = vadd.f32 %v1095, %v1255
      %v1257 = vpop.f32.mrb[0].mxu0
      %v1258 = vpop.f32.mrb[0].mxu0
      %v1259 = vadd.f32 %v1098, %v1258
      %v1260 = vpop.f32.mrb[0].mxu0
      %1261 = vmatprep.mubr.bf16.mxu0 0
      %1262 = vmatmul.mubr.bf16.gmra.mrb[0].mxu0 %v819
      %v1263 = vpop.f32.mrb[0].mxu0
      %v1264 = vadd.f32 %v1103, %v1263
      %v1265 = vpop.f32.mrb[0].mxu0
      %v1266 = vpop.f32.mrb[0].mxu0
      %v1267 = vadd.f32 %v1106, %v1266
      %v1268 = vpop.f32.mrb[0].mxu0
      %1269 = vmatprep.mubr.bf16.mxu0 0
      %1270 = vmatmul.mubr.bf16.gmra.mrb[0].mxu0 %v822
      %v1271 = vpop.f32.mrb[0].mxu0
      %v1272 = vadd.f32 %v1111, %v1271
      %v1273 = vpop.f32.mrb[0].mxu0
      %v1274 = vpop.f32.mrb[0].mxu0
      %v1275 = vadd.f32 %v1114, %v1274
      %v1276 = vpop.f32.mrb[0].mxu0
      %1277 = vmatprep.mubr.bf16.mxu0 0
      %1278 = vmatmul.mubr.bf16.gmra.mrb[0].mxu0 %v825
      %v1279 = vpop.f32.mrb[0].mxu0
      %v1280 = vadd.f32 %v1119, %v1279
      %v1281 = vpop.f32.mrb[0].mxu0
      %v1282 = vpop.f32.mrb[0].mxu0
      %v1283 = vadd.f32 %v1122, %v1282
      %v1284 = vpop.f32.mrb[0].mxu0
      %1285 = vmatprep.mubr.bf16.mxu0 0
      %1286 = vmatmul.mubr.bf16.gmra.mrb[0].mxu0 %v828
      %v1287 = vpop.f32.mrb[0].mxu0
      %v1288 = vadd.f32 %v1127, %v1287
      %v1289 = vpop.f32.mrb[0].mxu0
      %v1290 = vpop.f32.mrb[0].mxu0
      %v1291 = vadd.f32 %v1130, %v1290
      %v1292 = vpop.f32.mrb[0].mxu0
      %1293 = vmatprep.mubr.bf16.mxu0 0
      %1294 = vmatmul.mubr.bf16.gmra.mrb[0].mxu0 %v831
      %v1295 = vpop.f32.mrb[0].mxu0
      %v1296 = vadd.f32 %v1135, %v1295
      %v1297 = vpop.f32.mrb[0].mxu0
      %v1298 = vpop.f32.mrb[0].mxu0
      %v1299 = vadd.f32 %v1138, %v1298
      %v1300 = vpop.f32.mrb[0].mxu0
      %1301 = vmatprep.mubr.bf16.mxu0 0
      %1302 = vmatmul.mubr.bf16.gmra.mrb[0].mxu0 %v834
      %v1303 = vpop.f32.mrb[0].mxu0
      %v1304 = vadd.f32 %v1143, %v1303
      %v1305 = vpop.f32.mrb[0].mxu0
      %v1306 = vpop.f32.mrb[0].mxu0
      %v1307 = vadd.f32 %v1146, %v1306
      %v1308 = vpop.f32.mrb[0].mxu0
      %1309 = vmatprep.mubr.bf16.mxu0 0
      %1310 = vmatmul.mubr.bf16.gmra.mrb[0].mxu0 %v837
      %v1311 = vpop.f32.mrb[0].mxu0
      %v1312 = vadd.f32 %v1151, %v1311
      %v1313 = vpop.f32.mrb[0].mxu0
      %v1314 = vpop.f32.mrb[0].mxu0
      %v1315 = vadd.f32 %v1154, %v1314
      %v1316 = vpop.f32.mrb[0].mxu0
      %1317 = vmatprep.mubr.bf16.mxu0 0
      %1318 = vmatmul.mubr.bf16.gmra.mrb[0].mxu0 %v840
      %v1319 = vpop.f32.mrb[0].mxu0
      %v1320 = vadd.f32 %v1159, %v1319
      %v1321 = vpop.f32.mrb[0].mxu0
      %v1322 = vpop.f32.mrb[0].mxu0
      %v1323 = vadd.f32 %v1162, %v1322
      %v1324 = vpop.f32.mrb[0].mxu0
      %1325 = vmatprep.mubr.bf16.mxu0 0
      %1326 = vmatmul.mubr.bf16.gmra.mrb[0].mxu0 %v843
      %v1327 = vpop.f32.mrb[0].mxu0
      %v1328 = vadd.f32 %v1167, %v1327
      %v1329 = vpop.f32.mrb[0].mxu0
      %v1330 = vpop.f32.mrb[0].mxu0
      %v1331 = vadd.f32 %v1170, %v1330
      %v1332 = vpop.f32.mrb[0].mxu0
      %1333 = vmatprep.mubr.bf16.mxu0 0
      %1334 = vmatmul.mubr.bf16.gmra.mrb[0].mxu0 %v846
      %v1335 = vpop.f32.mrb[0].mxu0
      %v1336 = vadd.f32 %v1175, %v1335
      %v1337 = vpop.f32.mrb[0].mxu0
      %v1338 = vpop.f32.mrb[0].mxu0
      %v1339 = vadd.f32 %v1178, %v1338
      %v1340 = vpop.f32.mrb[0].mxu0
      %1341 = vmatprep.mubr.bf16.mxu0 0
      %1342 = vmatmul.mubr.bf16.gmra.mrb[0].mxu0 %v849
      %v1343 = vpop.f32.mrb[0].mxu0
      %v1344 = vadd.f32 %v1183, %v1343
      %v1345 = vpop.f32.mrb[0].mxu0
      %v1346 = vpop.f32.mrb[0].mxu0
      %v1347 = vadd.f32 %v1186, %v1346
      %v1348 = vpop.f32.mrb[0].mxu0
      %1349 = vmatprep.mubr.bf16.mxu0 0
      %1350 = vmatmul.mubr.bf16.gmra.mrb[0].mxu0 %v852
      %v1351 = vpop.f32.mrb[0].mxu0
      %v1352 = vadd.f32 %v1191, %v1351
      %v1353 = vpop.f32.mrb[0].mxu0
      %v1354 = vpop.f32.mrb[0].mxu0
      %v1355 = vadd.f32 %v1194, %v1354
      %v1356 = vpop.f32.mrb[0].mxu0
      %1357 = vmatprep.mubr.bf16.mxu0 0
      %1358 = vmatmul.mubr.bf16.gmra.mrb[0].mxu0 %v855
      %v1359 = vpop.f32.mrb[0].mxu0
      %v1360 = vadd.f32 %v1199, %v1359
      %v1361 = vpop.f32.mrb[0].mxu0
      %v1362 = vpop.f32.mrb[0].mxu0
      %v1363 = vadd.f32 %v1202, %v1362
      %v1364 = vpop.f32.mrb[0].mxu0
      %1365 = vmatprep.mubr.bf16.mxu0 0
      %1366 = vmatmul.mubr.bf16.gmra.mrb[0].mxu0 %v858
      %v1367 = vpop.f32.mrb[0].mxu0
      %v1368 = vadd.f32 %v1207, %v1367
      %v1369 = vpop.f32.mrb[0].mxu0
      %v1370 = vpop.f32.mrb[0].mxu0
      %v1371 = vadd.f32 %v1210, %v1370
      %v1372 = vpop.f32.mrb[0].mxu0
      %1373 = vdwg.mxu0
      %v1422 = vunpack.c.l.b16 %v667
      %v1423 = vunpack.c.l.b16 %v668
      %v1424 = vunpack.c.l.b16 %v669
      %v1425 = vunpack.c.l.b16 %v670
      %v1426 = vunpack.c.l.b16 %v671
      %v1427 = vunpack.c.l.b16 %v672
      %v1428 = vunpack.c.l.b16 %v673
      %v1429 = vunpack.c.l.b16 %v674
      %v1430 = vunpack.c.l.b16 %v675
      %v1431 = vunpack.c.l.b16 %v676
      %v1432 = vunpack.c.l.b16 %v677
      %v1433 = vunpack.c.l.b16 %v678
      %v1434 = vunpack.c.l.b16 %v679
      %v1435 = vunpack.c.l.b16 %v680
      %v1436 = vunpack.c.l.b16 %v681
      %v1437 = vunpack.c.l.b16 %v682
      %v1438 = vunpack.c.l.b16 %v683
      %v1439 = vunpack.c.l.b16 %v684
      %v1440 = vunpack.c.l.b16 %v685
      %v1441 = vunpack.c.l.b16 %v686
      %v1442 = vunpack.c.l.b16 %v687
      %v1443 = vunpack.c.l.b16 %v688
      %v1444 = vunpack.c.l.b16 %v689
      %v1445 = vunpack.c.l.b16 %v690
      %v1446 = vunpack.c.l.b16 %v691
      %v1447 = vunpack.c.l.b16 %v692
      %v1448 = vunpack.c.l.b16 %v693
      %v1449 = vunpack.c.l.b16 %v694
      %v1450 = vunpack.c.l.b16 %v695
      %v1451 = vunpack.c.l.b16 %v696
      %v1452 = vunpack.c.l.b16 %v697
      %v1453 = vunpack.c.l.b16 %v698
      %v1454 = vunpack.c.l.b16 %v699
      %v1455 = vunpack.c.l.b16 %v700
      %v1456 = vunpack.c.l.b16 %v701
      %v1457 = vunpack.c.l.b16 %v702
      %v1458 = vunpack.c.l.b16 %v703
      %v1459 = vunpack.c.l.b16 %v704
      %v1460 = vunpack.c.l.b16 %v705
      %v1461 = vunpack.c.l.b16 %v706
      %v1462 = vunpack.c.l.b16 %v707
      %v1463 = vunpack.c.l.b16 %v708
      %v1464 = vunpack.c.l.b16 %v709
      %v1465 = vunpack.c.l.b16 %v710
      %v1466 = vunpack.c.l.b16 %v711
      %v1467 = vunpack.c.l.b16 %v712
      %v1468 = vunpack.c.l.b16 %v713
      %v1469 = vunpack.c.l.b16 %v714
      %v1470 = vpack.c.b16 %v1423, %v1422
      %v1471 = vpack.c.b16 %v1425, %v1424
      %v1472 = vpack.c.b16 %v1427, %v1426
      %v1473 = vpack.c.b16 %v1429, %v1428
      %v1474 = vpack.c.b16 %v1431, %v1430
      %v1475 = vpack.c.b16 %v1433, %v1432
      %v1476 = vpack.c.b16 %v1435, %v1434
      %v1477 = vpack.c.b16 %v1437, %v1436
      %v1478 = vpack.c.b16 %v1439, %v1438
      %v1479 = vpack.c.b16 %v1441, %v1440
      %v1480 = vpack.c.b16 %v1443, %v1442
      %v1481 = vpack.c.b16 %v1445, %v1444
      %v1482 = vpack.c.b16 %v1447, %v1446
      %v1483 = vpack.c.b16 %v1449, %v1448
      %v1484 = vpack.c.b16 %v1451, %v1450
      %v1485 = vpack.c.b16 %v1453, %v1452
      %v1486 = vpack.c.b16 %v1455, %v1454
      %v1487 = vpack.c.b16 %v1457, %v1456
      %v1488 = vpack.c.b16 %v1459, %v1458
      %v1489 = vpack.c.b16 %v1461, %v1460
      %v1490 = vpack.c.b16 %v1463, %v1462
      %v1491 = vpack.c.b16 %v1465, %v1464
      %v1492 = vpack.c.b16 %v1467, %v1466
      %v1493 = vpack.c.b16 %v1469, %v1468
      %1518 = vmatprep.subr.bf16.mxu0 0
      %1519 = vmatpush1.bf16.msra.mxu0 %v1470
      %1520 = vmatprep.subr.bf16.mxu0 0
      %1521 = vmatpush1.bf16.msra.mxu0 %v1471
      %1522 = vmatprep.subr.bf16.mxu0 0
      %1523 = vmatpush1.bf16.msra.mxu0 %v1472
      %1524 = vmatprep.subr.bf16.mxu0 0
      %1525 = vmatpush1.bf16.msra.mxu0 %v1473
      %1526 = vmatprep.subr.bf16.mxu0 0
      %1527 = vmatpush1.bf16.msra.mxu0 %v1474
      %1528 = vmatprep.subr.bf16.mxu0 0
      %1529 = vmatpush1.bf16.msra.mxu0 %v1475
      %1530 = vmatprep.subr.bf16.mxu0 0
      %1531 = vmatpush1.bf16.msra.mxu0 %v1476
      %1532 = vmatprep.subr.bf16.mxu0 0
      %1533 = vmatpush1.bf16.msra.mxu0 %v1477
      %1534 = vmatprep.subr.bf16.mxu0 0
      %1535 = vmatpush1.bf16.msra.mxu0 %v1478
      %1536 = vmatprep.subr.bf16.mxu0 0
      %1537 = vmatpush1.bf16.msra.mxu0 %v1479
      %1538 = vmatprep.subr.bf16.mxu0 0
      %1539 = vmatpush1.bf16.msra.mxu0 %v1480
      %1540 = vmatprep.subr.bf16.mxu0 0
      %1541 = vmatpush1.bf16.msra.mxu0 %v1481
      %1542 = vmatprep.subr.bf16.mxu0 0
      %1543 = vmatpush1.bf16.msra.mxu0 %v1482
      %1544 = vmatprep.subr.bf16.mxu0 0
      %1545 = vmatpush1.bf16.msra.mxu0 %v1483
      %1546 = vmatprep.subr.bf16.mxu0 0
      %1547 = vmatpush1.bf16.msra.mxu0 %v1484
      %1548 = vmatprep.subr.bf16.mxu0 0
      %1549 = vmatpush1.bf16.msra.mxu0 %v1485
      %1550 = vmatprep.mubr.bf16.mxu0 %v620
      %1551 = vmatmul.mubr.bf16.gmra.mrb[0].mxu0 %v619
      %v1552 = vpop.f32.mrb[0].mxu0
      %v1553 = vadd.f32 %v1248, %v1552
      %v1554 = vpop.f32.mrb[0].mxu0
      %v1555 = vpop.f32.mrb[0].mxu0
      %v1556 = vadd.f32 %v1251, %v1555
      %v1557 = vpop.f32.mrb[0].mxu0
      %1558 = vmatprep.mubr.bf16.mxu0 %v623
      %1559 = vmatmul.mubr.bf16.gmra.mrb[0].mxu0 %v622
      %v1560 = vpop.f32.mrb[0].mxu0
      %v1561 = vadd.f32 %v1256, %v1560
      %v1562 = vpop.f32.mrb[0].mxu0
      %v1563 = vpop.f32.mrb[0].mxu0
      %v1564 = vadd.f32 %v1259, %v1563
      %v1565 = vpop.f32.mrb[0].mxu0
      %1566 = vmatprep.mubr.bf16.mxu0 %v626
      %1567 = vmatmul.mubr.bf16.gmra.mrb[0].mxu0 %v625
      %v1568 = vpop.f32.mrb[0].mxu0
      %v1569 = vadd.f32 %v1264, %v1568
      %v1570 = vpop.f32.mrb[0].mxu0
      %v1571 = vpop.f32.mrb[0].mxu0
      %v1572 = vadd.f32 %v1267, %v1571
      %v1573 = vpop.f32.mrb[0].mxu0
      %1574 = vmatprep.mubr.bf16.mxu0 %v629
      %1575 = vmatmul.mubr.bf16.gmra.mrb[0].mxu0 %v628
      %v1576 = vpop.f32.mrb[0].mxu0
      %v1577 = vadd.f32 %v1272, %v1576
      %v1578 = vpop.f32.mrb[0].mxu0
      %v1579 = vpop.f32.mrb[0].mxu0
      %v1580 = vadd.f32 %v1275, %v1579
      %v1581 = vpop.f32.mrb[0].mxu0
      %1582 = vmatprep.mubr.bf16.mxu0 %v632
      %1583 = vmatmul.mubr.bf16.gmra.mrb[0].mxu0 %v631
      %v1584 = vpop.f32.mrb[0].mxu0
      %v1585 = vadd.f32 %v1280, %v1584
      %v1586 = vpop.f32.mrb[0].mxu0
      %v1587 = vpop.f32.mrb[0].mxu0
      %v1588 = vadd.f32 %v1283, %v1587
      %v1589 = vpop.f32.mrb[0].mxu0
      %1590 = vmatprep.mubr.bf16.mxu0 %v635
      %1591 = vmatmul.mubr.bf16.gmra.mrb[0].mxu0 %v634
      %v1592 = vpop.f32.mrb[0].mxu0
      %v1593 = vadd.f32 %v1288, %v1592
      %v1594 = vpop.f32.mrb[0].mxu0
      %v1595 = vpop.f32.mrb[0].mxu0
      %v1596 = vadd.f32 %v1291, %v1595
      %v1597 = vpop.f32.mrb[0].mxu0
      %1598 = vmatprep.mubr.bf16.mxu0 %v638
      %1599 = vmatmul.mubr.bf16.gmra.mrb[0].mxu0 %v637
      %v1600 = vpop.f32.mrb[0].mxu0
      %v1601 = vadd.f32 %v1296, %v1600
      %v1602 = vpop.f32.mrb[0].mxu0
      %v1603 = vpop.f32.mrb[0].mxu0
      %v1604 = vadd.f32 %v1299, %v1603
      %v1605 = vpop.f32.mrb[0].mxu0
      %1606 = vmatprep.mubr.bf16.mxu0 %v641
      %1607 = vmatmul.mubr.bf16.gmra.mrb[0].mxu0 %v640
      %v1608 = vpop.f32.mrb[0].mxu0
      %v1609 = vadd.f32 %v1304, %v1608
      %v1610 = vpop.f32.mrb[0].mxu0
      %v1611 = vpop.f32.mrb[0].mxu0
      %v1612 = vadd.f32 %v1307, %v1611
      %v1613 = vpop.f32.mrb[0].mxu0
      %1614 = vmatprep.mubr.bf16.mxu0 %v644
      %1615 = vmatmul.mubr.bf16.gmra.mrb[0].mxu0 %v643
      %v1616 = vpop.f32.mrb[0].mxu0
      %v1617 = vadd.f32 %v1312, %v1616
      %v1618 = vpop.f32.mrb[0].mxu0
      %v1619 = vpop.f32.mrb[0].mxu0
      %v1620 = vadd.f32 %v1315, %v1619
      %v1621 = vpop.f32.mrb[0].mxu0
      %1622 = vmatprep.mubr.bf16.mxu0 %v647
      %1623 = vmatmul.mubr.bf16.gmra.mrb[0].mxu0 %v646
      %v1624 = vpop.f32.mrb[0].mxu0
      %v1625 = vadd.f32 %v1320, %v1624
      %v1626 = vpop.f32.mrb[0].mxu0
      %v1627 = vpop.f32.mrb[0].mxu0
      %v1628 = vadd.f32 %v1323, %v1627
      %v1629 = vpop.f32.mrb[0].mxu0
      %1630 = vmatprep.mubr.bf16.mxu0 %v650
      %1631 = vmatmul.mubr.bf16.gmra.mrb[0].mxu0 %v649
      %v1632 = vpop.f32.mrb[0].mxu0
      %v1633 = vadd.f32 %v1328, %v1632
      %v1634 = vpop.f32.mrb[0].mxu0
      %v1635 = vpop.f32.mrb[0].mxu0
      %v1636 = vadd.f32 %v1331, %v1635
      %v1637 = vpop.f32.mrb[0].mxu0
      %1638 = vmatprep.mubr.bf16.mxu0 %v653
      %1639 = vmatmul.mubr.bf16.gmra.mrb[0].mxu0 %v652
      %v1640 = vpop.f32.mrb[0].mxu0
      %v1641 = vadd.f32 %v1336, %v1640
      %v1642 = vpop.f32.mrb[0].mxu0
      %v1643 = vpop.f32.mrb[0].mxu0
      %v1644 = vadd.f32 %v1339, %v1643
      %v1645 = vpop.f32.mrb[0].mxu0
      %1646 = vmatprep.mubr.bf16.mxu0 %v656
      %1647 = vmatmul.mubr.bf16.gmra.mrb[0].mxu0 %v655
      %v1648 = vpop.f32.mrb[0].mxu0
      %v1649 = vadd.f32 %v1344, %v1648
      %v1650 = vpop.f32.mrb[0].mxu0
      %v1651 = vpop.f32.mrb[0].mxu0
      %v1652 = vadd.f32 %v1347, %v1651
      %v1653 = vpop.f32.mrb[0].mxu0
      %1654 = vmatprep.mubr.bf16.mxu0 %v659
      %1655 = vmatmul.mubr.bf16.gmra.mrb[0].mxu0 %v658
      %v1656 = vpop.f32.mrb[0].mxu0
      %v1657 = vadd.f32 %v1352, %v1656
      %v1658 = vpop.f32.mrb[0].mxu0
      %v1659 = vpop.f32.mrb[0].mxu0
      %v1660 = vadd.f32 %v1355, %v1659
      %v1661 = vpop.f32.mrb[0].mxu0
      %1662 = vmatprep.mubr.bf16.mxu0 %v662
      %1663 = vmatmul.mubr.bf16.gmra.mrb[0].mxu0 %v661
      %v1664 = vpop.f32.mrb[0].mxu0
      %v1665 = vadd.f32 %v1360, %v1664
      %v1666 = vpop.f32.mrb[0].mxu0
      %v1667 = vpop.f32.mrb[0].mxu0
      %v1668 = vadd.f32 %v1363, %v1667
      %v1669 = vpop.f32.mrb[0].mxu0
      %1670 = vmatprep.mubr.bf16.mxu0 %v665
      %1671 = vmatmul.mubr.bf16.gmra.mrb[0].mxu0 %v664
      %v1672 = vpop.f32.mrb[0].mxu0
      %v1673 = vadd.f32 %v1368, %v1672
      %v1674 = vpop.f32.mrb[0].mxu0
      %v1675 = vpop.f32.mrb[0].mxu0
      %v1676 = vadd.f32 %v1371, %v1675
      %v1677 = vpop.f32.mrb[0].mxu0
      %1678 = vdwg.mxu0
      %1679 = vmatprep.subr.bf16.mxu0 0
      %1680 = vmatpush1.bf16.msra.mxu0 %v1486
      %1681 = vmatprep.subr.bf16.mxu0 0
      %1682 = vmatpush1.bf16.msra.mxu0 %v1487
      %1683 = vmatprep.subr.bf16.mxu0 0
      %1684 = vmatpush1.bf16.msra.mxu0 %v1488
      %1685 = vmatprep.subr.bf16.mxu0 0
      %1686 = vmatpush1.bf16.msra.mxu0 %v1489
      %1687 = vmatprep.subr.bf16.mxu0 0
      %1688 = vmatpush1.bf16.msra.mxu0 %v1490
      %1689 = vmatprep.subr.bf16.mxu0 0
      %1690 = vmatpush1.bf16.msra.mxu0 %v1491
      %1691 = vmatprep.subr.bf16.mxu0 0
      %1692 = vmatpush1.bf16.msra.mxu0 %v1492
      %1693 = vmatprep.subr.bf16.mxu0 0
      %1694 = vmatpush1.bf16.msra.mxu0 %v1493
      %1695 = vmatprep.subr.bf16.mxu0 0
      %1696 = vmatpush1.bf16.msra.mxu0 0
      %1697 = vmatprep.subr.bf16.mxu0 0
      %1698 = vmatpush1.bf16.msra.mxu0 0
      %1699 = vmatprep.subr.bf16.mxu0 0
      %1700 = vmatpush1.bf16.msra.mxu0 0
      %1701 = vmatprep.subr.bf16.mxu0 0
      %1702 = vmatpush1.bf16.msra.mxu0 0
      %1703 = vmatprep.subr.bf16.mxu0 0
      %1704 = vmatpush1.bf16.msra.mxu0 0
      %1705 = vmatprep.subr.bf16.mxu0 0
      %1706 = vmatpush1.bf16.msra.mxu0 0
      %1707 = vmatprep.subr.bf16.mxu0 0
      %1708 = vmatpush1.bf16.msra.mxu0 0
      %1709 = vmatprep.subr.bf16.mxu0 0
      %1710 = vmatpush1.bf16.msra.mxu0 0
      %1711 = vmatprep.mubr.bf16.mxu0 0
      %1712 = vmatmul.mubr.bf16.gmra.mrb[0].mxu0 %v621
      %v1713 = vpop.f32.mrb[0].mxu0
      %v1714 = vadd.f32 %v1553, %v1713
      %v1715 = vpop.f32.mrb[0].mxu0
      %v1716 = vpop.f32.mrb[0].mxu0
      %v1717 = vadd.f32 %v1556, %v1716
      %v1718 = vpop.f32.mrb[0].mxu0
      %1719 = vmatprep.mubr.bf16.mxu0 0
      %1720 = vmatmul.mubr.bf16.gmra.mrb[0].mxu0 %v624
      %v1721 = vpop.f32.mrb[0].mxu0
      %v1722 = vadd.f32 %v1561, %v1721
      %v1723 = vpop.f32.mrb[0].mxu0
      %v1724 = vpop.f32.mrb[0].mxu0
      %v1725 = vadd.f32 %v1564, %v1724
      %v1726 = vpop.f32.mrb[0].mxu0
      %1727 = vmatprep.mubr.bf16.mxu0 0
      %1728 = vmatmul.mubr.bf16.gmra.mrb[0].mxu0 %v627
      %v1729 = vpop.f32.mrb[0].mxu0
      %v1730 = vadd.f32 %v1569, %v1729
      %v1731 = vpop.f32.mrb[0].mxu0
      %v1732 = vpop.f32.mrb[0].mxu0
      %v1733 = vadd.f32 %v1572, %v1732
      %v1734 = vpop.f32.mrb[0].mxu0
      %1735 = vmatprep.mubr.bf16.mxu0 0
      %1736 = vmatmul.mubr.bf16.gmra.mrb[0].mxu0 %v630
      %v1737 = vpop.f32.mrb[0].mxu0
      %v1738 = vadd.f32 %v1577, %v1737
      %v1739 = vpop.f32.mrb[0].mxu0
      %v1740 = vpop.f32.mrb[0].mxu0
      %v1741 = vadd.f32 %v1580, %v1740
      %v1742 = vpop.f32.mrb[0].mxu0
      %1743 = vmatprep.mubr.bf16.mxu0 0
      %1744 = vmatmul.mubr.bf16.gmra.mrb[0].mxu0 %v633
      %v1745 = vpop.f32.mrb[0].mxu0
      %v1746 = vadd.f32 %v1585, %v1745
      %v1747 = vpop.f32.mrb[0].mxu0
      %v1748 = vpop.f32.mrb[0].mxu0
      %v1749 = vadd.f32 %v1588, %v1748
      %v1750 = vpop.f32.mrb[0].mxu0
      %1751 = vmatprep.mubr.bf16.mxu0 0
      %1752 = vmatmul.mubr.bf16.gmra.mrb[0].mxu0 %v636
      %v1753 = vpop.f32.mrb[0].mxu0
      %v1754 = vadd.f32 %v1593, %v1753
      %v1755 = vpop.f32.mrb[0].mxu0
      %v1756 = vpop.f32.mrb[0].mxu0
      %v1757 = vadd.f32 %v1596, %v1756
      %v1758 = vpop.f32.mrb[0].mxu0
      %1759 = vmatprep.mubr.bf16.mxu0 0
      %1760 = vmatmul.mubr.bf16.gmra.mrb[0].mxu0 %v639
      %v1761 = vpop.f32.mrb[0].mxu0
      %v1762 = vadd.f32 %v1601, %v1761
      %v1763 = vpop.f32.mrb[0].mxu0
      %v1764 = vpop.f32.mrb[0].mxu0
      %v1765 = vadd.f32 %v1604, %v1764
      %v1766 = vpop.f32.mrb[0].mxu0
      %1767 = vmatprep.mubr.bf16.mxu0 0
      %1768 = vmatmul.mubr.bf16.gmra.mrb[0].mxu0 %v642
      %v1769 = vpop.f32.mrb[0].mxu0
      %v1770 = vadd.f32 %v1609, %v1769
      %v1771 = vpop.f32.mrb[0].mxu0
      %v1772 = vpop.f32.mrb[0].mxu0
      %v1773 = vadd.f32 %v1612, %v1772
      %v1774 = vpop.f32.mrb[0].mxu0
      %1775 = vmatprep.mubr.bf16.mxu0 0
      %1776 = vmatmul.mubr.bf16.gmra.mrb[0].mxu0 %v645
      %v1777 = vpop.f32.mrb[0].mxu0
      %v1778 = vadd.f32 %v1617, %v1777
      %v1779 = vpop.f32.mrb[0].mxu0
      %v1780 = vpop.f32.mrb[0].mxu0
      %v1781 = vadd.f32 %v1620, %v1780
      %v1782 = vpop.f32.mrb[0].mxu0
      %1783 = vmatprep.mubr.bf16.mxu0 0
      %1784 = vmatmul.mubr.bf16.gmra.mrb[0].mxu0 %v648
      %v1785 = vpop.f32.mrb[0].mxu0
      %v1786 = vadd.f32 %v1625, %v1785
      %v1787 = vpop.f32.mrb[0].mxu0
      %v1788 = vpop.f32.mrb[0].mxu0
      %v1789 = vadd.f32 %v1628, %v1788
      %v1790 = vpop.f32.mrb[0].mxu0
      %1791 = vmatprep.mubr.bf16.mxu0 0
      %1792 = vmatmul.mubr.bf16.gmra.mrb[0].mxu0 %v651
      %v1793 = vpop.f32.mrb[0].mxu0
      %v1794 = vadd.f32 %v1633, %v1793
      %v1795 = vpop.f32.mrb[0].mxu0
      %v1796 = vpop.f32.mrb[0].mxu0
      %v1797 = vadd.f32 %v1636, %v1796
      %v1798 = vpop.f32.mrb[0].mxu0
      %1799 = vmatprep.mubr.bf16.mxu0 0
      %1800 = vmatmul.mubr.bf16.gmra.mrb[0].mxu0 %v654
      %v1801 = vpop.f32.mrb[0].mxu0
      %v1802 = vadd.f32 %v1641, %v1801
      %v1803 = vpop.f32.mrb[0].mxu0
      %v1804 = vpop.f32.mrb[0].mxu0
      %v1805 = vadd.f32 %v1644, %v1804
      %v1806 = vpop.f32.mrb[0].mxu0
      %1807 = vmatprep.mubr.bf16.mxu0 0
      %1808 = vmatmul.mubr.bf16.gmra.mrb[0].mxu0 %v657
      %v1809 = vpop.f32.mrb[0].mxu0
      %v1810 = vadd.f32 %v1649, %v1809
      %v1811 = vpop.f32.mrb[0].mxu0
      %v1812 = vpop.f32.mrb[0].mxu0
      %v1813 = vadd.f32 %v1652, %v1812
      %v1814 = vpop.f32.mrb[0].mxu0
      %1815 = vmatprep.mubr.bf16.mxu0 0
      %1816 = vmatmul.mubr.bf16.gmra.mrb[0].mxu0 %v660
      %v1817 = vpop.f32.mrb[0].mxu0
      %v1818 = vadd.f32 %v1657, %v1817
      %v1819 = vpop.f32.mrb[0].mxu0
      %v1820 = vpop.f32.mrb[0].mxu0
      %v1821 = vadd.f32 %v1660, %v1820
      %v1822 = vpop.f32.mrb[0].mxu0
      %1823 = vmatprep.mubr.bf16.mxu0 0
      %1824 = vmatmul.mubr.bf16.gmra.mrb[0].mxu0 %v663
      %v1825 = vpop.f32.mrb[0].mxu0
      %v1826 = vadd.f32 %v1665, %v1825
      %v1827 = vpop.f32.mrb[0].mxu0
      %v1828 = vpop.f32.mrb[0].mxu0
      %v1829 = vadd.f32 %v1668, %v1828
      %v1830 = vpop.f32.mrb[0].mxu0
      %1831 = vmatprep.mubr.bf16.mxu0 0
      %1832 = vmatmul.mubr.bf16.gmra.mrb[0].mxu0 %v666
      %v1833 = vpop.f32.mrb[0].mxu0
      %v1834 = vadd.f32 %v1673, %v1833
      %v1835 = vpop.f32.mrb[0].mxu0
      %v1836 = vpop.f32.mrb[0].mxu0
      %v1837 = vadd.f32 %v1676, %v1836
      %v1838 = vpop.f32.mrb[0].mxu0
      %1839 = vdwg.mxu0
      %s1840 = scalar_lea.vmem [#allocation2], 48
      %v1841 = vld [vmem:[%s1840] sm:$0xff]
      %v1842 = vld [vmem:[%s1840 + $0x8] sm:$0xff]
      %v1843 = vld [vmem:[%s1840 + $0x18] sm:$0xff]
      %v1844 = vld [vmem:[%s1840 + $0x20] sm:$0xff]
      %v1845 = vld [vmem:[%s1840 + $0x30] sm:$0xff]
      %v1846 = vld [vmem:[%s1840 + $0x38] sm:$0xff]
      %v1847 = vld [vmem:[%s1840 + $0x48] sm:$0xff]
      %v1848 = vld [vmem:[%s1840 + $0x50] sm:$0xff]
      %v1849 = vld [vmem:[%s1840 + $0x60] sm:$0xff]
      %v1850 = vld [vmem:[%s1840 + $0x68] sm:$0xff]
      %v1851 = vld [vmem:[%s1840 + $0x78] sm:$0xff]
      %v1852 = vld [vmem:[%s1840 + $0x80] sm:$0xff]
      %v1853 = vld [vmem:[%s1840 + $0x90] sm:$0xff]
      %v1854 = vld [vmem:[%s1840 + $0x98] sm:$0xff]
      %v1855 = vld [vmem:[%s1840 + $0xa8] sm:$0xff]
      %v1856 = vld [vmem:[%s1840 + $0xb0] sm:$0xff]
      %v1857 = vld [vmem:[%s1840 + $0xc0] sm:$0xff]
      %v1858 = vld [vmem:[%s1840 + $0xc8] sm:$0xff]
      %v1859 = vld [vmem:[%s1840 + $0xd8] sm:$0xff]
      %v1860 = vld [vmem:[%s1840 + $0xe0] sm:$0xff]
      %v1861 = vld [vmem:[%s1840 + $0xf0] sm:$0xff]
      %v1862 = vld [vmem:[%s1840 + $0xf8] sm:$0xff]
      %v1863 = vld [vmem:[%s1840 + $0x108] sm:$0xff]
      %v1864 = vld [vmem:[%s1840 + $0x110] sm:$0xff]
      %v1865 = vld [vmem:[%s1840 + $0x120] sm:$0xff]
      %v1866 = vld [vmem:[%s1840 + $0x128] sm:$0xff]
      %v1867 = vld [vmem:[%s1840 + $0x138] sm:$0xff]
      %v1868 = vld [vmem:[%s1840 + $0x140] sm:$0xff]
      %v1869 = vld [vmem:[%s1840 + $0x150] sm:$0xff]
      %v1870 = vld [vmem:[%s1840 + $0x158] sm:$0xff]
      %v1871 = vld [vmem:[%s1840 + $0x168] sm:$0xff]
      %v1872 = vld [vmem:[%s1840 + $0x170] sm:$0xff]
      %v1873 = vld [vmem:[%s1840 + $0x1] sm:$0xff]
      %v1874 = vld [vmem:[%s1840 + $0x9] sm:$0xff]
      %v1875 = vld [vmem:[%s1840 + $0x19] sm:$0xff]
      %v1876 = vld [vmem:[%s1840 + $0x21] sm:$0xff]
      %v1877 = vld [vmem:[%s1840 + $0x31] sm:$0xff]
      %v1878 = vld [vmem:[%s1840 + $0x39] sm:$0xff]
      %v1879 = vld [vmem:[%s1840 + $0x49] sm:$0xff]
      %v1880 = vld [vmem:[%s1840 + $0x51] sm:$0xff]
      %v1881 = vld [vmem:[%s1840 + $0x61] sm:$0xff]
      %v1882 = vld [vmem:[%s1840 + $0x69] sm:$0xff]
      %v1883 = vld [vmem:[%s1840 + $0x79] sm:$0xff]
      %v1884 = vld [vmem:[%s1840 + $0x81] sm:$0xff]
      %v1885 = vld [vmem:[%s1840 + $0x91] sm:$0xff]
      %v1886 = vld [vmem:[%s1840 + $0x99] sm:$0xff]
      %v1887 = vld [vmem:[%s1840 + $0xa9] sm:$0xff]
      %v1888 = vld [vmem:[%s1840 + $0xb1] sm:$0xff]
      %v1889 = vld [vmem:[%s1840 + $0xc1] sm:$0xff]
      %v1890 = vld [vmem:[%s1840 + $0xc9] sm:$0xff]
      %v1891 = vld [vmem:[%s1840 + $0xd9] sm:$0xff]
      %v1892 = vld [vmem:[%s1840 + $0xe1] sm:$0xff]
      %v1893 = vld [vmem:[%s1840 + $0xf1] sm:$0xff]
      %v1894 = vld [vmem:[%s1840 + $0xf9] sm:$0xff]
      %v1895 = vld [vmem:[%s1840 + $0x109] sm:$0xff]
      %v1896 = vld [vmem:[%s1840 + $0x111] sm:$0xff]
      %v1897 = vld [vmem:[%s1840 + $0x121] sm:$0xff]
      %v1898 = vld [vmem:[%s1840 + $0x129] sm:$0xff]
      %v1899 = vld [vmem:[%s1840 + $0x139] sm:$0xff]
      %v1900 = vld [vmem:[%s1840 + $0x141] sm:$0xff]
      %v1901 = vld [vmem:[%s1840 + $0x151] sm:$0xff]
      %v1902 = vld [vmem:[%s1840 + $0x159] sm:$0xff]
      %v1903 = vld [vmem:[%s1840 + $0x169] sm:$0xff]
      %v1904 = vld [vmem:[%s1840 + $0x171] sm:$0xff]
      %v1905 = vld [vmem:[%s1840 + $0x2] sm:$0xff]
      %v1906 = vld [vmem:[%s1840 + $0xa] sm:$0xff]
      %v1907 = vld [vmem:[%s1840 + $0x1a] sm:$0xff]
      %v1908 = vld [vmem:[%s1840 + $0x22] sm:$0xff]
      %v1909 = vld [vmem:[%s1840 + $0x32] sm:$0xff]
      %v1910 = vld [vmem:[%s1840 + $0x3a] sm:$0xff]
      %v1911 = vld [vmem:[%s1840 + $0x4a] sm:$0xff]
      %v1912 = vld [vmem:[%s1840 + $0x52] sm:$0xff]
      %v1913 = vld [vmem:[%s1840 + $0x62] sm:$0xff]
      %v1914 = vld [vmem:[%s1840 + $0x6a] sm:$0xff]
      %v1915 = vld [vmem:[%s1840 + $0x7a] sm:$0xff]
      %v1916 = vld [vmem:[%s1840 + $0x82] sm:$0xff]
      %v1917 = vld [vmem:[%s1840 + $0x92] sm:$0xff]
      %v1918 = vld [vmem:[%s1840 + $0x9a] sm:$0xff]
      %v1919 = vld [vmem:[%s1840 + $0xaa] sm:$0xff]
      %v1920 = vld [vmem:[%s1840 + $0xb2] sm:$0xff]
      %v1921 = vld [vmem:[%s1840 + $0xc2] sm:$0xff]
      %v1922 = vld [vmem:[%s1840 + $0xca] sm:$0xff]
      %v1923 = vld [vmem:[%s1840 + $0xda] sm:$0xff]
      %v1924 = vld [vmem:[%s1840 + $0xe2] sm:$0xff]
      %v1925 = vld [vmem:[%s1840 + $0xf2] sm:$0xff]
      %v1926 = vld [vmem:[%s1840 + $0xfa] sm:$0xff]
      %v1927 = vld [vmem:[%s1840 + $0x10a] sm:$0xff]
      %v1928 = vld [vmem:[%s1840 + $0x112] sm:$0xff]
      %v1929 = vld [vmem:[%s1840 + $0x122] sm:$0xff]
      %v1930 = vld [vmem:[%s1840 + $0x12a] sm:$0xff]
      %v1931 = vld [vmem:[%s1840 + $0x13a] sm:$0xff]
      %v1932 = vld [vmem:[%s1840 + $0x142] sm:$0xff]
      %v1933 = vld [vmem:[%s1840 + $0x152] sm:$0xff]
      %v1934 = vld [vmem:[%s1840 + $0x15a] sm:$0xff]
      %v1935 = vld [vmem:[%s1840 + $0x16a] sm:$0xff]
      %v1936 = vld [vmem:[%s1840 + $0x172] sm:$0xff]
      %v1937 = vpack.c.bf16 %v1842, %v1841
      %v1938 = vpack.c.bf16 %v1874, %v1873
      %v1939 = vpack.c.bf16 %v1906, %v1905
      %v1940 = vpack.c.bf16 %v1844, %v1843
      %v1941 = vpack.c.bf16 %v1876, %v1875
      %v1942 = vpack.c.bf16 %v1908, %v1907
      %v1943 = vpack.c.bf16 %v1846, %v1845
      %v1944 = vpack.c.bf16 %v1878, %v1877
      %v1945 = vpack.c.bf16 %v1910, %v1909
      %v1946 = vpack.c.bf16 %v1848, %v1847
      %v1947 = vpack.c.bf16 %v1880, %v1879
      %v1948 = vpack.c.bf16 %v1912, %v1911
      %v1949 = vpack.c.bf16 %v1850, %v1849
      %v1950 = vpack.c.bf16 %v1882, %v1881
      %v1951 = vpack.c.bf16 %v1914, %v1913
      %v1952 = vpack.c.bf16 %v1852, %v1851
      %v1953 = vpack.c.bf16 %v1884, %v1883
      %v1954 = vpack.c.bf16 %v1916, %v1915
      %v1955 = vpack.c.bf16 %v1854, %v1853
      %v1956 = vpack.c.bf16 %v1886, %v1885
      %v1957 = vpack.c.bf16 %v1918, %v1917
      %v1958 = vpack.c.bf16 %v1856, %v1855
      %v1959 = vpack.c.bf16 %v1888, %v1887
      %v1960 = vpack.c.bf16 %v1920, %v1919
      %v1961 = vpack.c.bf16 %v1858, %v1857
      %v1962 = vpack.c.bf16 %v1890, %v1889
      %v1963 = vpack.c.bf16 %v1922, %v1921
      %v1964 = vpack.c.bf16 %v1860, %v1859
      %v1965 = vpack.c.bf16 %v1892, %v1891
      %v1966 = vpack.c.bf16 %v1924, %v1923
      %v1967 = vpack.c.bf16 %v1862, %v1861
      %v1968 = vpack.c.bf16 %v1894, %v1893
      %v1969 = vpack.c.bf16 %v1926, %v1925
      %v1970 = vpack.c.bf16 %v1864, %v1863
      %v1971 = vpack.c.bf16 %v1896, %v1895
      %v1972 = vpack.c.bf16 %v1928, %v1927
      %v1973 = vpack.c.bf16 %v1866, %v1865
      %v1974 = vpack.c.bf16 %v1898, %v1897
      %v1975 = vpack.c.bf16 %v1930, %v1929
      %v1976 = vpack.c.bf16 %v1868, %v1867
      %v1977 = vpack.c.bf16 %v1900, %v1899
      %v1978 = vpack.c.bf16 %v1932, %v1931
      %v1979 = vpack.c.bf16 %v1870, %v1869
      %v1980 = vpack.c.bf16 %v1902, %v1901
      %v1981 = vpack.c.bf16 %v1934, %v1933
      %v1982 = vpack.c.bf16 %v1872, %v1871
      %v1983 = vpack.c.bf16 %v1904, %v1903
      %v1984 = vpack.c.bf16 %v1936, %v1935
      %s1985 = scalar_lea.vmem %s4, 384
      %v1986 = vld [vmem:[%s1985] sm:$0xf]
      %v1987 = vld [vmem:[%s1985 + $0x4] sm:$0xf]
      %v1988 = vld [vmem:[%s1985 + $0x8] sm:$0xf]
      %v1989 = vld [vmem:[%s1985 + $0xc] sm:$0xf]
      %v1990 = vld [vmem:[%s1985 + $0x10] sm:$0xf]
      %v1991 = vld [vmem:[%s1985 + $0x14] sm:$0xf]
      %v1992 = vld [vmem:[%s1985 + $0x18] sm:$0xf]
      %v1993 = vld [vmem:[%s1985 + $0x1c] sm:$0xf]
      %v1994 = vld [vmem:[%s1985 + $0x20] sm:$0xf]
      %v1995 = vld [vmem:[%s1985 + $0x24] sm:$0xf]
      %v1996 = vld [vmem:[%s1985 + $0x28] sm:$0xf]
      %v1997 = vld [vmem:[%s1985 + $0x2c] sm:$0xf]
      %v1998 = vld [vmem:[%s1985 + $0x30] sm:$0xf]
      %v1999 = vld [vmem:[%s1985 + $0x34] sm:$0xf]
      %v2000 = vld [vmem:[%s1985 + $0x38] sm:$0xf]
      %v2001 = vld [vmem:[%s1985 + $0x3c] sm:$0xf]
      %v2002 = vld [vmem:[%s1985 + $0x40] sm:$0xf]
      %v2003 = vld [vmem:[%s1985 + $0x44] sm:$0xf]
      %v2004 = vld [vmem:[%s1985 + $0x48] sm:$0xf]
      %v2005 = vld [vmem:[%s1985 + $0x4c] sm:$0xf]
      %v2006 = vld [vmem:[%s1985 + $0x50] sm:$0xf]
      %v2007 = vld [vmem:[%s1985 + $0x54] sm:$0xf]
      %v2008 = vld [vmem:[%s1985 + $0x58] sm:$0xf]
      %v2009 = vld [vmem:[%s1985 + $0x5c] sm:$0xf]
      %v2010 = vld [vmem:[%s1985 + $0x60] sm:$0xf]
      %v2011 = vld [vmem:[%s1985 + $0x64] sm:$0xf]
      %v2012 = vld [vmem:[%s1985 + $0x68] sm:$0xf]
      %v2013 = vld [vmem:[%s1985 + $0x6c] sm:$0xf]
      %v2014 = vld [vmem:[%s1985 + $0x70] sm:$0xf]
      %v2015 = vld [vmem:[%s1985 + $0x74] sm:$0xf]
      %v2016 = vld [vmem:[%s1985 + $0x78] sm:$0xf]
      %v2017 = vld [vmem:[%s1985 + $0x7c] sm:$0xf]
      %v2018 = vld [vmem:[%s1985 + $0x80] sm:$0xf]
      %v2019 = vld [vmem:[%s1985 + $0x84] sm:$0xf]
      %v2020 = vld [vmem:[%s1985 + $0x88] sm:$0xf]
      %v2021 = vld [vmem:[%s1985 + $0x8c] sm:$0xf]
      %v2022 = vld [vmem:[%s1985 + $0x90] sm:$0xf]
      %v2023 = vld [vmem:[%s1985 + $0x94] sm:$0xf]
      %v2024 = vld [vmem:[%s1985 + $0x98] sm:$0xf]
      %v2025 = vld [vmem:[%s1985 + $0x9c] sm:$0xf]
      %v2026 = vld [vmem:[%s1985 + $0xa0] sm:$0xf]
      %v2027 = vld [vmem:[%s1985 + $0xa4] sm:$0xf]
      %v2028 = vld [vmem:[%s1985 + $0xa8] sm:$0xf]
      %v2029 = vld [vmem:[%s1985 + $0xac] sm:$0xf]
      %v2030 = vld [vmem:[%s1985 + $0xb0] sm:$0xf]
      %v2031 = vld [vmem:[%s1985 + $0xb4] sm:$0xf]
      %v2032 = vld [vmem:[%s1985 + $0xb8] sm:$0xf]
      %v2033 = vld [vmem:[%s1985 + $0xbc] sm:$0xf]
      %v2082 = vunpack.c.l.b16 %v1986
      %v2083 = vunpack.c.l.b16 %v1987
      %v2084 = vunpack.c.l.b16 %v1988
      %v2085 = vunpack.c.l.b16 %v1989
      %v2086 = vunpack.c.l.b16 %v1990
      %v2087 = vunpack.c.l.b16 %v1991
      %v2088 = vunpack.c.l.b16 %v1992
      %v2089 = vunpack.c.l.b16 %v1993
      %v2090 = vunpack.c.l.b16 %v1994
      %v2091 = vunpack.c.l.b16 %v1995
      %v2092 = vunpack.c.l.b16 %v1996
      %v2093 = vunpack.c.l.b16 %v1997
      %v2094 = vunpack.c.l.b16 %v1998
      %v2095 = vunpack.c.l.b16 %v1999
      %v2096 = vunpack.c.l.b16 %v2000
      %v2097 = vunpack.c.l.b16 %v2001
      %v2098 = vunpack.c.l.b16 %v2002
      %v2099 = vunpack.c.l.b16 %v2003
      %v2100 = vunpack.c.l.b16 %v2004
      %v2101 = vunpack.c.l.b16 %v2005
      %v2102 = vunpack.c.l.b16 %v2006
      %v2103 = vunpack.c.l.b16 %v2007
      %v2104 = vunpack.c.l.b16 %v2008
      %v2105 = vunpack.c.l.b16 %v2009
      %v2106 = vunpack.c.l.b16 %v2010
      %v2107 = vunpack.c.l.b16 %v2011
      %v2108 = vunpack.c.l.b16 %v2012
      %v2109 = vunpack.c.l.b16 %v2013
      %v2110 = vunpack.c.l.b16 %v2014
      %v2111 = vunpack.c.l.b16 %v2015
      %v2112 = vunpack.c.l.b16 %v2016
      %v2113 = vunpack.c.l.b16 %v2017
      %v2114 = vunpack.c.l.b16 %v2018
      %v2115 = vunpack.c.l.b16 %v2019
      %v2116 = vunpack.c.l.b16 %v2020
      %v2117 = vunpack.c.l.b16 %v2021
      %v2118 = vunpack.c.l.b16 %v2022
      %v2119 = vunpack.c.l.b16 %v2023
      %v2120 = vunpack.c.l.b16 %v2024
      %v2121 = vunpack.c.l.b16 %v2025
      %v2122 = vunpack.c.l.b16 %v2026
      %v2123 = vunpack.c.l.b16 %v2027
      %v2124 = vunpack.c.l.b16 %v2028
      %v2125 = vunpack.c.l.b16 %v2029
      %v2126 = vunpack.c.l.b16 %v2030
      %v2127 = vunpack.c.l.b16 %v2031
      %v2128 = vunpack.c.l.b16 %v2032
      %v2129 = vunpack.c.l.b16 %v2033
      %v2130 = vpack.c.b16 %v2083, %v2082
      %v2131 = vpack.c.b16 %v2085, %v2084
      %v2132 = vpack.c.b16 %v2087, %v2086
      %v2133 = vpack.c.b16 %v2089, %v2088
      %v2134 = vpack.c.b16 %v2091, %v2090
      %v2135 = vpack.c.b16 %v2093, %v2092
      %v2136 = vpack.c.b16 %v2095, %v2094
      %v2137 = vpack.c.b16 %v2097, %v2096
      %v2138 = vpack.c.b16 %v2099, %v2098
      %v2139 = vpack.c.b16 %v2101, %v2100
      %v2140 = vpack.c.b16 %v2103, %v2102
      %v2141 = vpack.c.b16 %v2105, %v2104
      %v2142 = vpack.c.b16 %v2107, %v2106
      %v2143 = vpack.c.b16 %v2109, %v2108
      %v2144 = vpack.c.b16 %v2111, %v2110
      %v2145 = vpack.c.b16 %v2113, %v2112
      %v2146 = vpack.c.b16 %v2115, %v2114
      %v2147 = vpack.c.b16 %v2117, %v2116
      %v2148 = vpack.c.b16 %v2119, %v2118
      %v2149 = vpack.c.b16 %v2121, %v2120
      %v2150 = vpack.c.b16 %v2123, %v2122
      %v2151 = vpack.c.b16 %v2125, %v2124
      %v2152 = vpack.c.b16 %v2127, %v2126
      %v2153 = vpack.c.b16 %v2129, %v2128
      %2178 = vmatprep.subr.bf16.mxu0 0
      %2179 = vmatpush1.bf16.msra.mxu0 %v2130
      %2180 = vmatprep.subr.bf16.mxu0 0
      %2181 = vmatpush1.bf16.msra.mxu0 %v2131
      %2182 = vmatprep.subr.bf16.mxu0 0
      %2183 = vmatpush1.bf16.msra.mxu0 %v2132
      %2184 = vmatprep.subr.bf16.mxu0 0
      %2185 = vmatpush1.bf16.msra.mxu0 %v2133
      %2186 = vmatprep.subr.bf16.mxu0 0
      %2187 = vmatpush1.bf16.msra.mxu0 %v2134
      %2188 = vmatprep.subr.bf16.mxu0 0
      %2189 = vmatpush1.bf16.msra.mxu0 %v2135
      %2190 = vmatprep.subr.bf16.mxu0 0
      %2191 = vmatpush1.bf16.msra.mxu0 %v2136
      %2192 = vmatprep.subr.bf16.mxu0 0
      %2193 = vmatpush1.bf16.msra.mxu0 %v2137
      %2194 = vmatprep.subr.bf16.mxu0 0
      %2195 = vmatpush1.bf16.msra.mxu0 %v2138
      %2196 = vmatprep.subr.bf16.mxu0 0
      %2197 = vmatpush1.bf16.msra.mxu0 %v2139
      %2198 = vmatprep.subr.bf16.mxu0 0
      %2199 = vmatpush1.bf16.msra.mxu0 %v2140
      %2200 = vmatprep.subr.bf16.mxu0 0
      %2201 = vmatpush1.bf16.msra.mxu0 %v2141
      %2202 = vmatprep.subr.bf16.mxu0 0
      %2203 = vmatpush1.bf16.msra.mxu0 %v2142
      %2204 = vmatprep.subr.bf16.mxu0 0
      %2205 = vmatpush1.bf16.msra.mxu0 %v2143
      %2206 = vmatprep.subr.bf16.mxu0 0
      %2207 = vmatpush1.bf16.msra.mxu0 %v2144
      %2208 = vmatprep.subr.bf16.mxu0 0
      %2209 = vmatpush1.bf16.msra.mxu0 %v2145
      %2210 = vmatprep.mubr.bf16.mxu0 %v1938
      %2211 = vmatmul.mubr.bf16.gmra.mrb[0].mxu0 %v1937
      %v2212 = vpop.f32.mrb[0].mxu0
      %v2213 = vadd.f32 0.0, %v2212
      %v2214 = vpop.f32.mrb[0].mxu0
      %v2215 = vpop.f32.mrb[0].mxu0
      %v2216 = vadd.f32 0.0, %v2215
      %v2217 = vpop.f32.mrb[0].mxu0
      %2218 = vmatprep.mubr.bf16.mxu0 %v1941
      %2219 = vmatmul.mubr.bf16.gmra.mrb[0].mxu0 %v1940
      %v2220 = vpop.f32.mrb[0].mxu0
      %v2221 = vadd.f32 0.0, %v2220
      %v2222 = vpop.f32.mrb[0].mxu0
      %v2223 = vpop.f32.mrb[0].mxu0
      %v2224 = vadd.f32 0.0, %v2223
      %v2225 = vpop.f32.mrb[0].mxu0
      %2226 = vmatprep.mubr.bf16.mxu0 %v1944
      %2227 = vmatmul.mubr.bf16.gmra.mrb[0].mxu0 %v1943
      %v2228 = vpop.f32.mrb[0].mxu0
      %v2229 = vadd.f32 0.0, %v2228
      %v2230 = vpop.f32.mrb[0].mxu0
      %v2231 = vpop.f32.mrb[0].mxu0
      %v2232 = vadd.f32 0.0, %v2231
      %v2233 = vpop.f32.mrb[0].mxu0
      %2234 = vmatprep.mubr.bf16.mxu0 %v1947
      %2235 = vmatmul.mubr.bf16.gmra.mrb[0].mxu0 %v1946
      %v2236 = vpop.f32.mrb[0].mxu0
      %v2237 = vadd.f32 0.0, %v2236
      %v2238 = vpop.f32.mrb[0].mxu0
      %v2239 = vpop.f32.mrb[0].mxu0
      %v2240 = vadd.f32 0.0, %v2239
      %v2241 = vpop.f32.mrb[0].mxu0
      %2242 = vmatprep.mubr.bf16.mxu0 %v1950
      %2243 = vmatmul.mubr.bf16.gmra.mrb[0].mxu0 %v1949
      %v2244 = vpop.f32.mrb[0].mxu0
      %v2245 = vadd.f32 0.0, %v2244
      %v2246 = vpop.f32.mrb[0].mxu0
      %v2247 = vpop.f32.mrb[0].mxu0
      %v2248 = vadd.f32 0.0, %v2247
      %v2249 = vpop.f32.mrb[0].mxu0
      %2250 = vmatprep.mubr.bf16.mxu0 %v1953
      %2251 = vmatmul.mubr.bf16.gmra.mrb[0].mxu0 %v1952
      %v2252 = vpop.f32.mrb[0].mxu0
      %v2253 = vadd.f32 0.0, %v2252
      %v2254 = vpop.f32.mrb[0].mxu0
      %v2255 = vpop.f32.mrb[0].mxu0
      %v2256 = vadd.f32 0.0, %v2255
      %v2257 = vpop.f32.mrb[0].mxu0
      %2258 = vmatprep.mubr.bf16.mxu0 %v1956
      %2259 = vmatmul.mubr.bf16.gmra.mrb[0].mxu0 %v1955
      %v2260 = vpop.f32.mrb[0].mxu0
      %v2261 = vadd.f32 0.0, %v2260
      %v2262 = vpop.f32.mrb[0].mxu0
      %v2263 = vpop.f32.mrb[0].mxu0
      %v2264 = vadd.f32 0.0, %v2263
      %v2265 = vpop.f32.mrb[0].mxu0
      %2266 = vmatprep.mubr.bf16.mxu0 %v1959
      %2267 = vmatmul.mubr.bf16.gmra.mrb[0].mxu0 %v1958
      %v2268 = vpop.f32.mrb[0].mxu0
      %v2269 = vadd.f32 0.0, %v2268
      %v2270 = vpop.f32.mrb[0].mxu0
      %v2271 = vpop.f32.mrb[0].mxu0
      %v2272 = vadd.f32 0.0, %v2271
      %v2273 = vpop.f32.mrb[0].mxu0
      %2274 = vmatprep.mubr.bf16.mxu0 %v1962
      %2275 = vmatmul.mubr.bf16.gmra.mrb[0].mxu0 %v1961
      %v2276 = vpop.f32.mrb[0].mxu0
      %v2277 = vadd.f32 0.0, %v2276
      %v2278 = vpop.f32.mrb[0].mxu0
      %v2279 = vpop.f32.mrb[0].mxu0
      %v2280 = vadd.f32 0.0, %v2279
      %v2281 = vpop.f32.mrb[0].mxu0
      %2282 = vmatprep.mubr.bf16.mxu0 %v1965
      %2283 = vmatmul.mubr.bf16.gmra.mrb[0].mxu0 %v1964
      %v2284 = vpop.f32.mrb[0].mxu0
      %v2285 = vadd.f32 0.0, %v2284
      %v2286 = vpop.f32.mrb[0].mxu0
      %v2287 = vpop.f32.mrb[0].mxu0
      %v2288 = vadd.f32 0.0, %v2287
      %v2289 = vpop.f32.mrb[0].mxu0
      %2290 = vmatprep.mubr.bf16.mxu0 %v1968
      %2291 = vmatmul.mubr.bf16.gmra.mrb[0].mxu0 %v1967
      %v2292 = vpop.f32.mrb[0].mxu0
      %v2293 = vadd.f32 0.0, %v2292
      %v2294 = vpop.f32.mrb[0].mxu0
      %v2295 = vpop.f32.mrb[0].mxu0
      %v2296 = vadd.f32 0.0, %v2295
      %v2297 = vpop.f32.mrb[0].mxu0
      %2298 = vmatprep.mubr.bf16.mxu0 %v1971
      %2299 = vmatmul.mubr.bf16.gmra.mrb[0].mxu0 %v1970
      %v2300 = vpop.f32.mrb[0].mxu0
      %v2301 = vadd.f32 0.0, %v2300
      %v2302 = vpop.f32.mrb[0].mxu0
      %v2303 = vpop.f32.mrb[0].mxu0
      %v2304 = vadd.f32 0.0, %v2303
      %v2305 = vpop.f32.mrb[0].mxu0
      %2306 = vmatprep.mubr.bf16.mxu0 %v1974
      %2307 = vmatmul.mubr.bf16.gmra.mrb[0].mxu0 %v1973
      %v2308 = vpop.f32.mrb[0].mxu0
      %v2309 = vadd.f32 0.0, %v2308
      %v2310 = vpop.f32.mrb[0].mxu0
      %v2311 = vpop.f32.mrb[0].mxu0
      %v2312 = vadd.f32 0.0, %v2311
      %v2313 = vpop.f32.mrb[0].mxu0
      %2314 = vmatprep.mubr.bf16.mxu0 %v1977
      %2315 = vmatmul.mubr.bf16.gmra.mrb[0].mxu0 %v1976
      %v2316 = vpop.f32.mrb[0].mxu0
      %v2317 = vadd.f32 0.0, %v2316
      %v2318 = vpop.f32.mrb[0].mxu0
      %v2319 = vpop.f32.mrb[0].mxu0
      %v2320 = vadd.f32 0.0, %v2319
      %v2321 = vpop.f32.mrb[0].mxu0
      %2322 = vmatprep.mubr.bf16.mxu0 %v1980
      %2323 = vmatmul.mubr.bf16.gmra.mrb[0].mxu0 %v1979
      %v2324 = vpop.f32.mrb[0].mxu0
      %v2325 = vadd.f32 0.0, %v2324
      %v2326 = vpop.f32.mrb[0].mxu0
      %v2327 = vpop.f32.mrb[0].mxu0
      %v2328 = vadd.f32 0.0, %v2327
      %v2329 = vpop.f32.mrb[0].mxu0
      %2330 = vmatprep.mubr.bf16.mxu0 %v1983
      %2331 = vmatmul.mubr.bf16.gmra.mrb[0].mxu0 %v1982
      %v2332 = vpop.f32.mrb[0].mxu0
      %v2333 = vadd.f32 0.0, %v2332
      %v2334 = vpop.f32.mrb[0].mxu0
      %v2335 = vpop.f32.mrb[0].mxu0
      %v2336 = vadd.f32 0.0, %v2335
      %v2337 = vpop.f32.mrb[0].mxu0
      %2338 = vdwg.mxu0
      %2339 = vmatprep.subr.bf16.mxu0 0
      %2340 = vmatpush1.bf16.msra.mxu0 %v2146
      %2341 = vmatprep.subr.bf16.mxu0 0
      %2342 = vmatpush1.bf16.msra.mxu0 %v2147
      %2343 = vmatprep.subr.bf16.mxu0 0
      %2344 = vmatpush1.bf16.msra.mxu0 %v2148
      %2345 = vmatprep.subr.bf16.mxu0 0
      %2346 = vmatpush1.bf16.msra.mxu0 %v2149
      %2347 = vmatprep.subr.bf16.mxu0 0
      %2348 = vmatpush1.bf16.msra.mxu0 %v2150
      %2349 = vmatprep.subr.bf16.mxu0 0
      %2350 = vmatpush1.bf16.msra.mxu0 %v2151
      %2351 = vmatprep.subr.bf16.mxu0 0
      %2352 = vmatpush1.bf16.msra.mxu0 %v2152
      %2353 = vmatprep.subr.bf16.mxu0 0
      %2354 = vmatpush1.bf16.msra.mxu0 %v2153
      %2355 = vmatprep.subr.bf16.mxu0 0
      %2356 = vmatpush1.bf16.msra.mxu0 0
      %2357 = vmatprep.subr.bf16.mxu0 0
      %2358 = vmatpush1.bf16.msra.mxu0 0
      %2359 = vmatprep.subr.bf16.mxu0 0
      %2360 = vmatpush1.bf16.msra.mxu0 0
      %2361 = vmatprep.subr.bf16.mxu0 0
      %2362 = vmatpush1.bf16.msra.mxu0 0
      %2363 = vmatprep.subr.bf16.mxu0 0
      %2364 = vmatpush1.bf16.msra.mxu0 0
      %2365 = vmatprep.subr.bf16.mxu0 0
      %2366 = vmatpush1.bf16.msra.mxu0 0
      %2367 = vmatprep.subr.bf16.mxu0 0
      %2368 = vmatpush1.bf16.msra.mxu0 0
      %2369 = vmatprep.subr.bf16.mxu0 0
      %2370 = vmatpush1.bf16.msra.mxu0 0
      %2371 = vmatprep.mubr.bf16.mxu0 0
      %2372 = vmatmul.mubr.bf16.gmra.mrb[0].mxu0 %v1939
      %v2373 = vpop.f32.mrb[0].mxu0
      %v2374 = vadd.f32 %v2213, %v2373
      %v2375 = vpop.f32.mrb[0].mxu0
      %v2376 = vpop.f32.mrb[0].mxu0
      %v2377 = vadd.f32 %v2216, %v2376
      %v2378 = vpop.f32.mrb[0].mxu0
      %2379 = vmatprep.mubr.bf16.mxu0 0
      %2380 = vmatmul.mubr.bf16.gmra.mrb[0].mxu0 %v1942
      %v2381 = vpop.f32.mrb[0].mxu0
      %v2382 = vadd.f32 %v2221, %v2381
      %v2383 = vpop.f32.mrb[0].mxu0
      %v2384 = vpop.f32.mrb[0].mxu0
      %v2385 = vadd.f32 %v2224, %v2384
      %v2386 = vpop.f32.mrb[0].mxu0
      %2387 = vmatprep.mubr.bf16.mxu0 0
      %2388 = vmatmul.mubr.bf16.gmra.mrb[0].mxu0 %v1945
      %v2389 = vpop.f32.mrb[0].mxu0
      %v2390 = vadd.f32 %v2229, %v2389
      %v2391 = vpop.f32.mrb[0].mxu0
      %v2392 = vpop.f32.mrb[0].mxu0
      %v2393 = vadd.f32 %v2232, %v2392
      %v2394 = vpop.f32.mrb[0].mxu0
      %2395 = vmatprep.mubr.bf16.mxu0 0
      %2396 = vmatmul.mubr.bf16.gmra.mrb[0].mxu0 %v1948
      %v2397 = vpop.f32.mrb[0].mxu0
      %v2398 = vadd.f32 %v2237, %v2397
      %v2399 = vpop.f32.mrb[0].mxu0
      %v2400 = vpop.f32.mrb[0].mxu0
      %v2401 = vadd.f32 %v2240, %v2400
      %v2402 = vpop.f32.mrb[0].mxu0
      %2403 = vmatprep.mubr.bf16.mxu0 0
      %2404 = vmatmul.mubr.bf16.gmra.mrb[0].mxu0 %v1951
      %v2405 = vpop.f32.mrb[0].mxu0
      %v2406 = vadd.f32 %v2245, %v2405
      %v2407 = vpop.f32.mrb[0].mxu0
      %v2408 = vpop.f32.mrb[0].mxu0
      %v2409 = vadd.f32 %v2248, %v2408
      %v2410 = vpop.f32.mrb[0].mxu0
      %2411 = vmatprep.mubr.bf16.mxu0 0
      %2412 = vmatmul.mubr.bf16.gmra.mrb[0].mxu0 %v1954
      %v2413 = vpop.f32.mrb[0].mxu0
      %v2414 = vadd.f32 %v2253, %v2413
      %v2415 = vpop.f32.mrb[0].mxu0
      %v2416 = vpop.f32.mrb[0].mxu0
      %v2417 = vadd.f32 %v2256, %v2416
      %v2418 = vpop.f32.mrb[0].mxu0
      %2419 = vmatprep.mubr.bf16.mxu0 0
      %2420 = vmatmul.mubr.bf16.gmra.mrb[0].mxu0 %v1957
      %v2421 = vpop.f32.mrb[0].mxu0
      %v2422 = vadd.f32 %v2261, %v2421
      %v2423 = vpop.f32.mrb[0].mxu0
      %v2424 = vpop.f32.mrb[0].mxu0
      %v2425 = vadd.f32 %v2264, %v2424
      %v2426 = vpop.f32.mrb[0].mxu0
      %2427 = vmatprep.mubr.bf16.mxu0 0
      %2428 = vmatmul.mubr.bf16.gmra.mrb[0].mxu0 %v1960
      %v2429 = vpop.f32.mrb[0].mxu0
      %v2430 = vadd.f32 %v2269, %v2429
      %v2431 = vpop.f32.mrb[0].mxu0
      %v2432 = vpop.f32.mrb[0].mxu0
      %v2433 = vadd.f32 %v2272, %v2432
      %v2434 = vpop.f32.mrb[0].mxu0
      %2435 = vmatprep.mubr.bf16.mxu0 0
      %2436 = vmatmul.mubr.bf16.gmra.mrb[0].mxu0 %v1963
      %v2437 = vpop.f32.mrb[0].mxu0
      %v2438 = vadd.f32 %v2277, %v2437
      %v2439 = vpop.f32.mrb[0].mxu0
      %v2440 = vpop.f32.mrb[0].mxu0
      %v2441 = vadd.f32 %v2280, %v2440
      %v2442 = vpop.f32.mrb[0].mxu0
      %2443 = vmatprep.mubr.bf16.mxu0 0
      %2444 = vmatmul.mubr.bf16.gmra.mrb[0].mxu0 %v1966
      %v2445 = vpop.f32.mrb[0].mxu0
      %v2446 = vadd.f32 %v2285, %v2445
      %v2447 = vpop.f32.mrb[0].mxu0
      %v2448 = vpop.f32.mrb[0].mxu0
      %v2449 = vadd.f32 %v2288, %v2448
      %v2450 = vpop.f32.mrb[0].mxu0
      %2451 = vmatprep.mubr.bf16.mxu0 0
      %2452 = vmatmul.mubr.bf16.gmra.mrb[0].mxu0 %v1969
      %v2453 = vpop.f32.mrb[0].mxu0
      %v2454 = vadd.f32 %v2293, %v2453
      %v2455 = vpop.f32.mrb[0].mxu0
      %v2456 = vpop.f32.mrb[0].mxu0
      %v2457 = vadd.f32 %v2296, %v2456
      %v2458 = vpop.f32.mrb[0].mxu0
      %2459 = vmatprep.mubr.bf16.mxu0 0
      %2460 = vmatmul.mubr.bf16.gmra.mrb[0].mxu0 %v1972
      %v2461 = vpop.f32.mrb[0].mxu0
      %v2462 = vadd.f32 %v2301, %v2461
      %v2463 = vpop.f32.mrb[0].mxu0
      %v2464 = vpop.f32.mrb[0].mxu0
      %v2465 = vadd.f32 %v2304, %v2464
      %v2466 = vpop.f32.mrb[0].mxu0
      %2467 = vmatprep.mubr.bf16.mxu0 0
      %2468 = vmatmul.mubr.bf16.gmra.mrb[0].mxu0 %v1975
      %v2469 = vpop.f32.mrb[0].mxu0
      %v2470 = vadd.f32 %v2309, %v2469
      %v2471 = vpop.f32.mrb[0].mxu0
      %v2472 = vpop.f32.mrb[0].mxu0
      %v2473 = vadd.f32 %v2312, %v2472
      %v2474 = vpop.f32.mrb[0].mxu0
      %2475 = vmatprep.mubr.bf16.mxu0 0
      %2476 = vmatmul.mubr.bf16.gmra.mrb[0].mxu0 %v1978
      %v2477 = vpop.f32.mrb[0].mxu0
      %v2478 = vadd.f32 %v2317, %v2477
      %v2479 = vpop.f32.mrb[0].mxu0
      %v2480 = vpop.f32.mrb[0].mxu0
      %v2481 = vadd.f32 %v2320, %v2480
      %v2482 = vpop.f32.mrb[0].mxu0
      %2483 = vmatprep.mubr.bf16.mxu0 0
      %2484 = vmatmul.mubr.bf16.gmra.mrb[0].mxu0 %v1981
      %v2485 = vpop.f32.mrb[0].mxu0
      %v2486 = vadd.f32 %v2325, %v2485
      %v2487 = vpop.f32.mrb[0].mxu0
      %v2488 = vpop.f32.mrb[0].mxu0
      %v2489 = vadd.f32 %v2328, %v2488
      %v2490 = vpop.f32.mrb[0].mxu0
      %2491 = vmatprep.mubr.bf16.mxu0 0
      %2492 = vmatmul.mubr.bf16.gmra.mrb[0].mxu0 %v1984
      %v2493 = vpop.f32.mrb[0].mxu0
      %v2494 = vadd.f32 %v2333, %v2493
      %v2495 = vpop.f32.mrb[0].mxu0
      %v2496 = vpop.f32.mrb[0].mxu0
      %v2497 = vadd.f32 %v2336, %v2496
      %v2498 = vpop.f32.mrb[0].mxu0
      %2499 = vdwg.mxu0
      %v2500 = vadd.f32 %v1714, %v2374
      %v2501 = vadd.f32 %v1717, %v2377
      %v2502 = vadd.f32 %v1722, %v2382
      %v2503 = vadd.f32 %v1725, %v2385
      %v2504 = vadd.f32 %v1730, %v2390
      %v2505 = vadd.f32 %v1733, %v2393
      %v2506 = vadd.f32 %v1738, %v2398
      %v2507 = vadd.f32 %v1741, %v2401
      %v2508 = vadd.f32 %v1746, %v2406
      %v2509 = vadd.f32 %v1749, %v2409
      %v2510 = vadd.f32 %v1754, %v2414
      %v2511 = vadd.f32 %v1757, %v2417
      %v2512 = vadd.f32 %v1762, %v2422
      %v2513 = vadd.f32 %v1765, %v2425
      %v2514 = vadd.f32 %v1770, %v2430
      %v2515 = vadd.f32 %v1773, %v2433
      %v2516 = vadd.f32 %v1778, %v2438
      %v2517 = vadd.f32 %v1781, %v2441
      %v2518 = vadd.f32 %v1786, %v2446
      %v2519 = vadd.f32 %v1789, %v2449
      %v2520 = vadd.f32 %v1794, %v2454
      %v2521 = vadd.f32 %v1797, %v2457
      %v2522 = vadd.f32 %v1802, %v2462
      %v2523 = vadd.f32 %v1805, %v2465
      %v2524 = vadd.f32 %v1810, %v2470
      %v2525 = vadd.f32 %v1813, %v2473
      %v2526 = vadd.f32 %v1818, %v2478
      %v2527 = vadd.f32 %v1821, %v2481
      %v2528 = vadd.f32 %v1826, %v2486
      %v2529 = vadd.f32 %v1829, %v2489
      %v2530 = vadd.f32 %v1834, %v2494
      %v2531 = vadd.f32 %v1837, %v2497
      %v2532 = vld [vmem:[%s5] sm:$0x1]
      %v2534 = vlaneseq
      %v2535 = vshrl.u32 %v2534, 7
      %v2536 = vsub.s32 0, %v2535
      %v2537 = vrot.slane %v2532, %v2536
      %v2539 = vadd.f32 %v2500, %v2537
      %v2540 = vadd.f32 %v2501, %v2537
      %v2541 = vadd.f32 %v2502, %v2537
      %v2542 = vadd.f32 %v2503, %v2537
      %v2543 = vadd.f32 %v2504, %v2537
      %v2544 = vadd.f32 %v2505, %v2537
      %v2545 = vadd.f32 %v2506, %v2537
      %v2546 = vadd.f32 %v2507, %v2537
      %v2547 = vadd.f32 %v2508, %v2537
      %v2548 = vadd.f32 %v2509, %v2537
      %v2549 = vadd.f32 %v2510, %v2537
      %v2550 = vadd.f32 %v2511, %v2537
      %v2551 = vadd.f32 %v2512, %v2537
      %v2552 = vadd.f32 %v2513, %v2537
      %v2553 = vadd.f32 %v2514, %v2537
      %v2554 = vadd.f32 %v2515, %v2537
      %v2555 = vadd.f32 %v2516, %v2537
      %v2556 = vadd.f32 %v2517, %v2537
      %v2557 = vadd.f32 %v2518, %v2537
      %v2558 = vadd.f32 %v2519, %v2537
      %v2559 = vadd.f32 %v2520, %v2537
      %v2560 = vadd.f32 %v2521, %v2537
      %v2561 = vadd.f32 %v2522, %v2537
      %v2562 = vadd.f32 %v2523, %v2537
      %v2563 = vadd.f32 %v2524, %v2537
      %v2564 = vadd.f32 %v2525, %v2537
      %v2565 = vadd.f32 %v2526, %v2537
      %v2566 = vadd.f32 %v2527, %v2537
      %v2567 = vadd.f32 %v2528, %v2537
      %v2568 = vadd.f32 %v2529, %v2537
      %v2569 = vadd.f32 %v2530, %v2537
      %v2570 = vadd.f32 %v2531, %v2537
      %v2571 = vld [vmem:[%s266] sm:$0xf]
      %v2572 = vld [vmem:[%s266 + $0x4] sm:$0xf]
      %v2573 = vld [vmem:[%s266 + $0x8] sm:$0xf]
      %v2574 = vld [vmem:[%s266 + $0xc] sm:$0xf]
      %v2575 = vld [vmem:[%s266 + $0x10] sm:$0xf]
      %v2576 = vld [vmem:[%s266 + $0x14] sm:$0xf]
      %v2577 = vld [vmem:[%s266 + $0x18] sm:$0xf]
      %v2578 = vld [vmem:[%s266 + $0x1c] sm:$0xf]
      %v2579 = vld [vmem:[%s266 + $0x20] sm:$0xf]
      %v2580 = vld [vmem:[%s266 + $0x24] sm:$0xf]
      %v2581 = vld [vmem:[%s266 + $0x28] sm:$0xf]
      %v2582 = vld [vmem:[%s266 + $0x2c] sm:$0xf]
      %v2583 = vld [vmem:[%s266 + $0x30] sm:$0xf]
      %v2584 = vld [vmem:[%s266 + $0x34] sm:$0xf]
      %v2585 = vld [vmem:[%s266 + $0x38] sm:$0xf]
      %v2586 = vld [vmem:[%s266 + $0x3c] sm:$0xf]
      %v2587 = vld [vmem:[%s266 + $0x40] sm:$0xf]
      %v2588 = vld [vmem:[%s266 + $0x44] sm:$0xf]
      %v2589 = vld [vmem:[%s266 + $0x48] sm:$0xf]
      %v2590 = vld [vmem:[%s266 + $0x4c] sm:$0xf]
      %v2591 = vld [vmem:[%s266 + $0x50] sm:$0xf]
      %v2592 = vld [vmem:[%s266 + $0x54] sm:$0xf]
      %v2593 = vld [vmem:[%s266 + $0x58] sm:$0xf]
      %v2594 = vld [vmem:[%s266 + $0x5c] sm:$0xf]
      %v2595 = vld [vmem:[%s266 + $0x60] sm:$0xf]
      %v2596 = vld [vmem:[%s266 + $0x64] sm:$0xf]
      %v2597 = vld [vmem:[%s266 + $0x68] sm:$0xf]
      %v2598 = vld [vmem:[%s266 + $0x6c] sm:$0xf]
      %v2599 = vld [vmem:[%s266 + $0x70] sm:$0xf]
      %v2600 = vld [vmem:[%s266 + $0x74] sm:$0xf]
      %v2601 = vld [vmem:[%s266 + $0x78] sm:$0xf]
      %v2602 = vld [vmem:[%s266 + $0x7c] sm:$0xf]
      %v2603 = vunpack.c.l.bf16 %v2571
      %v2604 = vunpack.c.l.bf16 %v2572
      %v2605 = vunpack.c.l.bf16 %v2573
      %v2606 = vunpack.c.l.bf16 %v2574
      %v2607 = vunpack.c.l.bf16 %v2575
      %v2608 = vunpack.c.l.bf16 %v2576
      %v2609 = vunpack.c.l.bf16 %v2577
      %v2610 = vunpack.c.l.bf16 %v2578
      %v2611 = vunpack.c.l.bf16 %v2579
      %v2612 = vunpack.c.l.bf16 %v2580
      %v2613 = vunpack.c.l.bf16 %v2581
      %v2614 = vunpack.c.l.bf16 %v2582
      %v2615 = vunpack.c.l.bf16 %v2583
      %v2616 = vunpack.c.l.bf16 %v2584
      %v2617 = vunpack.c.l.bf16 %v2585
      %v2618 = vunpack.c.l.bf16 %v2586
      %v2619 = vunpack.c.l.bf16 %v2587
      %v2620 = vunpack.c.l.bf16 %v2588
      %v2621 = vunpack.c.l.bf16 %v2589
      %v2622 = vunpack.c.l.bf16 %v2590
      %v2623 = vunpack.c.l.bf16 %v2591
      %v2624 = vunpack.c.l.bf16 %v2592
      %v2625 = vunpack.c.l.bf16 %v2593
      %v2626 = vunpack.c.l.bf16 %v2594
      %v2627 = vunpack.c.l.bf16 %v2595
      %v2628 = vunpack.c.l.bf16 %v2596
      %v2629 = vunpack.c.l.bf16 %v2597
      %v2630 = vunpack.c.l.bf16 %v2598
      %v2631 = vunpack.c.l.bf16 %v2599
      %v2632 = vunpack.c.l.bf16 %v2600
      %v2633 = vunpack.c.l.bf16 %v2601
      %v2634 = vunpack.c.l.bf16 %v2602
      %v2635 = vadd.f32 %v2539, %v2603
      %v2636 = vadd.f32 %v2540, %v2604
      %v2637 = vadd.f32 %v2541, %v2605
      %v2638 = vadd.f32 %v2542, %v2606
      %v2639 = vadd.f32 %v2543, %v2607
      %v2640 = vadd.f32 %v2544, %v2608
      %v2641 = vadd.f32 %v2545, %v2609
      %v2642 = vadd.f32 %v2546, %v2610
      %v2643 = vadd.f32 %v2547, %v2611
      %v2644 = vadd.f32 %v2548, %v2612
      %v2645 = vadd.f32 %v2549, %v2613
      %v2646 = vadd.f32 %v2550, %v2614
      %v2647 = vadd.f32 %v2551, %v2615
      %v2648 = vadd.f32 %v2552, %v2616
      %v2649 = vadd.f32 %v2553, %v2617
      %v2650 = vadd.f32 %v2554, %v2618
      %v2651 = vadd.f32 %v2555, %v2619
      %v2652 = vadd.f32 %v2556, %v2620
      %v2653 = vadd.f32 %v2557, %v2621
      %v2654 = vadd.f32 %v2558, %v2622
      %v2655 = vadd.f32 %v2559, %v2623
      %v2656 = vadd.f32 %v2560, %v2624
      %v2657 = vadd.f32 %v2561, %v2625
      %v2658 = vadd.f32 %v2562, %v2626
      %v2659 = vadd.f32 %v2563, %v2627
      %v2660 = vadd.f32 %v2564, %v2628
      %v2661 = vadd.f32 %v2565, %v2629
      %v2662 = vadd.f32 %v2566, %v2630
      %v2663 = vadd.f32 %v2567, %v2631
      %v2664 = vadd.f32 %v2568, %v2632
      %v2665 = vadd.f32 %v2569, %v2633
      %v2666 = vadd.f32 %v2570, %v2634
      %2667 = vst [vmem:[%s271] sm:$0xff] %v2635
      %2668 = vst [vmem:[%s271 + $0x8] sm:$0xff] %v2636
      %2669 = vst [vmem:[%s271 + $0x10] sm:$0xff] %v2637
      %2670 = vst [vmem:[%s271 + $0x18] sm:$0xff] %v2638
      %2671 = vst [vmem:[%s271 + $0x20] sm:$0xff] %v2639
      %2672 = vst [vmem:[%s271 + $0x28] sm:$0xff] %v2640
      %2673 = vst [vmem:[%s271 + $0x30] sm:$0xff] %v2641
      %2674 = vst [vmem:[%s271 + $0x38] sm:$0xff] %v2642
      %2675 = vst [vmem:[%s271 + $0x40] sm:$0xff] %v2643
      %2676 = vst [vmem:[%s271 + $0x48] sm:$0xff] %v2644
      %2677 = vst [vmem:[%s271 + $0x50] sm:$0xff] %v2645
      %2678 = vst [vmem:[%s271 + $0x58] sm:$0xff] %v2646
      %2679 = vst [vmem:[%s271 + $0x60] sm:$0xff] %v2647
      %2680 = vst [vmem:[%s271 + $0x68] sm:$0xff] %v2648
      %2681 = vst [vmem:[%s271 + $0x70] sm:$0xff] %v2649
      %2682 = vst [vmem:[%s271 + $0x78] sm:$0xff] %v2650
      %2683 = vst [vmem:[%s271 + $0x80] sm:$0xff] %v2651
      %2684 = vst [vmem:[%s271 + $0x88] sm:$0xff] %v2652
      %2685 = vst [vmem:[%s271 + $0x90] sm:$0xff] %v2653
      %2686 = vst [vmem:[%s271 + $0x98] sm:$0xff] %v2654
      %2687 = vst [vmem:[%s271 + $0xa0] sm:$0xff] %v2655
      %2688 = vst [vmem:[%s271 + $0xa8] sm:$0xff] %v2656
      %2689 = vst [vmem:[%s271 + $0xb0] sm:$0xff] %v2657
      %2690 = vst [vmem:[%s271 + $0xb8] sm:$0xff] %v2658
      %2691 = vst [vmem:[%s271 + $0xc0] sm:$0xff] %v2659
      %2692 = vst [vmem:[%s271 + $0xc8] sm:$0xff] %v2660
      %2693 = vst [vmem:[%s271 + $0xd0] sm:$0xff] %v2661
      %2694 = vst [vmem:[%s271 + $0xd8] sm:$0xff] %v2662
      %2695 = vst [vmem:[%s271 + $0xe0] sm:$0xff] %v2663
      %2696 = vst [vmem:[%s271 + $0xe8] sm:$0xff] %v2664
      %2697 = vst [vmem:[%s271 + $0xf0] sm:$0xff] %v2665
      %2698 = vst [vmem:[%s271 + $0xf8] sm:$0xff] %v2666
      %p2699 = scmp.lt.s32.totalorder %s17, 1
      %s2700 = scalar_select %p2699, %s17, 1
      %s2701 = smul.addr %s2700, 32
      %s2702 = smul.addr %s2701, 8
      %s2703 = scalar_lea.vmem %s6, %s2702
      // Predicated region
      $region45: #{resu_block_forward.5} parent=43 // pred_check
        %p2704 = pneg %p171
      $region46: #{resu_block_forward.5} parent=43 // pred_check_branch
        %2706 = sbr.rel (%p2704) target = $region48
      $region47: #{resu_block_forward.5} parent=43 // pred_region
        _
      $region48: #{resu_block_forward.5} parent=43 // pred_fallthru
        _
    $region44: #{resu_block_forward.5} parent=5 // pred_fallthru
      _
    %p2707 = scmp.le.s32.totalorder 2, %s12
    // Predicated region
    $region49: #{resu_block_forward.5} parent=5 // pred_check
      %p2708 = pneg %p2707
    $region50: #{resu_block_forward.5} parent=5 // pred_check_branch
      %2710 = sbr.rel (%p2708) target = $region52
    $region51: #{resu_block_forward.5} parent=5 // pred_region
      %s2711 = ssub.s32 %s12, 2
      // Predicated region
      $region53: #{resu_block_forward.5} parent=51 // pred_check
        %p2712 = pneg %p177
      $region54: #{resu_block_forward.5} parent=51 // pred_check_branch
        %2714 = sbr.rel (%p2712) target = $region56
      $region55: #{resu_block_forward.5} parent=51 // pred_region
        %p2715 = scmp.lt.s32.totalorder %s18, 1
        %s2716 = scalar_select %p2715, %s18, 1
        %s2717 = smul.addr %s2716, 32
        %s2718 = smul.addr %s2717, 8
        %s2719 = scalar_lea.vmem %s6, %s2718
      $region56: #{resu_block_forward.5} parent=51 // pred_fallthru
        _
    $region52: #{resu_block_forward.5} parent=5 // pred_fallthru
      _
  $region6: #{resu_block_forward.5} parent=0 // loop_footer
    %s16 = sadd.s32 1, %s12
  $region7: #{resu_block_forward.5} parent=0 // loop_footer_branch
    %11 = sbr.rel target = $region3
  $region8: #{resu_block_forward.5} parent=0 // loop_exit
    _

</llo_original>
